<compile_context>
chip_gen: v7x
topology: tpu7x:2x2x1
jax: 0.10.0
libtpu: 0.0.40
codegen_flags: <defaults>
</compile_context>

<pallas_src>
import functools
import math

import jax
import jax.numpy as jnp
from jax.experimental import pallas as pl
from jax.experimental.pallas import tpu as pltpu


# ----------------------------------------------------------------------------
# tiling helpers
# ----------------------------------------------------------------------------

_SUBLANE = 8     # second-to-last dim granularity
_LANE = 128      # last dim granularity


def _pick_tile(dim, target, mult):
    """Tile size that divides `dim`, is a multiple of `mult` (when < dim) and <= target.

    When the whole dim already fits under `target` we still try to split it in two
    (keeping the multiple-of-`mult` rule) so a megacore sees >= 2 parallel steps."""
    if dim <= target:
        half = dim // 2
        if half >= mult and half % mult == 0 and dim % half == 0:
            return half
        return dim
    t = (target // mult) * mult
    while t >= mult:
        if dim % t == 0:
            return t
        t -= mult
    return dim   # fallback: single full block


# ----------------------------------------------------------------------------
# Classifier matmul kernel (tiled, fp32 VMEM accumulator)
# ----------------------------------------------------------------------------

def _matmul_kernel(x_ref, w_ref, o_ref, acc_ref):
    """Tiled y = x @ w. K is the innermost ("arbitrary") grid axis; fp32 accumulator."""
    @pl.when(pl.program_id(2) == 0)
    def _init():
        acc_ref[...] = jnp.zeros_like(acc_ref)

    acc_ref[...] += jnp.dot(x_ref[...].astype(jnp.bfloat16),
                            w_ref[...].astype(jnp.bfloat16),
                            preferred_element_type=jnp.float32)

    @pl.when(pl.program_id(2) == pl.num_programs(2) - 1)
    def _store():
        o_ref[...] = acc_ref[...].astype(o_ref.dtype)


def matmul(x2d, w, *, tm=256, tn=256, tk=512):
    """y = x2d @ w   (used for the classifier; bias-free)."""
    M, K = x2d.shape
    K2, N = w.shape
    assert K == K2
    bm = _pick_tile(M, tm, _SUBLANE)
    bn = _pick_tile(N, tn, _LANE)
    bk = _pick_tile(K, tk, _LANE)
    cost = pl.CostEstimate(
        flops=2 * M * N * K,
        transcendentals=0,
        bytes_accessed=M * K * x2d.dtype.itemsize + K * N * w.dtype.itemsize + M * N * 4)
    return pl.pallas_call(
        _matmul_kernel,
        out_shape=jax.ShapeDtypeStruct((M, N), jnp.float32),
        grid=(M // bm, N // bn, K // bk),
        in_specs=[pl.BlockSpec((bm, bk), lambda i, j, k: (i, k)),
                  pl.BlockSpec((bk, bn), lambda i, j, k: (k, j))],
        out_specs=pl.BlockSpec((bm, bn), lambda i, j, k: (i, j)),
        scratch_shapes=[pltpu.VMEM((bm, bn), jnp.float32)],
        compiler_params=pltpu.CompilerParams(
            dimension_semantics=("parallel", "parallel", "arbitrary")),
        cost_estimate=cost,
    )(x2d, w)


# ----------------------------------------------------------------------------
# In-kernel helpers (traced inside the fused layer kernel)
# ----------------------------------------------------------------------------

def _attend(q, k, v, mask, num_heads, head_dim, scale):
    """Per-head softmax attention. q:(Tq,D) k,v:(Tk,D) fp32; mask:(Tq,Tk) bool."""
    outs = []
    for hh in range(num_heads):
        sl = slice(hh * head_dim, (hh + 1) * head_dim)
        qh = q[:, sl].astype(jnp.bfloat16)
        kh = k[:, sl].astype(jnp.bfloat16)
        vh = v[:, sl].astype(jnp.bfloat16)
        s = jax.lax.dot_general(qh, kh, (((1,), (1,)), ((), ())),
                                preferred_element_type=jnp.float32) * scale
        s = jnp.where(mask, s, -1e9)
        s = s - jnp.max(s, axis=-1, keepdims=True)            # fp32 softmax stats
        p = jnp.exp(s)
        p = p * pl.reciprocal(jnp.sum(p, axis=-1, keepdims=True), approx=True)
        outs.append(jnp.dot(p.astype(jnp.bfloat16), vh,
                            preferred_element_type=jnp.float32))
    return jnp.concatenate(outs, axis=-1)


def _layernorm(y, gamma, beta):
    mu = jnp.mean(y, axis=-1, keepdims=True)
    var = jnp.mean(jnp.square(y - mu), axis=-1, keepdims=True)
    return (y - mu) * jax.lax.rsqrt(var + 1e-5) * gamma + beta


# ----------------------------------------------------------------------------
# Fused decoder-layer kernel (one batch element per grid step)
# ----------------------------------------------------------------------------

def _decoder_layer_kernel(h_ref, enc_ref, skv_ref, ekv_ref, npm_ref,
                          s_wqkv, s_bqkv, s_wo, s_bo, g1, bb1,
                          c_wq, c_bq, c_wkv, c_bkv, c_wo, c_bo, g2, bb2,
                          f_w1, f_b1, f_w2, f_b2, g3, bb3,
                          o_ref, *, num_heads, head_dim, scale):
    D = num_heads * head_dim
    T = h_ref.shape[1]
    Te = enc_ref.shape[1]

    npm = npm_ref[0]                                   # (T, 1) fp32
    h = h_ref[0]                                       # (T, D) fp32 residual stream

    # ---- masked self-attention + W_O + residual + LN1 + non-pad mask ----
    qkv = jnp.dot(h.astype(jnp.bfloat16), s_wqkv[...],
                  preferred_element_type=jnp.float32) + s_bqkv[...]
    q, k, v = qkv[:, :D], qkv[:, D:2 * D], qkv[:, 2 * D:]
    mask = jnp.broadcast_to(skv_ref[0] > 0.0, (T, T))                 # key != eos
    qi = jax.lax.broadcasted_iota(jnp.int32, (T, T), 0)
    ki = jax.lax.broadcasted_iota(jnp.int32, (T, T), 1)
    mask = jnp.logical_and(mask, ki <= qi)                            # causal
    a = _attend(q, k, v, mask, num_heads, head_dim, scale)
    h = _layernorm(h + jnp.dot(a.astype(jnp.bfloat16), s_wo[...],
                               preferred_element_type=jnp.float32) + s_bo[...],
                   g1[...], bb1[...]) * npm

    # ---- cross-attention over encoder output + W_O + residual + LN2 + mask ----
    q = jnp.dot(h.astype(jnp.bfloat16), c_wq[...],
                preferred_element_type=jnp.float32) + c_bq[...]
    kv = jnp.dot(enc_ref[0].astype(jnp.bfloat16), c_wkv[...],
                 preferred_element_type=jnp.float32) + c_bkv[...]
    k, v = kv[:, :D], kv[:, D:]
    emask = jnp.broadcast_to(ekv_ref[0] > 0.0, (T, Te))               # key_pos < enc_len
    a = _attend(q, k, v, emask, num_heads, head_dim, scale)
    h = _layernorm(h + jnp.dot(a.astype(jnp.bfloat16), c_wo[...],
                               preferred_element_type=jnp.float32) + c_bo[...],
                   g2[...], bb2[...]) * npm

    # ---- feed-forward (two matmuls + ReLU) + residual + LN3 + mask ----
    t = jnp.dot(h.astype(jnp.bfloat16), f_w1[...],
                preferred_element_type=jnp.float32) + f_b1[...]
    t = jnp.maximum(t, 0.0)
    h = _layernorm(h + jnp.dot(t.astype(jnp.bfloat16), f_w2[...],
                               preferred_element_type=jnp.float32) + f_b2[...],
                   g3[...], bb3[...]) * npm

    o_ref[0] = h.astype(o_ref.dtype)


def decoder_layer(h, enc_x, self_kvalid, enc_kvalid, npm, p, num_heads):
    """One fused pallas_call per decoder layer; grid over batch (megacore parallel)."""
    B, T, D = h.shape
    Te = enc_x.shape[1]
    F = p["ff_w1"].shape[1]
    dh = D // num_heads

    kern = functools.partial(_decoder_layer_kernel, num_heads=num_heads,
                             head_dim=dh, scale=1.0 / math.sqrt(dh))

    row3 = lambda b: (b, 0, 0)
    rep2 = lambda b: (0, 0)

    in_specs = [
        pl.BlockSpec((1, T, D), row3),            # h
        pl.BlockSpec((1, Te, D), row3),           # enc_x
        pl.BlockSpec((1, 1, T), row3),            # self key-valid row
        pl.BlockSpec((1, 1, Te), row3),           # enc key-valid row
        pl.BlockSpec((1, T, 1), row3),            # non-pad mask
        pl.BlockSpec((D, 3 * D), rep2), pl.BlockSpec((1, 3 * D), rep2),   # self qkv
        pl.BlockSpec((D, D), rep2),     pl.BlockSpec((1, D), rep2),       # self wo
        pl.BlockSpec((1, D), rep2),     pl.BlockSpec((1, D), rep2),       # ln1
        pl.BlockSpec((D, D), rep2),     pl.BlockSpec((1, D), rep2),       # cross q
        pl.BlockSpec((D, 2 * D), rep2), pl.BlockSpec((1, 2 * D), rep2),   # cross kv
        pl.BlockSpec((D, D), rep2),     pl.BlockSpec((1, D), rep2),       # cross wo
        pl.BlockSpec((1, D), rep2),     pl.BlockSpec((1, D), rep2),       # ln2
        pl.BlockSpec((D, F), rep2),     pl.BlockSpec((1, F), rep2),       # ff w1
        pl.BlockSpec((F, D), rep2),     pl.BlockSpec((1, D), rep2),       # ff w2
        pl.BlockSpec((1, D), rep2),     pl.BlockSpec((1, D), rep2),       # ln3
    ]
    args = [h, enc_x, self_kvalid, enc_kvalid, npm,
            p["s_wqkv"], p["s_bqkv"], p["s_wo"], p["s_bo"], p["ln1_g"], p["ln1_b"],
            p["c_wq"], p["c_bq"], p["c_wkv"], p["c_bkv"], p["c_wo"], p["c_bo"],
            p["ln2_g"], p["ln2_b"],
            p["ff_w1"], p["ff_b1"], p["ff_w2"], p["ff_b2"], p["ln3_g"], p["ln3_b"]]

    return pl.pallas_call(
        kern,
        out_shape=jax.ShapeDtypeStruct((B, T, D), jnp.float32),
        grid=(B,),
        in_specs=in_specs,
        out_specs=pl.BlockSpec((1, T, D), row3),
        compiler_params=pltpu.CompilerParams(dimension_semantics=("parallel",)),
    )(*args)


# ----------------------------------------------------------------------------
# Model glue (embedding gather / reshapes stay in plain JAX)
# ----------------------------------------------------------------------------

def decoder_forward(params, cfg, tokens, enc_x, enc_lens):
    B, T = tokens.shape
    D = cfg["emb_dim"]
    H = cfg["num_heads"]
    Tenc = enc_x.shape[1]

    # tiny per-batch mask rows (no (B*H, T, T) mask is ever materialised)
    not_eos = (tokens != cfg["eos_token"]).astype(jnp.float32)            # (B, T)
    npm = not_eos.reshape(B, T, 1)                                        # non-pad mask
    self_kvalid = not_eos.reshape(B, 1, T)                                # key != eos
    enc_kvalid = (jnp.arange(Tenc)[None, :] < enc_lens[:, None]
                  ).astype(jnp.float32).reshape(B, 1, Tenc)               # key_pos < enc_len

    # embedding + trainable positional encoding (dropout = identity at inference)
    h = params["emb"][tokens] + params["pe"][:T][None, :, :]              # (B, T, D)

    for lp in params["layers"]:
        h = decoder_layer(h, enc_x, self_kvalid, enc_kvalid, npm, lp, H)

    logits = matmul(h.reshape(B * T, D), params["cls_w"])                 # (B*T, V)
    return logits.reshape(B, T, cfg["vocab_size"])


# ----------------------------------------------------------------------------
# Deterministic parameter init (weights cast to bf16 ONCE here; QKV / KV packed)
# ----------------------------------------------------------------------------

def init_params(key, cfg):
    D, F, V, S = cfg["emb_dim"], cfg["ff_dim"], cfg["vocab_size"], cfg["seq_len"]

    def nrm(k, shape, scale=0.02):
        return jax.random.normal(k, shape, jnp.float32) * scale

    def w16(k, shape):
        return nrm(k, shape).astype(jnp.bfloat16)

    keys = iter(jax.random.split(key, 8 + 8 * cfg["num_layers"]))

    emb = nrm(next(keys), (V, D)).at[cfg["padding_idx"]].set(0.0)   # nn.Embedding padding_idx
    pe = nrm(next(keys), (S, D))
    cls_w = w16(next(keys), (D, V))

    layers = []
    for _ in range(cfg["num_layers"]):
        layers.append({
            # self-attention: packed QKV projection + output projection + LN1
            "s_wqkv": w16(next(keys), (D, 3 * D)),
            "s_bqkv": jnp.zeros((1, 3 * D), jnp.float32),
            "s_wo": w16(next(keys), (D, D)), "s_bo": jnp.zeros((1, D), jnp.float32),
            "ln1_g": jnp.ones((1, D), jnp.float32), "ln1_b": jnp.zeros((1, D), jnp.float32),
            # cross-attention: Q projection, packed enc KV projection, output proj + LN2
            "c_wq": w16(next(keys), (D, D)), "c_bq": jnp.zeros((1, D), jnp.float32),
            "c_wkv": w16(next(keys), (D, 2 * D)),
            "c_bkv": jnp.zeros((1, 2 * D), jnp.float32),
            "c_wo": w16(next(keys), (D, D)), "c_bo": jnp.zeros((1, D), jnp.float32),
            "ln2_g": jnp.ones((1, D), jnp.float32), "ln2_b": jnp.zeros((1, D), jnp.float32),
            # feed-forward + LN3
            "ff_w1": w16(next(keys), (D, F)), "ff_b1": jnp.zeros((1, F), jnp.float32),
            "ff_w2": w16(next(keys), (F, D)), "ff_b2": jnp.zeros((1, D), jnp.float32),
            "ln3_g": jnp.ones((1, D), jnp.float32), "ln3_b": jnp.zeros((1, D), jnp.float32),
        })
    return {"emb": emb, "pe": pe, "cls_w": cls_w, "layers": layers}


# ----------------------------------------------------------------------------

if __name__ == "__main__":
    cfg = dict(vocab_size=50, seq_len=8, emb_dim=32, num_layers=2, num_heads=4,
               ff_dim=64, eos_token=1, bos_token=2, padding_idx=0)

    root = jax.random.PRNGKey(0)
    k_par, k_tok, k_enc = jax.random.split(root, 3)

    params = init_params(k_par, cfg)

    B, T = 2, cfg["seq_len"]
    tokens = jax.random.randint(k_tok, (B, T), 0, cfg["vocab_size"], dtype=jnp.int32)
    enc_x = jax.random.normal(k_enc, (B, T, cfg["emb_dim"]), jnp.float32)
    enc_lens = jnp.array([T, 5], jnp.int32)

    fwd = jax.jit(lambda p, tok, ex, el: decoder_forward(p, cfg, tok, ex, el))
    logits = fwd(params, tokens, enc_x, enc_lens)
    jax.block_until_ready(logits)

    assert logits.shape == (B, T, cfg["vocab_size"])
    assert bool(jnp.all(jnp.isfinite(logits)))
    print("KERNEL_OK")
</pallas_src>

<mosaic_0001>
module attributes {stable_mosaic.version = 11 : i64} {
  func.func @_matmul_kernel(%arg0: i32, %arg1: i32, %arg2: i32, %arg3: memref<8x32xf32, #tpu.memory_space<vmem>>, %arg4: memref<32x50xbf16, #tpu.memory_space<vmem>>, %arg5: memref<8x50xf32, #tpu.memory_space<vmem>>, %arg6: memref<8x50xf32, #tpu.memory_space<vmem>>) attributes {dimension_semantics = [#tpu.dimension_semantics<parallel>, #tpu.dimension_semantics<parallel>, #tpu.dimension_semantics<arbitrary>], iteration_bounds = array<i64: 2, 1, 1>, scalar_prefetch = 0 : i64, scratch_operands = 1 : i64, tpu.core_type = #tpu.core_type<tc>, window_params = [{transform_indices = @transform_0, window_bounds = array<i64: 8, 32>}, {transform_indices = @transform_1, window_bounds = array<i64: 32, 50>}, {transform_indices = @transform_2, window_bounds = array<i64: 8, 50>}]} {
    %c0_i32 = arith.constant 0 : i32
    %0 = arith.cmpi eq, %arg2, %c0_i32 : i32
    %1 = arith.extui %0 : i1 to i32
    %c0_i32_0 = arith.constant 0 : i32
    %2 = arith.cmpi ne, %1, %c0_i32_0 : i32
    scf.if %2 {
      %cst_10 = arith.constant 0.000000e+00 : f32
      %13 = vector.broadcast %cst_10 : f32 to vector<8x50xf32>
      %c0_11 = arith.constant 0 : index
      %c0_12 = arith.constant 0 : index
      %14 = vector.load %arg6[%c0_11, %c0_12] : memref<8x50xf32, #tpu.memory_space<vmem>>, vector<8x50xf32>
      tpu.vector_store %arg6[%c0_11, %c0_12], %13 {strides = array<i32>} : memref<8x50xf32, #tpu.memory_space<vmem>>, vector<8x50xf32>,
    } else {
    }
    %c0 = arith.constant 0 : index
    %c0_1 = arith.constant 0 : index
    %3 = vector.load %arg6[%c0, %c0_1] : memref<8x50xf32, #tpu.memory_space<vmem>>, vector<8x50xf32>
    %c0_2 = arith.constant 0 : index
    %c0_3 = arith.constant 0 : index
    %4 = vector.load %arg3[%c0_2, %c0_3] : memref<8x32xf32, #tpu.memory_space<vmem>>, vector<8x32xf32>
    %5 = arith.truncf %4 : vector<8x32xf32> to vector<8x32xbf16>
    %c0_4 = arith.constant 0 : index
    %c0_5 = arith.constant 0 : index
    %6 = vector.load %arg4[%c0_4, %c0_5] : memref<32x50xbf16, #tpu.memory_space<vmem>>, vector<32x50xbf16>
    %cst = arith.constant dense<0.000000e+00> : vector<8x50xf32>
    %7 = tpu.matmul %5, %6, %cst {dimension_numbers = #tpu.dot_dimension_numbers<[1], [0], [0], [1], [0, 0, 1, 1], [], []>} : vector<8x32xbf16>, vector<32x50xbf16>, vector<8x50xf32> -> vector<8x50xf32>
    %8 = arith.addf %3, %7 : vector<8x50xf32>
    %c0_6 = arith.constant 0 : index
    %c0_7 = arith.constant 0 : index
    %9 = vector.load %arg6[%c0_6, %c0_7] : memref<8x50xf32, #tpu.memory_space<vmem>>, vector<8x50xf32>
    tpu.vector_store %arg6[%c0_6, %c0_7], %8 {strides = array<i32>} : memref<8x50xf32, #tpu.memory_space<vmem>>, vector<8x50xf32>,
    %c0_i32_8 = arith.constant 0 : i32
    %10 = arith.cmpi eq, %arg2, %c0_i32_8 : i32
    %11 = arith.extui %10 : i1 to i32
    %c0_i32_9 = arith.constant 0 : i32
    %12 = arith.cmpi ne, %11, %c0_i32_9 : i32
    scf.if %12 {
      %c0_10 = arith.constant 0 : index
      %c0_11 = arith.constant 0 : index
      %13 = vector.load %arg6[%c0_10, %c0_11] : memref<8x50xf32, #tpu.memory_space<vmem>>, vector<8x50xf32>
      %c0_12 = arith.constant 0 : index
      %c0_13 = arith.constant 0 : index
      %14 = vector.load %arg5[%c0_12, %c0_13] : memref<8x50xf32, #tpu.memory_space<vmem>>, vector<8x50xf32>
      tpu.vector_store %arg5[%c0_12, %c0_13], %13 {strides = array<i32>} : memref<8x50xf32, #tpu.memory_space<vmem>>, vector<8x50xf32>,
    } else {
    }
    return
  }
  func.func @transform_0(%arg0: i32, %arg1: i32, %arg2: i32) -> (i32, i32) {
    %c0_i32 = arith.constant 0 : i32
    return %arg0, %arg2 : i32, i32
  }
  func.func @transform_1(%arg0: i32, %arg1: i32, %arg2: i32) -> (i32, i32) {
    %c0_i32 = arith.constant 0 : i32
    return %arg2, %arg1 : i32, i32
  }
  func.func @transform_2(%arg0: i32, %arg1: i32, %arg2: i32) -> (i32, i32) {
    %c0_i32 = arith.constant 0 : i32
    return %arg0, %arg1 : i32, i32
  }
}

module attributes {stable_mosaic.version = 11 : i64} {
  func.func @_decoder_layer_kernel(%arg0: i32, %arg1: memref<1x8x32xf32, #tpu.memory_space<vmem>>, %arg2: memref<1x8x32xf32, #tpu.memory_space<vmem>>, %arg3: memref<1x1x8xf32, #tpu.memory_space<vmem>>, %arg4: memref<1x1x8xf32, #tpu.memory_space<vmem>>, %arg5: memref<1x8x1xf32, #tpu.memory_space<vmem>>, %arg6: memref<32x96xbf16, #tpu.memory_space<vmem>>, %arg7: memref<1x96xf32, #tpu.memory_space<vmem>>, %arg8: memref<32x32xbf16, #tpu.memory_space<vmem>>, %arg9: memref<1x32xf32, #tpu.memory_space<vmem>>, %arg10: memref<1x32xf32, #tpu.memory_space<vmem>>, %arg11: memref<1x32xf32, #tpu.memory_space<vmem>>, %arg12: memref<32x32xbf16, #tpu.memory_space<vmem>>, %arg13: memref<1x32xf32, #tpu.memory_space<vmem>>, %arg14: memref<32x64xbf16, #tpu.memory_space<vmem>>, %arg15: memref<1x64xf32, #tpu.memory_space<vmem>>, %arg16: memref<32x32xbf16, #tpu.memory_space<vmem>>, %arg17: memref<1x32xf32, #tpu.memory_space<vmem>>, %arg18: memref<1x32xf32, #tpu.memory_space<vmem>>, %arg19: memref<1x32xf32, #tpu.memory_space<vmem>>, %arg20: memref<32x64xbf16, #tpu.memory_space<vmem>>, %arg21: memref<1x64xf32, #tpu.memory_space<vmem>>, %arg22: memref<64x32xbf16, #tpu.memory_space<vmem>>, %arg23: memref<1x32xf32, #tpu.memory_space<vmem>>, %arg24: memref<1x32xf32, #tpu.memory_space<vmem>>, %arg25: memref<1x32xf32, #tpu.memory_space<vmem>>, %arg26: memref<1x8x32xf32, #tpu.memory_space<vmem>>) attributes {dimension_semantics = [#tpu.dimension_semantics<parallel>], iteration_bounds = array<i64: 2>, scalar_prefetch = 0 : i64, scratch_operands = 0 : i64, tpu.core_type = #tpu.core_type<tc>, window_params = [{transform_indices = @transform_0, window_bounds = array<i64: 1, 8, 32>}, {transform_indices = @transform_1, window_bounds = array<i64: 1, 8, 32>}, {transform_indices = @transform_2, window_bounds = array<i64: 1, 1, 8>}, {transform_indices = @transform_3, window_bounds = array<i64: 1, 1, 8>}, {transform_indices = @transform_4, window_bounds = array<i64: 1, 8, 1>}, {pipeline_mode = #tpu.pipeline_mode<synchronous>, transform_indices = @transform_5, window_bounds = array<i64: 32, 96>}, {pipeline_mode = #tpu.pipeline_mode<synchronous>, transform_indices = @transform_6, window_bounds = array<i64: 1, 96>}, {pipeline_mode = #tpu.pipeline_mode<synchronous>, transform_indices = @transform_7, window_bounds = array<i64: 32, 32>}, {pipeline_mode = #tpu.pipeline_mode<synchronous>, transform_indices = @transform_8, window_bounds = array<i64: 1, 32>}, {pipeline_mode = #tpu.pipeline_mode<synchronous>, transform_indices = @transform_9, window_bounds = array<i64: 1, 32>}, {pipeline_mode = #tpu.pipeline_mode<synchronous>, transform_indices = @transform_10, window_bounds = array<i64: 1, 32>}, {pipeline_mode = #tpu.pipeline_mode<synchronous>, transform_indices = @transform_11, window_bounds = array<i64: 32, 32>}, {pipeline_mode = #tpu.pipeline_mode<synchronous>, transform_indices = @transform_12, window_bounds = array<i64: 1, 32>}, {pipeline_mode = #tpu.pipeline_mode<synchronous>, transform_indices = @transform_13, window_bounds = array<i64: 32, 64>}, {pipeline_mode = #tpu.pipeline_mode<synchronous>, transform_indices = @transform_14, window_bounds = array<i64: 1, 64>}, {pipeline_mode = #tpu.pipeline_mode<synchronous>, transform_indices = @transform_15, window_bounds = array<i64: 32, 32>}, {pipeline_mode = #tpu.pipeline_mode<synchronous>, transform_indices = @transform_16, window_bounds = array<i64: 1, 32>}, {pipeline_mode = #tpu.pipeline_mode<synchronous>, transform_indices = @transform_17, window_bounds = array<i64: 1, 32>}, {pipeline_mode = #tpu.pipeline_mode<synchronous>, transform_indices = @transform_18, window_bounds = array<i64: 1, 32>}, {pipeline_mode = #tpu.pipeline_mode<synchronous>, transform_indices = @transform_19, window_bounds = array<i64: 32, 64>}, {pipeline_mode = #tpu.pipeline_mode<synchronous>, transform_indices = @transform_20, window_bounds = array<i64: 1, 64>}, {pipeline_mode = #tpu.pipeline_mode<synchronous>, transform_indices = @transform_21, window_bounds = array<i64: 64, 32>}, {pipeline_mode = #tpu.pipeline_mode<synchronous>, transform_indices = @transform_22, window_bounds = array<i64: 1, 32>}, {pipeline_mode = #tpu.pipeline_mode<synchronous>, transform_indices = @transform_23, window_bounds = array<i64: 1, 32>}, {pipeline_mode = #tpu.pipeline_mode<synchronous>, transform_indices = @transform_24, window_bounds = array<i64: 1, 32>}, {transform_indices = @transform_25, window_bounds = array<i64: 1, 8, 32>}]} {
    %c0 = arith.constant 0 : index
    %c0_0 = arith.constant 0 : index
    %c0_1 = arith.constant 0 : index
    %0 = vector.load %arg5[%c0, %c0_0, %c0_1] : memref<1x8x1xf32, #tpu.memory_space<vmem>>, vector<1x8x1xf32>
    %1 = vector.shape_cast %0 : vector<1x8x1xf32> to vector<8x1xf32>
    %c0_2 = arith.constant 0 : index
    %c0_3 = arith.constant 0 : index
    %c0_4 = arith.constant 0 : index
    %2 = vector.load %arg1[%c0_2, %c0_3, %c0_4] : memref<1x8x32xf32, #tpu.memory_space<vmem>>, vector<1x8x32xf32>
    %3 = vector.shape_cast %2 : vector<1x8x32xf32> to vector<8x32xf32>
    %4 = arith.truncf %3 : vector<8x32xf32> to vector<8x32xbf16>
    %c0_5 = arith.constant 0 : index
    %c0_6 = arith.constant 0 : index
    %5 = vector.load %arg6[%c0_5, %c0_6] : memref<32x96xbf16, #tpu.memory_space<vmem>>, vector<32x96xbf16>
    %cst = arith.constant dense<0.000000e+00> : vector<8x96xf32>
    %6 = tpu.matmul %4, %5, %cst {dimension_numbers = #tpu.dot_dimension_numbers<[1], [0], [0], [1], [0, 0, 1, 1], [], []>} : vector<8x32xbf16>, vector<32x96xbf16>, vector<8x96xf32> -> vector<8x96xf32>
    %c0_7 = arith.constant 0 : index
    %c0_8 = arith.constant 0 : index
    %7 = vector.load %arg7[%c0_7, %c0_8] : memref<1x96xf32, #tpu.memory_space<vmem>>, vector<1x96xf32>
    %8 = vector.broadcast %7 : vector<1x96xf32> to vector<8x96xf32>
    %9 = arith.addf %6, %8 : vector<8x96xf32>
    %10 = vector.extract_strided_slice %9 {offsets = [0, 0], sizes = [8, 32], strides = [1, 1]} : vector<8x96xf32> to vector<8x32xf32>
    %11 = vector.extract_strided_slice %9 {offsets = [0, 32], sizes = [8, 32], strides = [1, 1]} : vector<8x96xf32> to vector<8x32xf32>
    %12 = vector.extract_strided_slice %9 {offsets = [0, 64], sizes = [8, 32], strides = [1, 1]} : vector<8x96xf32> to vector<8x32xf32>
    %c0_9 = arith.constant 0 : index
    %c0_10 = arith.constant 0 : index
    %c0_11 = arith.constant 0 : index
    %13 = vector.load %arg3[%c0_9, %c0_10, %c0_11] : memref<1x1x8xf32, #tpu.memory_space<vmem>>, vector<1x1x8xf32>
    %14 = vector.shape_cast %13 : vector<1x1x8xf32> to vector<1x8xf32>
    %cst_12 = arith.constant 0.000000e+00 : f32
    %15 = vector.broadcast %cst_12 : f32 to vector<1x8xf32>
    %16 = arith.cmpf ogt, %14, %15 : vector<1x8xf32>
    %17 = vector.shape_cast %16 : vector<1x8xi1> to vector<1x8xi1>
    %18 = vector.broadcast %17 : vector<1x8xi1> to vector<8x8xi1>
    %19 = tpu.iota {dimensions = array<i32: 0>} : vector<8x8xi32>
    %20 = tpu.iota {dimensions = array<i32: 1>} : vector<8x8xi32>
    %21 = arith.cmpi sle, %20, %19 : vector<8x8xi32>
    %22 = arith.andi %18, %21 : vector<8x8xi1>
    %23 = vector.extract_strided_slice %10 {offsets = [0, 0], sizes = [8, 8], strides = [1, 1]} : vector<8x32xf32> to vector<8x8xf32>
    %24 = arith.truncf %23 : vector<8x8xf32> to vector<8x8xbf16>
    %25 = vector.extract_strided_slice %11 {offsets = [0, 0], sizes = [8, 8], strides = [1, 1]} : vector<8x32xf32> to vector<8x8xf32>
    %26 = arith.truncf %25 : vector<8x8xf32> to vector<8x8xbf16>
    %27 = vector.extract_strided_slice %12 {offsets = [0, 0], sizes = [8, 8], strides = [1, 1]} : vector<8x32xf32> to vector<8x8xf32>
    %28 = arith.truncf %27 : vector<8x8xf32> to vector<8x8xbf16>
    %cst_13 = arith.constant dense<0.000000e+00> : vector<8x8xf32>
    %29 = tpu.matmul %24, %26, %cst_13 {dimension_numbers = #tpu.dot_dimension_numbers<[1], [1], [0], [0], [0, 0, 1, 0], [], []>} : vector<8x8xbf16>, vector<8x8xbf16>, vector<8x8xf32> -> vector<8x8xf32>
    %cst_14 = arith.constant 0.353553385 : f32
    %30 = vector.broadcast %cst_14 : f32 to vector<8x8xf32>
    %31 = arith.mulf %29, %30 : vector<8x8xf32>
    %cst_15 = arith.constant -1.000000e+09 : f32
    %32 = vector.broadcast %cst_15 : f32 to vector<8x8xf32>
    %33 = arith.select %22, %31, %32 : vector<8x8xi1>, vector<8x8xf32>
    %cst_16 = arith.constant dense<0xFF800000> : vector<8xf32>
    %34 = vector.multi_reduction <maximumf>, %33, %cst_16 [1] : vector<8x8xf32> to vector<8xf32>
    %35 = vector.shape_cast %34 : vector<8xf32> to vector<8x1xf32>
    %36 = vector.broadcast %35 : vector<8x1xf32> to vector<8x8xf32>
    %37 = arith.subf %33, %36 : vector<8x8xf32>
    %38 = math.exp %37 : vector<8x8xf32>
    %cst_17 = arith.constant dense<0.000000e+00> : vector<8xf32>
    %39 = vector.multi_reduction <add>, %38, %cst_17 [1] : vector<8x8xf32> to vector<8xf32>
    %40 = vector.shape_cast %39 : vector<8xf32> to vector<8x1xf32>
    %41 = tpu.reciprocal %40 {approx = true} : vector<8x1xf32> -> vector<8x1xf32>
    %42 = vector.broadcast %41 : vector<8x1xf32> to vector<8x8xf32>
    %43 = arith.mulf %38, %42 : vector<8x8xf32>
    %44 = arith.truncf %43 : vector<8x8xf32> to vector<8x8xbf16>
    %cst_18 = arith.constant dense<0.000000e+00> : vector<8x8xf32>
    %45 = tpu.matmul %44, %28, %cst_18 {dimension_numbers = #tpu.dot_dimension_numbers<[1], [0], [0], [1], [0, 0, 1, 1], [], []>} : vector<8x8xbf16>, vector<8x8xbf16>, vector<8x8xf32> -> vector<8x8xf32>
    %46 = vector.extract_strided_slice %10 {offsets = [0, 8], sizes = [8, 8], strides = [1, 1]} : vector<8x32xf32> to vector<8x8xf32>
    %47 = arith.truncf %46 : vector<8x8xf32> to vector<8x8xbf16>
    %48 = vector.extract_strided_slice %11 {offsets = [0, 8], sizes = [8, 8], strides = [1, 1]} : vector<8x32xf32> to vector<8x8xf32>
    %49 = arith.truncf %48 : vector<8x8xf32> to vector<8x8xbf16>
    %50 = vector.extract_strided_slice %12 {offsets = [0, 8], sizes = [8, 8], strides = [1, 1]} : vector<8x32xf32> to vector<8x8xf32>
    %51 = arith.truncf %50 : vector<8x8xf32> to vector<8x8xbf16>
    %cst_19 = arith.constant dense<0.000000e+00> : vector<8x8xf32>
    %52 = tpu.matmul %47, %49, %cst_19 {dimension_numbers = #tpu.dot_dimension_numbers<[1], [1], [0], [0], [0, 0, 1, 0], [], []>} : vector<8x8xbf16>, vector<8x8xbf16>, vector<8x8xf32> -> vector<8x8xf32>
    %cst_20 = arith.constant 0.353553385 : f32
    %53 = vector.broadcast %cst_20 : f32 to vector<8x8xf32>
    %54 = arith.mulf %52, %53 : vector<8x8xf32>
    %cst_21 = arith.constant -1.000000e+09 : f32
    %55 = vector.broadcast %cst_21 : f32 to vector<8x8xf32>
    %56 = arith.select %22, %54, %55 : vector<8x8xi1>, vector<8x8xf32>
    %cst_22 = arith.constant dense<0xFF800000> : vector<8xf32>
    %57 = vector.multi_reduction <maximumf>, %56, %cst_22 [1] : vector<8x8xf32> to vector<8xf32>
    %58 = vector.shape_cast %57 : vector<8xf32> to vector<8x1xf32>
    %59 = vector.broadcast %58 : vector<8x1xf32> to vector<8x8xf32>
    %60 = arith.subf %56, %59 : vector<8x8xf32>
    %61 = math.exp %60 : vector<8x8xf32>
    %cst_23 = arith.constant dense<0.000000e+00> : vector<8xf32>
    %62 = vector.multi_reduction <add>, %61, %cst_23 [1] : vector<8x8xf32> to vector<8xf32>
    %63 = vector.shape_cast %62 : vector<8xf32> to vector<8x1xf32>
    %64 = tpu.reciprocal %63 {approx = true} : vector<8x1xf32> -> vector<8x1xf32>
    %65 = vector.broadcast %64 : vector<8x1xf32> to vector<8x8xf32>
    %66 = arith.mulf %61, %65 : vector<8x8xf32>
    %67 = arith.truncf %66 : vector<8x8xf32> to vector<8x8xbf16>
    %cst_24 = arith.constant dense<0.000000e+00> : vector<8x8xf32>
    %68 = tpu.matmul %67, %51, %cst_24 {dimension_numbers = #tpu.dot_dimension_numbers<[1], [0], [0], [1], [0, 0, 1, 1], [], []>} : vector<8x8xbf16>, vector<8x8xbf16>, vector<8x8xf32> -> vector<8x8xf32>
    %69 = vector.extract_strided_slice %10 {offsets = [0, 16], sizes = [8, 8], strides = [1, 1]} : vector<8x32xf32> to vector<8x8xf32>
    %70 = arith.truncf %69 : vector<8x8xf32> to vector<8x8xbf16>
    %71 = vector.extract_strided_slice %11 {offsets = [0, 16], sizes = [8, 8], strides = [1, 1]} : vector<8x32xf32> to vector<8x8xf32>
    %72 = arith.truncf %71 : vector<8x8xf32> to vector<8x8xbf16>
    %73 = vector.extract_strided_slice %12 {offsets = [0, 16], sizes = [8, 8], strides = [1, 1]} : vector<8x32xf32> to vector<8x8xf32>
    %74 = arith.truncf %73 : vector<8x8xf32> to vector<8x8xbf16>
    %cst_25 = arith.constant dense<0.000000e+00> : vector<8x8xf32>
    %75 = tpu.matmul %70, %72, %cst_25 {dimension_numbers = #tpu.dot_dimension_numbers<[1], [1], [0], [0], [0, 0, 1, 0], [], []>} : vector<8x8xbf16>, vector<8x8xbf16>, vector<8x8xf32> -> vector<8x8xf32>
    %cst_26 = arith.constant 0.353553385 : f32
    %76 = vector.broadcast %cst_26 : f32 to vector<8x8xf32>
    %77 = arith.mulf %75, %76 : vector<8x8xf32>
    %cst_27 = arith.constant -1.000000e+09 : f32
    %78 = vector.broadcast %cst_27 : f32 to vector<8x8xf32>
    %79 = arith.select %22, %77, %78 : vector<8x8xi1>, vector<8x8xf32>
    %cst_28 = arith.constant dense<0xFF800000> : vector<8xf32>
    %80 = vector.multi_reduction <maximumf>, %79, %cst_28 [1] : vector<8x8xf32> to vector<8xf32>
    %81 = vector.shape_cast %80 : vector<8xf32> to vector<8x1xf32>
    %82 = vector.broadcast %81 : vector<8x1xf32> to vector<8x8xf32>
    %83 = arith.subf %79, %82 : vector<8x8xf32>
    %84 = math.exp %83 : vector<8x8xf32>
    %cst_29 = arith.constant dense<0.000000e+00> : vector<8xf32>
    %85 = vector.multi_reduction <add>, %84, %cst_29 [1] : vector<8x8xf32> to vector<8xf32>
    %86 = vector.shape_cast %85 : vector<8xf32> to vector<8x1xf32>
    %87 = tpu.reciprocal %86 {approx = true} : vector<8x1xf32> -> vector<8x1xf32>
    %88 = vector.broadcast %87 : vector<8x1xf32> to vector<8x8xf32>
    %89 = arith.mulf %84, %88 : vector<8x8xf32>
    %90 = arith.truncf %89 : vector<8x8xf32> to vector<8x8xbf16>
    %cst_30 = arith.constant dense<0.000000e+00> : vector<8x8xf32>
    %91 = tpu.matmul %90, %74, %cst_30 {dimension_numbers = #tpu.dot_dimension_numbers<[1], [0], [0], [1], [0, 0, 1, 1], [], []>} : vector<8x8xbf16>, vector<8x8xbf16>, vector<8x8xf32> -> vector<8x8xf32>
    %92 = vector.extract_strided_slice %10 {offsets = [0, 24], sizes = [8, 8], strides = [1, 1]} : vector<8x32xf32> to vector<8x8xf32>
    %93 = arith.truncf %92 : vector<8x8xf32> to vector<8x8xbf16>
    %94 = vector.extract_strided_slice %11 {offsets = [0, 24], sizes = [8, 8], strides = [1, 1]} : vector<8x32xf32> to vector<8x8xf32>
    %95 = arith.truncf %94 : vector<8x8xf32> to vector<8x8xbf16>
    %96 = vector.extract_strided_slice %12 {offsets = [0, 24], sizes = [8, 8], strides = [1, 1]} : vector<8x32xf32> to vector<8x8xf32>
    %97 = arith.truncf %96 : vector<8x8xf32> to vector<8x8xbf16>
    %cst_31 = arith.constant dense<0.000000e+00> : vector<8x8xf32>
    %98 = tpu.matmul %93, %95, %cst_31 {dimension_numbers = #tpu.dot_dimension_numbers<[1], [1], [0], [0], [0, 0, 1, 0], [], []>} : vector<8x8xbf16>, vector<8x8xbf16>, vector<8x8xf32> -> vector<8x8xf32>
    %cst_32 = arith.constant 0.353553385 : f32
    %99 = vector.broadcast %cst_32 : f32 to vector<8x8xf32>
    %100 = arith.mulf %98, %99 : vector<8x8xf32>
    %cst_33 = arith.constant -1.000000e+09 : f32
    %101 = vector.broadcast %cst_33 : f32 to vector<8x8xf32>
    %102 = arith.select %22, %100, %101 : vector<8x8xi1>, vector<8x8xf32>
    %cst_34 = arith.constant dense<0xFF800000> : vector<8xf32>
    %103 = vector.multi_reduction <maximumf>, %102, %cst_34 [1] : vector<8x8xf32> to vector<8xf32>
    %104 = vector.shape_cast %103 : vector<8xf32> to vector<8x1xf32>
    %105 = vector.broadcast %104 : vector<8x1xf32> to vector<8x8xf32>
    %106 = arith.subf %102, %105 : vector<8x8xf32>
    %107 = math.exp %106 : vector<8x8xf32>
    %cst_35 = arith.constant dense<0.000000e+00> : vector<8xf32>
    %108 = vector.multi_reduction <add>, %107, %cst_35 [1] : vector<8x8xf32> to vector<8xf32>
    %109 = vector.shape_cast %108 : vector<8xf32> to vector<8x1xf32>
    %110 = tpu.reciprocal %109 {approx = true} : vector<8x1xf32> -> vector<8x1xf32>
    %111 = vector.broadcast %110 : vector<8x1xf32> to vector<8x8xf32>
    %112 = arith.mulf %107, %111 : vector<8x8xf32>
    %113 = arith.truncf %112 : vector<8x8xf32> to vector<8x8xbf16>
    %cst_36 = arith.constant dense<0.000000e+00> : vector<8x8xf32>
    %114 = tpu.matmul %113, %97, %cst_36 {dimension_numbers = #tpu.dot_dimension_numbers<[1], [0], [0], [1], [0, 0, 1, 1], [], []>} : vector<8x8xbf16>, vector<8x8xbf16>, vector<8x8xf32> -> vector<8x8xf32>
    %115 = tpu.concatenate %45, %68, %91, %114 in 1 : vector<8x8xf32>, vector<8x8xf32>, vector<8x8xf32>, vector<8x8xf32> -> vector<8x32xf32>
    %116 = arith.truncf %115 : vector<8x32xf32> to vector<8x32xbf16>
    %c0_37 = arith.constant 0 : index
    %c0_38 = arith.constant 0 : index
    %117 = vector.load %arg8[%c0_37, %c0_38] : memref<32x32xbf16, #tpu.memory_space<vmem>>, vector<32x32xbf16>
    %cst_39 = arith.constant dense<0.000000e+00> : vector<8x32xf32>
    %118 = tpu.matmul %116, %117, %cst_39 {dimension_numbers = #tpu.dot_dimension_numbers<[1], [0], [0], [1], [0, 0, 1, 1], [], []>} : vector<8x32xbf16>, vector<32x32xbf16>, vector<8x32xf32> -> vector<8x32xf32>
    %119 = arith.addf %3, %118 : vector<8x32xf32>
    %c0_40 = arith.constant 0 : index
    %c0_41 = arith.constant 0 : index
    %120 = vector.load %arg9[%c0_40, %c0_41] : memref<1x32xf32, #tpu.memory_space<vmem>>, vector<1x32xf32>
    %121 = vector.broadcast %120 : vector<1x32xf32> to vector<8x32xf32>
    %122 = arith.addf %119, %121 : vector<8x32xf32>
    %c0_42 = arith.constant 0 : index
    %c0_43 = arith.constant 0 : index
    %123 = vector.load %arg10[%c0_42, %c0_43] : memref<1x32xf32, #tpu.memory_space<vmem>>, vector<1x32xf32>
    %c0_44 = arith.constant 0 : index
    %c0_45 = arith.constant 0 : index
    %124 = vector.load %arg11[%c0_44, %c0_45] : memref<1x32xf32, #tpu.memory_space<vmem>>, vector<1x32xf32>
    %cst_46 = arith.constant dense<0.000000e+00> : vector<8xf32>
    %125 = vector.multi_reduction <add>, %122, %cst_46 [1] : vector<8x32xf32> to vector<8xf32>
    %126 = vector.shape_cast %125 : vector<8xf32> to vector<8x1xf32>
    %cst_47 = arith.constant 3.200000e+01 : f32
    %127 = vector.broadcast %cst_47 : f32 to vector<8x1xf32>
    %128 = arith.divf %126, %127 : vector<8x1xf32>
    %129 = vector.broadcast %128 : vector<8x1xf32> to vector<8x32xf32>
    %130 = arith.subf %122, %129 : vector<8x32xf32>
    %131 = arith.mulf %130, %130 : vector<8x32xf32>
    %cst_48 = arith.constant dense<0.000000e+00> : vector<8xf32>
    %132 = vector.multi_reduction <add>, %131, %cst_48 [1] : vector<8x32xf32> to vector<8xf32>
    %133 = vector.shape_cast %132 : vector<8xf32> to vector<8x1xf32>
    %cst_49 = arith.constant 3.200000e+01 : f32
    %134 = vector.broadcast %cst_49 : f32 to vector<8x1xf32>
    %135 = arith.divf %133, %134 : vector<8x1xf32>
    %136 = vector.broadcast %128 : vector<8x1xf32> to vector<8x32xf32>
    %137 = arith.subf %122, %136 : vector<8x32xf32>
    %cst_50 = arith.constant 9.99999974E-6 : f32
    %138 = vector.broadcast %cst_50 : f32 to vector<8x1xf32>
    %139 = arith.addf %135, %138 : vector<8x1xf32>
    %140 = math.rsqrt %139 : vector<8x1xf32>
    %141 = vector.broadcast %140 : vector<8x1xf32> to vector<8x32xf32>
    %142 = arith.mulf %137, %141 : vector<8x32xf32>
    %143 = vector.broadcast %123 : vector<1x32xf32> to vector<8x32xf32>
    %144 = arith.mulf %142, %143 : vector<8x32xf32>
    %145 = vector.broadcast %124 : vector<1x32xf32> to vector<8x32xf32>
    %146 = arith.addf %144, %145 : vector<8x32xf32>
    %147 = vector.broadcast %1 : vector<8x1xf32> to vector<8x32xf32>
    %148 = arith.mulf %146, %147 : vector<8x32xf32>
    %149 = arith.truncf %148 : vector<8x32xf32> to vector<8x32xbf16>
    %c0_51 = arith.constant 0 : index
    %c0_52 = arith.constant 0 : index
    %150 = vector.load %arg12[%c0_51, %c0_52] : memref<32x32xbf16, #tpu.memory_space<vmem>>, vector<32x32xbf16>
    %cst_53 = arith.constant dense<0.000000e+00> : vector<8x32xf32>
    %151 = tpu.matmul %149, %150, %cst_53 {dimension_numbers = #tpu.dot_dimension_numbers<[1], [0], [0], [1], [0, 0, 1, 1], [], []>} : vector<8x32xbf16>, vector<32x32xbf16>, vector<8x32xf32> -> vector<8x32xf32>
    %c0_54 = arith.constant 0 : index
    %c0_55 = arith.constant 0 : index
    %152 = vector.load %arg13[%c0_54, %c0_55] : memref<1x32xf32, #tpu.memory_space<vmem>>, vector<1x32xf32>
    %153 = vector.broadcast %152 : vector<1x32xf32> to vector<8x32xf32>
    %154 = arith.addf %151, %153 : vector<8x32xf32>
    %c0_56 = arith.constant 0 : index
    %c0_57 = arith.constant 0 : index
    %c0_58 = arith.constant 0 : index
    %155 = vector.load %arg2[%c0_56, %c0_57, %c0_58] : memref<1x8x32xf32, #tpu.memory_space<vmem>>, vector<1x8x32xf32>
    %156 = vector.shape_cast %155 : vector<1x8x32xf32> to vector<8x32xf32>
    %157 = arith.truncf %156 : vector<8x32xf32> to vector<8x32xbf16>
    %c0_59 = arith.constant 0 : index
    %c0_60 = arith.constant 0 : index
    %158 = vector.load %arg14[%c0_59, %c0_60] : memref<32x64xbf16, #tpu.memory_space<vmem>>, vector<32x64xbf16>
    %cst_61 = arith.constant dense<0.000000e+00> : vector<8x64xf32>
    %159 = tpu.matmul %157, %158, %cst_61 {dimension_numbers = #tpu.dot_dimension_numbers<[1], [0], [0], [1], [0, 0, 1, 1], [], []>} : vector<8x32xbf16>, vector<32x64xbf16>, vector<8x64xf32> -> vector<8x64xf32>
    %c0_62 = arith.constant 0 : index
    %c0_63 = arith.constant 0 : index
    %160 = vector.load %arg15[%c0_62, %c0_63] : memref<1x64xf32, #tpu.memory_space<vmem>>, vector<1x64xf32>
    %161 = vector.broadcast %160 : vector<1x64xf32> to vector<8x64xf32>
    %162 = arith.addf %159, %161 : vector<8x64xf32>
    %163 = vector.extract_strided_slice %162 {offsets = [0, 0], sizes = [8, 32], strides = [1, 1]} : vector<8x64xf32> to vector<8x32xf32>
    %164 = vector.extract_strided_slice %162 {offsets = [0, 32], sizes = [8, 32], strides = [1, 1]} : vector<8x64xf32> to vector<8x32xf32>
    %c0_64 = arith.constant 0 : index
    %c0_65 = arith.constant 0 : index
    %c0_66 = arith.constant 0 : index
    %165 = vector.load %arg4[%c0_64, %c0_65, %c0_66] : memref<1x1x8xf32, #tpu.memory_space<vmem>>, vector<1x1x8xf32>
    %166 = vector.shape_cast %165 : vector<1x1x8xf32> to vector<1x8xf32>
    %cst_67 = arith.constant 0.000000e+00 : f32
    %167 = vector.broadcast %cst_67 : f32 to vector<1x8xf32>
    %168 = arith.cmpf ogt, %166, %167 : vector<1x8xf32>
    %169 = vector.shape_cast %168 : vector<1x8xi1> to vector<1x8xi1>
    %170 = vector.broadcast %169 : vector<1x8xi1> to vector<8x8xi1>
    %171 = vector.extract_strided_slice %154 {offsets = [0, 0], sizes = [8, 8], strides = [1, 1]} : vector<8x32xf32> to vector<8x8xf32>
    %172 = arith.truncf %171 : vector<8x8xf32> to vector<8x8xbf16>
    %173 = vector.extract_strided_slice %163 {offsets = [0, 0], sizes = [8, 8], strides = [1, 1]} : vector<8x32xf32> to vector<8x8xf32>
    %174 = arith.truncf %173 : vector<8x8xf32> to vector<8x8xbf16>
    %175 = vector.extract_strided_slice %164 {offsets = [0, 0], sizes = [8, 8], strides = [1, 1]} : vector<8x32xf32> to vector<8x8xf32>
    %176 = arith.truncf %175 : vector<8x8xf32> to vector<8x8xbf16>
    %cst_68 = arith.constant dense<0.000000e+00> : vector<8x8xf32>
    %177 = tpu.matmul %172, %174, %cst_68 {dimension_numbers = #tpu.dot_dimension_numbers<[1], [1], [0], [0], [0, 0, 1, 0], [], []>} : vector<8x8xbf16>, vector<8x8xbf16>, vector<8x8xf32> -> vector<8x8xf32>
    %cst_69 = arith.constant 0.353553385 : f32
    %178 = vector.broadcast %cst_69 : f32 to vector<8x8xf32>
    %179 = arith.mulf %177, %178 : vector<8x8xf32>
    %cst_70 = arith.constant -1.000000e+09 : f32
    %180 = vector.broadcast %cst_70 : f32 to vector<8x8xf32>
    %181 = arith.select %170, %179, %180 : vector<8x8xi1>, vector<8x8xf32>
    %cst_71 = arith.constant dense<0xFF800000> : vector<8xf32>
    %182 = vector.multi_reduction <maximumf>, %181, %cst_71 [1] : vector<8x8xf32> to vector<8xf32>
    %183 = vector.shape_cast %182 : vector<8xf32> to vector<8x1xf32>
    %184 = vector.broadcast %183 : vector<8x1xf32> to vector<8x8xf32>
    %185 = arith.subf %181, %184 : vector<8x8xf32>
    %186 = math.exp %185 : vector<8x8xf32>
    %cst_72 = arith.constant dense<0.000000e+00> : vector<8xf32>
    %187 = vector.multi_reduction <add>, %186, %cst_72 [1] : vector<8x8xf32> to vector<8xf32>
    %188 = vector.shape_cast %187 : vector<8xf32> to vector<8x1xf32>
    %189 = tpu.reciprocal %188 {approx = true} : vector<8x1xf32> -> vector<8x1xf32>
    %190 = vector.broadcast %189 : vector<8x1xf32> to vector<8x8xf32>
    %191 = arith.mulf %186, %190 : vector<8x8xf32>
    %192 = arith.truncf %191 : vector<8x8xf32> to vector<8x8xbf16>
    %cst_73 = arith.constant dense<0.000000e+00> : vector<8x8xf32>
    %193 = tpu.matmul %192, %176, %cst_73 {dimension_numbers = #tpu.dot_dimension_numbers<[1], [0], [0], [1], [0, 0, 1, 1], [], []>} : vector<8x8xbf16>, vector<8x8xbf16>, vector<8x8xf32> -> vector<8x8xf32>
    %194 = vector.extract_strided_slice %154 {offsets = [0, 8], sizes = [8, 8], strides = [1, 1]} : vector<8x32xf32> to vector<8x8xf32>
    %195 = arith.truncf %194 : vector<8x8xf32> to vector<8x8xbf16>
    %196 = vector.extract_strided_slice %163 {offsets = [0, 8], sizes = [8, 8], strides = [1, 1]} : vector<8x32xf32> to vector<8x8xf32>
    %197 = arith.truncf %196 : vector<8x8xf32> to vector<8x8xbf16>
    %198 = vector.extract_strided_slice %164 {offsets = [0, 8], sizes = [8, 8], strides = [1, 1]} : vector<8x32xf32> to vector<8x8xf32>
    %199 = arith.truncf %198 : vector<8x8xf32> to vector<8x8xbf16>
    %cst_74 = arith.constant dense<0.000000e+00> : vector<8x8xf32>
    %200 = tpu.matmul %195, %197, %cst_74 {dimension_numbers = #tpu.dot_dimension_numbers<[1], [1], [0], [0], [0, 0, 1, 0], [], []>} : vector<8x8xbf16>, vector<8x8xbf16>, vector<8x8xf32> -> vector<8x8xf32>
    %cst_75 = arith.constant 0.353553385 : f32
    %201 = vector.broadcast %cst_75 : f32 to vector<8x8xf32>
    %202 = arith.mulf %200, %201 : vector<8x8xf32>
    %cst_76 = arith.constant -1.000000e+09 : f32
    %203 = vector.broadcast %cst_76 : f32 to vector<8x8xf32>
    %204 = arith.select %170, %202, %203 : vector<8x8xi1>, vector<8x8xf32>
    %cst_77 = arith.constant dense<0xFF800000> : vector<8xf32>
    %205 = vector.multi_reduction <maximumf>, %204, %cst_77 [1] : vector<8x8xf32> to vector<8xf32>
    %206 = vector.shape_cast %205 : vector<8xf32> to vector<8x1xf32>
    %207 = vector.broadcast %206 : vector<8x1xf32> to vector<8x8xf32>
    %208 = arith.subf %204, %207 : vector<8x8xf32>
    %209 = math.exp %208 : vector<8x8xf32>
    %cst_78 = arith.constant dense<0.000000e+00> : vector<8xf32>
    %210 = vector.multi_reduction <add>, %209, %cst_78 [1] : vector<8x8xf32> to vector<8xf32>
    %211 = vector.shape_cast %210 : vector<8xf32> to vector<8x1xf32>
    %212 = tpu.reciprocal %211 {approx = true} : vector<8x1xf32> -> vector<8x1xf32>
    %213 = vector.broadcast %212 : vector<8x1xf32> to vector<8x8xf32>
    %214 = arith.mulf %209, %213 : vector<8x8xf32>
    %215 = arith.truncf %214 : vector<8x8xf32> to vector<8x8xbf16>
    %cst_79 = arith.constant dense<0.000000e+00> : vector<8x8xf32>
    %216 = tpu.matmul %215, %199, %cst_79 {dimension_numbers = #tpu.dot_dimension_numbers<[1], [0], [0], [1], [0, 0, 1, 1], [], []>} : vector<8x8xbf16>, vector<8x8xbf16>, vector<8x8xf32> -> vector<8x8xf32>
    %217 = vector.extract_strided_slice %154 {offsets = [0, 16], sizes = [8, 8], strides = [1, 1]} : vector<8x32xf32> to vector<8x8xf32>
    %218 = arith.truncf %217 : vector<8x8xf32> to vector<8x8xbf16>
    %219 = vector.extract_strided_slice %163 {offsets = [0, 16], sizes = [8, 8], strides = [1, 1]} : vector<8x32xf32> to vector<8x8xf32>
    %220 = arith.truncf %219 : vector<8x8xf32> to vector<8x8xbf16>
    %221 = vector.extract_strided_slice %164 {offsets = [0, 16], sizes = [8, 8], strides = [1, 1]} : vector<8x32xf32> to vector<8x8xf32>
    %222 = arith.truncf %221 : vector<8x8xf32> to vector<8x8xbf16>
    %cst_80 = arith.constant dense<0.000000e+00> : vector<8x8xf32>
    %223 = tpu.matmul %218, %220, %cst_80 {dimension_numbers = #tpu.dot_dimension_numbers<[1], [1], [0], [0], [0, 0, 1, 0], [], []>} : vector<8x8xbf16>, vector<8x8xbf16>, vector<8x8xf32> -> vector<8x8xf32>
    %cst_81 = arith.constant 0.353553385 : f32
    %224 = vector.broadcast %cst_81 : f32 to vector<8x8xf32>
    %225 = arith.mulf %223, %224 : vector<8x8xf32>
    %cst_82 = arith.constant -1.000000e+09 : f32
    %226 = vector.broadcast %cst_82 : f32 to vector<8x8xf32>
    %227 = arith.select %170, %225, %226 : vector<8x8xi1>, vector<8x8xf32>
    %cst_83 = arith.constant dense<0xFF800000> : vector<8xf32>
    %228 = vector.multi_reduction <maximumf>, %227, %cst_83 [1] : vector<8x8xf32> to vector<8xf32>
    %229 = vector.shape_cast %228 : vector<8xf32> to vector<8x1xf32>
    %230 = vector.broadcast %229 : vector<8x1xf32> to vector<8x8xf32>
    %231 = arith.subf %227, %230 : vector<8x8xf32>
    %232 = math.exp %231 : vector<8x8xf32>
    %cst_84 = arith.constant dense<0.000000e+00> : vector<8xf32>
    %233 = vector.multi_reduction <add>, %232, %cst_84 [1] : vector<8x8xf32> to vector<8xf32>
    %234 = vector.shape_cast %233 : vector<8xf32> to vector<8x1xf32>
    %235 = tpu.reciprocal %234 {approx = true} : vector<8x1xf32> -> vector<8x1xf32>
    %236 = vector.broadcast %235 : vector<8x1xf32> to vector<8x8xf32>
    %237 = arith.mulf %232, %236 : vector<8x8xf32>
    %238 = arith.truncf %237 : vector<8x8xf32> to vector<8x8xbf16>
    %cst_85 = arith.constant dense<0.000000e+00> : vector<8x8xf32>
    %239 = tpu.matmul %238, %222, %cst_85 {dimension_numbers = #tpu.dot_dimension_numbers<[1], [0], [0], [1], [0, 0, 1, 1], [], []>} : vector<8x8xbf16>, vector<8x8xbf16>, vector<8x8xf32> -> vector<8x8xf32>
    %240 = vector.extract_strided_slice %154 {offsets = [0, 24], sizes = [8, 8], strides = [1, 1]} : vector<8x32xf32> to vector<8x8xf32>
    %241 = arith.truncf %240 : vector<8x8xf32> to vector<8x8xbf16>
    %242 = vector.extract_strided_slice %163 {offsets = [0, 24], sizes = [8, 8], strides = [1, 1]} : vector<8x32xf32> to vector<8x8xf32>
    %243 = arith.truncf %242 : vector<8x8xf32> to vector<8x8xbf16>
    %244 = vector.extract_strided_slice %164 {offsets = [0, 24], sizes = [8, 8], strides = [1, 1]} : vector<8x32xf32> to vector<8x8xf32>
    %245 = arith.truncf %244 : vector<8x8xf32> to vector<8x8xbf16>
    %cst_86 = arith.constant dense<0.000000e+00> : vector<8x8xf32>
    %246 = tpu.matmul %241, %243, %cst_86 {dimension_numbers = #tpu.dot_dimension_numbers<[1], [1], [0], [0], [0, 0, 1, 0], [], []>} : vector<8x8xbf16>, vector<8x8xbf16>, vector<8x8xf32> -> vector<8x8xf32>
    %cst_87 = arith.constant 0.353553385 : f32
    %247 = vector.broadcast %cst_87 : f32 to vector<8x8xf32>
    %248 = arith.mulf %246, %247 : vector<8x8xf32>
    %cst_88 = arith.constant -1.000000e+09 : f32
    %249 = vector.broadcast %cst_88 : f32 to vector<8x8xf32>
    %250 = arith.select %170, %248, %249 : vector<8x8xi1>, vector<8x8xf32>
    %cst_89 = arith.constant dense<0xFF800000> : vector<8xf32>
    %251 = vector.multi_reduction <maximumf>, %250, %cst_89 [1] : vector<8x8xf32> to vector<8xf32>
    %252 = vector.shape_cast %251 : vector<8xf32> to vector<8x1xf32>
    %253 = vector.broadcast %252 : vector<8x1xf32> to vector<8x8xf32>
    %254 = arith.subf %250, %253 : vector<8x8xf32>
    %255 = math.exp %254 : vector<8x8xf32>
    %cst_90 = arith.constant dense<0.000000e+00> : vector<8xf32>
    %256 = vector.multi_reduction <add>, %255, %cst_90 [1] : vector<8x8xf32> to vector<8xf32>
    %257 = vector.shape_cast %256 : vector<8xf32> to vector<8x1xf32>
    %258 = tpu.reciprocal %257 {approx = true} : vector<8x1xf32> -> vector<8x1xf32>
    %259 = vector.broadcast %258 : vector<8x1xf32> to vector<8x8xf32>
    %260 = arith.mulf %255, %259 : vector<8x8xf32>
    %261 = arith.truncf %260 : vector<8x8xf32> to vector<8x8xbf16>
    %cst_91 = arith.constant dense<0.000000e+00> : vector<8x8xf32>
    %262 = tpu.matmul %261, %245, %cst_91 {dimension_numbers = #tpu.dot_dimension_numbers<[1], [0], [0], [1], [0, 0, 1, 1], [], []>} : vector<8x8xbf16>, vector<8x8xbf16>, vector<8x8xf32> -> vector<8x8xf32>
    %263 = tpu.concatenate %193, %216, %239, %262 in 1 : vector<8x8xf32>, vector<8x8xf32>, vector<8x8xf32>, vector<8x8xf32> -> vector<8x32xf32>
    %264 = arith.truncf %263 : vector<8x32xf32> to vector<8x32xbf16>
    %c0_92 = arith.constant 0 : index
    %c0_93 = arith.constant 0 : index
    %265 = vector.load %arg16[%c0_92, %c0_93] : memref<32x32xbf16, #tpu.memory_space<vmem>>, vector<32x32xbf16>
    %cst_94 = arith.constant dense<0.000000e+00> : vector<8x32xf32>
    %266 = tpu.matmul %264, %265, %cst_94 {dimension_numbers = #tpu.dot_dimension_numbers<[1], [0], [0], [1], [0, 0, 1, 1], [], []>} : vector<8x32xbf16>, vector<32x32xbf16>, vector<8x32xf32> -> vector<8x32xf32>
    %267 = arith.addf %148, %266 : vector<8x32xf32>
    %c0_95 = arith.constant 0 : index
    %c0_96 = arith.constant 0 : index
    %268 = vector.load %arg17[%c0_95, %c0_96] : memref<1x32xf32, #tpu.memory_space<vmem>>, vector<1x32xf32>
    %269 = vector.broadcast %268 : vector<1x32xf32> to vector<8x32xf32>
    %270 = arith.addf %267, %269 : vector<8x32xf32>
    %c0_97 = arith.constant 0 : index
    %c0_98 = arith.constant 0 : index
    %271 = vector.load %arg18[%c0_97, %c0_98] : memref<1x32xf32, #tpu.memory_space<vmem>>, vector<1x32xf32>
    %c0_99 = arith.constant 0 : index
    %c0_100 = arith.constant 0 : index
    %272 = vector.load %arg19[%c0_99, %c0_100] : memref<1x32xf32, #tpu.memory_space<vmem>>, vector<1x32xf32>
    %cst_101 = arith.constant dense<0.000000e+00> : vector<8xf32>
    %273 = vector.multi_reduction <add>, %270, %cst_101 [1] : vector<8x32xf32> to vector<8xf32>
    %274 = vector.shape_cast %273 : vector<8xf32> to vector<8x1xf32>
    %cst_102 = arith.constant 3.200000e+01 : f32
    %275 = vector.broadcast %cst_102 : f32 to vector<8x1xf32>
    %276 = arith.divf %274, %275 : vector<8x1xf32>
    %277 = vector.broadcast %276 : vector<8x1xf32> to vector<8x32xf32>
    %278 = arith.subf %270, %277 : vector<8x32xf32>
    %279 = arith.mulf %278, %278 : vector<8x32xf32>
    %cst_103 = arith.constant dense<0.000000e+00> : vector<8xf32>
    %280 = vector.multi_reduction <add>, %279, %cst_103 [1] : vector<8x32xf32> to vector<8xf32>
    %281 = vector.shape_cast %280 : vector<8xf32> to vector<8x1xf32>
    %cst_104 = arith.constant 3.200000e+01 : f32
    %282 = vector.broadcast %cst_104 : f32 to vector<8x1xf32>
    %283 = arith.divf %281, %282 : vector<8x1xf32>
    %284 = vector.broadcast %276 : vector<8x1xf32> to vector<8x32xf32>
    %285 = arith.subf %270, %284 : vector<8x32xf32>
    %cst_105 = arith.constant 9.99999974E-6 : f32
    %286 = vector.broadcast %cst_105 : f32 to vector<8x1xf32>
    %287 = arith.addf %283, %286 : vector<8x1xf32>
    %288 = math.rsqrt %287 : vector<8x1xf32>
    %289 = vector.broadcast %288 : vector<8x1xf32> to vector<8x32xf32>
    %290 = arith.mulf %285, %289 : vector<8x32xf32>
    %291 = vector.broadcast %271 : vector<1x32xf32> to vector<8x32xf32>
    %292 = arith.mulf %290, %291 : vector<8x32xf32>
    %293 = vector.broadcast %272 : vector<1x32xf32> to vector<8x32xf32>
    %294 = arith.addf %292, %293 : vector<8x32xf32>
    %295 = vector.broadcast %1 : vector<8x1xf32> to vector<8x32xf32>
    %296 = arith.mulf %294, %295 : vector<8x32xf32>
    %297 = arith.truncf %296 : vector<8x32xf32> to vector<8x32xbf16>
    %c0_106 = arith.constant 0 : index
    %c0_107 = arith.constant 0 : index
    %298 = vector.load %arg20[%c0_106, %c0_107] : memref<32x64xbf16, #tpu.memory_space<vmem>>, vector<32x64xbf16>
    %cst_108 = arith.constant dense<0.000000e+00> : vector<8x64xf32>
    %299 = tpu.matmul %297, %298, %cst_108 {dimension_numbers = #tpu.dot_dimension_numbers<[1], [0], [0], [1], [0, 0, 1, 1], [], []>} : vector<8x32xbf16>, vector<32x64xbf16>, vector<8x64xf32> -> vector<8x64xf32>
    %c0_109 = arith.constant 0 : index
    %c0_110 = arith.constant 0 : index
    %300 = vector.load %arg21[%c0_109, %c0_110] : memref<1x64xf32, #tpu.memory_space<vmem>>, vector<1x64xf32>
    %301 = vector.broadcast %300 : vector<1x64xf32> to vector<8x64xf32>
    %302 = arith.addf %299, %301 : vector<8x64xf32>
    %cst_111 = arith.constant 0.000000e+00 : f32
    %303 = vector.broadcast %cst_111 : f32 to vector<8x64xf32>
    %304 = arith.maximumf %302, %303 : vector<8x64xf32>
    %305 = arith.truncf %304 : vector<8x64xf32> to vector<8x64xbf16>
    %c0_112 = arith.constant 0 : index
    %c0_113 = arith.constant 0 : index
    %306 = vector.load %arg22[%c0_112, %c0_113] : memref<64x32xbf16, #tpu.memory_space<vmem>>, vector<64x32xbf16>
    %cst_114 = arith.constant dense<0.000000e+00> : vector<8x32xf32>
    %307 = tpu.matmul %305, %306, %cst_114 {dimension_numbers = #tpu.dot_dimension_numbers<[1], [0], [0], [1], [0, 0, 1, 1], [], []>} : vector<8x64xbf16>, vector<64x32xbf16>, vector<8x32xf32> -> vector<8x32xf32>
    %308 = arith.addf %296, %307 : vector<8x32xf32>
    %c0_115 = arith.constant 0 : index
    %c0_116 = arith.constant 0 : index
    %309 = vector.load %arg23[%c0_115, %c0_116] : memref<1x32xf32, #tpu.memory_space<vmem>>, vector<1x32xf32>
    %310 = vector.broadcast %309 : vector<1x32xf32> to vector<8x32xf32>
    %311 = arith.addf %308, %310 : vector<8x32xf32>
    %c0_117 = arith.constant 0 : index
    %c0_118 = arith.constant 0 : index
    %312 = vector.load %arg24[%c0_117, %c0_118] : memref<1x32xf32, #tpu.memory_space<vmem>>, vector<1x32xf32>
    %c0_119 = arith.constant 0 : index
    %c0_120 = arith.constant 0 : index
    %313 = vector.load %arg25[%c0_119, %c0_120] : memref<1x32xf32, #tpu.memory_space<vmem>>, vector<1x32xf32>
    %cst_121 = arith.constant dense<0.000000e+00> : vector<8xf32>
    %314 = vector.multi_reduction <add>, %311, %cst_121 [1] : vector<8x32xf32> to vector<8xf32>
    %315 = vector.shape_cast %314 : vector<8xf32> to vector<8x1xf32>
    %cst_122 = arith.constant 3.200000e+01 : f32
    %316 = vector.broadcast %cst_122 : f32 to vector<8x1xf32>
    %317 = arith.divf %315, %316 : vector<8x1xf32>
    %318 = vector.broadcast %317 : vector<8x1xf32> to vector<8x32xf32>
    %319 = arith.subf %311, %318 : vector<8x32xf32>
    %320 = arith.mulf %319, %319 : vector<8x32xf32>
    %cst_123 = arith.constant dense<0.000000e+00> : vector<8xf32>
    %321 = vector.multi_reduction <add>, %320, %cst_123 [1] : vector<8x32xf32> to vector<8xf32>
    %322 = vector.shape_cast %321 : vector<8xf32> to vector<8x1xf32>
    %cst_124 = arith.constant 3.200000e+01 : f32
    %323 = vector.broadcast %cst_124 : f32 to vector<8x1xf32>
    %324 = arith.divf %322, %323 : vector<8x1xf32>
    %325 = vector.broadcast %317 : vector<8x1xf32> to vector<8x32xf32>
    %326 = arith.subf %311, %325 : vector<8x32xf32>
    %cst_125 = arith.constant 9.99999974E-6 : f32
    %327 = vector.broadcast %cst_125 : f32 to vector<8x1xf32>
    %328 = arith.addf %324, %327 : vector<8x1xf32>
    %329 = math.rsqrt %328 : vector<8x1xf32>
    %330 = vector.broadcast %329 : vector<8x1xf32> to vector<8x32xf32>
    %331 = arith.mulf %326, %330 : vector<8x32xf32>
    %332 = vector.broadcast %312 : vector<1x32xf32> to vector<8x32xf32>
    %333 = arith.mulf %331, %332 : vector<8x32xf32>
    %334 = vector.broadcast %313 : vector<1x32xf32> to vector<8x32xf32>
    %335 = arith.addf %333, %334 : vector<8x32xf32>
    %336 = vector.broadcast %1 : vector<8x1xf32> to vector<8x32xf32>
    %337 = arith.mulf %335, %336 : vector<8x32xf32>
    %c0_126 = arith.constant 0 : index
    %c0_127 = arith.constant 0 : index
    %c0_128 = arith.constant 0 : index
    %338 = vector.load %arg26[%c0_126, %c0_127, %c0_128] : memref<1x8x32xf32, #tpu.memory_space<vmem>>, vector<1x8x32xf32>
    %339 = vector.shape_cast %338 : vector<1x8x32xf32> to vector<8x32xf32>
    %340 = vector.shape_cast %337 : vector<8x32xf32> to vector<1x8x32xf32>
    tpu.vector_store %arg26[%c0_126, %c0_127, %c0_128], %340 {strides = array<i32>} : memref<1x8x32xf32, #tpu.memory_space<vmem>>, vector<1x8x32xf32>,
    return
  }
  func.func @transform_0(%arg0: i32) -> (i32, i32, i32) {
    %c0_i32 = arith.constant 0 : i32
    %c0_i32_0 = arith.constant 0 : i32
    %c0_i32_1 = arith.constant 0 : i32
    return %arg0, %c0_i32, %c0_i32_0 : i32, i32, i32
  }
  func.func @transform_1(%arg0: i32) -> (i32, i32, i32) {
    %c0_i32 = arith.constant 0 : i32
    %c0_i32_0 = arith.constant 0 : i32
    %c0_i32_1 = arith.constant 0 : i32
    return %arg0, %c0_i32, %c0_i32_0 : i32, i32, i32
  }
  func.func @transform_2(%arg0: i32) -> (i32, i32, i32) {
    %c0_i32 = arith.constant 0 : i32
    %c0_i32_0 = arith.constant 0 : i32
    %c0_i32_1 = arith.constant 0 : i32
    return %arg0, %c0_i32, %c0_i32_0 : i32, i32, i32
  }
  func.func @transform_3(%arg0: i32) -> (i32, i32, i32) {
    %c0_i32 = arith.constant 0 : i32
    %c0_i32_0 = arith.constant 0 : i32
    %c0_i32_1 = arith.constant 0 : i32
    return %arg0, %c0_i32, %c0_i32_0 : i32, i32, i32
  }
  func.func @transform_4(%arg0: i32) -> (i32, i32, i32) {
    %c0_i32 = arith.constant 0 : i32
    %c0_i32_0 = arith.constant 0 : i32
    %c0_i32_1 = arith.constant 0 : i32
    return %arg0, %c0_i32, %c0_i32_0 : i32, i32, i32
  }
  func.func @transform_5(%arg0: i32) -> (i32, i32) {
    %c0_i32 = arith.constant 0 : i32
    %c0_i32_0 = arith.constant 0 : i32
    %c0_i32_1 = arith.constant 0 : i32
    return %c0_i32, %c0_i32_0 : i32, i32
  }
  func.func @transform_6(%arg0: i32) -> (i32, i32) {
    %c0_i32 = arith.constant 0 : i32
    %c0_i32_0 = arith.constant 0 : i32
    %c0_i32_1 = arith.constant 0 : i32
    return %c0_i32, %c0_i32_0 : i32, i32
  }
  func.func @transform_7(%arg0: i32) -> (i32, i32) {
    %c0_i32 = arith.constant 0 : i32
    %c0_i32_0 = arith.constant 0 : i32
    %c0_i32_1 = arith.constant 0 : i32
    return %c0_i32, %c0_i32_0 : i32, i32
  }
  func.func @transform_8(%arg0: i32) -> (i32, i32) {
    %c0_i32 = arith.constant 0 : i32
    %c0_i32_0 = arith.constant 0 : i32
    %c0_i32_1 = arith.constant 0 : i32
    return %c0_i32, %c0_i32_0 : i32, i32
  }
  func.func @transform_9(%arg0: i32) -> (i32, i32) {
    %c0_i32 = arith.constant 0 : i32
    %c0_i32_0 = arith.constant 0 : i32
    %c0_i32_1 = arith.constant 0 : i32
    return %c0_i32, %c0_i32_0 : i32, i32
  }
  func.func @transform_10(%arg0: i32) -> (i32, i32) {
    %c0_i32 = arith.constant 0 : i32
    %c0_i32_0 = arith.constant 0 : i32
    %c0_i32_1 = arith.constant 0 : i32
    return %c0_i32, %c0_i32_0 : i32, i32
  }
  func.func @transform_11(%arg0: i32) -> (i32, i32) {
    %c0_i32 = arith.constant 0 : i32
    %c0_i32_0 = arith.constant 0 : i32
    %c0_i32_1 = arith.constant 0 : i32
    return %c0_i32, %c0_i32_0 : i32, i32
  }
  func.func @transform_12(%arg0: i32) -> (i32, i32) {
    %c0_i32 = arith.constant 0 : i32
    %c0_i32_0 = arith.constant 0 : i32
    %c0_i32_1 = arith.constant 0 : i32
    return %c0_i32, %c0_i32_0 : i32, i32
  }
  func.func @transform_13(%arg0: i32) -> (i32, i32) {
    %c0_i32 = arith.constant 0 : i32
    %c0_i32_0 = arith.constant 0 : i32
    %c0_i32_1 = arith.constant 0 : i32
    return %c0_i32, %c0_i32_0 : i32, i32
  }
  func.func @transform_14(%arg0: i32) -> (i32, i32) {
    %c0_i32 = arith.constant 0 : i32
    %c0_i32_0 = arith.constant 0 : i32
    %c0_i32_1 = arith.constant 0 : i32
    return %c0_i32, %c0_i32_0 : i32, i32
  }
  func.func @transform_15(%arg0: i32) -> (i32, i32) {
    %c0_i32 = arith.constant 0 : i32
    %c0_i32_0 = arith.constant 0 : i32
    %c0_i32_1 = arith.constant 0 : i32
    return %c0_i32, %c0_i32_0 : i32, i32
  }
  func.func @transform_16(%arg0: i32) -> (i32, i32) {
    %c0_i32 = arith.constant 0 : i32
    %c0_i32_0 = arith.constant 0 : i32
    %c0_i32_1 = arith.constant 0 : i32
    return %c0_i32, %c0_i32_0 : i32, i32
  }
  func.func @transform_17(%arg0: i32) -> (i32, i32) {
    %c0_i32 = arith.constant 0 : i32
    %c0_i32_0 = arith.constant 0 : i32
    %c0_i32_1 = arith.constant 0 : i32
    return %c0_i32, %c0_i32_0 : i32, i32
  }
  func.func @transform_18(%arg0: i32) -> (i32, i32) {
    %c0_i32 = arith.constant 0 : i32
    %c0_i32_0 = arith.constant 0 : i32
    %c0_i32_1 = arith.constant 0 : i32
    return %c0_i32, %c0_i32_0 : i32, i32
  }
  func.func @transform_19(%arg0: i32) -> (i32, i32) {
    %c0_i32 = arith.constant 0 : i32
    %c0_i32_0 = arith.constant 0 : i32
    %c0_i32_1 = arith.constant 0 : i32
    return %c0_i32, %c0_i32_0 : i32, i32
  }
  func.func @transform_20(%arg0: i32) -> (i32, i32) {
    %c0_i32 = arith.constant 0 : i32
    %c0_i32_0 = arith.constant 0 : i32
    %c0_i32_1 = arith.constant 0 : i32
    return %c0_i32, %c0_i32_0 : i32, i32
  }
  func.func @transform_21(%arg0: i32) -> (i32, i32) {
    %c0_i32 = arith.constant 0 : i32
    %c0_i32_0 = arith.constant 0 : i32
    %c0_i32_1 = arith.constant 0 : i32
    return %c0_i32, %c0_i32_0 : i32, i32
  }
  func.func @transform_22(%arg0: i32) -> (i32, i32) {
    %c0_i32 = arith.constant 0 : i32
    %c0_i32_0 = arith.constant 0 : i32
    %c0_i32_1 = arith.constant 0 : i32
    return %c0_i32, %c0_i32_0 : i32, i32
  }
  func.func @transform_23(%arg0: i32) -> (i32, i32) {
    %c0_i32 = arith.constant 0 : i32
    %c0_i32_0 = arith.constant 0 : i32
    %c0_i32_1 = arith.constant 0 : i32
    return %c0_i32, %c0_i32_0 : i32, i32
  }
  func.func @transform_24(%arg0: i32) -> (i32, i32) {
    %c0_i32 = arith.constant 0 : i32
    %c0_i32_0 = arith.constant 0 : i32
    %c0_i32_1 = arith.constant 0 : i32
    return %c0_i32, %c0_i32_0 : i32, i32
  }
  func.func @transform_25(%arg0: i32) -> (i32, i32, i32) {
    %c0_i32 = arith.constant 0 : i32
    %c0_i32_0 = arith.constant 0 : i32
    %c0_i32_1 = arith.constant 0 : i32
    return %arg0, %c0_i32, %c0_i32_0 : i32, i32, i32
  }
}

module attributes {stable_mosaic.version = 11 : i64} {
  func.func @_decoder_layer_kernel(%arg0: i32, %arg1: memref<1x8x32xf32, #tpu.memory_space<vmem>>, %arg2: memref<1x8x32xf32, #tpu.memory_space<vmem>>, %arg3: memref<1x1x8xf32, #tpu.memory_space<vmem>>, %arg4: memref<1x1x8xf32, #tpu.memory_space<vmem>>, %arg5: memref<1x8x1xf32, #tpu.memory_space<vmem>>, %arg6: memref<32x96xbf16, #tpu.memory_space<vmem>>, %arg7: memref<1x96xf32, #tpu.memory_space<vmem>>, %arg8: memref<32x32xbf16, #tpu.memory_space<vmem>>, %arg9: memref<1x32xf32, #tpu.memory_space<vmem>>, %arg10: memref<1x32xf32, #tpu.memory_space<vmem>>, %arg11: memref<1x32xf32, #tpu.memory_space<vmem>>, %arg12: memref<32x32xbf16, #tpu.memory_space<vmem>>, %arg13: memref<1x32xf32, #tpu.memory_space<vmem>>, %arg14: memref<32x64xbf16, #tpu.memory_space<vmem>>, %arg15: memref<1x64xf32, #tpu.memory_space<vmem>>, %arg16: memref<32x32xbf16, #tpu.memory_space<vmem>>, %arg17: memref<1x32xf32, #tpu.memory_space<vmem>>, %arg18: memref<1x32xf32, #tpu.memory_space<vmem>>, %arg19: memref<1x32xf32, #tpu.memory_space<vmem>>, %arg20: memref<32x64xbf16, #tpu.memory_space<vmem>>, %arg21: memref<1x64xf32, #tpu.memory_space<vmem>>, %arg22: memref<64x32xbf16, #tpu.memory_space<vmem>>, %arg23: memref<1x32xf32, #tpu.memory_space<vmem>>, %arg24: memref<1x32xf32, #tpu.memory_space<vmem>>, %arg25: memref<1x32xf32, #tpu.memory_space<vmem>>, %arg26: memref<1x8x32xf32, #tpu.memory_space<vmem>>) attributes {dimension_semantics = [#tpu.dimension_semantics<parallel>], iteration_bounds = array<i64: 2>, scalar_prefetch = 0 : i64, scratch_operands = 0 : i64, tpu.core_type = #tpu.core_type<tc>, window_params = [{transform_indices = @transform_0, window_bounds = array<i64: 1, 8, 32>}, {transform_indices = @transform_1, window_bounds = array<i64: 1, 8, 32>}, {transform_indices = @transform_2, window_bounds = array<i64: 1, 1, 8>}, {transform_indices = @transform_3, window_bounds = array<i64: 1, 1, 8>}, {transform_indices = @transform_4, window_bounds = array<i64: 1, 8, 1>}, {pipeline_mode = #tpu.pipeline_mode<synchronous>, transform_indices = @transform_5, window_bounds = array<i64: 32, 96>}, {pipeline_mode = #tpu.pipeline_mode<synchronous>, transform_indices = @transform_6, window_bounds = array<i64: 1, 96>}, {pipeline_mode = #tpu.pipeline_mode<synchronous>, transform_indices = @transform_7, window_bounds = array<i64: 32, 32>}, {pipeline_mode = #tpu.pipeline_mode<synchronous>, transform_indices = @transform_8, window_bounds = array<i64: 1, 32>}, {pipeline_mode = #tpu.pipeline_mode<synchronous>, transform_indices = @transform_9, window_bounds = array<i64: 1, 32>}, {pipeline_mode = #tpu.pipeline_mode<synchronous>, transform_indices = @transform_10, window_bounds = array<i64: 1, 32>}, {pipeline_mode = #tpu.pipeline_mode<synchronous>, transform_indices = @transform_11, window_bounds = array<i64: 32, 32>}, {pipeline_mode = #tpu.pipeline_mode<synchronous>, transform_indices = @transform_12, window_bounds = array<i64: 1, 32>}, {pipeline_mode = #tpu.pipeline_mode<synchronous>, transform_indices = @transform_13, window_bounds = array<i64: 32, 64>}, {pipeline_mode = #tpu.pipeline_mode<synchronous>, transform_indices = @transform_14, window_bounds = array<i64: 1, 64>}, {pipeline_mode = #tpu.pipeline_mode<synchronous>, transform_indices = @transform_15, window_bounds = array<i64: 32, 32>}, {pipeline_mode = #tpu.pipeline_mode<synchronous>, transform_indices = @transform_16, window_bounds = array<i64: 1, 32>}, {pipeline_mode = #tpu.pipeline_mode<synchronous>, transform_indices = @transform_17, window_bounds = array<i64: 1, 32>}, {pipeline_mode = #tpu.pipeline_mode<synchronous>, transform_indices = @transform_18, window_bounds = array<i64: 1, 32>}, {pipeline_mode = #tpu.pipeline_mode<synchronous>, transform_indices = @transform_19, window_bounds = array<i64: 32, 64>}, {pipeline_mode = #tpu.pipeline_mode<synchronous>, transform_indices = @transform_20, window_bounds = array<i64: 1, 64>}, {pipeline_mode = #tpu.pipeline_mode<synchronous>, transform_indices = @transform_21, window_bounds = array<i64: 64, 32>}, {pipeline_mode = #tpu.pipeline_mode<synchronous>, transform_indices = @transform_22, window_bounds = array<i64: 1, 32>}, {pipeline_mode = #tpu.pipeline_mode<synchronous>, transform_indices = @transform_23, window_bounds = array<i64: 1, 32>}, {pipeline_mode = #tpu.pipeline_mode<synchronous>, transform_indices = @transform_24, window_bounds = array<i64: 1, 32>}, {transform_indices = @transform_25, window_bounds = array<i64: 1, 8, 32>}]} {
    %c0 = arith.constant 0 : index
    %c0_0 = arith.constant 0 : index
    %c0_1 = arith.constant 0 : index
    %0 = vector.load %arg5[%c0, %c0_0, %c0_1] : memref<1x8x1xf32, #tpu.memory_space<vmem>>, vector<1x8x1xf32>
    %1 = vector.shape_cast %0 : vector<1x8x1xf32> to vector<8x1xf32>
    %c0_2 = arith.constant 0 : index
    %c0_3 = arith.constant 0 : index
    %c0_4 = arith.constant 0 : index
    %2 = vector.load %arg1[%c0_2, %c0_3, %c0_4] : memref<1x8x32xf32, #tpu.memory_space<vmem>>, vector<1x8x32xf32>
    %3 = vector.shape_cast %2 : vector<1x8x32xf32> to vector<8x32xf32>
    %4 = arith.truncf %3 : vector<8x32xf32> to vector<8x32xbf16>
    %c0_5 = arith.constant 0 : index
    %c0_6 = arith.constant 0 : index
    %5 = vector.load %arg6[%c0_5, %c0_6] : memref<32x96xbf16, #tpu.memory_space<vmem>>, vector<32x96xbf16>
    %cst = arith.constant dense<0.000000e+00> : vector<8x96xf32>
    %6 = tpu.matmul %4, %5, %cst {dimension_numbers = #tpu.dot_dimension_numbers<[1], [0], [0], [1], [0, 0, 1, 1], [], []>} : vector<8x32xbf16>, vector<32x96xbf16>, vector<8x96xf32> -> vector<8x96xf32>
    %c0_7 = arith.constant 0 : index
    %c0_8 = arith.constant 0 : index
    %7 = vector.load %arg7[%c0_7, %c0_8] : memref<1x96xf32, #tpu.memory_space<vmem>>, vector<1x96xf32>
    %8 = vector.broadcast %7 : vector<1x96xf32> to vector<8x96xf32>
    %9 = arith.addf %6, %8 : vector<8x96xf32>
    %10 = vector.extract_strided_slice %9 {offsets = [0, 0], sizes = [8, 32], strides = [1, 1]} : vector<8x96xf32> to vector<8x32xf32>
    %11 = vector.extract_strided_slice %9 {offsets = [0, 32], sizes = [8, 32], strides = [1, 1]} : vector<8x96xf32> to vector<8x32xf32>
    %12 = vector.extract_strided_slice %9 {offsets = [0, 64], sizes = [8, 32], strides = [1, 1]} : vector<8x96xf32> to vector<8x32xf32>
    %c0_9 = arith.constant 0 : index
    %c0_10 = arith.constant 0 : index
    %c0_11 = arith.constant 0 : index
    %13 = vector.load %arg3[%c0_9, %c0_10, %c0_11] : memref<1x1x8xf32, #tpu.memory_space<vmem>>, vector<1x1x8xf32>
    %14 = vector.shape_cast %13 : vector<1x1x8xf32> to vector<1x8xf32>
    %cst_12 = arith.constant 0.000000e+00 : f32
    %15 = vector.broadcast %cst_12 : f32 to vector<1x8xf32>
    %16 = arith.cmpf ogt, %14, %15 : vector<1x8xf32>
    %17 = vector.shape_cast %16 : vector<1x8xi1> to vector<1x8xi1>
    %18 = vector.broadcast %17 : vector<1x8xi1> to vector<8x8xi1>
    %19 = tpu.iota {dimensions = array<i32: 0>} : vector<8x8xi32>
    %20 = tpu.iota {dimensions = array<i32: 1>} : vector<8x8xi32>
    %21 = arith.cmpi sle, %20, %19 : vector<8x8xi32>
    %22 = arith.andi %18, %21 : vector<8x8xi1>
    %23 = vector.extract_strided_slice %10 {offsets = [0, 0], sizes = [8, 8], strides = [1, 1]} : vector<8x32xf32> to vector<8x8xf32>
    %24 = arith.truncf %23 : vector<8x8xf32> to vector<8x8xbf16>
    %25 = vector.extract_strided_slice %11 {offsets = [0, 0], sizes = [8, 8], strides = [1, 1]} : vector<8x32xf32> to vector<8x8xf32>
    %26 = arith.truncf %25 : vector<8x8xf32> to vector<8x8xbf16>
    %27 = vector.extract_strided_slice %12 {offsets = [0, 0], sizes = [8, 8], strides = [1, 1]} : vector<8x32xf32> to vector<8x8xf32>
    %28 = arith.truncf %27 : vector<8x8xf32> to vector<8x8xbf16>
    %cst_13 = arith.constant dense<0.000000e+00> : vector<8x8xf32>
    %29 = tpu.matmul %24, %26, %cst_13 {dimension_numbers = #tpu.dot_dimension_numbers<[1], [1], [0], [0], [0, 0, 1, 0], [], []>} : vector<8x8xbf16>, vector<8x8xbf16>, vector<8x8xf32> -> vector<8x8xf32>
    %cst_14 = arith.constant 0.353553385 : f32
    %30 = vector.broadcast %cst_14 : f32 to vector<8x8xf32>
    %31 = arith.mulf %29, %30 : vector<8x8xf32>
    %cst_15 = arith.constant -1.000000e+09 : f32
    %32 = vector.broadcast %cst_15 : f32 to vector<8x8xf32>
    %33 = arith.select %22, %31, %32 : vector<8x8xi1>, vector<8x8xf32>
    %cst_16 = arith.constant dense<0xFF800000> : vector<8xf32>
    %34 = vector.multi_reduction <maximumf>, %33, %cst_16 [1] : vector<8x8xf32> to vector<8xf32>
    %35 = vector.shape_cast %34 : vector<8xf32> to vector<8x1xf32>
    %36 = vector.broadcast %35 : vector<8x1xf32> to vector<8x8xf32>
    %37 = arith.subf %33, %36 : vector<8x8xf32>
    %38 = math.exp %37 : vector<8x8xf32>
    %cst_17 = arith.constant dense<0.000000e+00> : vector<8xf32>
    %39 = vector.multi_reduction <add>, %38, %cst_17 [1] : vector<8x8xf32> to vector<8xf32>
    %40 = vector.shape_cast %39 : vector<8xf32> to vector<8x1xf32>
    %41 = tpu.reciprocal %40 {approx = true} : vector<8x1xf32> -> vector<8x1xf32>
    %42 = vector.broadcast %41 : vector<8x1xf32> to vector<8x8xf32>
    %43 = arith.mulf %38, %42 : vector<8x8xf32>
    %44 = arith.truncf %43 : vector<8x8xf32> to vector<8x8xbf16>
    %cst_18 = arith.constant dense<0.000000e+00> : vector<8x8xf32>
    %45 = tpu.matmul %44, %28, %cst_18 {dimension_numbers = #tpu.dot_dimension_numbers<[1], [0], [0], [1], [0, 0, 1, 1], [], []>} : vector<8x8xbf16>, vector<8x8xbf16>, vector<8x8xf32> -> vector<8x8xf32>
    %46 = vector.extract_strided_slice %10 {offsets = [0, 8], sizes = [8, 8], strides = [1, 1]} : vector<8x32xf32> to vector<8x8xf32>
    %47 = arith.truncf %46 : vector<8x8xf32> to vector<8x8xbf16>
    %48 = vector.extract_strided_slice %11 {offsets = [0, 8], sizes = [8, 8], strides = [1, 1]} : vector<8x32xf32> to vector<8x8xf32>
    %49 = arith.truncf %48 : vector<8x8xf32> to vector<8x8xbf16>
    %50 = vector.extract_strided_slice %12 {offsets = [0, 8], sizes = [8, 8], strides = [1, 1]} : vector<8x32xf32> to vector<8x8xf32>
    %51 = arith.truncf %50 : vector<8x8xf32> to vector<8x8xbf16>
    %cst_19 = arith.constant dense<0.000000e+00> : vector<8x8xf32>
    %52 = tpu.matmul %47, %49, %cst_19 {dimension_numbers = #tpu.dot_dimension_numbers<[1], [1], [0], [0], [0, 0, 1, 0], [], []>} : vector<8x8xbf16>, vector<8x8xbf16>, vector<8x8xf32> -> vector<8x8xf32>
    %cst_20 = arith.constant 0.353553385 : f32
    %53 = vector.broadcast %cst_20 : f32 to vector<8x8xf32>
    %54 = arith.mulf %52, %53 : vector<8x8xf32>
    %cst_21 = arith.constant -1.000000e+09 : f32
    %55 = vector.broadcast %cst_21 : f32 to vector<8x8xf32>
    %56 = arith.select %22, %54, %55 : vector<8x8xi1>, vector<8x8xf32>
    %cst_22 = arith.constant dense<0xFF800000> : vector<8xf32>
    %57 = vector.multi_reduction <maximumf>, %56, %cst_22 [1] : vector<8x8xf32> to vector<8xf32>
    %58 = vector.shape_cast %57 : vector<8xf32> to vector<8x1xf32>
    %59 = vector.broadcast %58 : vector<8x1xf32> to vector<8x8xf32>
    %60 = arith.subf %56, %59 : vector<8x8xf32>
    %61 = math.exp %60 : vector<8x8xf32>
    %cst_23 = arith.constant dense<0.000000e+00> : vector<8xf32>
    %62 = vector.multi_reduction <add>, %61, %cst_23 [1] : vector<8x8xf32> to vector<8xf32>
    %63 = vector.shape_cast %62 : vector<8xf32> to vector<8x1xf32>
    %64 = tpu.reciprocal %63 {approx = true} : vector<8x1xf32> -> vector<8x1xf32>
    %65 = vector.broadcast %64 : vector<8x1xf32> to vector<8x8xf32>
    %66 = arith.mulf %61, %65 : vector<8x8xf32>
    %67 = arith.truncf %66 : vector<8x8xf32> to vector<8x8xbf16>
    %cst_24 = arith.constant dense<0.000000e+00> : vector<8x8xf32>
    %68 = tpu.matmul %67, %51, %cst_24 {dimension_numbers = #tpu.dot_dimension_numbers<[1], [0], [0], [1], [0, 0, 1, 1], [], []>} : vector<8x8xbf16>, vector<8x8xbf16>, vector<8x8xf32> -> vector<8x8xf32>
    %69 = vector.extract_strided_slice %10 {offsets = [0, 16], sizes = [8, 8], strides = [1, 1]} : vector<8x32xf32> to vector<8x8xf32>
    %70 = arith.truncf %69 : vector<8x8xf32> to vector<8x8xbf16>
    %71 = vector.extract_strided_slice %11 {offsets = [0, 16], sizes = [8, 8], strides = [1, 1]} : vector<8x32xf32> to vector<8x8xf32>
    %72 = arith.truncf %71 : vector<8x8xf32> to vector<8x8xbf16>
    %73 = vector.extract_strided_slice %12 {offsets = [0, 16], sizes = [8, 8], strides = [1, 1]} : vector<8x32xf32> to vector<8x8xf32>
    %74 = arith.truncf %73 : vector<8x8xf32> to vector<8x8xbf16>
    %cst_25 = arith.constant dense<0.000000e+00> : vector<8x8xf32>
    %75 = tpu.matmul %70, %72, %cst_25 {dimension_numbers = #tpu.dot_dimension_numbers<[1], [1], [0], [0], [0, 0, 1, 0], [], []>} : vector<8x8xbf16>, vector<8x8xbf16>, vector<8x8xf32> -> vector<8x8xf32>
    %cst_26 = arith.constant 0.353553385 : f32
    %76 = vector.broadcast %cst_26 : f32 to vector<8x8xf32>
    %77 = arith.mulf %75, %76 : vector<8x8xf32>
    %cst_27 = arith.constant -1.000000e+09 : f32
    %78 = vector.broadcast %cst_27 : f32 to vector<8x8xf32>
    %79 = arith.select %22, %77, %78 : vector<8x8xi1>, vector<8x8xf32>
    %cst_28 = arith.constant dense<0xFF800000> : vector<8xf32>
    %80 = vector.multi_reduction <maximumf>, %79, %cst_28 [1] : vector<8x8xf32> to vector<8xf32>
    %81 = vector.shape_cast %80 : vector<8xf32> to vector<8x1xf32>
    %82 = vector.broadcast %81 : vector<8x1xf32> to vector<8x8xf32>
    %83 = arith.subf %79, %82 : vector<8x8xf32>
    %84 = math.exp %83 : vector<8x8xf32>
    %cst_29 = arith.constant dense<0.000000e+00> : vector<8xf32>
    %85 = vector.multi_reduction <add>, %84, %cst_29 [1] : vector<8x8xf32> to vector<8xf32>
    %86 = vector.shape_cast %85 : vector<8xf32> to vector<8x1xf32>
    %87 = tpu.reciprocal %86 {approx = true} : vector<8x1xf32> -> vector<8x1xf32>
    %88 = vector.broadcast %87 : vector<8x1xf32> to vector<8x8xf32>
    %89 = arith.mulf %84, %88 : vector<8x8xf32>
    %90 = arith.truncf %89 : vector<8x8xf32> to vector<8x8xbf16>
    %cst_30 = arith.constant dense<0.000000e+00> : vector<8x8xf32>
    %91 = tpu.matmul %90, %74, %cst_30 {dimension_numbers = #tpu.dot_dimension_numbers<[1], [0], [0], [1], [0, 0, 1, 1], [], []>} : vector<8x8xbf16>, vector<8x8xbf16>, vector<8x8xf32> -> vector<8x8xf32>
    %92 = vector.extract_strided_slice %10 {offsets = [0, 24], sizes = [8, 8], strides = [1, 1]} : vector<8x32xf32> to vector<8x8xf32>
    %93 = arith.truncf %92 : vector<8x8xf32> to vector<8x8xbf16>
    %94 = vector.extract_strided_slice %11 {offsets = [0, 24], sizes = [8, 8], strides = [1, 1]} : vector<8x32xf32> to vector<8x8xf32>
    %95 = arith.truncf %94 : vector<8x8xf32> to vector<8x8xbf16>
    %96 = vector.extract_strided_slice %12 {offsets = [0, 24], sizes = [8, 8], strides = [1, 1]} : vector<8x32xf32> to vector<8x8xf32>
    %97 = arith.truncf %96 : vector<8x8xf32> to vector<8x8xbf16>
    %cst_31 = arith.constant dense<0.000000e+00> : vector<8x8xf32>
    %98 = tpu.matmul %93, %95, %cst_31 {dimension_numbers = #tpu.dot_dimension_numbers<[1], [1], [0], [0], [0, 0, 1, 0], [], []>} : vector<8x8xbf16>, vector<8x8xbf16>, vector<8x8xf32> -> vector<8x8xf32>
    %cst_32 = arith.constant 0.353553385 : f32
    %99 = vector.broadcast %cst_32 : f32 to vector<8x8xf32>
    %100 = arith.mulf %98, %99 : vector<8x8xf32>
    %cst_33 = arith.constant -1.000000e+09 : f32
    %101 = vector.broadcast %cst_33 : f32 to vector<8x8xf32>
    %102 = arith.select %22, %100, %101 : vector<8x8xi1>, vector<8x8xf32>
    %cst_34 = arith.constant dense<0xFF800000> : vector<8xf32>
    %103 = vector.multi_reduction <maximumf>, %102, %cst_34 [1] : vector<8x8xf32> to vector<8xf32>
    %104 = vector.shape_cast %103 : vector<8xf32> to vector<8x1xf32>
    %105 = vector.broadcast %104 : vector<8x1xf32> to vector<8x8xf32>
    %106 = arith.subf %102, %105 : vector<8x8xf32>
    %107 = math.exp %106 : vector<8x8xf32>
    %cst_35 = arith.constant dense<0.000000e+00> : vector<8xf32>
    %108 = vector.multi_reduction <add>, %107, %cst_35 [1] : vector<8x8xf32> to vector<8xf32>
    %109 = vector.shape_cast %108 : vector<8xf32> to vector<8x1xf32>
    %110 = tpu.reciprocal %109 {approx = true} : vector<8x1xf32> -> vector<8x1xf32>
    %111 = vector.broadcast %110 : vector<8x1xf32> to vector<8x8xf32>
    %112 = arith.mulf %107, %111 : vector<8x8xf32>
    %113 = arith.truncf %112 : vector<8x8xf32> to vector<8x8xbf16>
    %cst_36 = arith.constant dense<0.000000e+00> : vector<8x8xf32>
    %114 = tpu.matmul %113, %97, %cst_36 {dimension_numbers = #tpu.dot_dimension_numbers<[1], [0], [0], [1], [0, 0, 1, 1], [], []>} : vector<8x8xbf16>, vector<8x8xbf16>, vector<8x8xf32> -> vector<8x8xf32>
    %115 = tpu.concatenate %45, %68, %91, %114 in 1 : vector<8x8xf32>, vector<8x8xf32>, vector<8x8xf32>, vector<8x8xf32> -> vector<8x32xf32>
    %116 = arith.truncf %115 : vector<8x32xf32> to vector<8x32xbf16>
    %c0_37 = arith.constant 0 : index
    %c0_38 = arith.constant 0 : index
    %117 = vector.load %arg8[%c0_37, %c0_38] : memref<32x32xbf16, #tpu.memory_space<vmem>>, vector<32x32xbf16>
    %cst_39 = arith.constant dense<0.000000e+00> : vector<8x32xf32>
    %118 = tpu.matmul %116, %117, %cst_39 {dimension_numbers = #tpu.dot_dimension_numbers<[1], [0], [0], [1], [0, 0, 1, 1], [], []>} : vector<8x32xbf16>, vector<32x32xbf16>, vector<8x32xf32> -> vector<8x32xf32>
    %119 = arith.addf %3, %118 : vector<8x32xf32>
    %c0_40 = arith.constant 0 : index
    %c0_41 = arith.constant 0 : index
    %120 = vector.load %arg9[%c0_40, %c0_41] : memref<1x32xf32, #tpu.memory_space<vmem>>, vector<1x32xf32>
    %121 = vector.broadcast %120 : vector<1x32xf32> to vector<8x32xf32>
    %122 = arith.addf %119, %121 : vector<8x32xf32>
    %c0_42 = arith.constant 0 : index
    %c0_43 = arith.constant 0 : index
    %123 = vector.load %arg10[%c0_42, %c0_43] : memref<1x32xf32, #tpu.memory_space<vmem>>, vector<1x32xf32>
    %c0_44 = arith.constant 0 : index
    %c0_45 = arith.constant 0 : index
    %124 = vector.load %arg11[%c0_44, %c0_45] : memref<1x32xf32, #tpu.memory_space<vmem>>, vector<1x32xf32>
    %cst_46 = arith.constant dense<0.000000e+00> : vector<8xf32>
    %125 = vector.multi_reduction <add>, %122, %cst_46 [1] : vector<8x32xf32> to vector<8xf32>
    %126 = vector.shape_cast %125 : vector<8xf32> to vector<8x1xf32>
    %cst_47 = arith.constant 3.200000e+01 : f32
    %127 = vector.broadcast %cst_47 : f32 to vector<8x1xf32>
    %128 = arith.divf %126, %127 : vector<8x1xf32>
    %129 = vector.broadcast %128 : vector<8x1xf32> to vector<8x32xf32>
    %130 = arith.subf %122, %129 : vector<8x32xf32>
    %131 = arith.mulf %130, %130 : vector<8x32xf32>
    %cst_48 = arith.constant dense<0.000000e+00> : vector<8xf32>
    %132 = vector.multi_reduction <add>, %131, %cst_48 [1] : vector<8x32xf32> to vector<8xf32>
    %133 = vector.shape_cast %132 : vector<8xf32> to vector<8x1xf32>
    %cst_49 = arith.constant 3.200000e+01 : f32
    %134 = vector.broadcast %cst_49 : f32 to vector<8x1xf32>
    %135 = arith.divf %133, %134 : vector<8x1xf32>
    %136 = vector.broadcast %128 : vector<8x1xf32> to vector<8x32xf32>
    %137 = arith.subf %122, %136 : vector<8x32xf32>
    %cst_50 = arith.constant 9.99999974E-6 : f32
    %138 = vector.broadcast %cst_50 : f32 to vector<8x1xf32>
    %139 = arith.addf %135, %138 : vector<8x1xf32>
    %140 = math.rsqrt %139 : vector<8x1xf32>
    %141 = vector.broadcast %140 : vector<8x1xf32> to vector<8x32xf32>
    %142 = arith.mulf %137, %141 : vector<8x32xf32>
    %143 = vector.broadcast %123 : vector<1x32xf32> to vector<8x32xf32>
    %144 = arith.mulf %142, %143 : vector<8x32xf32>
    %145 = vector.broadcast %124 : vector<1x32xf32> to vector<8x32xf32>
    %146 = arith.addf %144, %145 : vector<8x32xf32>
    %147 = vector.broadcast %1 : vector<8x1xf32> to vector<8x32xf32>
    %148 = arith.mulf %146, %147 : vector<8x32xf32>
    %149 = arith.truncf %148 : vector<8x32xf32> to vector<8x32xbf16>
    %c0_51 = arith.constant 0 : index
    %c0_52 = arith.constant 0 : index
    %150 = vector.load %arg12[%c0_51, %c0_52] : memref<32x32xbf16, #tpu.memory_space<vmem>>, vector<32x32xbf16>
    %cst_53 = arith.constant dense<0.000000e+00> : vector<8x32xf32>
    %151 = tpu.matmul %149, %150, %cst_53 {dimension_numbers = #tpu.dot_dimension_numbers<[1], [0], [0], [1], [0, 0, 1, 1], [], []>} : vector<8x32xbf16>, vector<32x32xbf16>, vector<8x32xf32> -> vector<8x32xf32>
    %c0_54 = arith.constant 0 : index
    %c0_55 = arith.constant 0 : index
    %152 = vector.load %arg13[%c0_54, %c0_55] : memref<1x32xf32, #tpu.memory_space<vmem>>, vector<1x32xf32>
    %153 = vector.broadcast %152 : vector<1x32xf32> to vector<8x32xf32>
    %154 = arith.addf %151, %153 : vector<8x32xf32>
    %c0_56 = arith.constant 0 : index
    %c0_57 = arith.constant 0 : index
    %c0_58 = arith.constant 0 : index
    %155 = vector.load %arg2[%c0_56, %c0_57, %c0_58] : memref<1x8x32xf32, #tpu.memory_space<vmem>>, vector<1x8x32xf32>
    %156 = vector.shape_cast %155 : vector<1x8x32xf32> to vector<8x32xf32>
    %157 = arith.truncf %156 : vector<8x32xf32> to vector<8x32xbf16>
    %c0_59 = arith.constant 0 : index
    %c0_60 = arith.constant 0 : index
    %158 = vector.load %arg14[%c0_59, %c0_60] : memref<32x64xbf16, #tpu.memory_space<vmem>>, vector<32x64xbf16>
    %cst_61 = arith.constant dense<0.000000e+00> : vector<8x64xf32>
    %159 = tpu.matmul %157, %158, %cst_61 {dimension_numbers = #tpu.dot_dimension_numbers<[1], [0], [0], [1], [0, 0, 1, 1], [], []>} : vector<8x32xbf16>, vector<32x64xbf16>, vector<8x64xf32> -> vector<8x64xf32>
    %c0_62 = arith.constant 0 : index
    %c0_63 = arith.constant 0 : index
    %160 = vector.load %arg15[%c0_62, %c0_63] : memref<1x64xf32, #tpu.memory_space<vmem>>, vector<1x64xf32>
    %161 = vector.broadcast %160 : vector<1x64xf32> to vector<8x64xf32>
    %162 = arith.addf %159, %161 : vector<8x64xf32>
    %163 = vector.extract_strided_slice %162 {offsets = [0, 0], sizes = [8, 32], strides = [1, 1]} : vector<8x64xf32> to vector<8x32xf32>
    %164 = vector.extract_strided_slice %162 {offsets = [0, 32], sizes = [8, 32], strides = [1, 1]} : vector<8x64xf32> to vector<8x32xf32>
    %c0_64 = arith.constant 0 : index
    %c0_65 = arith.constant 0 : index
    %c0_66 = arith.constant 0 : index
    %165 = vector.load %arg4[%c0_64, %c0_65, %c0_66] : memref<1x1x8xf32, #tpu.memory_space<vmem>>, vector<1x1x8xf32>
    %166 = vector.shape_cast %165 : vector<1x1x8xf32> to vector<1x8xf32>
    %cst_67 = arith.constant 0.000000e+00 : f32
    %167 = vector.broadcast %cst_67 : f32 to vector<1x8xf32>
    %168 = arith.cmpf ogt, %166, %167 : vector<1x8xf32>
    %169 = vector.shape_cast %168 : vector<1x8xi1> to vector<1x8xi1>
    %170 = vector.broadcast %169 : vector<1x8xi1> to vector<8x8xi1>
    %171 = vector.extract_strided_slice %154 {offsets = [0, 0], sizes = [8, 8], strides = [1, 1]} : vector<8x32xf32> to vector<8x8xf32>
    %172 = arith.truncf %171 : vector<8x8xf32> to vector<8x8xbf16>
    %173 = vector.extract_strided_slice %163 {offsets = [0, 0], sizes = [8, 8], strides = [1, 1]} : vector<8x32xf32> to vector<8x8xf32>
    %174 = arith.truncf %173 : vector<8x8xf32> to vector<8x8xbf16>
    %175 = vector.extract_strided_slice %164 {offsets = [0, 0], sizes = [8, 8], strides = [1, 1]} : vector<8x32xf32> to vector<8x8xf32>
    %176 = arith.truncf %175 : vector<8x8xf32> to vector<8x8xbf16>
    %cst_68 = arith.constant dense<0.000000e+00> : vector<8x8xf32>
    %177 = tpu.matmul %172, %174, %cst_68 {dimension_numbers = #tpu.dot_dimension_numbers<[1], [1], [0], [0], [0, 0, 1, 0], [], []>} : vector<8x8xbf16>, vector<8x8xbf16>, vector<8x8xf32> -> vector<8x8xf32>
    %cst_69 = arith.constant 0.353553385 : f32
    %178 = vector.broadcast %cst_69 : f32 to vector<8x8xf32>
    %179 = arith.mulf %177, %178 : vector<8x8xf32>
    %cst_70 = arith.constant -1.000000e+09 : f32
    %180 = vector.broadcast %cst_70 : f32 to vector<8x8xf32>
    %181 = arith.select %170, %179, %180 : vector<8x8xi1>, vector<8x8xf32>
    %cst_71 = arith.constant dense<0xFF800000> : vector<8xf32>
    %182 = vector.multi_reduction <maximumf>, %181, %cst_71 [1] : vector<8x8xf32> to vector<8xf32>
    %183 = vector.shape_cast %182 : vector<8xf32> to vector<8x1xf32>
    %184 = vector.broadcast %183 : vector<8x1xf32> to vector<8x8xf32>
    %185 = arith.subf %181, %184 : vector<8x8xf32>
    %186 = math.exp %185 : vector<8x8xf32>
    %cst_72 = arith.constant dense<0.000000e+00> : vector<8xf32>
    %187 = vector.multi_reduction <add>, %186, %cst_72 [1] : vector<8x8xf32> to vector<8xf32>
    %188 = vector.shape_cast %187 : vector<8xf32> to vector<8x1xf32>
    %189 = tpu.reciprocal %188 {approx = true} : vector<8x1xf32> -> vector<8x1xf32>
    %190 = vector.broadcast %189 : vector<8x1xf32> to vector<8x8xf32>
    %191 = arith.mulf %186, %190 : vector<8x8xf32>
    %192 = arith.truncf %191 : vector<8x8xf32> to vector<8x8xbf16>
    %cst_73 = arith.constant dense<0.000000e+00> : vector<8x8xf32>
    %193 = tpu.matmul %192, %176, %cst_73 {dimension_numbers = #tpu.dot_dimension_numbers<[1], [0], [0], [1], [0, 0, 1, 1], [], []>} : vector<8x8xbf16>, vector<8x8xbf16>, vector<8x8xf32> -> vector<8x8xf32>
    %194 = vector.extract_strided_slice %154 {offsets = [0, 8], sizes = [8, 8], strides = [1, 1]} : vector<8x32xf32> to vector<8x8xf32>
    %195 = arith.truncf %194 : vector<8x8xf32> to vector<8x8xbf16>
    %196 = vector.extract_strided_slice %163 {offsets = [0, 8], sizes = [8, 8], strides = [1, 1]} : vector<8x32xf32> to vector<8x8xf32>
    %197 = arith.truncf %196 : vector<8x8xf32> to vector<8x8xbf16>
    %198 = vector.extract_strided_slice %164 {offsets = [0, 8], sizes = [8, 8], strides = [1, 1]} : vector<8x32xf32> to vector<8x8xf32>
    %199 = arith.truncf %198 : vector<8x8xf32> to vector<8x8xbf16>
    %cst_74 = arith.constant dense<0.000000e+00> : vector<8x8xf32>
    %200 = tpu.matmul %195, %197, %cst_74 {dimension_numbers = #tpu.dot_dimension_numbers<[1], [1], [0], [0], [0, 0, 1, 0], [], []>} : vector<8x8xbf16>, vector<8x8xbf16>, vector<8x8xf32> -> vector<8x8xf32>
    %cst_75 = arith.constant 0.353553385 : f32
    %201 = vector.broadcast %cst_75 : f32 to vector<8x8xf32>
    %202 = arith.mulf %200, %201 : vector<8x8xf32>
    %cst_76 = arith.constant -1.000000e+09 : f32
    %203 = vector.broadcast %cst_76 : f32 to vector<8x8xf32>
    %204 = arith.select %170, %202, %203 : vector<8x8xi1>, vector<8x8xf32>
    %cst_77 = arith.constant dense<0xFF800000> : vector<8xf32>
    %205 = vector.multi_reduction <maximumf>, %204, %cst_77 [1] : vector<8x8xf32> to vector<8xf32>
    %206 = vector.shape_cast %205 : vector<8xf32> to vector<8x1xf32>
    %207 = vector.broadcast %206 : vector<8x1xf32> to vector<8x8xf32>
    %208 = arith.subf %204, %207 : vector<8x8xf32>
    %209 = math.exp %208 : vector<8x8xf32>
    %cst_78 = arith.constant dense<0.000000e+00> : vector<8xf32>
    %210 = vector.multi_reduction <add>, %209, %cst_78 [1] : vector<8x8xf32> to vector<8xf32>
    %211 = vector.shape_cast %210 : vector<8xf32> to vector<8x1xf32>
    %212 = tpu.reciprocal %211 {approx = true} : vector<8x1xf32> -> vector<8x1xf32>
    %213 = vector.broadcast %212 : vector<8x1xf32> to vector<8x8xf32>
    %214 = arith.mulf %209, %213 : vector<8x8xf32>
    %215 = arith.truncf %214 : vector<8x8xf32> to vector<8x8xbf16>
    %cst_79 = arith.constant dense<0.000000e+00> : vector<8x8xf32>
    %216 = tpu.matmul %215, %199, %cst_79 {dimension_numbers = #tpu.dot_dimension_numbers<[1], [0], [0], [1], [0, 0, 1, 1], [], []>} : vector<8x8xbf16>, vector<8x8xbf16>, vector<8x8xf32> -> vector<8x8xf32>
    %217 = vector.extract_strided_slice %154 {offsets = [0, 16], sizes = [8, 8], strides = [1, 1]} : vector<8x32xf32> to vector<8x8xf32>
    %218 = arith.truncf %217 : vector<8x8xf32> to vector<8x8xbf16>
    %219 = vector.extract_strided_slice %163 {offsets = [0, 16], sizes = [8, 8], strides = [1, 1]} : vector<8x32xf32> to vector<8x8xf32>
    %220 = arith.truncf %219 : vector<8x8xf32> to vector<8x8xbf16>
    %221 = vector.extract_strided_slice %164 {offsets = [0, 16], sizes = [8, 8], strides = [1, 1]} : vector<8x32xf32> to vector<8x8xf32>
    %222 = arith.truncf %221 : vector<8x8xf32> to vector<8x8xbf16>
    %cst_80 = arith.constant dense<0.000000e+00> : vector<8x8xf32>
    %223 = tpu.matmul %218, %220, %cst_80 {dimension_numbers = #tpu.dot_dimension_numbers<[1], [1], [0], [0], [0, 0, 1, 0], [], []>} : vector<8x8xbf16>, vector<8x8xbf16>, vector<8x8xf32> -> vector<8x8xf32>
    %cst_81 = arith.constant 0.353553385 : f32
    %224 = vector.broadcast %cst_81 : f32 to vector<8x8xf32>
    %225 = arith.mulf %223, %224 : vector<8x8xf32>
    %cst_82 = arith.constant -1.000000e+09 : f32
    %226 = vector.broadcast %cst_82 : f32 to vector<8x8xf32>
    %227 = arith.select %170, %225, %226 : vector<8x8xi1>, vector<8x8xf32>
    %cst_83 = arith.constant dense<0xFF800000> : vector<8xf32>
    %228 = vector.multi_reduction <maximumf>, %227, %cst_83 [1] : vector<8x8xf32> to vector<8xf32>
    %229 = vector.shape_cast %228 : vector<8xf32> to vector<8x1xf32>
    %230 = vector.broadcast %229 : vector<8x1xf32> to vector<8x8xf32>
    %231 = arith.subf %227, %230 : vector<8x8xf32>
    %232 = math.exp %231 : vector<8x8xf32>
    %cst_84 = arith.constant dense<0.000000e+00> : vector<8xf32>
    %233 = vector.multi_reduction <add>, %232, %cst_84 [1] : vector<8x8xf32> to vector<8xf32>
    %234 = vector.shape_cast %233 : vector<8xf32> to vector<8x1xf32>
    %235 = tpu.reciprocal %234 {approx = true} : vector<8x1xf32> -> vector<8x1xf32>
    %236 = vector.broadcast %235 : vector<8x1xf32> to vector<8x8xf32>
    %237 = arith.mulf %232, %236 : vector<8x8xf32>
    %238 = arith.truncf %237 : vector<8x8xf32> to vector<8x8xbf16>
    %cst_85 = arith.constant dense<0.000000e+00> : vector<8x8xf32>
    %239 = tpu.matmul %238, %222, %cst_85 {dimension_numbers = #tpu.dot_dimension_numbers<[1], [0], [0], [1], [0, 0, 1, 1], [], []>} : vector<8x8xbf16>, vector<8x8xbf16>, vector<8x8xf32> -> vector<8x8xf32>
    %240 = vector.extract_strided_slice %154 {offsets = [0, 24], sizes = [8, 8], strides = [1, 1]} : vector<8x32xf32> to vector<8x8xf32>
    %241 = arith.truncf %240 : vector<8x8xf32> to vector<8x8xbf16>
    %242 = vector.extract_strided_slice %163 {offsets = [0, 24], sizes = [8, 8], strides = [1, 1]} : vector<8x32xf32> to vector<8x8xf32>
    %243 = arith.truncf %242 : vector<8x8xf32> to vector<8x8xbf16>
    %244 = vector.extract_strided_slice %164 {offsets = [0, 24], sizes = [8, 8], strides = [1, 1]} : vector<8x32xf32> to vector<8x8xf32>
    %245 = arith.truncf %244 : vector<8x8xf32> to vector<8x8xbf16>
    %cst_86 = arith.constant dense<0.000000e+00> : vector<8x8xf32>
    %246 = tpu.matmul %241, %243, %cst_86 {dimension_numbers = #tpu.dot_dimension_numbers<[1], [1], [0], [0], [0, 0, 1, 0], [], []>} : vector<8x8xbf16>, vector<8x8xbf16>, vector<8x8xf32> -> vector<8x8xf32>
    %cst_87 = arith.constant 0.353553385 : f32
    %247 = vector.broadcast %cst_87 : f32 to vector<8x8xf32>
    %248 = arith.mulf %246, %247 : vector<8x8xf32>
    %cst_88 = arith.constant -1.000000e+09 : f32
    %249 = vector.broadcast %cst_88 : f32 to vector<8x8xf32>
    %250 = arith.select %170, %248, %249 : vector<8x8xi1>, vector<8x8xf32>
    %cst_89 = arith.constant dense<0xFF800000> : vector<8xf32>
    %251 = vector.multi_reduction <maximumf>, %250, %cst_89 [1] : vector<8x8xf32> to vector<8xf32>
    %252 = vector.shape_cast %251 : vector<8xf32> to vector<8x1xf32>
    %253 = vector.broadcast %252 : vector<8x1xf32> to vector<8x8xf32>
    %254 = arith.subf %250, %253 : vector<8x8xf32>
    %255 = math.exp %254 : vector<8x8xf32>
    %cst_90 = arith.constant dense<0.000000e+00> : vector<8xf32>
    %256 = vector.multi_reduction <add>, %255, %cst_90 [1] : vector<8x8xf32> to vector<8xf32>
    %257 = vector.shape_cast %256 : vector<8xf32> to vector<8x1xf32>
    %258 = tpu.reciprocal %257 {approx = true} : vector<8x1xf32> -> vector<8x1xf32>
    %259 = vector.broadcast %258 : vector<8x1xf32> to vector<8x8xf32>
    %260 = arith.mulf %255, %259 : vector<8x8xf32>
    %261 = arith.truncf %260 : vector<8x8xf32> to vector<8x8xbf16>
    %cst_91 = arith.constant dense<0.000000e+00> : vector<8x8xf32>
    %262 = tpu.matmul %261, %245, %cst_91 {dimension_numbers = #tpu.dot_dimension_numbers<[1], [0], [0], [1], [0, 0, 1, 1], [], []>} : vector<8x8xbf16>, vector<8x8xbf16>, vector<8x8xf32> -> vector<8x8xf32>
    %263 = tpu.concatenate %193, %216, %239, %262 in 1 : vector<8x8xf32>, vector<8x8xf32>, vector<8x8xf32>, vector<8x8xf32> -> vector<8x32xf32>
    %264 = arith.truncf %263 : vector<8x32xf32> to vector<8x32xbf16>
    %c0_92 = arith.constant 0 : index
    %c0_93 = arith.constant 0 : index
    %265 = vector.load %arg16[%c0_92, %c0_93] : memref<32x32xbf16, #tpu.memory_space<vmem>>, vector<32x32xbf16>
    %cst_94 = arith.constant dense<0.000000e+00> : vector<8x32xf32>
    %266 = tpu.matmul %264, %265, %cst_94 {dimension_numbers = #tpu.dot_dimension_numbers<[1], [0], [0], [1], [0, 0, 1, 1], [], []>} : vector<8x32xbf16>, vector<32x32xbf16>, vector<8x32xf32> -> vector<8x32xf32>
    %267 = arith.addf %148, %266 : vector<8x32xf32>
    %c0_95 = arith.constant 0 : index
    %c0_96 = arith.constant 0 : index
    %268 = vector.load %arg17[%c0_95, %c0_96] : memref<1x32xf32, #tpu.memory_space<vmem>>, vector<1x32xf32>
    %269 = vector.broadcast %268 : vector<1x32xf32> to vector<8x32xf32>
    %270 = arith.addf %267, %269 : vector<8x32xf32>
    %c0_97 = arith.constant 0 : index
    %c0_98 = arith.constant 0 : index
    %271 = vector.load %arg18[%c0_97, %c0_98] : memref<1x32xf32, #tpu.memory_space<vmem>>, vector<1x32xf32>
    %c0_99 = arith.constant 0 : index
    %c0_100 = arith.constant 0 : index
    %272 = vector.load %arg19[%c0_99, %c0_100] : memref<1x32xf32, #tpu.memory_space<vmem>>, vector<1x32xf32>
    %cst_101 = arith.constant dense<0.000000e+00> : vector<8xf32>
    %273 = vector.multi_reduction <add>, %270, %cst_101 [1] : vector<8x32xf32> to vector<8xf32>
    %274 = vector.shape_cast %273 : vector<8xf32> to vector<8x1xf32>
    %cst_102 = arith.constant 3.200000e+01 : f32
    %275 = vector.broadcast %cst_102 : f32 to vector<8x1xf32>
    %276 = arith.divf %274, %275 : vector<8x1xf32>
    %277 = vector.broadcast %276 : vector<8x1xf32> to vector<8x32xf32>
    %278 = arith.subf %270, %277 : vector<8x32xf32>
    %279 = arith.mulf %278, %278 : vector<8x32xf32>
    %cst_103 = arith.constant dense<0.000000e+00> : vector<8xf32>
    %280 = vector.multi_reduction <add>, %279, %cst_103 [1] : vector<8x32xf32> to vector<8xf32>
    %281 = vector.shape_cast %280 : vector<8xf32> to vector<8x1xf32>
    %cst_104 = arith.constant 3.200000e+01 : f32
    %282 = vector.broadcast %cst_104 : f32 to vector<8x1xf32>
    %283 = arith.divf %281, %282 : vector<8x1xf32>
    %284 = vector.broadcast %276 : vector<8x1xf32> to vector<8x32xf32>
    %285 = arith.subf %270, %284 : vector<8x32xf32>
    %cst_105 = arith.constant 9.99999974E-6 : f32
    %286 = vector.broadcast %cst_105 : f32 to vector<8x1xf32>
    %287 = arith.addf %283, %286 : vector<8x1xf32>
    %288 = math.rsqrt %287 : vector<8x1xf32>
    %289 = vector.broadcast %288 : vector<8x1xf32> to vector<8x32xf32>
    %290 = arith.mulf %285, %289 : vector<8x32xf32>
    %291 = vector.broadcast %271 : vector<1x32xf32> to vector<8x32xf32>
    %292 = arith.mulf %290, %291 : vector<8x32xf32>
    %293 = vector.broadcast %272 : vector<1x32xf32> to vector<8x32xf32>
    %294 = arith.addf %292, %293 : vector<8x32xf32>
    %295 = vector.broadcast %1 : vector<8x1xf32> to vector<8x32xf32>
    %296 = arith.mulf %294, %295 : vector<8x32xf32>
    %297 = arith.truncf %296 : vector<8x32xf32> to vector<8x32xbf16>
    %c0_106 = arith.constant 0 : index
    %c0_107 = arith.constant 0 : index
    %298 = vector.load %arg20[%c0_106, %c0_107] : memref<32x64xbf16, #tpu.memory_space<vmem>>, vector<32x64xbf16>
    %cst_108 = arith.constant dense<0.000000e+00> : vector<8x64xf32>
    %299 = tpu.matmul %297, %298, %cst_108 {dimension_numbers = #tpu.dot_dimension_numbers<[1], [0], [0], [1], [0, 0, 1, 1], [], []>} : vector<8x32xbf16>, vector<32x64xbf16>, vector<8x64xf32> -> vector<8x64xf32>
    %c0_109 = arith.constant 0 : index
    %c0_110 = arith.constant 0 : index
    %300 = vector.load %arg21[%c0_109, %c0_110] : memref<1x64xf32, #tpu.memory_space<vmem>>, vector<1x64xf32>
    %301 = vector.broadcast %300 : vector<1x64xf32> to vector<8x64xf32>
    %302 = arith.addf %299, %301 : vector<8x64xf32>
    %cst_111 = arith.constant 0.000000e+00 : f32
    %303 = vector.broadcast %cst_111 : f32 to vector<8x64xf32>
    %304 = arith.maximumf %302, %303 : vector<8x64xf32>
    %305 = arith.truncf %304 : vector<8x64xf32> to vector<8x64xbf16>
    %c0_112 = arith.constant 0 : index
    %c0_113 = arith.constant 0 : index
    %306 = vector.load %arg22[%c0_112, %c0_113] : memref<64x32xbf16, #tpu.memory_space<vmem>>, vector<64x32xbf16>
    %cst_114 = arith.constant dense<0.000000e+00> : vector<8x32xf32>
    %307 = tpu.matmul %305, %306, %cst_114 {dimension_numbers = #tpu.dot_dimension_numbers<[1], [0], [0], [1], [0, 0, 1, 1], [], []>} : vector<8x64xbf16>, vector<64x32xbf16>, vector<8x32xf32> -> vector<8x32xf32>
    %308 = arith.addf %296, %307 : vector<8x32xf32>
    %c0_115 = arith.constant 0 : index
    %c0_116 = arith.constant 0 : index
    %309 = vector.load %arg23[%c0_115, %c0_116] : memref<1x32xf32, #tpu.memory_space<vmem>>, vector<1x32xf32>
    %310 = vector.broadcast %309 : vector<1x32xf32> to vector<8x32xf32>
    %311 = arith.addf %308, %310 : vector<8x32xf32>
    %c0_117 = arith.constant 0 : index
    %c0_118 = arith.constant 0 : index
    %312 = vector.load %arg24[%c0_117, %c0_118] : memref<1x32xf32, #tpu.memory_space<vmem>>, vector<1x32xf32>
    %c0_119 = arith.constant 0 : index
    %c0_120 = arith.constant 0 : index
    %313 = vector.load %arg25[%c0_119, %c0_120] : memref<1x32xf32, #tpu.memory_space<vmem>>, vector<1x32xf32>
    %cst_121 = arith.constant dense<0.000000e+00> : vector<8xf32>
    %314 = vector.multi_reduction <add>, %311, %cst_121 [1] : vector<8x32xf32> to vector<8xf32>
    %315 = vector.shape_cast %314 : vector<8xf32> to vector<8x1xf32>
    %cst_122 = arith.constant 3.200000e+01 : f32
    %316 = vector.broadcast %cst_122 : f32 to vector<8x1xf32>
    %317 = arith.divf %315, %316 : vector<8x1xf32>
    %318 = vector.broadcast %317 : vector<8x1xf32> to vector<8x32xf32>
    %319 = arith.subf %311, %318 : vector<8x32xf32>
    %320 = arith.mulf %319, %319 : vector<8x32xf32>
    %cst_123 = arith.constant dense<0.000000e+00> : vector<8xf32>
    %321 = vector.multi_reduction <add>, %320, %cst_123 [1] : vector<8x32xf32> to vector<8xf32>
    %322 = vector.shape_cast %321 : vector<8xf32> to vector<8x1xf32>
    %cst_124 = arith.constant 3.200000e+01 : f32
    %323 = vector.broadcast %cst_124 : f32 to vector<8x1xf32>
    %324 = arith.divf %322, %323 : vector<8x1xf32>
    %325 = vector.broadcast %317 : vector<8x1xf32> to vector<8x32xf32>
    %326 = arith.subf %311, %325 : vector<8x32xf32>
    %cst_125 = arith.constant 9.99999974E-6 : f32
    %327 = vector.broadcast %cst_125 : f32 to vector<8x1xf32>
    %328 = arith.addf %324, %327 : vector<8x1xf32>
    %329 = math.rsqrt %328 : vector<8x1xf32>
    %330 = vector.broadcast %329 : vector<8x1xf32> to vector<8x32xf32>
    %331 = arith.mulf %326, %330 : vector<8x32xf32>
    %332 = vector.broadcast %312 : vector<1x32xf32> to vector<8x32xf32>
    %333 = arith.mulf %331, %332 : vector<8x32xf32>
    %334 = vector.broadcast %313 : vector<1x32xf32> to vector<8x32xf32>
    %335 = arith.addf %333, %334 : vector<8x32xf32>
    %336 = vector.broadcast %1 : vector<8x1xf32> to vector<8x32xf32>
    %337 = arith.mulf %335, %336 : vector<8x32xf32>
    %c0_126 = arith.constant 0 : index
    %c0_127 = arith.constant 0 : index
    %c0_128 = arith.constant 0 : index
    %338 = vector.load %arg26[%c0_126, %c0_127, %c0_128] : memref<1x8x32xf32, #tpu.memory_space<vmem>>, vector<1x8x32xf32>
    %339 = vector.shape_cast %338 : vector<1x8x32xf32> to vector<8x32xf32>
    %340 = vector.shape_cast %337 : vector<8x32xf32> to vector<1x8x32xf32>
    tpu.vector_store %arg26[%c0_126, %c0_127, %c0_128], %340 {strides = array<i32>} : memref<1x8x32xf32, #tpu.memory_space<vmem>>, vector<1x8x32xf32>,
    return
  }
  func.func @transform_0(%arg0: i32) -> (i32, i32, i32) {
    %c0_i32 = arith.constant 0 : i32
    %c0_i32_0 = arith.constant 0 : i32
    %c0_i32_1 = arith.constant 0 : i32
    return %arg0, %c0_i32, %c0_i32_0 : i32, i32, i32
  }
  func.func @transform_1(%arg0: i32) -> (i32, i32, i32) {
    %c0_i32 = arith.constant 0 : i32
    %c0_i32_0 = arith.constant 0 : i32
    %c0_i32_1 = arith.constant 0 : i32
    return %arg0, %c0_i32, %c0_i32_0 : i32, i32, i32
  }
  func.func @transform_2(%arg0: i32) -> (i32, i32, i32) {
    %c0_i32 = arith.constant 0 : i32
    %c0_i32_0 = arith.constant 0 : i32
    %c0_i32_1 = arith.constant 0 : i32
    return %arg0, %c0_i32, %c0_i32_0 : i32, i32, i32
  }
  func.func @transform_3(%arg0: i32) -> (i32, i32, i32) {
    %c0_i32 = arith.constant 0 : i32
    %c0_i32_0 = arith.constant 0 : i32
    %c0_i32_1 = arith.constant 0 : i32
    return %arg0, %c0_i32, %c0_i32_0 : i32, i32, i32
  }
  func.func @transform_4(%arg0: i32) -> (i32, i32, i32) {
    %c0_i32 = arith.constant 0 : i32
    %c0_i32_0 = arith.constant 0 : i32
    %c0_i32_1 = arith.constant 0 : i32
    return %arg0, %c0_i32, %c0_i32_0 : i32, i32, i32
  }
  func.func @transform_5(%arg0: i32) -> (i32, i32) {
    %c0_i32 = arith.constant 0 : i32
    %c0_i32_0 = arith.constant 0 : i32
    %c0_i32_1 = arith.constant 0 : i32
    return %c0_i32, %c0_i32_0 : i32, i32
  }
  func.func @transform_6(%arg0: i32) -> (i32, i32) {
    %c0_i32 = arith.constant 0 : i32
    %c0_i32_0 = arith.constant 0 : i32
    %c0_i32_1 = arith.constant 0 : i32
    return %c0_i32, %c0_i32_0 : i32, i32
  }
  func.func @transform_7(%arg0: i32) -> (i32, i32) {
    %c0_i32 = arith.constant 0 : i32
    %c0_i32_0 = arith.constant 0 : i32
    %c0_i32_1 = arith.constant 0 : i32
    return %c0_i32, %c0_i32_0 : i32, i32
  }
  func.func @transform_8(%arg0: i32) -> (i32, i32) {
    %c0_i32 = arith.constant 0 : i32
    %c0_i32_0 = arith.constant 0 : i32
    %c0_i32_1 = arith.constant 0 : i32
    return %c0_i32, %c0_i32_0 : i32, i32
  }
  func.func @transform_9(%arg0: i32) -> (i32, i32) {
    %c0_i32 = arith.constant 0 : i32
    %c0_i32_0 = arith.constant 0 : i32
    %c0_i32_1 = arith.constant 0 : i32
    return %c0_i32, %c0_i32_0 : i32, i32
  }
  func.func @transform_10(%arg0: i32) -> (i32, i32) {
    %c0_i32 = arith.constant 0 : i32
    %c0_i32_0 = arith.constant 0 : i32
    %c0_i32_1 = arith.constant 0 : i32
    return %c0_i32, %c0_i32_0 : i32, i32
  }
  func.func @transform_11(%arg0: i32) -> (i32, i32) {
    %c0_i32 = arith.constant 0 : i32
    %c0_i32_0 = arith.constant 0 : i32
    %c0_i32_1 = arith.constant 0 : i32
    return %c0_i32, %c0_i32_0 : i32, i32
  }
  func.func @transform_12(%arg0: i32) -> (i32, i32) {
    %c0_i32 = arith.constant 0 : i32
    %c0_i32_0 = arith.constant 0 : i32
    %c0_i32_1 = arith.constant 0 : i32
    return %c0_i32, %c0_i32_0 : i32, i32
  }
  func.func @transform_13(%arg0: i32) -> (i32, i32) {
    %c0_i32 = arith.constant 0 : i32
    %c0_i32_0 = arith.constant 0 : i32
    %c0_i32_1 = arith.constant 0 : i32
    return %c0_i32, %c0_i32_0 : i32, i32
  }
  func.func @transform_14(%arg0: i32) -> (i32, i32) {
    %c0_i32 = arith.constant 0 : i32
    %c0_i32_0 = arith.constant 0 : i32
    %c0_i32_1 = arith.constant 0 : i32
    return %c0_i32, %c0_i32_0 : i32, i32
  }
  func.func @transform_15(%arg0: i32) -> (i32, i32) {
    %c0_i32 = arith.constant 0 : i32
    %c0_i32_0 = arith.constant 0 : i32
    %c0_i32_1 = arith.constant 0 : i32
    return %c0_i32, %c0_i32_0 : i32, i32
  }
  func.func @transform_16(%arg0: i32) -> (i32, i32) {
    %c0_i32 = arith.constant 0 : i32
    %c0_i32_0 = arith.constant 0 : i32
    %c0_i32_1 = arith.constant 0 : i32
    return %c0_i32, %c0_i32_0 : i32, i32
  }
  func.func @transform_17(%arg0: i32) -> (i32, i32) {
    %c0_i32 = arith.constant 0 : i32
    %c0_i32_0 = arith.constant 0 : i32
    %c0_i32_1 = arith.constant 0 : i32
    return %c0_i32, %c0_i32_0 : i32, i32
  }
  func.func @transform_18(%arg0: i32) -> (i32, i32) {
    %c0_i32 = arith.constant 0 : i32
    %c0_i32_0 = arith.constant 0 : i32
    %c0_i32_1 = arith.constant 0 : i32
    return %c0_i32, %c0_i32_0 : i32, i32
  }
  func.func @transform_19(%arg0: i32) -> (i32, i32) {
    %c0_i32 = arith.constant 0 : i32
    %c0_i32_0 = arith.constant 0 : i32
    %c0_i32_1 = arith.constant 0 : i32
    return %c0_i32, %c0_i32_0 : i32, i32
  }
  func.func @transform_20(%arg0: i32) -> (i32, i32) {
    %c0_i32 = arith.constant 0 : i32
    %c0_i32_0 = arith.constant 0 : i32
    %c0_i32_1 = arith.constant 0 : i32
    return %c0_i32, %c0_i32_0 : i32, i32
  }
  func.func @transform_21(%arg0: i32) -> (i32, i32) {
    %c0_i32 = arith.constant 0 : i32
    %c0_i32_0 = arith.constant 0 : i32
    %c0_i32_1 = arith.constant 0 : i32
    return %c0_i32, %c0_i32_0 : i32, i32
  }
  func.func @transform_22(%arg0: i32) -> (i32, i32) {
    %c0_i32 = arith.constant 0 : i32
    %c0_i32_0 = arith.constant 0 : i32
    %c0_i32_1 = arith.constant 0 : i32
    return %c0_i32, %c0_i32_0 : i32, i32
  }
  func.func @transform_23(%arg0: i32) -> (i32, i32) {
    %c0_i32 = arith.constant 0 : i32
    %c0_i32_0 = arith.constant 0 : i32
    %c0_i32_1 = arith.constant 0 : i32
    return %c0_i32, %c0_i32_0 : i32, i32
  }
  func.func @transform_24(%arg0: i32) -> (i32, i32) {
    %c0_i32 = arith.constant 0 : i32
    %c0_i32_0 = arith.constant 0 : i32
    %c0_i32_1 = arith.constant 0 : i32
    return %c0_i32, %c0_i32_0 : i32, i32
  }
  func.func @transform_25(%arg0: i32) -> (i32, i32, i32) {
    %c0_i32 = arith.constant 0 : i32
    %c0_i32_0 = arith.constant 0 : i32
    %c0_i32_1 = arith.constant 0 : i32
    return %arg0, %c0_i32, %c0_i32_0 : i32, i32, i32
  }
}

</mosaic_0001>

<llo_original>
// kernel: _lambda_.5
$region0: #{_lambda_.5}
  #allocation0 [shape = 'u32[]', space=smem, size = 0x4, offset = 0x4, fixed_abs, tag = 'smem constant byte address 0x4 - core index']
  #allocation1 [shape = 'u32[144,128]{1,0:T(1,128)}', space=vmem, size = 0x12000, scoped, tag = 'internal scratch']
  #allocation2 [shape = 'f32[8,50]{1,0:T(8,128)}', space=vmem, size = 0x1000, scoped, tag = 'scratch operand']
  %s0 = inlined_call_operand.vmem [shape: f32[16,32], index: 0, kind: input, shape index: {}]
  %s1 = inlined_call_operand.vmem [shape: bf16[32,50], index: 1, kind: input, shape index: {}]
  %s2 = inlined_call_operand.hbm [shape: f32[16,50], index: 2, kind: output, shape index: {}]
  %s3 = sld [smem:[#allocation0]]
  $region49: #{_lambda_.5} parent=0
    _
  %s5 = ssub.s32 1, %s3
  %s6 = scalar_select 0, %s5, %s3
  $region1: #{_lambda_.5} parent=0
    #allocation3 [shape = 'u8[8192]{0}', space=vmem, size = 0x2000, scoped, tag = 'output window, operand 0']
    #allocation4 [shape = 's32[2]{0}', space=sflag, size = 0x8, scoped, tag = 'scoped memory for _lambda_.5']
    %7 = vsyncpa [#allocation4], 0
    %s8 = scalar_lea.sflag [#allocation4], 1
    %9 = vsyncpa %s8, 0
    loop: start=0, step=1, limit=4
    $region2: #{_lambda_.5} parent=1 // loop_pre_header
      _
    $region3: #{_lambda_.5} parent=1 // loop_header
      %s11 = sphi 0, %s15
      %p12 = scmp.ge.s32.totalorder %s11, 4
      %s18 = sphi 0, %s37
      %s19 = sphi 0, %s33
      %s20 = sphi 0, %s29
      %s21 = sphi 0, %s18
      %s22 = sphi 0, %s19
      %s23 = sphi 0, %s20
      %s24 = sphi 0, %s21
      %s25 = sphi 0, %s22
      %s26 = sphi 0, %s23
      %s42 = sphi 0, %s44
      %s45 = sphi 0, %s42
      %s46 = sphi 0, %s45
      %s62 = sphi 0, %s46
      %s70 = sphi 0, %s72
      %s73 = sphi 0, %s70
      %s74 = sphi 0, %s73
      %s90 = sphi 0, %s74
      %s98 = sphi 0, %s100
      %s101 = sphi 0, %s98
      %s102 = sphi 0, %s101
      %s118 = sphi 0, %s102
    $region4: #{_lambda_.5} parent=1 // loop_header_branch
      %14 = sbr.rel (%p12) target = $region8
    $region5: #{_lambda_.5} parent=1 // loop_body
      %s16 = ssub.s32 %s11, 1
      %s17 = ssub.s32 %s11, 2
      %s27 = sadd.s32 1, %s20
      %p28 = scmp.ge.s32.totalorder %s27, 1
      %s29 = scalar_select %p28, 0, %s27
      %s30 = sadd.s32 1, %s19
      %s31 = scalar_select %p28, %s30, %s19
      %p32 = scmp.ge.s32.totalorder %s31, 1
      %s33 = scalar_select %p32, 0, %s31
      %s34 = sadd.s32 1, %s18
      %s35 = scalar_select %p32, %s34, %s18
      %p36 = scmp.ge.s32.totalorder %s35, 2
      %s37 = scalar_select %p36, 0, %s35
      %s38 = ssub.s32 %s18, %s37
      %s39 = ssub.s32 %s20, %s29
      %s40 = sor.u32 %s38, %s39
      %p41 = scmp.eq.s32.totalorder %s40, 0
      %s43 = sadd.s32 %s42, 1
      %s44 = scalar_select %p41, %s42, %s43
      %p47 = pneg %p41
      %p48 = scmp.eq.s32.totalorder %s11, 1
      %p49 = por %p47, %p48
      %p50 = scmp.ne.s32.totalorder %s42, %s45
      %p51 = scmp.eq.s32.totalorder %s11, 0
      %p52 = por %p50, %p51
      %p53 = scmp.ne.s32.totalorder %s42, %s45
      %p54 = scmp.eq.s32.totalorder %s16, 1
      %p55 = por %p53, %p54
      %p56 = scmp.ne.s32.totalorder %s45, %s46
      %p57 = scmp.eq.s32.totalorder %s16, 0
      %p58 = por %p56, %p57
      %p59 = scmp.ne.s32.totalorder %s45, %s46
      %p60 = scmp.eq.s32.totalorder %s17, 1
      %p61 = por %p59, %p60
      %p63 = scmp.ne.s32.totalorder %s46, %s62
      %p64 = scmp.eq.s32.totalorder %s17, 0
      %p65 = por %p63, %p64
      %s66 = ssub.s32 %s20, %s29
      %s67 = ssub.s32 %s19, %s33
      %s68 = sor.u32 %s66, %s67
      %p69 = scmp.eq.s32.totalorder %s68, 0
      %s71 = sadd.s32 %s70, 1
      %s72 = scalar_select %p69, %s70, %s71
      %p75 = pneg %p69
      %p76 = scmp.eq.s32.totalorder %s11, 1
      %p77 = por %p75, %p76
      %p78 = scmp.ne.s32.totalorder %s70, %s73
      %p79 = scmp.eq.s32.totalorder %s11, 0
      %p80 = por %p78, %p79
      %p81 = scmp.ne.s32.totalorder %s70, %s73
      %p82 = scmp.eq.s32.totalorder %s16, 1
      %p83 = por %p81, %p82
      %p84 = scmp.ne.s32.totalorder %s73, %s74
      %p85 = scmp.eq.s32.totalorder %s16, 0
      %p86 = por %p84, %p85
      %p87 = scmp.ne.s32.totalorder %s73, %s74
      %p88 = scmp.eq.s32.totalorder %s17, 1
      %p89 = por %p87, %p88
      %p91 = scmp.ne.s32.totalorder %s74, %s90
      %p92 = scmp.eq.s32.totalorder %s17, 0
      %p93 = por %p91, %p92
      %s94 = ssub.s32 %s18, %s37
      %s95 = ssub.s32 %s19, %s33
      %s96 = sor.u32 %s94, %s95
      %p97 = scmp.eq.s32.totalorder %s96, 0
      %s99 = sadd.s32 %s98, 1
      %s100 = scalar_select %p97, %s98, %s99
      %p103 = pneg %p97
      %p104 = scmp.eq.s32.totalorder %s11, 1
      %p105 = por %p103, %p104
      %p106 = scmp.ne.s32.totalorder %s98, %s101
      %p107 = scmp.eq.s32.totalorder %s11, 0
      %p108 = por %p106, %p107
      %p109 = scmp.ne.s32.totalorder %s98, %s101
      %p110 = scmp.eq.s32.totalorder %s16, 1
      %p111 = por %p109, %p110
      %p112 = scmp.ne.s32.totalorder %s101, %s102
      %p113 = scmp.eq.s32.totalorder %s16, 0
      %p114 = por %p112, %p113
      %p115 = scmp.ne.s32.totalorder %s101, %s102
      %p116 = scmp.eq.s32.totalorder %s17, 1
      %p117 = por %p115, %p116
      %p119 = scmp.ne.s32.totalorder %s102, %s118
      %p120 = scmp.eq.s32.totalorder %s17, 0
      %p121 = por %p119, %p120
      %p122 = scmp.le.s32.totalorder 1, %s11
      %p123 = scmp.lt.s32.totalorder %s11, 3
      %p124 = pnand %p122, %p123
      %p125 = pneg %p124
      // Predicated region
      $region9: #{_lambda_.5} parent=5 // pred_check
        _
      $region10: #{_lambda_.5} parent=5 // pred_check_branch
        %127 = sbr.rel (%p124) target = $region12
      $region11: #{_lambda_.5} parent=5 // pred_region
        %s128 = ssub.s32 %s11, 1
        // Predicated region
        $region13: #{_lambda_.5} parent=11 // pred_check
          %p129 = pneg %p86
        $region14: #{_lambda_.5} parent=11 // pred_check_branch
          %131 = sbr.rel (%p129) target = $region16
        $region15: #{_lambda_.5} parent=11 // pred_region
          %s132 = smul.u32 4, %s23
          %p133 = scmp.lt.s32.totalorder %s132, 3
          %s134 = scalar_select %p133, %s132, 3
          %p135 = scmp.lt.s32.totalorder %s22, 0
          %s136 = scalar_select %p135, %s22, 0
          %s137 = sadd.s32 %s136, %s134
          %s138 = smul.addr %s137, 4
          %s139 = scalar_lea.vmem %s1, %s138
          %s140 = smul.u32 4, %s23
        $region16: #{_lambda_.5} parent=11 // pred_fallthru
          _
      $region12: #{_lambda_.5} parent=5 // pred_fallthru
        _
      %p141 = scmp.lt.s32.totalorder %s11, 2
      // Predicated region
      $region17: #{_lambda_.5} parent=5 // pred_check
        %p142 = pneg %p141
      $region18: #{_lambda_.5} parent=5 // pred_check_branch
        %144 = sbr.rel (%p142) target = $region20
      $region19: #{_lambda_.5} parent=5 // pred_region
        // Predicated region
        $region21: #{_lambda_.5} parent=19 // pred_check
          %p145 = pneg %p52
        $region22: #{_lambda_.5} parent=19 // pred_check_branch
          %147 = sbr.rel (%p145) target = $region24
        $region23: #{_lambda_.5} parent=19 // pred_region
          %p148 = scmp.lt.s32.totalorder %s18, 1
          %s149 = scalar_select %p148, %s18, 1
          %p150 = scmp.lt.s32.totalorder %s20, 0
          %s151 = scalar_select %p150, %s20, 0
          %s152 = sadd.s32 %s151, %s149
          %s153 = smul.addr %s152, 8
          %s154 = scalar_lea.vmem %s0, %s153
        $region24: #{_lambda_.5} parent=19 // pred_fallthru
          _
      $region20: #{_lambda_.5} parent=5 // pred_fallthru
        _
      %p155 = scmp.le.s32.totalorder 1, %s11
      %p156 = scmp.lt.s32.totalorder %s11, 3
      %p157 = pnand %p155, %p156
      %p158 = pneg %p157
      // Predicated region
      $region25: #{_lambda_.5} parent=5 // pred_check
        _
      $region26: #{_lambda_.5} parent=5 // pred_check_branch
        %160 = sbr.rel (%p157) target = $region28
      $region27: #{_lambda_.5} parent=5 // pred_region
        %s161 = ssub.s32 %s11, 1
        %p162 = scmp.lt.s32.totalorder %s21, 1
        %s163 = scalar_select %p162, %s21, 1
        %p164 = scmp.lt.s32.totalorder %s23, 0
        %s165 = scalar_select %p164, %s23, 0
        %s166 = sadd.s32 %s165, %s163
        %s167 = smul.addr %s166, 8
        %s168 = scalar_lea.vmem %s0, %s167
        %p169 = pneg %p58
        %p170 = pneg %p55
        %s171 = smul.u32 4, %s23
        %p172 = scmp.lt.s32.totalorder %s171, 3
        %s173 = scalar_select %p172, %s171, 3
        %p174 = scmp.lt.s32.totalorder %s22, 0
        %s175 = scalar_select %p174, %s22, 0
        %s176 = sadd.s32 %s175, %s173
        %s177 = smul.addr %s176, 4
        %s178 = scalar_lea.vmem %s1, %s177
        %p179 = pneg %p86
        %p180 = pneg %p83
        %p181 = pneg %p114
        %p182 = pneg %p111
        %s183 = sand.u32 %s101, 1
        %s184 = scalar_lea.sflag [#allocation4], %s183
        %s185 = sand.u32 %s101, 1
        %s186 = smul.addr %s185, 8
        %s187 = scalar_lea.vmem [#allocation3], %s186
        %p188 = scmp.lt.s32.totalorder %s21, 1
        %s189 = scalar_select %p188, %s21, 1
        %p190 = scmp.lt.s32.totalorder %s23, 0
        %s191 = scalar_select %p190, %s23, 0
        %s192 = sadd.s32 %s191, %s189
        %s193 = smul.addr %s192, 8
        %s194 = scalar_lea.vmem %s0, %s193
        %s195 = smul.u32 4, %s23
        %p196 = scmp.lt.s32.totalorder %s195, 3
        %s197 = scalar_select %p196, %s195, 3
        %p198 = scmp.lt.s32.totalorder %s22, 0
        %s199 = scalar_select %p198, %s22, 0
        %s200 = sadd.s32 %s199, %s197
        %s201 = smul.addr %s200, 4
        %s202 = scalar_lea.vmem %s1, %s201
        %s203 = smul.u32 4, %s23
        %p205 = scmp.eq.s32.totalorder %s23, 0
        // Predicated region
        $region29: #{_lambda_.5} parent=27 // pred_check
          %p206 = pneg %p205
        $region30: #{_lambda_.5} parent=27 // pred_check_branch
          %208 = sbr.rel (%p206) target = $region32
        $region31: #{_lambda_.5} parent=27 // pred_region
          %vm209 = vcmask 408576
          %210 = vst.msk [vmem:[#allocation2] sm:$0xff] %vm209, 0.0
        $region32: #{_lambda_.5} parent=27 // pred_fallthru
          _
        %v211 = vld [vmem:[#allocation2] sm:$0xff]
        %v212 = vld [vmem:[%s194] sm:$0xff]
        %v213 = vpack.c.bf16 %v212, %v212
        %v214 = vld [vmem:[%s202] sm:$0xf]
        %v215 = vld [vmem:[%s202 + $0x4] sm:$0xf]
        %v216 = vld [vmem:[%s202 + $0x8] sm:$0xf]
        %v217 = vld [vmem:[%s202 + $0xc] sm:$0xf]
        %v222 = vunpack.c.l.b16 %v214
        %v223 = vunpack.c.l.b16 %v215
        %v224 = vunpack.c.l.b16 %v216
        %v225 = vunpack.c.l.b16 %v217
        %v226 = vpack.c.b16 %v223, %v222
        %v227 = vpack.c.b16 %v225, %v224
        %vm230 = vcmask 261120
        %v232 = vsel %vm230, %v213, 0
        %234 = vmatprep.subr.bf16.mxu0 0
        %235 = vmatpush1.bf16.msra.mxu0 %v226
        %236 = vmatprep.subr.bf16.mxu0 0
        %237 = vmatpush1.bf16.msra.mxu0 %v227
        %238 = vmatprep.subr.bf16.mxu0 0
        %239 = vmatpush1.bf16.msra.mxu0 0
        %240 = vmatprep.subr.bf16.mxu0 0
        %241 = vmatpush1.bf16.msra.mxu0 0
        %242 = vmatprep.subr.bf16.mxu0 0
        %243 = vmatpush1.bf16.msra.mxu0 0
        %244 = vmatprep.subr.bf16.mxu0 0
        %245 = vmatpush1.bf16.msra.mxu0 0
        %246 = vmatprep.subr.bf16.mxu0 0
        %247 = vmatpush1.bf16.msra.mxu0 0
        %248 = vmatprep.subr.bf16.mxu0 0
        %249 = vmatpush1.bf16.msra.mxu0 0
        %250 = vmatprep.subr.bf16.mxu0 0
        %251 = vmatpush1.bf16.msra.mxu0 0
        %252 = vmatprep.subr.bf16.mxu0 0
        %253 = vmatpush1.bf16.msra.mxu0 0
        %254 = vmatprep.subr.bf16.mxu0 0
        %255 = vmatpush1.bf16.msra.mxu0 0
        %256 = vmatprep.subr.bf16.mxu0 0
        %257 = vmatpush1.bf16.msra.mxu0 0
        %258 = vmatprep.subr.bf16.mxu0 0
        %259 = vmatpush1.bf16.msra.mxu0 0
        %260 = vmatprep.subr.bf16.mxu0 0
        %261 = vmatpush1.bf16.msra.mxu0 0
        %262 = vmatprep.subr.bf16.mxu0 0
        %263 = vmatpush1.bf16.msra.mxu0 0
        %264 = vmatprep.subr.bf16.mxu0 0
        %265 = vmatpush1.bf16.msra.mxu0 0
        %266 = vmatprep.mubr.bf16.mxu0 0
        %267 = vmatmul.mubr.bf16.gmra.mrb[0].mxu0 %v232
        %v268 = vpop.f32.mrb[0].mxu0
        %v269 = vadd.f32 0.0, %v268
        %v270 = vpop.f32.mrb[0].mxu0
        %v271 = vpop.f32.mrb[0].mxu0
        %v272 = vpop.f32.mrb[0].mxu0
        %273 = vdwg.mxu0
        %v274 = vadd.f32 %v211, %v269
        %vm275 = vcmask 408576
        %276 = vst.msk [vmem:[#allocation2] sm:$0xff] %vm275, %v274
        // Predicated region
        $region33: #{_lambda_.5} parent=27 // pred_check
          %p277 = pneg %p205
        $region34: #{_lambda_.5} parent=27 // pred_check_branch
          %279 = sbr.rel (%p277) target = $region36
        $region35: #{_lambda_.5} parent=27 // pred_region
          %v280 = vld [vmem:[#allocation2] sm:$0xff]
          %281 = vst.msk [vmem:[%s187] sm:$0xff] %vm275, %v280
        $region36: #{_lambda_.5} parent=27 // pred_fallthru
          _
        %s282 = sand.u32 %s101, 1
        %s283 = scalar_lea.sflag [#allocation4], %s282
        %s284 = sand.u32 %s101, 1
        %s285 = smul.addr %s284, 8
        %s286 = scalar_lea.vmem [#allocation3], %s285
        // Predicated region
        $region37: #{_lambda_.5} parent=27 // pred_check
          %p287 = pneg %p111
        $region38: #{_lambda_.5} parent=27 // pred_check_branch
          %289 = sbr.rel (%p287) target = $region40
        $region39: #{_lambda_.5} parent=27 // pred_region
          %s291 = ssub.s32 128, 128
          %292 = vsyncadd %s283, %s291
          %s293 = sadd.s32 %s22, %s21
          %s294 = smul.addr %s293, 128
          %s295 = scalar_lea.hbm %s2, %s294
          %s297 = sshll.u32 %s286, 4
          %s298 = int_to_ptr.vmem [resolvable:$true] %s297
          %300 = dma.vmem_to_hbm [thread:$0]  %s298, 128, %s295, %s283
        $region40: #{_lambda_.5} parent=27 // pred_fallthru
          _
      $region28: #{_lambda_.5} parent=5 // pred_fallthru
        _
      %p301 = scmp.le.s32.totalorder 2, %s11
      // Predicated region
      $region41: #{_lambda_.5} parent=5 // pred_check
        %p302 = pneg %p301
      $region42: #{_lambda_.5} parent=5 // pred_check_branch
        %304 = sbr.rel (%p302) target = $region44
      $region43: #{_lambda_.5} parent=5 // pred_region
        %s305 = ssub.s32 %s11, 2
        // Predicated region
        $region45: #{_lambda_.5} parent=43 // pred_check
          %p306 = pneg %p117
        $region46: #{_lambda_.5} parent=43 // pred_check_branch
          %308 = sbr.rel (%p306) target = $region48
        $region47: #{_lambda_.5} parent=43 // pred_region
          %s309 = sand.u32 %s102, 1
          %s310 = scalar_lea.sflag [#allocation4], %s309
          %s311 = sand.u32 %s102, 1
          %s312 = smul.addr %s311, 8
          %s313 = scalar_lea.vmem [#allocation3], %s312
          %314 = dma.done %s310, 128
        $region48: #{_lambda_.5} parent=43 // pred_fallthru
          _
      $region44: #{_lambda_.5} parent=5 // pred_fallthru
        _
    $region6: #{_lambda_.5} parent=1 // loop_footer
      %s15 = sadd.s32 1, %s11
    $region7: #{_lambda_.5} parent=1 // loop_footer_branch
      %10 = sbr.rel target = $region3
    $region8: #{_lambda_.5} parent=1 // loop_exit
      _
    %315 = vsyncpa [#allocation4], 1
    %s316 = scalar_lea.sflag [#allocation4], 1
    %317 = vsyncpa %s316, 1

// kernel: _lambda_.4
$region0: #{_lambda_.4}
  #allocation0 [shape = 'u32[]', space=smem, size = 0x4, offset = 0x4, fixed_abs, tag = 'smem constant byte address 0x4 - core index']
  #allocation1 [shape = 'u32[144,128]{1,0:T(1,128)}', space=vmem, size = 0x12000, scoped, tag = 'internal scratch']
  %s0 = inlined_call_operand.vmem [shape: f32[2,8,32], index: 0, kind: input, shape index: {}]
  %s1 = inlined_call_operand.vmem [shape: f32[2,8,32], index: 1, kind: input, shape index: {}]
  %s2 = inlined_call_operand.vmem [shape: f32[2,1,8], index: 2, kind: input, shape index: {}]
  %s3 = inlined_call_operand.vmem [shape: f32[2,1,8], index: 3, kind: input, shape index: {}]
  %s4 = inlined_call_operand.vmem [shape: f32[2,8,1], index: 4, kind: input, shape index: {}]
  %s5 = inlined_call_operand.vmem [shape: bf16[32,96], index: 5, kind: input, shape index: {}]
  %s6 = inlined_call_operand.vmem [shape: f32[1,96], index: 6, kind: input, shape index: {}]
  %s7 = inlined_call_operand.vmem [shape: bf16[32,32], index: 7, kind: input, shape index: {}]
  %s8 = inlined_call_operand.vmem [shape: f32[1,32], index: 8, kind: input, shape index: {}]
  %s9 = inlined_call_operand.vmem [shape: f32[1,32], index: 9, kind: input, shape index: {}]
  %s10 = inlined_call_operand.vmem [shape: f32[1,32], index: 10, kind: input, shape index: {}]
  %s11 = inlined_call_operand.vmem [shape: bf16[32,32], index: 11, kind: input, shape index: {}]
  %s12 = inlined_call_operand.vmem [shape: f32[1,32], index: 12, kind: input, shape index: {}]
  %s13 = inlined_call_operand.vmem [shape: bf16[32,64], index: 13, kind: input, shape index: {}]
  %s14 = inlined_call_operand.vmem [shape: f32[1,64], index: 14, kind: input, shape index: {}]
  %s15 = inlined_call_operand.vmem [shape: bf16[32,32], index: 15, kind: input, shape index: {}]
  %s16 = inlined_call_operand.vmem [shape: f32[1,32], index: 16, kind: input, shape index: {}]
  %s17 = inlined_call_operand.vmem [shape: f32[1,32], index: 17, kind: input, shape index: {}]
  %s18 = inlined_call_operand.vmem [shape: f32[1,32], index: 18, kind: input, shape index: {}]
  %s19 = inlined_call_operand.vmem [shape: bf16[32,64], index: 19, kind: input, shape index: {}]
  %s20 = inlined_call_operand.vmem [shape: f32[1,64], index: 20, kind: input, shape index: {}]
  %s21 = inlined_call_operand.vmem [shape: bf16[64,32], index: 21, kind: input, shape index: {}]
  %s22 = inlined_call_operand.vmem [shape: f32[1,32], index: 22, kind: input, shape index: {}]
  %s23 = inlined_call_operand.hbm [shape: f32[1,32], index: 23, kind: input, shape index: {}]
  %s24 = inlined_call_operand.hbm [shape: f32[1,32], index: 24, kind: input, shape index: {}]
  %s25 = inlined_call_operand.vmem [shape: f32[2,8,32], index: 25, kind: output, shape index: {}]
  %s26 = sld [smem:[#allocation0]]
  $region141: #{_lambda_.4} parent=0
    _
  %s28 = ssub.s32 1, %s26
  %s29 = scalar_select 0, %s28, %s26
  $region1: #{_lambda_.4} parent=0
    #allocation2 [shape = 'u8[512]{0}', space=vmem, size = 0x400, scoped, tag = 'input window, operand 23, single buffered']
    #allocation3 [shape = 's32[2]{0}', space=sflag, size = 0x8, scoped, tag = 'scoped memory for _lambda_.4']
    #allocation4 [shape = 'u8[512]{0}', space=vmem, size = 0x400, scoped, tag = 'input window, operand 24, single buffered']
    #allocation5 [shape = 's32[1]{0}', space=sflag, size = 0x4, scoped, tag = 'scoped memory for _lambda_.4']
    %30 = vsyncpa [#allocation3], 0
    %31 = vsyncpa [#allocation5], 0
    loop: start=0, step=1, limit=4
    $region2: #{_lambda_.4} parent=1 // loop_pre_header
      _
    $region3: #{_lambda_.4} parent=1 // loop_header
      %s33 = sphi 0, %s37
      %p34 = scmp.ge.s32.totalorder %s33, 4
      %s43 = sphi 0, %s45
      %s46 = sphi 0, %s43
      %s47 = sphi 0, %s46
      %s63 = sphi 0, %s47
      %s69 = sphi 0, %s71
      %s72 = sphi 0, %s69
      %s73 = sphi 0, %s72
      %s89 = sphi 0, %s73
      %s95 = sphi 0, %s97
      %s98 = sphi 0, %s95
      %s99 = sphi 0, %s98
      %s115 = sphi 0, %s99
      %s121 = sphi 0, %s123
      %s124 = sphi 0, %s121
      %s125 = sphi 0, %s124
      %s141 = sphi 0, %s125
      %s147 = sphi 0, %s149
      %s150 = sphi 0, %s147
      %s151 = sphi 0, %s150
      %s167 = sphi 0, %s151
      %s171 = sphi 0, %s171
      %s173 = sphi 0, %s171
      %s174 = sphi 0, %s173
      %s188 = sphi 0, %s174
      %s192 = sphi 0, %s192
      %s194 = sphi 0, %s192
      %s195 = sphi 0, %s194
      %s209 = sphi 0, %s195
      %s213 = sphi 0, %s213
      %s215 = sphi 0, %s213
      %s216 = sphi 0, %s215
      %s230 = sphi 0, %s216
      %s234 = sphi 0, %s234
      %s236 = sphi 0, %s234
      %s237 = sphi 0, %s236
      %s251 = sphi 0, %s237
      %s255 = sphi 0, %s255
      %s257 = sphi 0, %s255
      %s258 = sphi 0, %s257
      %s272 = sphi 0, %s258
      %s276 = sphi 0, %s276
      %s278 = sphi 0, %s276
      %s279 = sphi 0, %s278
      %s293 = sphi 0, %s279
      %s297 = sphi 0, %s297
      %s299 = sphi 0, %s297
      %s300 = sphi 0, %s299
      %s314 = sphi 0, %s300
      %s318 = sphi 0, %s318
      %s320 = sphi 0, %s318
      %s321 = sphi 0, %s320
      %s335 = sphi 0, %s321
      %s339 = sphi 0, %s339
      %s341 = sphi 0, %s339
      %s342 = sphi 0, %s341
      %s356 = sphi 0, %s342
      %s360 = sphi 0, %s360
      %s362 = sphi 0, %s360
      %s363 = sphi 0, %s362
      %s377 = sphi 0, %s363
      %s381 = sphi 0, %s381
      %s383 = sphi 0, %s381
      %s384 = sphi 0, %s383
      %s398 = sphi 0, %s384
      %s402 = sphi 0, %s402
      %s404 = sphi 0, %s402
      %s405 = sphi 0, %s404
      %s419 = sphi 0, %s405
      %s423 = sphi 0, %s423
      %s425 = sphi 0, %s423
      %s426 = sphi 0, %s425
      %s440 = sphi 0, %s426
      %s444 = sphi 0, %s444
      %s446 = sphi 0, %s444
      %s447 = sphi 0, %s446
      %s461 = sphi 0, %s447
      %s465 = sphi 0, %s465
      %s467 = sphi 0, %s465
      %s468 = sphi 0, %s467
      %s482 = sphi 0, %s468
      %s486 = sphi 0, %s486
      %s488 = sphi 0, %s486
      %s489 = sphi 0, %s488
      %s503 = sphi 0, %s489
      %s507 = sphi 0, %s507
      %s509 = sphi 0, %s507
      %s510 = sphi 0, %s509
      %s524 = sphi 0, %s510
      %s528 = sphi 0, %s528
      %s530 = sphi 0, %s528
      %s531 = sphi 0, %s530
      %s545 = sphi 0, %s531
      %s549 = sphi 0, %s549
      %s551 = sphi 0, %s549
      %s552 = sphi 0, %s551
      %s566 = sphi 0, %s552
      %s570 = sphi 0, %s570
      %s572 = sphi 0, %s570
      %s573 = sphi 0, %s572
      %s587 = sphi 0, %s573
      %s593 = sphi 0, %s595
      %s596 = sphi 0, %s593
      %s597 = sphi 0, %s596
      %s613 = sphi 0, %s597
    $region4: #{_lambda_.4} parent=1 // loop_header_branch
      %36 = sbr.rel (%p34) target = $region8
    $region5: #{_lambda_.4} parent=1 // loop_body
      %s38 = ssub.s32 %s33, 1
      %s39 = ssub.s32 %s33, 2
      %s40 = sadd.s32 %s33, 1
      %s41 = ssub.s32 %s33, %s40
      %p42 = scmp.eq.s32.totalorder %s41, 0
      %s44 = sadd.s32 %s43, 1
      %s45 = scalar_select %p42, %s43, %s44
      %p48 = pneg %p42
      %p49 = scmp.eq.s32.totalorder %s33, 1
      %p50 = por %p48, %p49
      %p51 = scmp.ne.s32.totalorder %s43, %s46
      %p52 = scmp.eq.s32.totalorder %s33, 0
      %p53 = por %p51, %p52
      %p54 = scmp.ne.s32.totalorder %s43, %s46
      %p55 = scmp.eq.s32.totalorder %s38, 1
      %p56 = por %p54, %p55
      %p57 = scmp.ne.s32.totalorder %s46, %s47
      %p58 = scmp.eq.s32.totalorder %s38, 0
      %p59 = por %p57, %p58
      %p60 = scmp.ne.s32.totalorder %s46, %s47
      %p61 = scmp.eq.s32.totalorder %s39, 1
      %p62 = por %p60, %p61
      %p64 = scmp.ne.s32.totalorder %s47, %s63
      %p65 = scmp.eq.s32.totalorder %s39, 0
      %p66 = por %p64, %p65
      %s67 = ssub.s32 %s33, %s40
      %p68 = scmp.eq.s32.totalorder %s67, 0
      %s70 = sadd.s32 %s69, 1
      %s71 = scalar_select %p68, %s69, %s70
      %p74 = pneg %p68
      %p75 = scmp.eq.s32.totalorder %s33, 1
      %p76 = por %p74, %p75
      %p77 = scmp.ne.s32.totalorder %s69, %s72
      %p78 = scmp.eq.s32.totalorder %s33, 0
      %p79 = por %p77, %p78
      %p80 = scmp.ne.s32.totalorder %s69, %s72
      %p81 = scmp.eq.s32.totalorder %s38, 1
      %p82 = por %p80, %p81
      %p83 = scmp.ne.s32.totalorder %s72, %s73
      %p84 = scmp.eq.s32.totalorder %s38, 0
      %p85 = por %p83, %p84
      %p86 = scmp.ne.s32.totalorder %s72, %s73
      %p87 = scmp.eq.s32.totalorder %s39, 1
      %p88 = por %p86, %p87
      %p90 = scmp.ne.s32.totalorder %s73, %s89
      %p91 = scmp.eq.s32.totalorder %s39, 0
      %p92 = por %p90, %p91
      %s93 = ssub.s32 %s33, %s40
      %p94 = scmp.eq.s32.totalorder %s93, 0
      %s96 = sadd.s32 %s95, 1
      %s97 = scalar_select %p94, %s95, %s96
      %p100 = pneg %p94
      %p101 = scmp.eq.s32.totalorder %s33, 1
      %p102 = por %p100, %p101
      %p103 = scmp.ne.s32.totalorder %s95, %s98
      %p104 = scmp.eq.s32.totalorder %s33, 0
      %p105 = por %p103, %p104
      %p106 = scmp.ne.s32.totalorder %s95, %s98
      %p107 = scmp.eq.s32.totalorder %s38, 1
      %p108 = por %p106, %p107
      %p109 = scmp.ne.s32.totalorder %s98, %s99
      %p110 = scmp.eq.s32.totalorder %s38, 0
      %p111 = por %p109, %p110
      %p112 = scmp.ne.s32.totalorder %s98, %s99
      %p113 = scmp.eq.s32.totalorder %s39, 1
      %p114 = por %p112, %p113
      %p116 = scmp.ne.s32.totalorder %s99, %s115
      %p117 = scmp.eq.s32.totalorder %s39, 0
      %p118 = por %p116, %p117
      %s119 = ssub.s32 %s33, %s40
      %p120 = scmp.eq.s32.totalorder %s119, 0
      %s122 = sadd.s32 %s121, 1
      %s123 = scalar_select %p120, %s121, %s122
      %p126 = pneg %p120
      %p127 = scmp.eq.s32.totalorder %s33, 1
      %p128 = por %p126, %p127
      %p129 = scmp.ne.s32.totalorder %s121, %s124
      %p130 = scmp.eq.s32.totalorder %s33, 0
      %p131 = por %p129, %p130
      %p132 = scmp.ne.s32.totalorder %s121, %s124
      %p133 = scmp.eq.s32.totalorder %s38, 1
      %p134 = por %p132, %p133
      %p135 = scmp.ne.s32.totalorder %s124, %s125
      %p136 = scmp.eq.s32.totalorder %s38, 0
      %p137 = por %p135, %p136
      %p138 = scmp.ne.s32.totalorder %s124, %s125
      %p139 = scmp.eq.s32.totalorder %s39, 1
      %p140 = por %p138, %p139
      %p142 = scmp.ne.s32.totalorder %s125, %s141
      %p143 = scmp.eq.s32.totalorder %s39, 0
      %p144 = por %p142, %p143
      %s145 = ssub.s32 %s33, %s40
      %p146 = scmp.eq.s32.totalorder %s145, 0
      %s148 = sadd.s32 %s147, 1
      %s149 = scalar_select %p146, %s147, %s148
      %p152 = pneg %p146
      %p153 = scmp.eq.s32.totalorder %s33, 1
      %p154 = por %p152, %p153
      %p155 = scmp.ne.s32.totalorder %s147, %s150
      %p156 = scmp.eq.s32.totalorder %s33, 0
      %p157 = por %p155, %p156
      %p158 = scmp.ne.s32.totalorder %s147, %s150
      %p159 = scmp.eq.s32.totalorder %s38, 1
      %p160 = por %p158, %p159
      %p161 = scmp.ne.s32.totalorder %s150, %s151
      %p162 = scmp.eq.s32.totalorder %s38, 0
      %p163 = por %p161, %p162
      %p164 = scmp.ne.s32.totalorder %s150, %s151
      %p165 = scmp.eq.s32.totalorder %s39, 1
      %p166 = por %p164, %p165
      %p168 = scmp.ne.s32.totalorder %s151, %s167
      %p169 = scmp.eq.s32.totalorder %s39, 0
      %p170 = por %p168, %p169
      %s172 = sadd.s32 %s171, 1
      %p175 = scmp.eq.s32.totalorder %s33, 1
      %p176 = scmp.ne.s32.totalorder %s171, %s173
      %p177 = scmp.eq.s32.totalorder %s33, 0
      %p178 = por %p176, %p177
      %p179 = scmp.ne.s32.totalorder %s171, %s173
      %p180 = scmp.eq.s32.totalorder %s38, 1
      %p181 = por %p179, %p180
      %p182 = scmp.ne.s32.totalorder %s173, %s174
      %p183 = scmp.eq.s32.totalorder %s38, 0
      %p184 = por %p182, %p183
      %p185 = scmp.ne.s32.totalorder %s173, %s174
      %p186 = scmp.eq.s32.totalorder %s39, 1
      %p187 = por %p185, %p186
      %p189 = scmp.ne.s32.totalorder %s174, %s188
      %p190 = scmp.eq.s32.totalorder %s39, 0
      %p191 = por %p189, %p190
      %s193 = sadd.s32 %s192, 1
      %p196 = scmp.eq.s32.totalorder %s33, 1
      %p197 = scmp.ne.s32.totalorder %s192, %s194
      %p198 = scmp.eq.s32.totalorder %s33, 0
      %p199 = por %p197, %p198
      %p200 = scmp.ne.s32.totalorder %s192, %s194
      %p201 = scmp.eq.s32.totalorder %s38, 1
      %p202 = por %p200, %p201
      %p203 = scmp.ne.s32.totalorder %s194, %s195
      %p204 = scmp.eq.s32.totalorder %s38, 0
      %p205 = por %p203, %p204
      %p206 = scmp.ne.s32.totalorder %s194, %s195
      %p207 = scmp.eq.s32.totalorder %s39, 1
      %p208 = por %p206, %p207
      %p210 = scmp.ne.s32.totalorder %s195, %s209
      %p211 = scmp.eq.s32.totalorder %s39, 0
      %p212 = por %p210, %p211
      %s214 = sadd.s32 %s213, 1
      %p217 = scmp.eq.s32.totalorder %s33, 1
      %p218 = scmp.ne.s32.totalorder %s213, %s215
      %p219 = scmp.eq.s32.totalorder %s33, 0
      %p220 = por %p218, %p219
      %p221 = scmp.ne.s32.totalorder %s213, %s215
      %p222 = scmp.eq.s32.totalorder %s38, 1
      %p223 = por %p221, %p222
      %p224 = scmp.ne.s32.totalorder %s215, %s216
      %p225 = scmp.eq.s32.totalorder %s38, 0
      %p226 = por %p224, %p225
      %p227 = scmp.ne.s32.totalorder %s215, %s216
      %p228 = scmp.eq.s32.totalorder %s39, 1
      %p229 = por %p227, %p228
      %p231 = scmp.ne.s32.totalorder %s216, %s230
      %p232 = scmp.eq.s32.totalorder %s39, 0
      %p233 = por %p231, %p232
      %s235 = sadd.s32 %s234, 1
      %p238 = scmp.eq.s32.totalorder %s33, 1
      %p239 = scmp.ne.s32.totalorder %s234, %s236
      %p240 = scmp.eq.s32.totalorder %s33, 0
      %p241 = por %p239, %p240
      %p242 = scmp.ne.s32.totalorder %s234, %s236
      %p243 = scmp.eq.s32.totalorder %s38, 1
      %p244 = por %p242, %p243
      %p245 = scmp.ne.s32.totalorder %s236, %s237
      %p246 = scmp.eq.s32.totalorder %s38, 0
      %p247 = por %p245, %p246
      %p248 = scmp.ne.s32.totalorder %s236, %s237
      %p249 = scmp.eq.s32.totalorder %s39, 1
      %p250 = por %p248, %p249
      %p252 = scmp.ne.s32.totalorder %s237, %s251
      %p253 = scmp.eq.s32.totalorder %s39, 0
      %p254 = por %p252, %p253
      %s256 = sadd.s32 %s255, 1
      %p259 = scmp.eq.s32.totalorder %s33, 1
      %p260 = scmp.ne.s32.totalorder %s255, %s257
      %p261 = scmp.eq.s32.totalorder %s33, 0
      %p262 = por %p260, %p261
      %p263 = scmp.ne.s32.totalorder %s255, %s257
      %p264 = scmp.eq.s32.totalorder %s38, 1
      %p265 = por %p263, %p264
      %p266 = scmp.ne.s32.totalorder %s257, %s258
      %p267 = scmp.eq.s32.totalorder %s38, 0
      %p268 = por %p266, %p267
      %p269 = scmp.ne.s32.totalorder %s257, %s258
      %p270 = scmp.eq.s32.totalorder %s39, 1
      %p271 = por %p269, %p270
      %p273 = scmp.ne.s32.totalorder %s258, %s272
      %p274 = scmp.eq.s32.totalorder %s39, 0
      %p275 = por %p273, %p274
      %s277 = sadd.s32 %s276, 1
      %p280 = scmp.eq.s32.totalorder %s33, 1
      %p281 = scmp.ne.s32.totalorder %s276, %s278
      %p282 = scmp.eq.s32.totalorder %s33, 0
      %p283 = por %p281, %p282
      %p284 = scmp.ne.s32.totalorder %s276, %s278
      %p285 = scmp.eq.s32.totalorder %s38, 1
      %p286 = por %p284, %p285
      %p287 = scmp.ne.s32.totalorder %s278, %s279
      %p288 = scmp.eq.s32.totalorder %s38, 0
      %p289 = por %p287, %p288
      %p290 = scmp.ne.s32.totalorder %s278, %s279
      %p291 = scmp.eq.s32.totalorder %s39, 1
      %p292 = por %p290, %p291
      %p294 = scmp.ne.s32.totalorder %s279, %s293
      %p295 = scmp.eq.s32.totalorder %s39, 0
      %p296 = por %p294, %p295
      %s298 = sadd.s32 %s297, 1
      %p301 = scmp.eq.s32.totalorder %s33, 1
      %p302 = scmp.ne.s32.totalorder %s297, %s299
      %p303 = scmp.eq.s32.totalorder %s33, 0
      %p304 = por %p302, %p303
      %p305 = scmp.ne.s32.totalorder %s297, %s299
      %p306 = scmp.eq.s32.totalorder %s38, 1
      %p307 = por %p305, %p306
      %p308 = scmp.ne.s32.totalorder %s299, %s300
      %p309 = scmp.eq.s32.totalorder %s38, 0
      %p310 = por %p308, %p309
      %p311 = scmp.ne.s32.totalorder %s299, %s300
      %p312 = scmp.eq.s32.totalorder %s39, 1
      %p313 = por %p311, %p312
      %p315 = scmp.ne.s32.totalorder %s300, %s314
      %p316 = scmp.eq.s32.totalorder %s39, 0
      %p317 = por %p315, %p316
      %s319 = sadd.s32 %s318, 1
      %p322 = scmp.eq.s32.totalorder %s33, 1
      %p323 = scmp.ne.s32.totalorder %s318, %s320
      %p324 = scmp.eq.s32.totalorder %s33, 0
      %p325 = por %p323, %p324
      %p326 = scmp.ne.s32.totalorder %s318, %s320
      %p327 = scmp.eq.s32.totalorder %s38, 1
      %p328 = por %p326, %p327
      %p329 = scmp.ne.s32.totalorder %s320, %s321
      %p330 = scmp.eq.s32.totalorder %s38, 0
      %p331 = por %p329, %p330
      %p332 = scmp.ne.s32.totalorder %s320, %s321
      %p333 = scmp.eq.s32.totalorder %s39, 1
      %p334 = por %p332, %p333
      %p336 = scmp.ne.s32.totalorder %s321, %s335
      %p337 = scmp.eq.s32.totalorder %s39, 0
      %p338 = por %p336, %p337
      %s340 = sadd.s32 %s339, 1
      %p343 = scmp.eq.s32.totalorder %s33, 1
      %p344 = scmp.ne.s32.totalorder %s339, %s341
      %p345 = scmp.eq.s32.totalorder %s33, 0
      %p346 = por %p344, %p345
      %p347 = scmp.ne.s32.totalorder %s339, %s341
      %p348 = scmp.eq.s32.totalorder %s38, 1
      %p349 = por %p347, %p348
      %p350 = scmp.ne.s32.totalorder %s341, %s342
      %p351 = scmp.eq.s32.totalorder %s38, 0
      %p352 = por %p350, %p351
      %p353 = scmp.ne.s32.totalorder %s341, %s342
      %p354 = scmp.eq.s32.totalorder %s39, 1
      %p355 = por %p353, %p354
      %p357 = scmp.ne.s32.totalorder %s342, %s356
      %p358 = scmp.eq.s32.totalorder %s39, 0
      %p359 = por %p357, %p358
      %s361 = sadd.s32 %s360, 1
      %p364 = scmp.eq.s32.totalorder %s33, 1
      %p365 = scmp.ne.s32.totalorder %s360, %s362
      %p366 = scmp.eq.s32.totalorder %s33, 0
      %p367 = por %p365, %p366
      %p368 = scmp.ne.s32.totalorder %s360, %s362
      %p369 = scmp.eq.s32.totalorder %s38, 1
      %p370 = por %p368, %p369
      %p371 = scmp.ne.s32.totalorder %s362, %s363
      %p372 = scmp.eq.s32.totalorder %s38, 0
      %p373 = por %p371, %p372
      %p374 = scmp.ne.s32.totalorder %s362, %s363
      %p375 = scmp.eq.s32.totalorder %s39, 1
      %p376 = por %p374, %p375
      %p378 = scmp.ne.s32.totalorder %s363, %s377
      %p379 = scmp.eq.s32.totalorder %s39, 0
      %p380 = por %p378, %p379
      %s382 = sadd.s32 %s381, 1
      %p385 = scmp.eq.s32.totalorder %s33, 1
      %p386 = scmp.ne.s32.totalorder %s381, %s383
      %p387 = scmp.eq.s32.totalorder %s33, 0
      %p388 = por %p386, %p387
      %p389 = scmp.ne.s32.totalorder %s381, %s383
      %p390 = scmp.eq.s32.totalorder %s38, 1
      %p391 = por %p389, %p390
      %p392 = scmp.ne.s32.totalorder %s383, %s384
      %p393 = scmp.eq.s32.totalorder %s38, 0
      %p394 = por %p392, %p393
      %p395 = scmp.ne.s32.totalorder %s383, %s384
      %p396 = scmp.eq.s32.totalorder %s39, 1
      %p397 = por %p395, %p396
      %p399 = scmp.ne.s32.totalorder %s384, %s398
      %p400 = scmp.eq.s32.totalorder %s39, 0
      %p401 = por %p399, %p400
      %s403 = sadd.s32 %s402, 1
      %p406 = scmp.eq.s32.totalorder %s33, 1
      %p407 = scmp.ne.s32.totalorder %s402, %s404
      %p408 = scmp.eq.s32.totalorder %s33, 0
      %p409 = por %p407, %p408
      %p410 = scmp.ne.s32.totalorder %s402, %s404
      %p411 = scmp.eq.s32.totalorder %s38, 1
      %p412 = por %p410, %p411
      %p413 = scmp.ne.s32.totalorder %s404, %s405
      %p414 = scmp.eq.s32.totalorder %s38, 0
      %p415 = por %p413, %p414
      %p416 = scmp.ne.s32.totalorder %s404, %s405
      %p417 = scmp.eq.s32.totalorder %s39, 1
      %p418 = por %p416, %p417
      %p420 = scmp.ne.s32.totalorder %s405, %s419
      %p421 = scmp.eq.s32.totalorder %s39, 0
      %p422 = por %p420, %p421
      %s424 = sadd.s32 %s423, 1
      %p427 = scmp.eq.s32.totalorder %s33, 1
      %p428 = scmp.ne.s32.totalorder %s423, %s425
      %p429 = scmp.eq.s32.totalorder %s33, 0
      %p430 = por %p428, %p429
      %p431 = scmp.ne.s32.totalorder %s423, %s425
      %p432 = scmp.eq.s32.totalorder %s38, 1
      %p433 = por %p431, %p432
      %p434 = scmp.ne.s32.totalorder %s425, %s426
      %p435 = scmp.eq.s32.totalorder %s38, 0
      %p436 = por %p434, %p435
      %p437 = scmp.ne.s32.totalorder %s425, %s426
      %p438 = scmp.eq.s32.totalorder %s39, 1
      %p439 = por %p437, %p438
      %p441 = scmp.ne.s32.totalorder %s426, %s440
      %p442 = scmp.eq.s32.totalorder %s39, 0
      %p443 = por %p441, %p442
      %s445 = sadd.s32 %s444, 1
      %p448 = scmp.eq.s32.totalorder %s33, 1
      %p449 = scmp.ne.s32.totalorder %s444, %s446
      %p450 = scmp.eq.s32.totalorder %s33, 0
      %p451 = por %p449, %p450
      %p452 = scmp.ne.s32.totalorder %s444, %s446
      %p453 = scmp.eq.s32.totalorder %s38, 1
      %p454 = por %p452, %p453
      %p455 = scmp.ne.s32.totalorder %s446, %s447
      %p456 = scmp.eq.s32.totalorder %s38, 0
      %p457 = por %p455, %p456
      %p458 = scmp.ne.s32.totalorder %s446, %s447
      %p459 = scmp.eq.s32.totalorder %s39, 1
      %p460 = por %p458, %p459
      %p462 = scmp.ne.s32.totalorder %s447, %s461
      %p463 = scmp.eq.s32.totalorder %s39, 0
      %p464 = por %p462, %p463
      %s466 = sadd.s32 %s465, 1
      %p469 = scmp.eq.s32.totalorder %s33, 1
      %p470 = scmp.ne.s32.totalorder %s465, %s467
      %p471 = scmp.eq.s32.totalorder %s33, 0
      %p472 = por %p470, %p471
      %p473 = scmp.ne.s32.totalorder %s465, %s467
      %p474 = scmp.eq.s32.totalorder %s38, 1
      %p475 = por %p473, %p474
      %p476 = scmp.ne.s32.totalorder %s467, %s468
      %p477 = scmp.eq.s32.totalorder %s38, 0
      %p478 = por %p476, %p477
      %p479 = scmp.ne.s32.totalorder %s467, %s468
      %p480 = scmp.eq.s32.totalorder %s39, 1
      %p481 = por %p479, %p480
      %p483 = scmp.ne.s32.totalorder %s468, %s482
      %p484 = scmp.eq.s32.totalorder %s39, 0
      %p485 = por %p483, %p484
      %s487 = sadd.s32 %s486, 1
      %p490 = scmp.eq.s32.totalorder %s33, 1
      %p491 = scmp.ne.s32.totalorder %s486, %s488
      %p492 = scmp.eq.s32.totalorder %s33, 0
      %p493 = por %p491, %p492
      %p494 = scmp.ne.s32.totalorder %s486, %s488
      %p495 = scmp.eq.s32.totalorder %s38, 1
      %p496 = por %p494, %p495
      %p497 = scmp.ne.s32.totalorder %s488, %s489
      %p498 = scmp.eq.s32.totalorder %s38, 0
      %p499 = por %p497, %p498
      %p500 = scmp.ne.s32.totalorder %s488, %s489
      %p501 = scmp.eq.s32.totalorder %s39, 1
      %p502 = por %p500, %p501
      %p504 = scmp.ne.s32.totalorder %s489, %s503
      %p505 = scmp.eq.s32.totalorder %s39, 0
      %p506 = por %p504, %p505
      %s508 = sadd.s32 %s507, 1
      %p511 = scmp.eq.s32.totalorder %s33, 1
      %p512 = scmp.ne.s32.totalorder %s507, %s509
      %p513 = scmp.eq.s32.totalorder %s33, 0
      %p514 = por %p512, %p513
      %p515 = scmp.ne.s32.totalorder %s507, %s509
      %p516 = scmp.eq.s32.totalorder %s38, 1
      %p517 = por %p515, %p516
      %p518 = scmp.ne.s32.totalorder %s509, %s510
      %p519 = scmp.eq.s32.totalorder %s38, 0
      %p520 = por %p518, %p519
      %p521 = scmp.ne.s32.totalorder %s509, %s510
      %p522 = scmp.eq.s32.totalorder %s39, 1
      %p523 = por %p521, %p522
      %p525 = scmp.ne.s32.totalorder %s510, %s524
      %p526 = scmp.eq.s32.totalorder %s39, 0
      %p527 = por %p525, %p526
      %s529 = sadd.s32 %s528, 1
      %p532 = scmp.eq.s32.totalorder %s33, 1
      %p533 = scmp.ne.s32.totalorder %s528, %s530
      %p534 = scmp.eq.s32.totalorder %s33, 0
      %p535 = por %p533, %p534
      %p536 = scmp.ne.s32.totalorder %s528, %s530
      %p537 = scmp.eq.s32.totalorder %s38, 1
      %p538 = por %p536, %p537
      %p539 = scmp.ne.s32.totalorder %s530, %s531
      %p540 = scmp.eq.s32.totalorder %s38, 0
      %p541 = por %p539, %p540
      %p542 = scmp.ne.s32.totalorder %s530, %s531
      %p543 = scmp.eq.s32.totalorder %s39, 1
      %p544 = por %p542, %p543
      %p546 = scmp.ne.s32.totalorder %s531, %s545
      %p547 = scmp.eq.s32.totalorder %s39, 0
      %p548 = por %p546, %p547
      %s550 = sadd.s32 %s549, 1
      %p553 = scmp.eq.s32.totalorder %s33, 1
      %p554 = scmp.ne.s32.totalorder %s549, %s551
      %p555 = scmp.eq.s32.totalorder %s33, 0
      %p556 = por %p554, %p555
      %p557 = scmp.ne.s32.totalorder %s549, %s551
      %p558 = scmp.eq.s32.totalorder %s38, 1
      %p559 = por %p557, %p558
      %p560 = scmp.ne.s32.totalorder %s551, %s552
      %p561 = scmp.eq.s32.totalorder %s38, 0
      %p562 = por %p560, %p561
      %p563 = scmp.ne.s32.totalorder %s551, %s552
      %p564 = scmp.eq.s32.totalorder %s39, 1
      %p565 = por %p563, %p564
      %p567 = scmp.ne.s32.totalorder %s552, %s566
      %p568 = scmp.eq.s32.totalorder %s39, 0
      %p569 = por %p567, %p568
      %s571 = sadd.s32 %s570, 1
      %p574 = scmp.eq.s32.totalorder %s33, 1
      %p575 = scmp.ne.s32.totalorder %s570, %s572
      %p576 = scmp.eq.s32.totalorder %s33, 0
      %p577 = por %p575, %p576
      %p578 = scmp.ne.s32.totalorder %s570, %s572
      %p579 = scmp.eq.s32.totalorder %s38, 1
      %p580 = por %p578, %p579
      %p581 = scmp.ne.s32.totalorder %s572, %s573
      %p582 = scmp.eq.s32.totalorder %s38, 0
      %p583 = por %p581, %p582
      %p584 = scmp.ne.s32.totalorder %s572, %s573
      %p585 = scmp.eq.s32.totalorder %s39, 1
      %p586 = por %p584, %p585
      %p588 = scmp.ne.s32.totalorder %s573, %s587
      %p589 = scmp.eq.s32.totalorder %s39, 0
      %p590 = por %p588, %p589
      %s591 = ssub.s32 %s33, %s40
      %p592 = scmp.eq.s32.totalorder %s591, 0
      %s594 = sadd.s32 %s593, 1
      %s595 = scalar_select %p592, %s593, %s594
      %p598 = pneg %p592
      %p599 = scmp.eq.s32.totalorder %s33, 1
      %p600 = por %p598, %p599
      %p601 = scmp.ne.s32.totalorder %s593, %s596
      %p602 = scmp.eq.s32.totalorder %s33, 0
      %p603 = por %p601, %p602
      %p604 = scmp.ne.s32.totalorder %s593, %s596
      %p605 = scmp.eq.s32.totalorder %s38, 1
      %p606 = por %p604, %p605
      %p607 = scmp.ne.s32.totalorder %s596, %s597
      %p608 = scmp.eq.s32.totalorder %s38, 0
      %p609 = por %p607, %p608
      %p610 = scmp.ne.s32.totalorder %s596, %s597
      %p611 = scmp.eq.s32.totalorder %s39, 1
      %p612 = por %p610, %p611
      %p614 = scmp.ne.s32.totalorder %s597, %s613
      %p615 = scmp.eq.s32.totalorder %s39, 0
      %p616 = por %p614, %p615
      %p617 = scmp.le.s32.totalorder 1, %s33
      %p618 = scmp.lt.s32.totalorder %s33, 3
      %p619 = pnand %p617, %p618
      %p620 = pneg %p619
      // Predicated region
      $region9: #{_lambda_.4} parent=5 // pred_check
        _
      $region10: #{_lambda_.4} parent=5 // pred_check_branch
        %622 = sbr.rel (%p619) target = $region12
      $region11: #{_lambda_.4} parent=5 // pred_region
        %s623 = ssub.s32 %s33, 1
        // Predicated region
        $region13: #{_lambda_.4} parent=11 // pred_check
          %p624 = pneg %p184
        $region14: #{_lambda_.4} parent=11 // pred_check_branch
          %626 = sbr.rel (%p624) target = $region16
        $region15: #{_lambda_.4} parent=11 // pred_region
          _
        $region16: #{_lambda_.4} parent=11 // pred_fallthru
          _
        // Predicated region
        $region17: #{_lambda_.4} parent=11 // pred_check
          %p627 = pneg %p205
        $region18: #{_lambda_.4} parent=11 // pred_check_branch
          %629 = sbr.rel (%p627) target = $region20
        $region19: #{_lambda_.4} parent=11 // pred_region
          _
        $region20: #{_lambda_.4} parent=11 // pred_fallthru
          _
        // Predicated region
        $region21: #{_lambda_.4} parent=11 // pred_check
          %p630 = pneg %p226
        $region22: #{_lambda_.4} parent=11 // pred_check_branch
          %632 = sbr.rel (%p630) target = $region24
        $region23: #{_lambda_.4} parent=11 // pred_region
          _
        $region24: #{_lambda_.4} parent=11 // pred_fallthru
          _
        // Predicated region
        $region25: #{_lambda_.4} parent=11 // pred_check
          %p633 = pneg %p247
        $region26: #{_lambda_.4} parent=11 // pred_check_branch
          %635 = sbr.rel (%p633) target = $region28
        $region27: #{_lambda_.4} parent=11 // pred_region
          _
        $region28: #{_lambda_.4} parent=11 // pred_fallthru
          _
        // Predicated region
        $region29: #{_lambda_.4} parent=11 // pred_check
          %p636 = pneg %p268
        $region30: #{_lambda_.4} parent=11 // pred_check_branch
          %638 = sbr.rel (%p636) target = $region32
        $region31: #{_lambda_.4} parent=11 // pred_region
          _
        $region32: #{_lambda_.4} parent=11 // pred_fallthru
          _
        // Predicated region
        $region33: #{_lambda_.4} parent=11 // pred_check
          %p639 = pneg %p289
        $region34: #{_lambda_.4} parent=11 // pred_check_branch
          %641 = sbr.rel (%p639) target = $region36
        $region35: #{_lambda_.4} parent=11 // pred_region
          _
        $region36: #{_lambda_.4} parent=11 // pred_fallthru
          _
        // Predicated region
        $region37: #{_lambda_.4} parent=11 // pred_check
          %p642 = pneg %p310
        $region38: #{_lambda_.4} parent=11 // pred_check_branch
          %644 = sbr.rel (%p642) target = $region40
        $region39: #{_lambda_.4} parent=11 // pred_region
          _
        $region40: #{_lambda_.4} parent=11 // pred_fallthru
          _
        // Predicated region
        $region41: #{_lambda_.4} parent=11 // pred_check
          %p645 = pneg %p331
        $region42: #{_lambda_.4} parent=11 // pred_check_branch
          %647 = sbr.rel (%p645) target = $region44
        $region43: #{_lambda_.4} parent=11 // pred_region
          _
        $region44: #{_lambda_.4} parent=11 // pred_fallthru
          _
        // Predicated region
        $region45: #{_lambda_.4} parent=11 // pred_check
          %p648 = pneg %p352
        $region46: #{_lambda_.4} parent=11 // pred_check_branch
          %650 = sbr.rel (%p648) target = $region48
        $region47: #{_lambda_.4} parent=11 // pred_region
          _
        $region48: #{_lambda_.4} parent=11 // pred_fallthru
          _
        // Predicated region
        $region49: #{_lambda_.4} parent=11 // pred_check
          %p651 = pneg %p373
        $region50: #{_lambda_.4} parent=11 // pred_check_branch
          %653 = sbr.rel (%p651) target = $region52
        $region51: #{_lambda_.4} parent=11 // pred_region
          _
        $region52: #{_lambda_.4} parent=11 // pred_fallthru
          _
        // Predicated region
        $region53: #{_lambda_.4} parent=11 // pred_check
          %p654 = pneg %p394
        $region54: #{_lambda_.4} parent=11 // pred_check_branch
          %656 = sbr.rel (%p654) target = $region56
        $region55: #{_lambda_.4} parent=11 // pred_region
          _
        $region56: #{_lambda_.4} parent=11 // pred_fallthru
          _
        // Predicated region
        $region57: #{_lambda_.4} parent=11 // pred_check
          %p657 = pneg %p415
        $region58: #{_lambda_.4} parent=11 // pred_check_branch
          %659 = sbr.rel (%p657) target = $region60
        $region59: #{_lambda_.4} parent=11 // pred_region
          _
        $region60: #{_lambda_.4} parent=11 // pred_fallthru
          _
        // Predicated region
        $region61: #{_lambda_.4} parent=11 // pred_check
          %p660 = pneg %p436
        $region62: #{_lambda_.4} parent=11 // pred_check_branch
          %662 = sbr.rel (%p660) target = $region64
        $region63: #{_lambda_.4} parent=11 // pred_region
          _
        $region64: #{_lambda_.4} parent=11 // pred_fallthru
          _
        // Predicated region
        $region65: #{_lambda_.4} parent=11 // pred_check
          %p663 = pneg %p457
        $region66: #{_lambda_.4} parent=11 // pred_check_branch
          %665 = sbr.rel (%p663) target = $region68
        $region67: #{_lambda_.4} parent=11 // pred_region
          _
        $region68: #{_lambda_.4} parent=11 // pred_fallthru
          _
        // Predicated region
        $region69: #{_lambda_.4} parent=11 // pred_check
          %p666 = pneg %p478
        $region70: #{_lambda_.4} parent=11 // pred_check_branch
          %668 = sbr.rel (%p666) target = $region72
        $region71: #{_lambda_.4} parent=11 // pred_region
          _
        $region72: #{_lambda_.4} parent=11 // pred_fallthru
          _
        // Predicated region
        $region73: #{_lambda_.4} parent=11 // pred_check
          %p669 = pneg %p499
        $region74: #{_lambda_.4} parent=11 // pred_check_branch
          %671 = sbr.rel (%p669) target = $region76
        $region75: #{_lambda_.4} parent=11 // pred_region
          _
        $region76: #{_lambda_.4} parent=11 // pred_fallthru
          _
        // Predicated region
        $region77: #{_lambda_.4} parent=11 // pred_check
          %p672 = pneg %p520
        $region78: #{_lambda_.4} parent=11 // pred_check_branch
          %674 = sbr.rel (%p672) target = $region80
        $region79: #{_lambda_.4} parent=11 // pred_region
          _
        $region80: #{_lambda_.4} parent=11 // pred_fallthru
          _
        // Predicated region
        $region81: #{_lambda_.4} parent=11 // pred_check
          %p675 = pneg %p541
        $region82: #{_lambda_.4} parent=11 // pred_check_branch
          %677 = sbr.rel (%p675) target = $region84
        $region83: #{_lambda_.4} parent=11 // pred_region
          _
        $region84: #{_lambda_.4} parent=11 // pred_fallthru
          _
        // Predicated region
        $region85: #{_lambda_.4} parent=11 // pred_check
          %p678 = pneg %p562
        $region86: #{_lambda_.4} parent=11 // pred_check_branch
          %680 = sbr.rel (%p678) target = $region88
        $region87: #{_lambda_.4} parent=11 // pred_region
          %s682 = ssub.s32 16, 16
          %683 = vsyncadd [#allocation3], %s682
          %s685 = sshll.u32 [#allocation2], 4
          %s686 = int_to_ptr.vmem [resolvable:$true] %s685
          %688 = dma.hbm_to_vmem [thread:$0]  %s23, 16, %s686, [#allocation3]
        $region88: #{_lambda_.4} parent=11 // pred_fallthru
          _
        // Predicated region
        $region89: #{_lambda_.4} parent=11 // pred_check
          %p689 = pneg %p583
        $region90: #{_lambda_.4} parent=11 // pred_check_branch
          %691 = sbr.rel (%p689) target = $region92
        $region91: #{_lambda_.4} parent=11 // pred_region
          %s693 = ssub.s32 16, 16
          %694 = vsyncadd [#allocation5], %s693
          %s696 = sshll.u32 [#allocation4], 4
          %s697 = int_to_ptr.vmem [resolvable:$true] %s696
          %699 = dma.hbm_to_vmem [thread:$0]  %s24, 16, %s697, [#allocation5]
        $region92: #{_lambda_.4} parent=11 // pred_fallthru
          _
      $region12: #{_lambda_.4} parent=5 // pred_fallthru
        _
      %p700 = scmp.lt.s32.totalorder %s33, 2
      // Predicated region
      $region93: #{_lambda_.4} parent=5 // pred_check
        %p701 = pneg %p700
      $region94: #{_lambda_.4} parent=5 // pred_check_branch
        %703 = sbr.rel (%p701) target = $region96
      $region95: #{_lambda_.4} parent=5 // pred_region
        // Predicated region
        $region97: #{_lambda_.4} parent=95 // pred_check
          %p704 = pneg %p53
        $region98: #{_lambda_.4} parent=95 // pred_check_branch
          %706 = sbr.rel (%p704) target = $region100
        $region99: #{_lambda_.4} parent=95 // pred_region
          %p707 = scmp.lt.s32.totalorder %s33, 1
          %s708 = scalar_select %p707, %s33, 1
          %s709 = smul.addr %s708, 8
          %s710 = scalar_lea.vmem %s0, %s709
        $region100: #{_lambda_.4} parent=95 // pred_fallthru
          _
        // Predicated region
        $region101: #{_lambda_.4} parent=95 // pred_check
          %p711 = pneg %p79
        $region102: #{_lambda_.4} parent=95 // pred_check_branch
          %713 = sbr.rel (%p711) target = $region104
        $region103: #{_lambda_.4} parent=95 // pred_region
          %p714 = scmp.lt.s32.totalorder %s33, 1
          %s715 = scalar_select %p714, %s33, 1
          %s716 = smul.addr %s715, 8
          %s717 = scalar_lea.vmem %s1, %s716
        $region104: #{_lambda_.4} parent=95 // pred_fallthru
          _
        // Predicated region
        $region105: #{_lambda_.4} parent=95 // pred_check
          %p718 = pneg %p105
        $region106: #{_lambda_.4} parent=95 // pred_check_branch
          %720 = sbr.rel (%p718) target = $region108
        $region107: #{_lambda_.4} parent=95 // pred_region
          %p721 = scmp.lt.s32.totalorder %s33, 1
          %s722 = scalar_select %p721, %s33, 1
          %s723 = scalar_lea.vmem %s2, %s722
        $region108: #{_lambda_.4} parent=95 // pred_fallthru
          _
        // Predicated region
        $region109: #{_lambda_.4} parent=95 // pred_check
          %p724 = pneg %p131
        $region110: #{_lambda_.4} parent=95 // pred_check_branch
          %726 = sbr.rel (%p724) target = $region112
        $region111: #{_lambda_.4} parent=95 // pred_region
          %p727 = scmp.lt.s32.totalorder %s33, 1
          %s728 = scalar_select %p727, %s33, 1
          %s729 = scalar_lea.vmem %s3, %s728
        $region112: #{_lambda_.4} parent=95 // pred_fallthru
          _
        // Predicated region
        $region113: #{_lambda_.4} parent=95 // pred_check
          %p730 = pneg %p157
        $region114: #{_lambda_.4} parent=95 // pred_check_branch
          %732 = sbr.rel (%p730) target = $region116
        $region115: #{_lambda_.4} parent=95 // pred_region
          %p733 = scmp.lt.s32.totalorder %s33, 1
          %s734 = scalar_select %p733, %s33, 1
          %s735 = smul.addr %s734, 8
          %s736 = scalar_lea.vmem %s4, %s735
        $region116: #{_lambda_.4} parent=95 // pred_fallthru
          _
      $region96: #{_lambda_.4} parent=5 // pred_fallthru
        _
      %p737 = scmp.le.s32.totalorder 1, %s33
      %p738 = scmp.lt.s32.totalorder %s33, 3
      %p739 = pnand %p737, %p738
      %p740 = pneg %p739
      // Predicated region
      $region117: #{_lambda_.4} parent=5 // pred_check
        _
      $region118: #{_lambda_.4} parent=5 // pred_check_branch
        %742 = sbr.rel (%p739) target = $region120
      $region119: #{_lambda_.4} parent=5 // pred_region
        %s743 = ssub.s32 %s33, 1
        // Predicated region
        $region121: #{_lambda_.4} parent=119 // pred_check
          %p744 = pneg %p562
        $region122: #{_lambda_.4} parent=119 // pred_check_branch
          %746 = sbr.rel (%p744) target = $region124
        $region123: #{_lambda_.4} parent=119 // pred_region
          %747 = dma.done [#allocation3], 16
        $region124: #{_lambda_.4} parent=119 // pred_fallthru
          _
        // Predicated region
        $region125: #{_lambda_.4} parent=119 // pred_check
          %p748 = pneg %p583
        $region126: #{_lambda_.4} parent=119 // pred_check_branch
          %750 = sbr.rel (%p748) target = $region128
        $region127: #{_lambda_.4} parent=119 // pred_region
          %751 = dma.done [#allocation5], 16
        $region128: #{_lambda_.4} parent=119 // pred_fallthru
          _
        %p752 = scmp.lt.s32.totalorder %s38, 1
        %s753 = scalar_select %p752, %s38, 1
        %s754 = smul.addr %s753, 8
        %s755 = scalar_lea.vmem %s0, %s754
        %p756 = pneg %p59
        %p757 = pneg %p56
        %p758 = scmp.lt.s32.totalorder %s38, 1
        %s759 = scalar_select %p758, %s38, 1
        %s760 = smul.addr %s759, 8
        %s761 = scalar_lea.vmem %s1, %s760
        %p762 = pneg %p85
        %p763 = pneg %p82
        %p764 = scmp.lt.s32.totalorder %s38, 1
        %s765 = scalar_select %p764, %s38, 1
        %s766 = scalar_lea.vmem %s2, %s765
        %p767 = pneg %p111
        %p768 = pneg %p108
        %p769 = scmp.lt.s32.totalorder %s38, 1
        %s770 = scalar_select %p769, %s38, 1
        %s771 = scalar_lea.vmem %s3, %s770
        %p772 = pneg %p137
        %p773 = pneg %p134
        %p774 = scmp.lt.s32.totalorder %s38, 1
        %s775 = scalar_select %p774, %s38, 1
        %s776 = smul.addr %s775, 8
        %s777 = scalar_lea.vmem %s4, %s776
        %p778 = pneg %p163
        %p779 = pneg %p160
        %p780 = pneg %p184
        %p781 = pneg %p181
        %p782 = pneg %p205
        %p783 = pneg %p202
        %p784 = pneg %p226
        %p785 = pneg %p223
        %p786 = pneg %p247
        %p787 = pneg %p244
        %p788 = pneg %p268
        %p789 = pneg %p265
        %p790 = pneg %p289
        %p791 = pneg %p286
        %p792 = pneg %p310
        %p793 = pneg %p307
        %p794 = pneg %p331
        %p795 = pneg %p328
        %p796 = pneg %p352
        %p797 = pneg %p349
        %p798 = pneg %p373
        %p799 = pneg %p370
        %p800 = pneg %p394
        %p801 = pneg %p391
        %p802 = pneg %p415
        %p803 = pneg %p412
        %p804 = pneg %p436
        %p805 = pneg %p433
        %p806 = pneg %p457
        %p807 = pneg %p454
        %p808 = pneg %p478
        %p809 = pneg %p475
        %p810 = pneg %p499
        %p811 = pneg %p496
        %p812 = pneg %p520
        %p813 = pneg %p517
        %p814 = pneg %p541
        %p815 = pneg %p538
        %p816 = pneg %p562
        %p817 = pneg %p559
        %p818 = pneg %p583
        %p819 = pneg %p580
        %p820 = pneg %p609
        %p821 = pneg %p606
        %p822 = scmp.lt.s32.totalorder %s38, 1
        %s823 = scalar_select %p822, %s38, 1
        %s824 = smul.addr %s823, 8
        %s825 = scalar_lea.vmem %s25, %s824
        %p826 = scmp.lt.s32.totalorder %s38, 1
        %s827 = scalar_select %p826, %s38, 1
        %s828 = smul.addr %s827, 8
        %s829 = scalar_lea.vmem %s0, %s828
        %p830 = scmp.lt.s32.totalorder %s38, 1
        %s831 = scalar_select %p830, %s38, 1
        %s832 = smul.addr %s831, 8
        %s833 = scalar_lea.vmem %s1, %s832
        %p834 = scmp.lt.s32.totalorder %s38, 1
        %s835 = scalar_select %p834, %s38, 1
        %s836 = scalar_lea.vmem %s2, %s835
        %p837 = scmp.lt.s32.totalorder %s38, 1
        %s838 = scalar_select %p837, %s38, 1
        %s839 = scalar_lea.vmem %s3, %s838
        %p840 = scmp.lt.s32.totalorder %s38, 1
        %s841 = scalar_select %p840, %s38, 1
        %s842 = smul.addr %s841, 8
        %s843 = scalar_lea.vmem %s4, %s842
        %p844 = scmp.lt.s32.totalorder %s38, 1
        %s845 = scalar_select %p844, %s38, 1
        %s846 = smul.addr %s845, 8
        %s847 = scalar_lea.vmem %s25, %s846
        %v849 = vld [vmem:[%s843] sm:$0xff]
        %v850 = vld [vmem:[%s829] sm:$0xff]
        %v851 = vpack.c.bf16 %v850, %v850
        %v852 = vld [vmem:[%s5] sm:$0xf]
        %v853 = vld [vmem:[%s5 + $0x4] sm:$0xf]
        %v854 = vld [vmem:[%s5 + $0x8] sm:$0xf]
        %v855 = vld [vmem:[%s5 + $0xc] sm:$0xf]
        %v856 = vld [vmem:[%s6] sm:$0x1]
        %v858 = vlaneseq
        %v859 = vshrl.u32 %v858, 7
        %v860 = vsub.s32 0, %v859
        %v861 = vrot.slane %v856, %v860
        %v867 = vunpack.c.l.b16 %v852
        %v868 = vunpack.c.l.b16 %v853
        %v869 = vunpack.c.l.b16 %v854
        %v870 = vunpack.c.l.b16 %v855
        %v871 = vpack.c.b16 %v868, %v867
        %v872 = vpack.c.b16 %v870, %v869
        %vm875 = vcmask 261120
        %v877 = vsel %vm875, %v851, 0
        %879 = vmatprep.subr.bf16.mxu0 0
        %880 = vmatpush1.bf16.msra.mxu0 %v871
        %881 = vmatprep.subr.bf16.mxu0 0
        %882 = vmatpush1.bf16.msra.mxu0 %v872
        %883 = vmatprep.subr.bf16.mxu0 0
        %884 = vmatpush1.bf16.msra.mxu0 0
        %885 = vmatprep.subr.bf16.mxu0 0
        %886 = vmatpush1.bf16.msra.mxu0 0
        %887 = vmatprep.subr.bf16.mxu0 0
        %888 = vmatpush1.bf16.msra.mxu0 0
        %889 = vmatprep.subr.bf16.mxu0 0
        %890 = vmatpush1.bf16.msra.mxu0 0
        %891 = vmatprep.subr.bf16.mxu0 0
        %892 = vmatpush1.bf16.msra.mxu0 0
        %893 = vmatprep.subr.bf16.mxu0 0
        %894 = vmatpush1.bf16.msra.mxu0 0
        %895 = vmatprep.subr.bf16.mxu0 0
        %896 = vmatpush1.bf16.msra.mxu0 0
        %897 = vmatprep.subr.bf16.mxu0 0
        %898 = vmatpush1.bf16.msra.mxu0 0
        %899 = vmatprep.subr.bf16.mxu0 0
        %900 = vmatpush1.bf16.msra.mxu0 0
        %901 = vmatprep.subr.bf16.mxu0 0
        %902 = vmatpush1.bf16.msra.mxu0 0
        %903 = vmatprep.subr.bf16.mxu0 0
        %904 = vmatpush1.bf16.msra.mxu0 0
        %905 = vmatprep.subr.bf16.mxu0 0
        %906 = vmatpush1.bf16.msra.mxu0 0
        %907 = vmatprep.subr.bf16.mxu0 0
        %908 = vmatpush1.bf16.msra.mxu0 0
        %909 = vmatprep.subr.bf16.mxu0 0
        %910 = vmatpush1.bf16.msra.mxu0 0
        %911 = vmatprep.mubr.bf16.mxu0 0
        %912 = vmatmul.mubr.bf16.gmra.mrb[0].mxu0 %v877
        %v913 = vpop.f32.mrb[0].mxu0
        %v914 = vadd.f32 %v861, %v913
        %v915 = vpop.f32.mrb[0].mxu0
        %v916 = vpop.f32.mrb[0].mxu0
        %v917 = vpop.f32.mrb[0].mxu0
        %918 = vdwg.mxu0
        %v919 = vld [vmem:[%s836] sm:$0x1]
        %vm920 = vcmp.gt.f32.partialorder %v919, 0.0
        %v921 = vsel %vm920, 1, 0
        %v922 = vlaneseq
        %v923 = vshrl.u32 %v922, 7
        %v924 = vsub.s32 0, %v923
        %v925 = vrot.slane %v921, %v924
        %vm926 = vcmp.eq.s32.totalorder %v925, 1
        %v927 = vlaneseq
        %v928 = vshrl.u32 %v927, 7
        %v929 = vlaneseq
        %v930 = vand.u32 %v929, 127
        %vm931 = vcmp.le.s32.totalorder %v930, %v928
        %vm932 = vmand %vm926, %vm931
        %v933 = vpack.c.bf16 %v914, %v914
        %935 = vrot.lane.b32.xlu0 %v933, 96
        %v936 = vpop.permute.xlu0 %935
        %vm937 = vcmask 64512
        %v939 = vsel %vm937, %v933, 0
        %v942 = vsel %vm937, %v936, 0
        %944 = vmatprep.subr.bf16.mxu0 0
        %945 = vmatpush1.bf16.xpose.msra.mxu0 %v942
        %946 = vmatprep.subr.bf16.mxu0 0
        %947 = vmatpush1.bf16.xpose.msra.mxu0 0
        %948 = vmatprep.subr.bf16.mxu0 0
        %949 = vmatpush1.bf16.xpose.msra.mxu0 0
        %950 = vmatprep.subr.bf16.mxu0 0
        %951 = vmatpush1.bf16.xpose.msra.mxu0 0
        %952 = vmatprep.subr.bf16.mxu0 0
        %953 = vmatpush1.bf16.xpose.msra.mxu0 0
        %954 = vmatprep.subr.bf16.mxu0 0
        %955 = vmatpush1.bf16.xpose.msra.mxu0 0
        %956 = vmatprep.subr.bf16.mxu0 0
        %957 = vmatpush1.bf16.xpose.msra.mxu0 0
        %958 = vmatprep.subr.bf16.mxu0 0
        %959 = vmatpush1.bf16.xpose.msra.mxu0 0
        %960 = vmatprep.subr.bf16.mxu0 0
        %961 = vmatpush1.bf16.xpose.msra.mxu0 0
        %962 = vmatprep.subr.bf16.mxu0 0
        %963 = vmatpush1.bf16.xpose.msra.mxu0 0
        %964 = vmatprep.subr.bf16.mxu0 0
        %965 = vmatpush1.bf16.xpose.msra.mxu0 0
        %966 = vmatprep.subr.bf16.mxu0 0
        %967 = vmatpush1.bf16.xpose.msra.mxu0 0
        %968 = vmatprep.subr.bf16.mxu0 0
        %969 = vmatpush1.bf16.xpose.msra.mxu0 0
        %970 = vmatprep.subr.bf16.mxu0 0
        %971 = vmatpush1.bf16.xpose.msra.mxu0 0
        %972 = vmatprep.subr.bf16.mxu0 0
        %973 = vmatpush1.bf16.xpose.msra.mxu0 0
        %974 = vmatprep.subr.bf16.mxu0 0
        %975 = vmatpush1.bf16.xpose.msra.mxu0 0
        %976 = vmatprep.mubr.bf16.mxu0 0
        %977 = vmatmul.mubr.bf16.gmra.mrb[0].mxu0 %v939
        %v978 = vpop.f32.mrb[0].mxu0
        %v979 = vadd.f32 0.0, %v978
        %v980 = vpop.f32.mrb[0].mxu0
        %v981 = vpop.f32.mrb[0].mxu0
        %v982 = vpop.f32.mrb[0].mxu0
        %983 = vdwg.mxu0
        %v984 = vmul.f32 %v979, 0.35355338
        %v985 = vsel %vm932, %v984, -1e+09
        %v986 = vsel %vm937, %v985, -inf
        %987 = vmax.xlane.f32.xlu0 %v986
        %v988 = vpop.xlane.xlu0 %987
        %v989 = vsub.f32 %v985, %v988
        %v990 = vmul.f32 %v989, 1.442695
        %v991 = vpow.pop %v990
        %v992 = vsel %vm937, %v991, 0.0
        %993 = vadd.xlane.f32.xlu0 %v992
        %v994 = vpop.xlane.xlu0 %993
        %v995 = vrcp.pop %v994
        %v996 = vmul.f32 %v991, %v995
        %v997 = vpack.c.bf16 %v996, %v996
        %998 = vrot.lane.b32.xlu0 %v933, 64
        %v999 = vpop.permute.xlu0 %998
        %v1001 = vsel %vm937, %v997, 0
        %vm1003 = vcmask 1043456
        %v1005 = vsel %vm1003, %v999, 0
        %1007 = vmatprep.subr.bf16.mxu0 0
        %1008 = vmatpush1.bf16.msra.mxu0 %v1005
        %1009 = vmatprep.subr.bf16.mxu0 0
        %1010 = vmatpush1.bf16.msra.mxu0 0
        %1011 = vmatprep.subr.bf16.mxu0 0
        %1012 = vmatpush1.bf16.msra.mxu0 0
        %1013 = vmatprep.subr.bf16.mxu0 0
        %1014 = vmatpush1.bf16.msra.mxu0 0
        %1015 = vmatprep.subr.bf16.mxu0 0
        %1016 = vmatpush1.bf16.msra.mxu0 0
        %1017 = vmatprep.subr.bf16.mxu0 0
        %1018 = vmatpush1.bf16.msra.mxu0 0
        %1019 = vmatprep.subr.bf16.mxu0 0
        %1020 = vmatpush1.bf16.msra.mxu0 0
        %1021 = vmatprep.subr.bf16.mxu0 0
        %1022 = vmatpush1.bf16.msra.mxu0 0
        %1023 = vmatprep.subr.bf16.mxu0 0
        %1024 = vmatpush1.bf16.msra.mxu0 0
        %1025 = vmatprep.subr.bf16.mxu0 0
        %1026 = vmatpush1.bf16.msra.mxu0 0
        %1027 = vmatprep.subr.bf16.mxu0 0
        %1028 = vmatpush1.bf16.msra.mxu0 0
        %1029 = vmatprep.subr.bf16.mxu0 0
        %1030 = vmatpush1.bf16.msra.mxu0 0
        %1031 = vmatprep.subr.bf16.mxu0 0
        %1032 = vmatpush1.bf16.msra.mxu0 0
        %1033 = vmatprep.subr.bf16.mxu0 0
        %1034 = vmatpush1.bf16.msra.mxu0 0
        %1035 = vmatprep.subr.bf16.mxu0 0
        %1036 = vmatpush1.bf16.msra.mxu0 0
        %1037 = vmatprep.subr.bf16.mxu0 0
        %1038 = vmatpush1.bf16.msra.mxu0 0
        %1039 = vmatprep.mubr.bf16.mxu0 0
        %1040 = vmatmul.mubr.bf16.gmra.mrb[0].mxu0 %v1001
        %v1041 = vpop.f32.mrb[0].mxu0
        %v1042 = vadd.f32 0.0, %v1041
        %v1043 = vpop.f32.mrb[0].mxu0
        %v1044 = vpop.f32.mrb[0].mxu0
        %v1045 = vpop.f32.mrb[0].mxu0
        %1046 = vdwg.mxu0
        %1047 = vrot.lane.b32.xlu0 %v933, 120
        %v1048 = vpop.permute.xlu0 %1047
        %1049 = vrot.lane.b32.xlu0 %v933, 88
        %v1050 = vpop.permute.xlu0 %1049
        %v1052 = vsel %vm937, %v1048, 0
        %v1055 = vsel %vm937, %v1050, 0
        %1057 = vmatprep.subr.bf16.mxu0 0
        %1058 = vmatpush1.bf16.xpose.msra.mxu0 %v1055
        %1059 = vmatprep.subr.bf16.mxu0 0
        %1060 = vmatpush1.bf16.xpose.msra.mxu0 0
        %1061 = vmatprep.subr.bf16.mxu0 0
        %1062 = vmatpush1.bf16.xpose.msra.mxu0 0
        %1063 = vmatprep.subr.bf16.mxu0 0
        %1064 = vmatpush1.bf16.xpose.msra.mxu0 0
        %1065 = vmatprep.subr.bf16.mxu0 0
        %1066 = vmatpush1.bf16.xpose.msra.mxu0 0
        %1067 = vmatprep.subr.bf16.mxu0 0
        %1068 = vmatpush1.bf16.xpose.msra.mxu0 0
        %1069 = vmatprep.subr.bf16.mxu0 0
        %1070 = vmatpush1.bf16.xpose.msra.mxu0 0
        %1071 = vmatprep.subr.bf16.mxu0 0
        %1072 = vmatpush1.bf16.xpose.msra.mxu0 0
        %1073 = vmatprep.subr.bf16.mxu0 0
        %1074 = vmatpush1.bf16.xpose.msra.mxu0 0
        %1075 = vmatprep.subr.bf16.mxu0 0
        %1076 = vmatpush1.bf16.xpose.msra.mxu0 0
        %1077 = vmatprep.subr.bf16.mxu0 0
        %1078 = vmatpush1.bf16.xpose.msra.mxu0 0
        %1079 = vmatprep.subr.bf16.mxu0 0
        %1080 = vmatpush1.bf16.xpose.msra.mxu0 0
        %1081 = vmatprep.subr.bf16.mxu0 0
        %1082 = vmatpush1.bf16.xpose.msra.mxu0 0
        %1083 = vmatprep.subr.bf16.mxu0 0
        %1084 = vmatpush1.bf16.xpose.msra.mxu0 0
        %1085 = vmatprep.subr.bf16.mxu0 0
        %1086 = vmatpush1.bf16.xpose.msra.mxu0 0
        %1087 = vmatprep.subr.bf16.mxu0 0
        %1088 = vmatpush1.bf16.xpose.msra.mxu0 0
        %1089 = vmatprep.mubr.bf16.mxu0 0
        %1090 = vmatmul.mubr.bf16.gmra.mrb[0].mxu0 %v1052
        %v1091 = vpop.f32.mrb[0].mxu0
        %v1092 = vadd.f32 0.0, %v1091
        %v1093 = vpop.f32.mrb[0].mxu0
        %v1094 = vpop.f32.mrb[0].mxu0
        %v1095 = vpop.f32.mrb[0].mxu0
        %1096 = vdwg.mxu0
        %v1097 = vmul.f32 %v1092, 0.35355338
        %v1098 = vsel %vm932, %v1097, -1e+09
        %v1099 = vsel %vm937, %v1098, -inf
        %1100 = vmax.xlane.f32.xlu0 %v1099
        %v1101 = vpop.xlane.xlu0 %1100
        %v1102 = vsub.f32 %v1098, %v1101
        %v1103 = vmul.f32 %v1102, 1.442695
        %v1104 = vpow.pop %v1103
        %v1105 = vsel %vm937, %v1104, 0.0
        %1106 = vadd.xlane.f32.xlu0 %v1105
        %v1107 = vpop.xlane.xlu0 %1106
        %v1108 = vrcp.pop %v1107
        %v1109 = vmul.f32 %v1104, %v1108
        %v1110 = vpack.c.bf16 %v1109, %v1109
        %1111 = vrot.lane.b32.xlu0 %v933, 56
        %v1112 = vpop.permute.xlu0 %1111
        %v1114 = vsel %vm937, %v1110, 0
        %v1117 = vsel %vm1003, %v1112, 0
        %1119 = vmatprep.subr.bf16.mxu0 0
        %1120 = vmatpush1.bf16.msra.mxu0 %v1117
        %1121 = vmatprep.subr.bf16.mxu0 0
        %1122 = vmatpush1.bf16.msra.mxu0 0
        %1123 = vmatprep.subr.bf16.mxu0 0
        %1124 = vmatpush1.bf16.msra.mxu0 0
        %1125 = vmatprep.subr.bf16.mxu0 0
        %1126 = vmatpush1.bf16.msra.mxu0 0
        %1127 = vmatprep.subr.bf16.mxu0 0
        %1128 = vmatpush1.bf16.msra.mxu0 0
        %1129 = vmatprep.subr.bf16.mxu0 0
        %1130 = vmatpush1.bf16.msra.mxu0 0
        %1131 = vmatprep.subr.bf16.mxu0 0
        %1132 = vmatpush1.bf16.msra.mxu0 0
        %1133 = vmatprep.subr.bf16.mxu0 0
        %1134 = vmatpush1.bf16.msra.mxu0 0
        %1135 = vmatprep.subr.bf16.mxu0 0
        %1136 = vmatpush1.bf16.msra.mxu0 0
        %1137 = vmatprep.subr.bf16.mxu0 0
        %1138 = vmatpush1.bf16.msra.mxu0 0
        %1139 = vmatprep.subr.bf16.mxu0 0
        %1140 = vmatpush1.bf16.msra.mxu0 0
        %1141 = vmatprep.subr.bf16.mxu0 0
        %1142 = vmatpush1.bf16.msra.mxu0 0
        %1143 = vmatprep.subr.bf16.mxu0 0
        %1144 = vmatpush1.bf16.msra.mxu0 0
        %1145 = vmatprep.subr.bf16.mxu0 0
        %1146 = vmatpush1.bf16.msra.mxu0 0
        %1147 = vmatprep.subr.bf16.mxu0 0
        %1148 = vmatpush1.bf16.msra.mxu0 0
        %1149 = vmatprep.subr.bf16.mxu0 0
        %1150 = vmatpush1.bf16.msra.mxu0 0
        %1151 = vmatprep.mubr.bf16.mxu0 0
        %1152 = vmatmul.mubr.bf16.gmra.mrb[0].mxu0 %v1114
        %v1153 = vpop.f32.mrb[0].mxu0
        %v1154 = vadd.f32 0.0, %v1153
        %v1155 = vpop.f32.mrb[0].mxu0
        %v1156 = vpop.f32.mrb[0].mxu0
        %v1157 = vpop.f32.mrb[0].mxu0
        %1158 = vdwg.mxu0
        %1159 = vrot.lane.b32.xlu0 %v933, 112
        %v1160 = vpop.permute.xlu0 %1159
        %1161 = vrot.lane.b32.xlu0 %v933, 80
        %v1162 = vpop.permute.xlu0 %1161
        %v1164 = vsel %vm937, %v1160, 0
        %v1167 = vsel %vm937, %v1162, 0
        %1169 = vmatprep.subr.bf16.mxu0 0
        %1170 = vmatpush1.bf16.xpose.msra.mxu0 %v1167
        %1171 = vmatprep.subr.bf16.mxu0 0
        %1172 = vmatpush1.bf16.xpose.msra.mxu0 0
        %1173 = vmatprep.subr.bf16.mxu0 0
        %1174 = vmatpush1.bf16.xpose.msra.mxu0 0
        %1175 = vmatprep.subr.bf16.mxu0 0
        %1176 = vmatpush1.bf16.xpose.msra.mxu0 0
        %1177 = vmatprep.subr.bf16.mxu0 0
        %1178 = vmatpush1.bf16.xpose.msra.mxu0 0
        %1179 = vmatprep.subr.bf16.mxu0 0
        %1180 = vmatpush1.bf16.xpose.msra.mxu0 0
        %1181 = vmatprep.subr.bf16.mxu0 0
        %1182 = vmatpush1.bf16.xpose.msra.mxu0 0
        %1183 = vmatprep.subr.bf16.mxu0 0
        %1184 = vmatpush1.bf16.xpose.msra.mxu0 0
        %1185 = vmatprep.subr.bf16.mxu0 0
        %1186 = vmatpush1.bf16.xpose.msra.mxu0 0
        %1187 = vmatprep.subr.bf16.mxu0 0
        %1188 = vmatpush1.bf16.xpose.msra.mxu0 0
        %1189 = vmatprep.subr.bf16.mxu0 0
        %1190 = vmatpush1.bf16.xpose.msra.mxu0 0
        %1191 = vmatprep.subr.bf16.mxu0 0
        %1192 = vmatpush1.bf16.xpose.msra.mxu0 0
        %1193 = vmatprep.subr.bf16.mxu0 0
        %1194 = vmatpush1.bf16.xpose.msra.mxu0 0
        %1195 = vmatprep.subr.bf16.mxu0 0
        %1196 = vmatpush1.bf16.xpose.msra.mxu0 0
        %1197 = vmatprep.subr.bf16.mxu0 0
        %1198 = vmatpush1.bf16.xpose.msra.mxu0 0
        %1199 = vmatprep.subr.bf16.mxu0 0
        %1200 = vmatpush1.bf16.xpose.msra.mxu0 0
        %1201 = vmatprep.mubr.bf16.mxu0 0
        %1202 = vmatmul.mubr.bf16.gmra.mrb[0].mxu0 %v1164
        %v1203 = vpop.f32.mrb[0].mxu0
        %v1204 = vadd.f32 0.0, %v1203
        %v1205 = vpop.f32.mrb[0].mxu0
        %v1206 = vpop.f32.mrb[0].mxu0
        %v1207 = vpop.f32.mrb[0].mxu0
        %1208 = vdwg.mxu0
        %v1209 = vmul.f32 %v1204, 0.35355338
        %v1210 = vsel %vm932, %v1209, -1e+09
        %v1211 = vsel %vm937, %v1210, -inf
        %1212 = vmax.xlane.f32.xlu0 %v1211
        %v1213 = vpop.xlane.xlu0 %1212
        %v1214 = vsub.f32 %v1210, %v1213
        %v1215 = vmul.f32 %v1214, 1.442695
        %v1216 = vpow.pop %v1215
        %v1217 = vsel %vm937, %v1216, 0.0
        %1218 = vadd.xlane.f32.xlu0 %v1217
        %v1219 = vpop.xlane.xlu0 %1218
        %v1220 = vrcp.pop %v1219
        %v1221 = vmul.f32 %v1216, %v1220
        %v1222 = vpack.c.bf16 %v1221, %v1221
        %1223 = vrot.lane.b32.xlu0 %v933, 48
        %v1224 = vpop.permute.xlu0 %1223
        %v1226 = vsel %vm937, %v1222, 0
        %v1229 = vsel %vm1003, %v1224, 0
        %1231 = vmatprep.subr.bf16.mxu0 0
        %1232 = vmatpush1.bf16.msra.mxu0 %v1229
        %1233 = vmatprep.subr.bf16.mxu0 0
        %1234 = vmatpush1.bf16.msra.mxu0 0
        %1235 = vmatprep.subr.bf16.mxu0 0
        %1236 = vmatpush1.bf16.msra.mxu0 0
        %1237 = vmatprep.subr.bf16.mxu0 0
        %1238 = vmatpush1.bf16.msra.mxu0 0
        %1239 = vmatprep.subr.bf16.mxu0 0
        %1240 = vmatpush1.bf16.msra.mxu0 0
        %1241 = vmatprep.subr.bf16.mxu0 0
        %1242 = vmatpush1.bf16.msra.mxu0 0
        %1243 = vmatprep.subr.bf16.mxu0 0
        %1244 = vmatpush1.bf16.msra.mxu0 0
        %1245 = vmatprep.subr.bf16.mxu0 0
        %1246 = vmatpush1.bf16.msra.mxu0 0
        %1247 = vmatprep.subr.bf16.mxu0 0
        %1248 = vmatpush1.bf16.msra.mxu0 0
        %1249 = vmatprep.subr.bf16.mxu0 0
        %1250 = vmatpush1.bf16.msra.mxu0 0
        %1251 = vmatprep.subr.bf16.mxu0 0
        %1252 = vmatpush1.bf16.msra.mxu0 0
        %1253 = vmatprep.subr.bf16.mxu0 0
        %1254 = vmatpush1.bf16.msra.mxu0 0
        %1255 = vmatprep.subr.bf16.mxu0 0
        %1256 = vmatpush1.bf16.msra.mxu0 0
        %1257 = vmatprep.subr.bf16.mxu0 0
        %1258 = vmatpush1.bf16.msra.mxu0 0
        %1259 = vmatprep.subr.bf16.mxu0 0
        %1260 = vmatpush1.bf16.msra.mxu0 0
        %1261 = vmatprep.subr.bf16.mxu0 0
        %1262 = vmatpush1.bf16.msra.mxu0 0
        %1263 = vmatprep.mubr.bf16.mxu0 0
        %1264 = vmatmul.mubr.bf16.gmra.mrb[0].mxu0 %v1226
        %v1265 = vpop.f32.mrb[0].mxu0
        %v1266 = vadd.f32 0.0, %v1265
        %v1267 = vpop.f32.mrb[0].mxu0
        %v1268 = vpop.f32.mrb[0].mxu0
        %v1269 = vpop.f32.mrb[0].mxu0
        %1270 = vdwg.mxu0
        %1271 = vrot.lane.b32.xlu0 %v933, 104
        %v1272 = vpop.permute.xlu0 %1271
        %1273 = vrot.lane.b32.xlu0 %v933, 72
        %v1274 = vpop.permute.xlu0 %1273
        %v1276 = vsel %vm937, %v1272, 0
        %v1279 = vsel %vm937, %v1274, 0
        %1281 = vmatprep.subr.bf16.mxu0 0
        %1282 = vmatpush1.bf16.xpose.msra.mxu0 %v1279
        %1283 = vmatprep.subr.bf16.mxu0 0
        %1284 = vmatpush1.bf16.xpose.msra.mxu0 0
        %1285 = vmatprep.subr.bf16.mxu0 0
        %1286 = vmatpush1.bf16.xpose.msra.mxu0 0
        %1287 = vmatprep.subr.bf16.mxu0 0
        %1288 = vmatpush1.bf16.xpose.msra.mxu0 0
        %1289 = vmatprep.subr.bf16.mxu0 0
        %1290 = vmatpush1.bf16.xpose.msra.mxu0 0
        %1291 = vmatprep.subr.bf16.mxu0 0
        %1292 = vmatpush1.bf16.xpose.msra.mxu0 0
        %1293 = vmatprep.subr.bf16.mxu0 0
        %1294 = vmatpush1.bf16.xpose.msra.mxu0 0
        %1295 = vmatprep.subr.bf16.mxu0 0
        %1296 = vmatpush1.bf16.xpose.msra.mxu0 0
        %1297 = vmatprep.subr.bf16.mxu0 0
        %1298 = vmatpush1.bf16.xpose.msra.mxu0 0
        %1299 = vmatprep.subr.bf16.mxu0 0
        %1300 = vmatpush1.bf16.xpose.msra.mxu0 0
        %1301 = vmatprep.subr.bf16.mxu0 0
        %1302 = vmatpush1.bf16.xpose.msra.mxu0 0
        %1303 = vmatprep.subr.bf16.mxu0 0
        %1304 = vmatpush1.bf16.xpose.msra.mxu0 0
        %1305 = vmatprep.subr.bf16.mxu0 0
        %1306 = vmatpush1.bf16.xpose.msra.mxu0 0
        %1307 = vmatprep.subr.bf16.mxu0 0
        %1308 = vmatpush1.bf16.xpose.msra.mxu0 0
        %1309 = vmatprep.subr.bf16.mxu0 0
        %1310 = vmatpush1.bf16.xpose.msra.mxu0 0
        %1311 = vmatprep.subr.bf16.mxu0 0
        %1312 = vmatpush1.bf16.xpose.msra.mxu0 0
        %1313 = vmatprep.mubr.bf16.mxu0 0
        %1314 = vmatmul.mubr.bf16.gmra.mrb[0].mxu0 %v1276
        %v1315 = vpop.f32.mrb[0].mxu0
        %v1316 = vadd.f32 0.0, %v1315
        %v1317 = vpop.f32.mrb[0].mxu0
        %v1318 = vpop.f32.mrb[0].mxu0
        %v1319 = vpop.f32.mrb[0].mxu0
        %1320 = vdwg.mxu0
        %v1321 = vmul.f32 %v1316, 0.35355338
        %v1322 = vsel %vm932, %v1321, -1e+09
        %v1323 = vsel %vm937, %v1322, -inf
        %1324 = vmax.xlane.f32.xlu0 %v1323
        %v1325 = vpop.xlane.xlu0 %1324
        %v1326 = vsub.f32 %v1322, %v1325
        %v1327 = vmul.f32 %v1326, 1.442695
        %v1328 = vpow.pop %v1327
        %v1329 = vsel %vm937, %v1328, 0.0
        %1330 = vadd.xlane.f32.xlu0 %v1329
        %v1331 = vpop.xlane.xlu0 %1330
        %v1332 = vrcp.pop %v1331
        %v1333 = vmul.f32 %v1328, %v1332
        %v1334 = vpack.c.bf16 %v1333, %v1333
        %1335 = vrot.lane.b32.xlu0 %v933, 40
        %v1336 = vpop.permute.xlu0 %1335
        %v1338 = vsel %vm937, %v1334, 0
        %v1341 = vsel %vm1003, %v1336, 0
        %1343 = vmatprep.subr.bf16.mxu0 0
        %1344 = vmatpush1.bf16.msra.mxu0 %v1341
        %1345 = vmatprep.subr.bf16.mxu0 0
        %1346 = vmatpush1.bf16.msra.mxu0 0
        %1347 = vmatprep.subr.bf16.mxu0 0
        %1348 = vmatpush1.bf16.msra.mxu0 0
        %1349 = vmatprep.subr.bf16.mxu0 0
        %1350 = vmatpush1.bf16.msra.mxu0 0
        %1351 = vmatprep.subr.bf16.mxu0 0
        %1352 = vmatpush1.bf16.msra.mxu0 0
        %1353 = vmatprep.subr.bf16.mxu0 0
        %1354 = vmatpush1.bf16.msra.mxu0 0
        %1355 = vmatprep.subr.bf16.mxu0 0
        %1356 = vmatpush1.bf16.msra.mxu0 0
        %1357 = vmatprep.subr.bf16.mxu0 0
        %1358 = vmatpush1.bf16.msra.mxu0 0
        %1359 = vmatprep.subr.bf16.mxu0 0
        %1360 = vmatpush1.bf16.msra.mxu0 0
        %1361 = vmatprep.subr.bf16.mxu0 0
        %1362 = vmatpush1.bf16.msra.mxu0 0
        %1363 = vmatprep.subr.bf16.mxu0 0
        %1364 = vmatpush1.bf16.msra.mxu0 0
        %1365 = vmatprep.subr.bf16.mxu0 0
        %1366 = vmatpush1.bf16.msra.mxu0 0
        %1367 = vmatprep.subr.bf16.mxu0 0
        %1368 = vmatpush1.bf16.msra.mxu0 0
        %1369 = vmatprep.subr.bf16.mxu0 0
        %1370 = vmatpush1.bf16.msra.mxu0 0
        %1371 = vmatprep.subr.bf16.mxu0 0
        %1372 = vmatpush1.bf16.msra.mxu0 0
        %1373 = vmatprep.subr.bf16.mxu0 0
        %1374 = vmatpush1.bf16.msra.mxu0 0
        %1375 = vmatprep.mubr.bf16.mxu0 0
        %1376 = vmatmul.mubr.bf16.gmra.mrb[0].mxu0 %v1338
        %v1377 = vpop.f32.mrb[0].mxu0
        %v1378 = vadd.f32 0.0, %v1377
        %v1379 = vpop.f32.mrb[0].mxu0
        %v1380 = vpop.f32.mrb[0].mxu0
        %v1381 = vpop.f32.mrb[0].mxu0
        %1382 = vdwg.mxu0
        %1384 = vrot.lane.b32.xlu0 %v1154, 8
        %v1385 = vpop.permute.xlu0 %1384
        %1388 = vrot.lane.b32.xlu0 %v1266, 16
        %v1389 = vpop.permute.xlu0 %1388
        %1392 = vrot.lane.b32.xlu0 %v1378, 24
        %v1393 = vpop.permute.xlu0 %1392
        %v1395 = vsel %vm937, %v1042, %v1385
        %vm1396 = vcmask 130048
        %v1397 = vsel %vm1396, %v1395, %v1389
        %vm1398 = vcmask 195584
        %v1399 = vsel %vm1398, %v1397, %v1393
        %v1400 = vpack.c.bf16 %v1399, %v1399
        %v1401 = vld [vmem:[%s7] sm:$0xf]
        %v1402 = vld [vmem:[%s7 + $0x4] sm:$0xf]
        %v1403 = vld [vmem:[%s7 + $0x8] sm:$0xf]
        %v1404 = vld [vmem:[%s7 + $0xc] sm:$0xf]
        %v1409 = vunpack.c.l.b16 %v1401
        %v1410 = vunpack.c.l.b16 %v1402
        %v1411 = vunpack.c.l.b16 %v1403
        %v1412 = vunpack.c.l.b16 %v1404
        %v1413 = vpack.c.b16 %v1410, %v1409
        %v1414 = vpack.c.b16 %v1412, %v1411
        %v1418 = vsel %vm875, %v1400, 0
        %1420 = vmatprep.subr.bf16.mxu0 0
        %1421 = vmatpush1.bf16.msra.mxu0 %v1413
        %1422 = vmatprep.subr.bf16.mxu0 0
        %1423 = vmatpush1.bf16.msra.mxu0 %v1414
        %1424 = vmatprep.subr.bf16.mxu0 0
        %1425 = vmatpush1.bf16.msra.mxu0 0
        %1426 = vmatprep.subr.bf16.mxu0 0
        %1427 = vmatpush1.bf16.msra.mxu0 0
        %1428 = vmatprep.subr.bf16.mxu0 0
        %1429 = vmatpush1.bf16.msra.mxu0 0
        %1430 = vmatprep.subr.bf16.mxu0 0
        %1431 = vmatpush1.bf16.msra.mxu0 0
        %1432 = vmatprep.subr.bf16.mxu0 0
        %1433 = vmatpush1.bf16.msra.mxu0 0
        %1434 = vmatprep.subr.bf16.mxu0 0
        %1435 = vmatpush1.bf16.msra.mxu0 0
        %1436 = vmatprep.subr.bf16.mxu0 0
        %1437 = vmatpush1.bf16.msra.mxu0 0
        %1438 = vmatprep.subr.bf16.mxu0 0
        %1439 = vmatpush1.bf16.msra.mxu0 0
        %1440 = vmatprep.subr.bf16.mxu0 0
        %1441 = vmatpush1.bf16.msra.mxu0 0
        %1442 = vmatprep.subr.bf16.mxu0 0
        %1443 = vmatpush1.bf16.msra.mxu0 0
        %1444 = vmatprep.subr.bf16.mxu0 0
        %1445 = vmatpush1.bf16.msra.mxu0 0
        %1446 = vmatprep.subr.bf16.mxu0 0
        %1447 = vmatpush1.bf16.msra.mxu0 0
        %1448 = vmatprep.subr.bf16.mxu0 0
        %1449 = vmatpush1.bf16.msra.mxu0 0
        %1450 = vmatprep.subr.bf16.mxu0 0
        %1451 = vmatpush1.bf16.msra.mxu0 0
        %1452 = vmatprep.mubr.bf16.mxu0 0
        %1453 = vmatmul.mubr.bf16.gmra.mrb[0].mxu0 %v1418
        %v1454 = vpop.f32.mrb[0].mxu0
        %v1455 = vadd.f32 0.0, %v1454
        %v1456 = vpop.f32.mrb[0].mxu0
        %v1457 = vpop.f32.mrb[0].mxu0
        %v1458 = vpop.f32.mrb[0].mxu0
        %1459 = vdwg.mxu0
        %v1460 = vadd.f32 %v850, %v1455
        %v1461 = vld [vmem:[%s8] sm:$0x1]
        %v1463 = vlaneseq
        %v1464 = vshrl.u32 %v1463, 7
        %v1465 = vsub.s32 0, %v1464
        %v1466 = vrot.slane %v1461, %v1465
        %v1468 = vadd.f32 %v1460, %v1466
        %v1469 = vld [vmem:[%s9] sm:$0x1]
        %v1470 = vld [vmem:[%s10] sm:$0x1]
        %v1471 = vsel %vm875, %v1468, 0.0
        %1472 = vadd.xlane.f32.xlu0 %v1471
        %v1473 = vpop.xlane.xlu0 %1472
        %v1474 = vrcp.pop 32.0
        %v1475 = vmul.f32 %v1473, %v1474
        %v1476 = vsub.f32 %v1468, %v1475
        %v1477 = vmul.f32 %v1476, %v1476
        %v1478 = vsel %vm875, %v1477, 0.0
        %1479 = vadd.xlane.f32.xlu0 %v1478
        %v1480 = vpop.xlane.xlu0 %1479
        %v1481 = vmul.f32 %v1480, %v1474
        %v1482 = vadd.f32 %v1481, 1e-05
        %v1483 = vrsqrt.pop %v1482
        %v1484 = vmul.f32 %v1476, %v1483
        %v1486 = vlaneseq
        %v1487 = vshrl.u32 %v1486, 7
        %v1488 = vsub.s32 0, %v1487
        %v1489 = vrot.slane %v1469, %v1488
        %v1491 = vmul.f32 %v1484, %v1489
        %v1493 = vlaneseq
        %v1494 = vshrl.u32 %v1493, 7
        %v1495 = vsub.s32 0, %v1494
        %v1496 = vrot.slane %v1470, %v1495
        %v1498 = vadd.f32 %v1491, %v1496
        %1500 = vset.pattern.permute.xlu0 0
        %1501 = vperm.xlu0 %1500, %v849
        %v1502 = vpop.permute.xlu0 %1501
        %v1504 = vmul.f32 %v1498, %v1502
        %v1505 = vpack.c.bf16 %v1504, %v1504
        %v1506 = vld [vmem:[%s11] sm:$0xf]
        %v1507 = vld [vmem:[%s11 + $0x4] sm:$0xf]
        %v1508 = vld [vmem:[%s11 + $0x8] sm:$0xf]
        %v1509 = vld [vmem:[%s11 + $0xc] sm:$0xf]
        %v1510 = vld [vmem:[%s12] sm:$0x1]
        %v1512 = vlaneseq
        %v1513 = vshrl.u32 %v1512, 7
        %v1514 = vsub.s32 0, %v1513
        %v1515 = vrot.slane %v1510, %v1514
        %v1521 = vunpack.c.l.b16 %v1506
        %v1522 = vunpack.c.l.b16 %v1507
        %v1523 = vunpack.c.l.b16 %v1508
        %v1524 = vunpack.c.l.b16 %v1509
        %v1525 = vpack.c.b16 %v1522, %v1521
        %v1526 = vpack.c.b16 %v1524, %v1523
        %v1530 = vsel %vm875, %v1505, 0
        %1532 = vmatprep.subr.bf16.mxu0 0
        %1533 = vmatpush1.bf16.msra.mxu0 %v1525
        %1534 = vmatprep.subr.bf16.mxu0 0
        %1535 = vmatpush1.bf16.msra.mxu0 %v1526
        %1536 = vmatprep.subr.bf16.mxu0 0
        %1537 = vmatpush1.bf16.msra.mxu0 0
        %1538 = vmatprep.subr.bf16.mxu0 0
        %1539 = vmatpush1.bf16.msra.mxu0 0
        %1540 = vmatprep.subr.bf16.mxu0 0
        %1541 = vmatpush1.bf16.msra.mxu0 0
        %1542 = vmatprep.subr.bf16.mxu0 0
        %1543 = vmatpush1.bf16.msra.mxu0 0
        %1544 = vmatprep.subr.bf16.mxu0 0
        %1545 = vmatpush1.bf16.msra.mxu0 0
        %1546 = vmatprep.subr.bf16.mxu0 0
        %1547 = vmatpush1.bf16.msra.mxu0 0
        %1548 = vmatprep.subr.bf16.mxu0 0
        %1549 = vmatpush1.bf16.msra.mxu0 0
        %1550 = vmatprep.subr.bf16.mxu0 0
        %1551 = vmatpush1.bf16.msra.mxu0 0
        %1552 = vmatprep.subr.bf16.mxu0 0
        %1553 = vmatpush1.bf16.msra.mxu0 0
        %1554 = vmatprep.subr.bf16.mxu0 0
        %1555 = vmatpush1.bf16.msra.mxu0 0
        %1556 = vmatprep.subr.bf16.mxu0 0
        %1557 = vmatpush1.bf16.msra.mxu0 0
        %1558 = vmatprep.subr.bf16.mxu0 0
        %1559 = vmatpush1.bf16.msra.mxu0 0
        %1560 = vmatprep.subr.bf16.mxu0 0
        %1561 = vmatpush1.bf16.msra.mxu0 0
        %1562 = vmatprep.subr.bf16.mxu0 0
        %1563 = vmatpush1.bf16.msra.mxu0 0
        %1564 = vmatprep.mubr.bf16.mxu0 0
        %1565 = vmatmul.mubr.bf16.gmra.mrb[0].mxu0 %v1530
        %v1566 = vpop.f32.mrb[0].mxu0
        %v1567 = vadd.f32 %v1515, %v1566
        %v1568 = vpop.f32.mrb[0].mxu0
        %v1569 = vpop.f32.mrb[0].mxu0
        %v1570 = vpop.f32.mrb[0].mxu0
        %1571 = vdwg.mxu0
        %v1572 = vld [vmem:[%s833] sm:$0xff]
        %v1573 = vpack.c.bf16 %v1572, %v1572
        %v1574 = vld [vmem:[%s13] sm:$0xf]
        %v1575 = vld [vmem:[%s13 + $0x4] sm:$0xf]
        %v1576 = vld [vmem:[%s13 + $0x8] sm:$0xf]
        %v1577 = vld [vmem:[%s13 + $0xc] sm:$0xf]
        %v1578 = vld [vmem:[%s14] sm:$0x1]
        %v1580 = vlaneseq
        %v1581 = vshrl.u32 %v1580, 7
        %v1582 = vsub.s32 0, %v1581
        %v1583 = vrot.slane %v1578, %v1582
        %v1589 = vunpack.c.l.b16 %v1574
        %v1590 = vunpack.c.l.b16 %v1575
        %v1591 = vunpack.c.l.b16 %v1576
        %v1592 = vunpack.c.l.b16 %v1577
        %v1593 = vpack.c.b16 %v1590, %v1589
        %v1594 = vpack.c.b16 %v1592, %v1591
        %v1598 = vsel %vm875, %v1573, 0
        %1600 = vmatprep.subr.bf16.mxu0 0
        %1601 = vmatpush1.bf16.msra.mxu0 %v1593
        %1602 = vmatprep.subr.bf16.mxu0 0
        %1603 = vmatpush1.bf16.msra.mxu0 %v1594
        %1604 = vmatprep.subr.bf16.mxu0 0
        %1605 = vmatpush1.bf16.msra.mxu0 0
        %1606 = vmatprep.subr.bf16.mxu0 0
        %1607 = vmatpush1.bf16.msra.mxu0 0
        %1608 = vmatprep.subr.bf16.mxu0 0
        %1609 = vmatpush1.bf16.msra.mxu0 0
        %1610 = vmatprep.subr.bf16.mxu0 0
        %1611 = vmatpush1.bf16.msra.mxu0 0
        %1612 = vmatprep.subr.bf16.mxu0 0
        %1613 = vmatpush1.bf16.msra.mxu0 0
        %1614 = vmatprep.subr.bf16.mxu0 0
        %1615 = vmatpush1.bf16.msra.mxu0 0
        %1616 = vmatprep.subr.bf16.mxu0 0
        %1617 = vmatpush1.bf16.msra.mxu0 0
        %1618 = vmatprep.subr.bf16.mxu0 0
        %1619 = vmatpush1.bf16.msra.mxu0 0
        %1620 = vmatprep.subr.bf16.mxu0 0
        %1621 = vmatpush1.bf16.msra.mxu0 0
        %1622 = vmatprep.subr.bf16.mxu0 0
        %1623 = vmatpush1.bf16.msra.mxu0 0
        %1624 = vmatprep.subr.bf16.mxu0 0
        %1625 = vmatpush1.bf16.msra.mxu0 0
        %1626 = vmatprep.subr.bf16.mxu0 0
        %1627 = vmatpush1.bf16.msra.mxu0 0
        %1628 = vmatprep.subr.bf16.mxu0 0
        %1629 = vmatpush1.bf16.msra.mxu0 0
        %1630 = vmatprep.subr.bf16.mxu0 0
        %1631 = vmatpush1.bf16.msra.mxu0 0
        %1632 = vmatprep.mubr.bf16.mxu0 0
        %1633 = vmatmul.mubr.bf16.gmra.mrb[0].mxu0 %v1598
        %v1634 = vpop.f32.mrb[0].mxu0
        %v1635 = vadd.f32 %v1583, %v1634
        %v1636 = vpop.f32.mrb[0].mxu0
        %v1637 = vpop.f32.mrb[0].mxu0
        %v1638 = vpop.f32.mrb[0].mxu0
        %1639 = vdwg.mxu0
        %v1640 = vld [vmem:[%s839] sm:$0x1]
        %vm1641 = vcmp.gt.f32.partialorder %v1640, 0.0
        %v1642 = vsel %vm1641, 1, 0
        %v1643 = vlaneseq
        %v1644 = vshrl.u32 %v1643, 7
        %v1645 = vsub.s32 0, %v1644
        %v1646 = vrot.slane %v1642, %v1645
        %vm1647 = vcmp.eq.s32.totalorder %v1646, 1
        %v1648 = vpack.c.bf16 %v1567, %v1567
        %v1649 = vpack.c.bf16 %v1635, %v1635
        %v1651 = vsel %vm937, %v1648, 0
        %v1654 = vsel %vm937, %v1649, 0
        %1656 = vmatprep.subr.bf16.mxu0 0
        %1657 = vmatpush1.bf16.xpose.msra.mxu0 %v1654
        %1658 = vmatprep.subr.bf16.mxu0 0
        %1659 = vmatpush1.bf16.xpose.msra.mxu0 0
        %1660 = vmatprep.subr.bf16.mxu0 0
        %1661 = vmatpush1.bf16.xpose.msra.mxu0 0
        %1662 = vmatprep.subr.bf16.mxu0 0
        %1663 = vmatpush1.bf16.xpose.msra.mxu0 0
        %1664 = vmatprep.subr.bf16.mxu0 0
        %1665 = vmatpush1.bf16.xpose.msra.mxu0 0
        %1666 = vmatprep.subr.bf16.mxu0 0
        %1667 = vmatpush1.bf16.xpose.msra.mxu0 0
        %1668 = vmatprep.subr.bf16.mxu0 0
        %1669 = vmatpush1.bf16.xpose.msra.mxu0 0
        %1670 = vmatprep.subr.bf16.mxu0 0
        %1671 = vmatpush1.bf16.xpose.msra.mxu0 0
        %1672 = vmatprep.subr.bf16.mxu0 0
        %1673 = vmatpush1.bf16.xpose.msra.mxu0 0
        %1674 = vmatprep.subr.bf16.mxu0 0
        %1675 = vmatpush1.bf16.xpose.msra.mxu0 0
        %1676 = vmatprep.subr.bf16.mxu0 0
        %1677 = vmatpush1.bf16.xpose.msra.mxu0 0
        %1678 = vmatprep.subr.bf16.mxu0 0
        %1679 = vmatpush1.bf16.xpose.msra.mxu0 0
        %1680 = vmatprep.subr.bf16.mxu0 0
        %1681 = vmatpush1.bf16.xpose.msra.mxu0 0
        %1682 = vmatprep.subr.bf16.mxu0 0
        %1683 = vmatpush1.bf16.xpose.msra.mxu0 0
        %1684 = vmatprep.subr.bf16.mxu0 0
        %1685 = vmatpush1.bf16.xpose.msra.mxu0 0
        %1686 = vmatprep.subr.bf16.mxu0 0
        %1687 = vmatpush1.bf16.xpose.msra.mxu0 0
        %1688 = vmatprep.mubr.bf16.mxu0 0
        %1689 = vmatmul.mubr.bf16.gmra.mrb[0].mxu0 %v1651
        %v1690 = vpop.f32.mrb[0].mxu0
        %v1691 = vadd.f32 0.0, %v1690
        %v1692 = vpop.f32.mrb[0].mxu0
        %v1693 = vpop.f32.mrb[0].mxu0
        %v1694 = vpop.f32.mrb[0].mxu0
        %1695 = vdwg.mxu0
        %v1696 = vmul.f32 %v1691, 0.35355338
        %v1697 = vsel %vm1647, %v1696, -1e+09
        %v1698 = vsel %vm937, %v1697, -inf
        %1699 = vmax.xlane.f32.xlu0 %v1698
        %v1700 = vpop.xlane.xlu0 %1699
        %v1701 = vsub.f32 %v1697, %v1700
        %v1702 = vmul.f32 %v1701, 1.442695
        %v1703 = vpow.pop %v1702
        %v1704 = vsel %vm937, %v1703, 0.0
        %1705 = vadd.xlane.f32.xlu0 %v1704
        %v1706 = vpop.xlane.xlu0 %1705
        %v1707 = vrcp.pop %v1706
        %v1708 = vmul.f32 %v1703, %v1707
        %v1709 = vpack.c.bf16 %v1708, %v1708
        %1711 = vrot.lane.b32.xlu0 %v1649, 96
        %v1712 = vpop.permute.xlu0 %1711
        %v1714 = vsel %vm937, %v1709, 0
        %v1717 = vsel %vm1003, %v1712, 0
        %1719 = vmatprep.subr.bf16.mxu0 0
        %1720 = vmatpush1.bf16.msra.mxu0 %v1717
        %1721 = vmatprep.subr.bf16.mxu0 0
        %1722 = vmatpush1.bf16.msra.mxu0 0
        %1723 = vmatprep.subr.bf16.mxu0 0
        %1724 = vmatpush1.bf16.msra.mxu0 0
        %1725 = vmatprep.subr.bf16.mxu0 0
        %1726 = vmatpush1.bf16.msra.mxu0 0
        %1727 = vmatprep.subr.bf16.mxu0 0
        %1728 = vmatpush1.bf16.msra.mxu0 0
        %1729 = vmatprep.subr.bf16.mxu0 0
        %1730 = vmatpush1.bf16.msra.mxu0 0
        %1731 = vmatprep.subr.bf16.mxu0 0
        %1732 = vmatpush1.bf16.msra.mxu0 0
        %1733 = vmatprep.subr.bf16.mxu0 0
        %1734 = vmatpush1.bf16.msra.mxu0 0
        %1735 = vmatprep.subr.bf16.mxu0 0
        %1736 = vmatpush1.bf16.msra.mxu0 0
        %1737 = vmatprep.subr.bf16.mxu0 0
        %1738 = vmatpush1.bf16.msra.mxu0 0
        %1739 = vmatprep.subr.bf16.mxu0 0
        %1740 = vmatpush1.bf16.msra.mxu0 0
        %1741 = vmatprep.subr.bf16.mxu0 0
        %1742 = vmatpush1.bf16.msra.mxu0 0
        %1743 = vmatprep.subr.bf16.mxu0 0
        %1744 = vmatpush1.bf16.msra.mxu0 0
        %1745 = vmatprep.subr.bf16.mxu0 0
        %1746 = vmatpush1.bf16.msra.mxu0 0
        %1747 = vmatprep.subr.bf16.mxu0 0
        %1748 = vmatpush1.bf16.msra.mxu0 0
        %1749 = vmatprep.subr.bf16.mxu0 0
        %1750 = vmatpush1.bf16.msra.mxu0 0
        %1751 = vmatprep.mubr.bf16.mxu0 0
        %1752 = vmatmul.mubr.bf16.gmra.mrb[0].mxu0 %v1714
        %v1753 = vpop.f32.mrb[0].mxu0
        %v1754 = vadd.f32 0.0, %v1753
        %v1755 = vpop.f32.mrb[0].mxu0
        %v1756 = vpop.f32.mrb[0].mxu0
        %v1757 = vpop.f32.mrb[0].mxu0
        %1758 = vdwg.mxu0
        %1760 = vrot.lane.b32.xlu0 %v1648, 120
        %v1761 = vpop.permute.xlu0 %1760
        %1762 = vrot.lane.b32.xlu0 %v1649, 120
        %v1763 = vpop.permute.xlu0 %1762
        %v1765 = vsel %vm937, %v1761, 0
        %v1768 = vsel %vm937, %v1763, 0
        %1770 = vmatprep.subr.bf16.mxu0 0
        %1771 = vmatpush1.bf16.xpose.msra.mxu0 %v1768
        %1772 = vmatprep.subr.bf16.mxu0 0
        %1773 = vmatpush1.bf16.xpose.msra.mxu0 0
        %1774 = vmatprep.subr.bf16.mxu0 0
        %1775 = vmatpush1.bf16.xpose.msra.mxu0 0
        %1776 = vmatprep.subr.bf16.mxu0 0
        %1777 = vmatpush1.bf16.xpose.msra.mxu0 0
        %1778 = vmatprep.subr.bf16.mxu0 0
        %1779 = vmatpush1.bf16.xpose.msra.mxu0 0
        %1780 = vmatprep.subr.bf16.mxu0 0
        %1781 = vmatpush1.bf16.xpose.msra.mxu0 0
        %1782 = vmatprep.subr.bf16.mxu0 0
        %1783 = vmatpush1.bf16.xpose.msra.mxu0 0
        %1784 = vmatprep.subr.bf16.mxu0 0
        %1785 = vmatpush1.bf16.xpose.msra.mxu0 0
        %1786 = vmatprep.subr.bf16.mxu0 0
        %1787 = vmatpush1.bf16.xpose.msra.mxu0 0
        %1788 = vmatprep.subr.bf16.mxu0 0
        %1789 = vmatpush1.bf16.xpose.msra.mxu0 0
        %1790 = vmatprep.subr.bf16.mxu0 0
        %1791 = vmatpush1.bf16.xpose.msra.mxu0 0
        %1792 = vmatprep.subr.bf16.mxu0 0
        %1793 = vmatpush1.bf16.xpose.msra.mxu0 0
        %1794 = vmatprep.subr.bf16.mxu0 0
        %1795 = vmatpush1.bf16.xpose.msra.mxu0 0
        %1796 = vmatprep.subr.bf16.mxu0 0
        %1797 = vmatpush1.bf16.xpose.msra.mxu0 0
        %1798 = vmatprep.subr.bf16.mxu0 0
        %1799 = vmatpush1.bf16.xpose.msra.mxu0 0
        %1800 = vmatprep.subr.bf16.mxu0 0
        %1801 = vmatpush1.bf16.xpose.msra.mxu0 0
        %1802 = vmatprep.mubr.bf16.mxu0 0
        %1803 = vmatmul.mubr.bf16.gmra.mrb[0].mxu0 %v1765
        %v1804 = vpop.f32.mrb[0].mxu0
        %v1805 = vadd.f32 0.0, %v1804
        %v1806 = vpop.f32.mrb[0].mxu0
        %v1807 = vpop.f32.mrb[0].mxu0
        %v1808 = vpop.f32.mrb[0].mxu0
        %1809 = vdwg.mxu0
        %v1810 = vmul.f32 %v1805, 0.35355338
        %v1811 = vsel %vm1647, %v1810, -1e+09
        %v1812 = vsel %vm937, %v1811, -inf
        %1813 = vmax.xlane.f32.xlu0 %v1812
        %v1814 = vpop.xlane.xlu0 %1813
        %v1815 = vsub.f32 %v1811, %v1814
        %v1816 = vmul.f32 %v1815, 1.442695
        %v1817 = vpow.pop %v1816
        %v1818 = vsel %vm937, %v1817, 0.0
        %1819 = vadd.xlane.f32.xlu0 %v1818
        %v1820 = vpop.xlane.xlu0 %1819
        %v1821 = vrcp.pop %v1820
        %v1822 = vmul.f32 %v1817, %v1821
        %v1823 = vpack.c.bf16 %v1822, %v1822
        %1824 = vrot.lane.b32.xlu0 %v1649, 88
        %v1825 = vpop.permute.xlu0 %1824
        %v1827 = vsel %vm937, %v1823, 0
        %v1830 = vsel %vm1003, %v1825, 0
        %1832 = vmatprep.subr.bf16.mxu0 0
        %1833 = vmatpush1.bf16.msra.mxu0 %v1830
        %1834 = vmatprep.subr.bf16.mxu0 0
        %1835 = vmatpush1.bf16.msra.mxu0 0
        %1836 = vmatprep.subr.bf16.mxu0 0
        %1837 = vmatpush1.bf16.msra.mxu0 0
        %1838 = vmatprep.subr.bf16.mxu0 0
        %1839 = vmatpush1.bf16.msra.mxu0 0
        %1840 = vmatprep.subr.bf16.mxu0 0
        %1841 = vmatpush1.bf16.msra.mxu0 0
        %1842 = vmatprep.subr.bf16.mxu0 0
        %1843 = vmatpush1.bf16.msra.mxu0 0
        %1844 = vmatprep.subr.bf16.mxu0 0
        %1845 = vmatpush1.bf16.msra.mxu0 0
        %1846 = vmatprep.subr.bf16.mxu0 0
        %1847 = vmatpush1.bf16.msra.mxu0 0
        %1848 = vmatprep.subr.bf16.mxu0 0
        %1849 = vmatpush1.bf16.msra.mxu0 0
        %1850 = vmatprep.subr.bf16.mxu0 0
        %1851 = vmatpush1.bf16.msra.mxu0 0
        %1852 = vmatprep.subr.bf16.mxu0 0
        %1853 = vmatpush1.bf16.msra.mxu0 0
        %1854 = vmatprep.subr.bf16.mxu0 0
        %1855 = vmatpush1.bf16.msra.mxu0 0
        %1856 = vmatprep.subr.bf16.mxu0 0
        %1857 = vmatpush1.bf16.msra.mxu0 0
        %1858 = vmatprep.subr.bf16.mxu0 0
        %1859 = vmatpush1.bf16.msra.mxu0 0
        %1860 = vmatprep.subr.bf16.mxu0 0
        %1861 = vmatpush1.bf16.msra.mxu0 0
        %1862 = vmatprep.subr.bf16.mxu0 0
        %1863 = vmatpush1.bf16.msra.mxu0 0
        %1864 = vmatprep.mubr.bf16.mxu0 0
        %1865 = vmatmul.mubr.bf16.gmra.mrb[0].mxu0 %v1827
        %v1866 = vpop.f32.mrb[0].mxu0
        %v1867 = vadd.f32 0.0, %v1866
        %v1868 = vpop.f32.mrb[0].mxu0
        %v1869 = vpop.f32.mrb[0].mxu0
        %v1870 = vpop.f32.mrb[0].mxu0
        %1871 = vdwg.mxu0
        %1872 = vrot.lane.b32.xlu0 %v1648, 112
        %v1873 = vpop.permute.xlu0 %1872
        %1874 = vrot.lane.b32.xlu0 %v1649, 112
        %v1875 = vpop.permute.xlu0 %1874
        %v1877 = vsel %vm937, %v1873, 0
        %v1880 = vsel %vm937, %v1875, 0
        %1882 = vmatprep.subr.bf16.mxu0 0
        %1883 = vmatpush1.bf16.xpose.msra.mxu0 %v1880
        %1884 = vmatprep.subr.bf16.mxu0 0
        %1885 = vmatpush1.bf16.xpose.msra.mxu0 0
        %1886 = vmatprep.subr.bf16.mxu0 0
        %1887 = vmatpush1.bf16.xpose.msra.mxu0 0
        %1888 = vmatprep.subr.bf16.mxu0 0
        %1889 = vmatpush1.bf16.xpose.msra.mxu0 0
        %1890 = vmatprep.subr.bf16.mxu0 0
        %1891 = vmatpush1.bf16.xpose.msra.mxu0 0
        %1892 = vmatprep.subr.bf16.mxu0 0
        %1893 = vmatpush1.bf16.xpose.msra.mxu0 0
        %1894 = vmatprep.subr.bf16.mxu0 0
        %1895 = vmatpush1.bf16.xpose.msra.mxu0 0
        %1896 = vmatprep.subr.bf16.mxu0 0
        %1897 = vmatpush1.bf16.xpose.msra.mxu0 0
        %1898 = vmatprep.subr.bf16.mxu0 0
        %1899 = vmatpush1.bf16.xpose.msra.mxu0 0
        %1900 = vmatprep.subr.bf16.mxu0 0
        %1901 = vmatpush1.bf16.xpose.msra.mxu0 0
        %1902 = vmatprep.subr.bf16.mxu0 0
        %1903 = vmatpush1.bf16.xpose.msra.mxu0 0
        %1904 = vmatprep.subr.bf16.mxu0 0
        %1905 = vmatpush1.bf16.xpose.msra.mxu0 0
        %1906 = vmatprep.subr.bf16.mxu0 0
        %1907 = vmatpush1.bf16.xpose.msra.mxu0 0
        %1908 = vmatprep.subr.bf16.mxu0 0
        %1909 = vmatpush1.bf16.xpose.msra.mxu0 0
        %1910 = vmatprep.subr.bf16.mxu0 0
        %1911 = vmatpush1.bf16.xpose.msra.mxu0 0
        %1912 = vmatprep.subr.bf16.mxu0 0
        %1913 = vmatpush1.bf16.xpose.msra.mxu0 0
        %1914 = vmatprep.mubr.bf16.mxu0 0
        %1915 = vmatmul.mubr.bf16.gmra.mrb[0].mxu0 %v1877
        %v1916 = vpop.f32.mrb[0].mxu0
        %v1917 = vadd.f32 0.0, %v1916
        %v1918 = vpop.f32.mrb[0].mxu0
        %v1919 = vpop.f32.mrb[0].mxu0
        %v1920 = vpop.f32.mrb[0].mxu0
        %1921 = vdwg.mxu0
        %v1922 = vmul.f32 %v1917, 0.35355338
        %v1923 = vsel %vm1647, %v1922, -1e+09
        %v1924 = vsel %vm937, %v1923, -inf
        %1925 = vmax.xlane.f32.xlu0 %v1924
        %v1926 = vpop.xlane.xlu0 %1925
        %v1927 = vsub.f32 %v1923, %v1926
        %v1928 = vmul.f32 %v1927, 1.442695
        %v1929 = vpow.pop %v1928
        %v1930 = vsel %vm937, %v1929, 0.0
        %1931 = vadd.xlane.f32.xlu0 %v1930
        %v1932 = vpop.xlane.xlu0 %1931
        %v1933 = vrcp.pop %v1932
        %v1934 = vmul.f32 %v1929, %v1933
        %v1935 = vpack.c.bf16 %v1934, %v1934
        %1936 = vrot.lane.b32.xlu0 %v1649, 80
        %v1937 = vpop.permute.xlu0 %1936
        %v1939 = vsel %vm937, %v1935, 0
        %v1942 = vsel %vm1003, %v1937, 0
        %1944 = vmatprep.subr.bf16.mxu0 0
        %1945 = vmatpush1.bf16.msra.mxu0 %v1942
        %1946 = vmatprep.subr.bf16.mxu0 0
        %1947 = vmatpush1.bf16.msra.mxu0 0
        %1948 = vmatprep.subr.bf16.mxu0 0
        %1949 = vmatpush1.bf16.msra.mxu0 0
        %1950 = vmatprep.subr.bf16.mxu0 0
        %1951 = vmatpush1.bf16.msra.mxu0 0
        %1952 = vmatprep.subr.bf16.mxu0 0
        %1953 = vmatpush1.bf16.msra.mxu0 0
        %1954 = vmatprep.subr.bf16.mxu0 0
        %1955 = vmatpush1.bf16.msra.mxu0 0
        %1956 = vmatprep.subr.bf16.mxu0 0
        %1957 = vmatpush1.bf16.msra.mxu0 0
        %1958 = vmatprep.subr.bf16.mxu0 0
        %1959 = vmatpush1.bf16.msra.mxu0 0
        %1960 = vmatprep.subr.bf16.mxu0 0
        %1961 = vmatpush1.bf16.msra.mxu0 0
        %1962 = vmatprep.subr.bf16.mxu0 0
        %1963 = vmatpush1.bf16.msra.mxu0 0
        %1964 = vmatprep.subr.bf16.mxu0 0
        %1965 = vmatpush1.bf16.msra.mxu0 0
        %1966 = vmatprep.subr.bf16.mxu0 0
        %1967 = vmatpush1.bf16.msra.mxu0 0
        %1968 = vmatprep.subr.bf16.mxu0 0
        %1969 = vmatpush1.bf16.msra.mxu0 0
        %1970 = vmatprep.subr.bf16.mxu0 0
        %1971 = vmatpush1.bf16.msra.mxu0 0
        %1972 = vmatprep.subr.bf16.mxu0 0
        %1973 = vmatpush1.bf16.msra.mxu0 0
        %1974 = vmatprep.subr.bf16.mxu0 0
        %1975 = vmatpush1.bf16.msra.mxu0 0
        %1976 = vmatprep.mubr.bf16.mxu0 0
        %1977 = vmatmul.mubr.bf16.gmra.mrb[0].mxu0 %v1939
        %v1978 = vpop.f32.mrb[0].mxu0
        %v1979 = vadd.f32 0.0, %v1978
        %v1980 = vpop.f32.mrb[0].mxu0
        %v1981 = vpop.f32.mrb[0].mxu0
        %v1982 = vpop.f32.mrb[0].mxu0
        %1983 = vdwg.mxu0
        %1984 = vrot.lane.b32.xlu0 %v1648, 104
        %v1985 = vpop.permute.xlu0 %1984
        %1986 = vrot.lane.b32.xlu0 %v1649, 104
        %v1987 = vpop.permute.xlu0 %1986
        %v1989 = vsel %vm937, %v1985, 0
        %v1992 = vsel %vm937, %v1987, 0
        %1994 = vmatprep.subr.bf16.mxu0 0
        %1995 = vmatpush1.bf16.xpose.msra.mxu0 %v1992
        %1996 = vmatprep.subr.bf16.mxu0 0
        %1997 = vmatpush1.bf16.xpose.msra.mxu0 0
        %1998 = vmatprep.subr.bf16.mxu0 0
        %1999 = vmatpush1.bf16.xpose.msra.mxu0 0
        %2000 = vmatprep.subr.bf16.mxu0 0
        %2001 = vmatpush1.bf16.xpose.msra.mxu0 0
        %2002 = vmatprep.subr.bf16.mxu0 0
        %2003 = vmatpush1.bf16.xpose.msra.mxu0 0
        %2004 = vmatprep.subr.bf16.mxu0 0
        %2005 = vmatpush1.bf16.xpose.msra.mxu0 0
        %2006 = vmatprep.subr.bf16.mxu0 0
        %2007 = vmatpush1.bf16.xpose.msra.mxu0 0
        %2008 = vmatprep.subr.bf16.mxu0 0
        %2009 = vmatpush1.bf16.xpose.msra.mxu0 0
        %2010 = vmatprep.subr.bf16.mxu0 0
        %2011 = vmatpush1.bf16.xpose.msra.mxu0 0
        %2012 = vmatprep.subr.bf16.mxu0 0
        %2013 = vmatpush1.bf16.xpose.msra.mxu0 0
        %2014 = vmatprep.subr.bf16.mxu0 0
        %2015 = vmatpush1.bf16.xpose.msra.mxu0 0
        %2016 = vmatprep.subr.bf16.mxu0 0
        %2017 = vmatpush1.bf16.xpose.msra.mxu0 0
        %2018 = vmatprep.subr.bf16.mxu0 0
        %2019 = vmatpush1.bf16.xpose.msra.mxu0 0
        %2020 = vmatprep.subr.bf16.mxu0 0
        %2021 = vmatpush1.bf16.xpose.msra.mxu0 0
        %2022 = vmatprep.subr.bf16.mxu0 0
        %2023 = vmatpush1.bf16.xpose.msra.mxu0 0
        %2024 = vmatprep.subr.bf16.mxu0 0
        %2025 = vmatpush1.bf16.xpose.msra.mxu0 0
        %2026 = vmatprep.mubr.bf16.mxu0 0
        %2027 = vmatmul.mubr.bf16.gmra.mrb[0].mxu0 %v1989
        %v2028 = vpop.f32.mrb[0].mxu0
        %v2029 = vadd.f32 0.0, %v2028
        %v2030 = vpop.f32.mrb[0].mxu0
        %v2031 = vpop.f32.mrb[0].mxu0
        %v2032 = vpop.f32.mrb[0].mxu0
        %2033 = vdwg.mxu0
        %v2034 = vmul.f32 %v2029, 0.35355338
        %v2035 = vsel %vm1647, %v2034, -1e+09
        %v2036 = vsel %vm937, %v2035, -inf
        %2037 = vmax.xlane.f32.xlu0 %v2036
        %v2038 = vpop.xlane.xlu0 %2037
        %v2039 = vsub.f32 %v2035, %v2038
        %v2040 = vmul.f32 %v2039, 1.442695
        %v2041 = vpow.pop %v2040
        %v2042 = vsel %vm937, %v2041, 0.0
        %2043 = vadd.xlane.f32.xlu0 %v2042
        %v2044 = vpop.xlane.xlu0 %2043
        %v2045 = vrcp.pop %v2044
        %v2046 = vmul.f32 %v2041, %v2045
        %v2047 = vpack.c.bf16 %v2046, %v2046
        %2048 = vrot.lane.b32.xlu0 %v1649, 72
        %v2049 = vpop.permute.xlu0 %2048
        %v2051 = vsel %vm937, %v2047, 0
        %v2054 = vsel %vm1003, %v2049, 0
        %2056 = vmatprep.subr.bf16.mxu0 0
        %2057 = vmatpush1.bf16.msra.mxu0 %v2054
        %2058 = vmatprep.subr.bf16.mxu0 0
        %2059 = vmatpush1.bf16.msra.mxu0 0
        %2060 = vmatprep.subr.bf16.mxu0 0
        %2061 = vmatpush1.bf16.msra.mxu0 0
        %2062 = vmatprep.subr.bf16.mxu0 0
        %2063 = vmatpush1.bf16.msra.mxu0 0
        %2064 = vmatprep.subr.bf16.mxu0 0
        %2065 = vmatpush1.bf16.msra.mxu0 0
        %2066 = vmatprep.subr.bf16.mxu0 0
        %2067 = vmatpush1.bf16.msra.mxu0 0
        %2068 = vmatprep.subr.bf16.mxu0 0
        %2069 = vmatpush1.bf16.msra.mxu0 0
        %2070 = vmatprep.subr.bf16.mxu0 0
        %2071 = vmatpush1.bf16.msra.mxu0 0
        %2072 = vmatprep.subr.bf16.mxu0 0
        %2073 = vmatpush1.bf16.msra.mxu0 0
        %2074 = vmatprep.subr.bf16.mxu0 0
        %2075 = vmatpush1.bf16.msra.mxu0 0
        %2076 = vmatprep.subr.bf16.mxu0 0
        %2077 = vmatpush1.bf16.msra.mxu0 0
        %2078 = vmatprep.subr.bf16.mxu0 0
        %2079 = vmatpush1.bf16.msra.mxu0 0
        %2080 = vmatprep.subr.bf16.mxu0 0
        %2081 = vmatpush1.bf16.msra.mxu0 0
        %2082 = vmatprep.subr.bf16.mxu0 0
        %2083 = vmatpush1.bf16.msra.mxu0 0
        %2084 = vmatprep.subr.bf16.mxu0 0
        %2085 = vmatpush1.bf16.msra.mxu0 0
        %2086 = vmatprep.subr.bf16.mxu0 0
        %2087 = vmatpush1.bf16.msra.mxu0 0
        %2088 = vmatprep.mubr.bf16.mxu0 0
        %2089 = vmatmul.mubr.bf16.gmra.mrb[0].mxu0 %v2051
        %v2090 = vpop.f32.mrb[0].mxu0
        %v2091 = vadd.f32 0.0, %v2090
        %v2092 = vpop.f32.mrb[0].mxu0
        %v2093 = vpop.f32.mrb[0].mxu0
        %v2094 = vpop.f32.mrb[0].mxu0
        %2095 = vdwg.mxu0
        %2097 = vrot.lane.b32.xlu0 %v1867, 8
        %v2098 = vpop.permute.xlu0 %2097
        %2101 = vrot.lane.b32.xlu0 %v1979, 16
        %v2102 = vpop.permute.xlu0 %2101
        %2105 = vrot.lane.b32.xlu0 %v2091, 24
        %v2106 = vpop.permute.xlu0 %2105
        %v2108 = vsel %vm937, %v1754, %v2098
        %v2109 = vsel %vm1396, %v2108, %v2102
        %v2110 = vsel %vm1398, %v2109, %v2106
        %v2111 = vpack.c.bf16 %v2110, %v2110
        %v2112 = vld [vmem:[%s15] sm:$0xf]
        %v2113 = vld [vmem:[%s15 + $0x4] sm:$0xf]
        %v2114 = vld [vmem:[%s15 + $0x8] sm:$0xf]
        %v2115 = vld [vmem:[%s15 + $0xc] sm:$0xf]
        %v2120 = vunpack.c.l.b16 %v2112
        %v2121 = vunpack.c.l.b16 %v2113
        %v2122 = vunpack.c.l.b16 %v2114
        %v2123 = vunpack.c.l.b16 %v2115
        %v2124 = vpack.c.b16 %v2121, %v2120
        %v2125 = vpack.c.b16 %v2123, %v2122
        %v2129 = vsel %vm875, %v2111, 0
        %2131 = vmatprep.subr.bf16.mxu0 0
        %2132 = vmatpush1.bf16.msra.mxu0 %v2124
        %2133 = vmatprep.subr.bf16.mxu0 0
        %2134 = vmatpush1.bf16.msra.mxu0 %v2125
        %2135 = vmatprep.subr.bf16.mxu0 0
        %2136 = vmatpush1.bf16.msra.mxu0 0
        %2137 = vmatprep.subr.bf16.mxu0 0
        %2138 = vmatpush1.bf16.msra.mxu0 0
        %2139 = vmatprep.subr.bf16.mxu0 0
        %2140 = vmatpush1.bf16.msra.mxu0 0
        %2141 = vmatprep.subr.bf16.mxu0 0
        %2142 = vmatpush1.bf16.msra.mxu0 0
        %2143 = vmatprep.subr.bf16.mxu0 0
        %2144 = vmatpush1.bf16.msra.mxu0 0
        %2145 = vmatprep.subr.bf16.mxu0 0
        %2146 = vmatpush1.bf16.msra.mxu0 0
        %2147 = vmatprep.subr.bf16.mxu0 0
        %2148 = vmatpush1.bf16.msra.mxu0 0
        %2149 = vmatprep.subr.bf16.mxu0 0
        %2150 = vmatpush1.bf16.msra.mxu0 0
        %2151 = vmatprep.subr.bf16.mxu0 0
        %2152 = vmatpush1.bf16.msra.mxu0 0
        %2153 = vmatprep.subr.bf16.mxu0 0
        %2154 = vmatpush1.bf16.msra.mxu0 0
        %2155 = vmatprep.subr.bf16.mxu0 0
        %2156 = vmatpush1.bf16.msra.mxu0 0
        %2157 = vmatprep.subr.bf16.mxu0 0
        %2158 = vmatpush1.bf16.msra.mxu0 0
        %2159 = vmatprep.subr.bf16.mxu0 0
        %2160 = vmatpush1.bf16.msra.mxu0 0
        %2161 = vmatprep.subr.bf16.mxu0 0
        %2162 = vmatpush1.bf16.msra.mxu0 0
        %2163 = vmatprep.mubr.bf16.mxu0 0
        %2164 = vmatmul.mubr.bf16.gmra.mrb[0].mxu0 %v2129
        %v2165 = vpop.f32.mrb[0].mxu0
        %v2166 = vadd.f32 0.0, %v2165
        %v2167 = vpop.f32.mrb[0].mxu0
        %v2168 = vpop.f32.mrb[0].mxu0
        %v2169 = vpop.f32.mrb[0].mxu0
        %2170 = vdwg.mxu0
        %v2171 = vadd.f32 %v1504, %v2166
        %v2172 = vld [vmem:[%s16] sm:$0x1]
        %v2174 = vlaneseq
        %v2175 = vshrl.u32 %v2174, 7
        %v2176 = vsub.s32 0, %v2175
        %v2177 = vrot.slane %v2172, %v2176
        %v2179 = vadd.f32 %v2171, %v2177
        %v2180 = vld [vmem:[%s17] sm:$0x1]
        %v2181 = vld [vmem:[%s18] sm:$0x1]
        %v2182 = vsel %vm875, %v2179, 0.0
        %2183 = vadd.xlane.f32.xlu0 %v2182
        %v2184 = vpop.xlane.xlu0 %2183
        %v2185 = vmul.f32 %v2184, %v1474
        %v2186 = vsub.f32 %v2179, %v2185
        %v2187 = vmul.f32 %v2186, %v2186
        %v2188 = vsel %vm875, %v2187, 0.0
        %2189 = vadd.xlane.f32.xlu0 %v2188
        %v2190 = vpop.xlane.xlu0 %2189
        %v2191 = vmul.f32 %v2190, %v1474
        %v2192 = vadd.f32 %v2191, 1e-05
        %v2193 = vrsqrt.pop %v2192
        %v2194 = vmul.f32 %v2186, %v2193
        %v2196 = vlaneseq
        %v2197 = vshrl.u32 %v2196, 7
        %v2198 = vsub.s32 0, %v2197
        %v2199 = vrot.slane %v2180, %v2198
        %v2201 = vmul.f32 %v2194, %v2199
        %v2203 = vlaneseq
        %v2204 = vshrl.u32 %v2203, 7
        %v2205 = vsub.s32 0, %v2204
        %v2206 = vrot.slane %v2181, %v2205
        %v2208 = vadd.f32 %v2201, %v2206
        %v2209 = vmul.f32 %v2208, %v1502
        %v2210 = vpack.c.bf16 %v2209, %v2209
        %v2211 = vld [vmem:[%s19] sm:$0xf]
        %v2212 = vld [vmem:[%s19 + $0x4] sm:$0xf]
        %v2213 = vld [vmem:[%s19 + $0x8] sm:$0xf]
        %v2214 = vld [vmem:[%s19 + $0xc] sm:$0xf]
        %v2215 = vld [vmem:[%s20] sm:$0x1]
        %v2217 = vlaneseq
        %v2218 = vshrl.u32 %v2217, 7
        %v2219 = vsub.s32 0, %v2218
        %v2220 = vrot.slane %v2215, %v2219
        %v2226 = vunpack.c.l.b16 %v2211
        %v2227 = vunpack.c.l.b16 %v2212
        %v2228 = vunpack.c.l.b16 %v2213
        %v2229 = vunpack.c.l.b16 %v2214
        %v2230 = vpack.c.b16 %v2227, %v2226
        %v2231 = vpack.c.b16 %v2229, %v2228
        %v2235 = vsel %vm875, %v2210, 0
        %2237 = vmatprep.subr.bf16.mxu0 0
        %2238 = vmatpush1.bf16.msra.mxu0 %v2230
        %2239 = vmatprep.subr.bf16.mxu0 0
        %2240 = vmatpush1.bf16.msra.mxu0 %v2231
        %2241 = vmatprep.subr.bf16.mxu0 0
        %2242 = vmatpush1.bf16.msra.mxu0 0
        %2243 = vmatprep.subr.bf16.mxu0 0
        %2244 = vmatpush1.bf16.msra.mxu0 0
        %2245 = vmatprep.subr.bf16.mxu0 0
        %2246 = vmatpush1.bf16.msra.mxu0 0
        %2247 = vmatprep.subr.bf16.mxu0 0
        %2248 = vmatpush1.bf16.msra.mxu0 0
        %2249 = vmatprep.subr.bf16.mxu0 0
        %2250 = vmatpush1.bf16.msra.mxu0 0
        %2251 = vmatprep.subr.bf16.mxu0 0
        %2252 = vmatpush1.bf16.msra.mxu0 0
        %2253 = vmatprep.subr.bf16.mxu0 0
        %2254 = vmatpush1.bf16.msra.mxu0 0
        %2255 = vmatprep.subr.bf16.mxu0 0
        %2256 = vmatpush1.bf16.msra.mxu0 0
        %2257 = vmatprep.subr.bf16.mxu0 0
        %2258 = vmatpush1.bf16.msra.mxu0 0
        %2259 = vmatprep.subr.bf16.mxu0 0
        %2260 = vmatpush1.bf16.msra.mxu0 0
        %2261 = vmatprep.subr.bf16.mxu0 0
        %2262 = vmatpush1.bf16.msra.mxu0 0
        %2263 = vmatprep.subr.bf16.mxu0 0
        %2264 = vmatpush1.bf16.msra.mxu0 0
        %2265 = vmatprep.subr.bf16.mxu0 0
        %2266 = vmatpush1.bf16.msra.mxu0 0
        %2267 = vmatprep.subr.bf16.mxu0 0
        %2268 = vmatpush1.bf16.msra.mxu0 0
        %2269 = vmatprep.mubr.bf16.mxu0 0
        %2270 = vmatmul.mubr.bf16.gmra.mrb[0].mxu0 %v2235
        %v2271 = vpop.f32.mrb[0].mxu0
        %v2272 = vadd.f32 %v2220, %v2271
        %v2273 = vpop.f32.mrb[0].mxu0
        %v2274 = vpop.f32.mrb[0].mxu0
        %v2275 = vpop.f32.mrb[0].mxu0
        %2276 = vdwg.mxu0
        %v2277 = vmax.f32 %v2272, 0.0
        %v2278 = vpack.c.bf16 %v2277, %v2277
        %v2279 = vld [vmem:[%s21] sm:$0xf]
        %v2280 = vld [vmem:[%s21 + $0x4] sm:$0xf]
        %v2281 = vld [vmem:[%s21 + $0x8] sm:$0xf]
        %v2282 = vld [vmem:[%s21 + $0xc] sm:$0xf]
        %v2283 = vld [vmem:[%s21 + $0x10] sm:$0xf]
        %v2284 = vld [vmem:[%s21 + $0x14] sm:$0xf]
        %v2285 = vld [vmem:[%s21 + $0x18] sm:$0xf]
        %v2286 = vld [vmem:[%s21 + $0x1c] sm:$0xf]
        %v2295 = vunpack.c.l.b16 %v2279
        %v2296 = vunpack.c.l.b16 %v2280
        %v2297 = vunpack.c.l.b16 %v2281
        %v2298 = vunpack.c.l.b16 %v2282
        %v2299 = vunpack.c.l.b16 %v2283
        %v2300 = vunpack.c.l.b16 %v2284
        %v2301 = vunpack.c.l.b16 %v2285
        %v2302 = vunpack.c.l.b16 %v2286
        %v2303 = vpack.c.b16 %v2296, %v2295
        %v2304 = vpack.c.b16 %v2298, %v2297
        %v2305 = vpack.c.b16 %v2300, %v2299
        %v2306 = vpack.c.b16 %v2302, %v2301
        %vm2311 = vcmask 523264
        %v2313 = vsel %vm2311, %v2278, 0
        %2315 = vmatprep.subr.bf16.mxu0 0
        %2316 = vmatpush1.bf16.msra.mxu0 %v2303
        %2317 = vmatprep.subr.bf16.mxu0 0
        %2318 = vmatpush1.bf16.msra.mxu0 %v2304
        %2319 = vmatprep.subr.bf16.mxu0 0
        %2320 = vmatpush1.bf16.msra.mxu0 %v2305
        %2321 = vmatprep.subr.bf16.mxu0 0
        %2322 = vmatpush1.bf16.msra.mxu0 %v2306
        %2323 = vmatprep.subr.bf16.mxu0 0
        %2324 = vmatpush1.bf16.msra.mxu0 0
        %2325 = vmatprep.subr.bf16.mxu0 0
        %2326 = vmatpush1.bf16.msra.mxu0 0
        %2327 = vmatprep.subr.bf16.mxu0 0
        %2328 = vmatpush1.bf16.msra.mxu0 0
        %2329 = vmatprep.subr.bf16.mxu0 0
        %2330 = vmatpush1.bf16.msra.mxu0 0
        %2331 = vmatprep.subr.bf16.mxu0 0
        %2332 = vmatpush1.bf16.msra.mxu0 0
        %2333 = vmatprep.subr.bf16.mxu0 0
        %2334 = vmatpush1.bf16.msra.mxu0 0
        %2335 = vmatprep.subr.bf16.mxu0 0
        %2336 = vmatpush1.bf16.msra.mxu0 0
        %2337 = vmatprep.subr.bf16.mxu0 0
        %2338 = vmatpush1.bf16.msra.mxu0 0
        %2339 = vmatprep.subr.bf16.mxu0 0
        %2340 = vmatpush1.bf16.msra.mxu0 0
        %2341 = vmatprep.subr.bf16.mxu0 0
        %2342 = vmatpush1.bf16.msra.mxu0 0
        %2343 = vmatprep.subr.bf16.mxu0 0
        %2344 = vmatpush1.bf16.msra.mxu0 0
        %2345 = vmatprep.subr.bf16.mxu0 0
        %2346 = vmatpush1.bf16.msra.mxu0 0
        %2347 = vmatprep.mubr.bf16.mxu0 0
        %2348 = vmatmul.mubr.bf16.gmra.mrb[0].mxu0 %v2313
        %v2349 = vpop.f32.mrb[0].mxu0
        %v2350 = vadd.f32 0.0, %v2349
        %v2351 = vpop.f32.mrb[0].mxu0
        %v2352 = vpop.f32.mrb[0].mxu0
        %v2353 = vpop.f32.mrb[0].mxu0
        %2354 = vdwg.mxu0
        %v2355 = vadd.f32 %v2209, %v2350
        %v2356 = vld [vmem:[%s22] sm:$0x1]
        %v2358 = vlaneseq
        %v2359 = vshrl.u32 %v2358, 7
        %v2360 = vsub.s32 0, %v2359
        %v2361 = vrot.slane %v2356, %v2360
        %v2363 = vadd.f32 %v2355, %v2361
        %v2364 = vld [vmem:[#allocation2] sm:$0x1]
        %v2365 = vld [vmem:[#allocation4] sm:$0x1]
        %v2366 = vsel %vm875, %v2363, 0.0
        %2367 = vadd.xlane.f32.xlu0 %v2366
        %v2368 = vpop.xlane.xlu0 %2367
        %v2369 = vmul.f32 %v2368, %v1474
        %v2370 = vsub.f32 %v2363, %v2369
        %v2371 = vmul.f32 %v2370, %v2370
        %v2372 = vsel %vm875, %v2371, 0.0
        %2373 = vadd.xlane.f32.xlu0 %v2372
        %v2374 = vpop.xlane.xlu0 %2373
        %v2375 = vmul.f32 %v2374, %v1474
        %v2376 = vadd.f32 %v2375, 1e-05
        %v2377 = vrsqrt.pop %v2376
        %v2378 = vmul.f32 %v2370, %v2377
        %v2380 = vlaneseq
        %v2381 = vshrl.u32 %v2380, 7
        %v2382 = vsub.s32 0, %v2381
        %v2383 = vrot.slane %v2364, %v2382
        %v2385 = vmul.f32 %v2378, %v2383
        %v2387 = vlaneseq
        %v2388 = vshrl.u32 %v2387, 7
        %v2389 = vsub.s32 0, %v2388
        %v2390 = vrot.slane %v2365, %v2389
        %v2392 = vadd.f32 %v2385, %v2390
        %v2393 = vmul.f32 %v2392, %v1502
        %2394 = vst.msk [vmem:[%s847] sm:$0xff] %vm875, %v2393
        %p2395 = scmp.lt.s32.totalorder %s38, 1
        %s2396 = scalar_select %p2395, %s38, 1
        %s2397 = smul.addr %s2396, 8
        %s2398 = scalar_lea.vmem %s25, %s2397
        // Predicated region
        $region129: #{_lambda_.4} parent=119 // pred_check
          %p2399 = pneg %p606
        $region130: #{_lambda_.4} parent=119 // pred_check_branch
          %2401 = sbr.rel (%p2399) target = $region132
        $region131: #{_lambda_.4} parent=119 // pred_region
          _
        $region132: #{_lambda_.4} parent=119 // pred_fallthru
          _
      $region120: #{_lambda_.4} parent=5 // pred_fallthru
        _
      %p2402 = scmp.le.s32.totalorder 2, %s33
      // Predicated region
      $region133: #{_lambda_.4} parent=5 // pred_check
        %p2403 = pneg %p2402
      $region134: #{_lambda_.4} parent=5 // pred_check_branch
        %2405 = sbr.rel (%p2403) target = $region136
      $region135: #{_lambda_.4} parent=5 // pred_region
        %s2406 = ssub.s32 %s33, 2
        // Predicated region
        $region137: #{_lambda_.4} parent=135 // pred_check
          %p2407 = pneg %p612
        $region138: #{_lambda_.4} parent=135 // pred_check_branch
          %2409 = sbr.rel (%p2407) target = $region140
        $region139: #{_lambda_.4} parent=135 // pred_region
          %p2410 = scmp.lt.s32.totalorder %s39, 1
          %s2411 = scalar_select %p2410, %s39, 1
          %s2412 = smul.addr %s2411, 8
          %s2413 = scalar_lea.vmem %s25, %s2412
        $region140: #{_lambda_.4} parent=135 // pred_fallthru
          _
      $region136: #{_lambda_.4} parent=5 // pred_fallthru
        _
    $region6: #{_lambda_.4} parent=1 // loop_footer
      %s37 = sadd.s32 1, %s33
    $region7: #{_lambda_.4} parent=1 // loop_footer_branch
      %32 = sbr.rel target = $region3
    $region8: #{_lambda_.4} parent=1 // loop_exit
      _
    %2414 = vsyncpa [#allocation3], 1
    %s2415 = scalar_lea.sflag [#allocation3], 1
    %2416 = vsyncpa %s2415, 1
    %2417 = vsyncpa [#allocation5], 1

// kernel: _lambda_.3
$region0: #{_lambda_.3}
  #allocation0 [shape = 'u32[]', space=smem, size = 0x4, offset = 0x4, fixed_abs, tag = 'smem constant byte address 0x4 - core index']
  #allocation1 [shape = 'u32[144,128]{1,0:T(1,128)}', space=vmem, size = 0x12000, scoped, tag = 'internal scratch']
  %s0 = inlined_call_operand.vmem [shape: f32[2,8,32], index: 0, kind: input, shape index: {}]
  %s1 = inlined_call_operand.vmem [shape: f32[2,8,32], index: 1, kind: input, shape index: {}]
  %s2 = inlined_call_operand.vmem [shape: f32[2,1,8], index: 2, kind: input, shape index: {}]
  %s3 = inlined_call_operand.vmem [shape: f32[2,1,8], index: 3, kind: input, shape index: {}]
  %s4 = inlined_call_operand.vmem [shape: f32[2,8,1], index: 4, kind: input, shape index: {}]
  %s5 = inlined_call_operand.vmem [shape: bf16[32,96], index: 5, kind: input, shape index: {}]
  %s6 = inlined_call_operand.vmem [shape: f32[1,96], index: 6, kind: input, shape index: {}]
  %s7 = inlined_call_operand.vmem [shape: bf16[32,32], index: 7, kind: input, shape index: {}]
  %s8 = inlined_call_operand.vmem [shape: f32[1,32], index: 8, kind: input, shape index: {}]
  %s9 = inlined_call_operand.vmem [shape: f32[1,32], index: 9, kind: input, shape index: {}]
  %s10 = inlined_call_operand.vmem [shape: f32[1,32], index: 10, kind: input, shape index: {}]
  %s11 = inlined_call_operand.vmem [shape: bf16[32,32], index: 11, kind: input, shape index: {}]
  %s12 = inlined_call_operand.vmem [shape: f32[1,32], index: 12, kind: input, shape index: {}]
  %s13 = inlined_call_operand.vmem [shape: bf16[32,64], index: 13, kind: input, shape index: {}]
  %s14 = inlined_call_operand.vmem [shape: f32[1,64], index: 14, kind: input, shape index: {}]
  %s15 = inlined_call_operand.vmem [shape: bf16[32,32], index: 15, kind: input, shape index: {}]
  %s16 = inlined_call_operand.vmem [shape: f32[1,32], index: 16, kind: input, shape index: {}]
  %s17 = inlined_call_operand.vmem [shape: f32[1,32], index: 17, kind: input, shape index: {}]
  %s18 = inlined_call_operand.vmem [shape: f32[1,32], index: 18, kind: input, shape index: {}]
  %s19 = inlined_call_operand.vmem [shape: bf16[32,64], index: 19, kind: input, shape index: {}]
  %s20 = inlined_call_operand.vmem [shape: f32[1,64], index: 20, kind: input, shape index: {}]
  %s21 = inlined_call_operand.vmem [shape: bf16[64,32], index: 21, kind: input, shape index: {}]
  %s22 = inlined_call_operand.vmem [shape: f32[1,32], index: 22, kind: input, shape index: {}]
  %s23 = inlined_call_operand.vmem [shape: f32[1,32], index: 23, kind: input, shape index: {}]
  %s24 = inlined_call_operand.vmem [shape: f32[1,32], index: 24, kind: input, shape index: {}]
  %s25 = inlined_call_operand.vmem [shape: f32[2,8,32], index: 25, kind: output, shape index: {}]
  %s26 = sld [smem:[#allocation0]]
  $region133: #{_lambda_.3} parent=0
    _
  %s28 = ssub.s32 1, %s26
  %s29 = scalar_select 0, %s28, %s26
  loop: start=0, step=1, limit=4
  $region2: #{_lambda_.3} parent=0 // loop_pre_header
    _
  $region3: #{_lambda_.3} parent=0 // loop_header
    %s31 = sphi 0, %s35
    %p32 = scmp.ge.s32.totalorder %s31, 4
    %s41 = sphi 0, %s43
    %s44 = sphi 0, %s41
    %s45 = sphi 0, %s44
    %s61 = sphi 0, %s45
    %s67 = sphi 0, %s69
    %s70 = sphi 0, %s67
    %s71 = sphi 0, %s70
    %s87 = sphi 0, %s71
    %s93 = sphi 0, %s95
    %s96 = sphi 0, %s93
    %s97 = sphi 0, %s96
    %s113 = sphi 0, %s97
    %s119 = sphi 0, %s121
    %s122 = sphi 0, %s119
    %s123 = sphi 0, %s122
    %s139 = sphi 0, %s123
    %s145 = sphi 0, %s147
    %s148 = sphi 0, %s145
    %s149 = sphi 0, %s148
    %s165 = sphi 0, %s149
    %s169 = sphi 0, %s169
    %s171 = sphi 0, %s169
    %s172 = sphi 0, %s171
    %s186 = sphi 0, %s172
    %s190 = sphi 0, %s190
    %s192 = sphi 0, %s190
    %s193 = sphi 0, %s192
    %s207 = sphi 0, %s193
    %s211 = sphi 0, %s211
    %s213 = sphi 0, %s211
    %s214 = sphi 0, %s213
    %s228 = sphi 0, %s214
    %s232 = sphi 0, %s232
    %s234 = sphi 0, %s232
    %s235 = sphi 0, %s234
    %s249 = sphi 0, %s235
    %s253 = sphi 0, %s253
    %s255 = sphi 0, %s253
    %s256 = sphi 0, %s255
    %s270 = sphi 0, %s256
    %s274 = sphi 0, %s274
    %s276 = sphi 0, %s274
    %s277 = sphi 0, %s276
    %s291 = sphi 0, %s277
    %s295 = sphi 0, %s295
    %s297 = sphi 0, %s295
    %s298 = sphi 0, %s297
    %s312 = sphi 0, %s298
    %s316 = sphi 0, %s316
    %s318 = sphi 0, %s316
    %s319 = sphi 0, %s318
    %s333 = sphi 0, %s319
    %s337 = sphi 0, %s337
    %s339 = sphi 0, %s337
    %s340 = sphi 0, %s339
    %s354 = sphi 0, %s340
    %s358 = sphi 0, %s358
    %s360 = sphi 0, %s358
    %s361 = sphi 0, %s360
    %s375 = sphi 0, %s361
    %s379 = sphi 0, %s379
    %s381 = sphi 0, %s379
    %s382 = sphi 0, %s381
    %s396 = sphi 0, %s382
    %s400 = sphi 0, %s400
    %s402 = sphi 0, %s400
    %s403 = sphi 0, %s402
    %s417 = sphi 0, %s403
    %s421 = sphi 0, %s421
    %s423 = sphi 0, %s421
    %s424 = sphi 0, %s423
    %s438 = sphi 0, %s424
    %s442 = sphi 0, %s442
    %s444 = sphi 0, %s442
    %s445 = sphi 0, %s444
    %s459 = sphi 0, %s445
    %s463 = sphi 0, %s463
    %s465 = sphi 0, %s463
    %s466 = sphi 0, %s465
    %s480 = sphi 0, %s466
    %s484 = sphi 0, %s484
    %s486 = sphi 0, %s484
    %s487 = sphi 0, %s486
    %s501 = sphi 0, %s487
    %s505 = sphi 0, %s505
    %s507 = sphi 0, %s505
    %s508 = sphi 0, %s507
    %s522 = sphi 0, %s508
    %s526 = sphi 0, %s526
    %s528 = sphi 0, %s526
    %s529 = sphi 0, %s528
    %s543 = sphi 0, %s529
    %s547 = sphi 0, %s547
    %s549 = sphi 0, %s547
    %s550 = sphi 0, %s549
    %s564 = sphi 0, %s550
    %s568 = sphi 0, %s568
    %s570 = sphi 0, %s568
    %s571 = sphi 0, %s570
    %s585 = sphi 0, %s571
    %s591 = sphi 0, %s593
    %s594 = sphi 0, %s591
    %s595 = sphi 0, %s594
    %s611 = sphi 0, %s595
  $region4: #{_lambda_.3} parent=0 // loop_header_branch
    %34 = sbr.rel (%p32) target = $region8
  $region5: #{_lambda_.3} parent=0 // loop_body
    %s36 = ssub.s32 %s31, 1
    %s37 = ssub.s32 %s31, 2
    %s38 = sadd.s32 %s31, 1
    %s39 = ssub.s32 %s31, %s38
    %p40 = scmp.eq.s32.totalorder %s39, 0
    %s42 = sadd.s32 %s41, 1
    %s43 = scalar_select %p40, %s41, %s42
    %p46 = pneg %p40
    %p47 = scmp.eq.s32.totalorder %s31, 1
    %p48 = por %p46, %p47
    %p49 = scmp.ne.s32.totalorder %s41, %s44
    %p50 = scmp.eq.s32.totalorder %s31, 0
    %p51 = por %p49, %p50
    %p52 = scmp.ne.s32.totalorder %s41, %s44
    %p53 = scmp.eq.s32.totalorder %s36, 1
    %p54 = por %p52, %p53
    %p55 = scmp.ne.s32.totalorder %s44, %s45
    %p56 = scmp.eq.s32.totalorder %s36, 0
    %p57 = por %p55, %p56
    %p58 = scmp.ne.s32.totalorder %s44, %s45
    %p59 = scmp.eq.s32.totalorder %s37, 1
    %p60 = por %p58, %p59
    %p62 = scmp.ne.s32.totalorder %s45, %s61
    %p63 = scmp.eq.s32.totalorder %s37, 0
    %p64 = por %p62, %p63
    %s65 = ssub.s32 %s31, %s38
    %p66 = scmp.eq.s32.totalorder %s65, 0
    %s68 = sadd.s32 %s67, 1
    %s69 = scalar_select %p66, %s67, %s68
    %p72 = pneg %p66
    %p73 = scmp.eq.s32.totalorder %s31, 1
    %p74 = por %p72, %p73
    %p75 = scmp.ne.s32.totalorder %s67, %s70
    %p76 = scmp.eq.s32.totalorder %s31, 0
    %p77 = por %p75, %p76
    %p78 = scmp.ne.s32.totalorder %s67, %s70
    %p79 = scmp.eq.s32.totalorder %s36, 1
    %p80 = por %p78, %p79
    %p81 = scmp.ne.s32.totalorder %s70, %s71
    %p82 = scmp.eq.s32.totalorder %s36, 0
    %p83 = por %p81, %p82
    %p84 = scmp.ne.s32.totalorder %s70, %s71
    %p85 = scmp.eq.s32.totalorder %s37, 1
    %p86 = por %p84, %p85
    %p88 = scmp.ne.s32.totalorder %s71, %s87
    %p89 = scmp.eq.s32.totalorder %s37, 0
    %p90 = por %p88, %p89
    %s91 = ssub.s32 %s31, %s38
    %p92 = scmp.eq.s32.totalorder %s91, 0
    %s94 = sadd.s32 %s93, 1
    %s95 = scalar_select %p92, %s93, %s94
    %p98 = pneg %p92
    %p99 = scmp.eq.s32.totalorder %s31, 1
    %p100 = por %p98, %p99
    %p101 = scmp.ne.s32.totalorder %s93, %s96
    %p102 = scmp.eq.s32.totalorder %s31, 0
    %p103 = por %p101, %p102
    %p104 = scmp.ne.s32.totalorder %s93, %s96
    %p105 = scmp.eq.s32.totalorder %s36, 1
    %p106 = por %p104, %p105
    %p107 = scmp.ne.s32.totalorder %s96, %s97
    %p108 = scmp.eq.s32.totalorder %s36, 0
    %p109 = por %p107, %p108
    %p110 = scmp.ne.s32.totalorder %s96, %s97
    %p111 = scmp.eq.s32.totalorder %s37, 1
    %p112 = por %p110, %p111
    %p114 = scmp.ne.s32.totalorder %s97, %s113
    %p115 = scmp.eq.s32.totalorder %s37, 0
    %p116 = por %p114, %p115
    %s117 = ssub.s32 %s31, %s38
    %p118 = scmp.eq.s32.totalorder %s117, 0
    %s120 = sadd.s32 %s119, 1
    %s121 = scalar_select %p118, %s119, %s120
    %p124 = pneg %p118
    %p125 = scmp.eq.s32.totalorder %s31, 1
    %p126 = por %p124, %p125
    %p127 = scmp.ne.s32.totalorder %s119, %s122
    %p128 = scmp.eq.s32.totalorder %s31, 0
    %p129 = por %p127, %p128
    %p130 = scmp.ne.s32.totalorder %s119, %s122
    %p131 = scmp.eq.s32.totalorder %s36, 1
    %p132 = por %p130, %p131
    %p133 = scmp.ne.s32.totalorder %s122, %s123
    %p134 = scmp.eq.s32.totalorder %s36, 0
    %p135 = por %p133, %p134
    %p136 = scmp.ne.s32.totalorder %s122, %s123
    %p137 = scmp.eq.s32.totalorder %s37, 1
    %p138 = por %p136, %p137
    %p140 = scmp.ne.s32.totalorder %s123, %s139
    %p141 = scmp.eq.s32.totalorder %s37, 0
    %p142 = por %p140, %p141
    %s143 = ssub.s32 %s31, %s38
    %p144 = scmp.eq.s32.totalorder %s143, 0
    %s146 = sadd.s32 %s145, 1
    %s147 = scalar_select %p144, %s145, %s146
    %p150 = pneg %p144
    %p151 = scmp.eq.s32.totalorder %s31, 1
    %p152 = por %p150, %p151
    %p153 = scmp.ne.s32.totalorder %s145, %s148
    %p154 = scmp.eq.s32.totalorder %s31, 0
    %p155 = por %p153, %p154
    %p156 = scmp.ne.s32.totalorder %s145, %s148
    %p157 = scmp.eq.s32.totalorder %s36, 1
    %p158 = por %p156, %p157
    %p159 = scmp.ne.s32.totalorder %s148, %s149
    %p160 = scmp.eq.s32.totalorder %s36, 0
    %p161 = por %p159, %p160
    %p162 = scmp.ne.s32.totalorder %s148, %s149
    %p163 = scmp.eq.s32.totalorder %s37, 1
    %p164 = por %p162, %p163
    %p166 = scmp.ne.s32.totalorder %s149, %s165
    %p167 = scmp.eq.s32.totalorder %s37, 0
    %p168 = por %p166, %p167
    %s170 = sadd.s32 %s169, 1
    %p173 = scmp.eq.s32.totalorder %s31, 1
    %p174 = scmp.ne.s32.totalorder %s169, %s171
    %p175 = scmp.eq.s32.totalorder %s31, 0
    %p176 = por %p174, %p175
    %p177 = scmp.ne.s32.totalorder %s169, %s171
    %p178 = scmp.eq.s32.totalorder %s36, 1
    %p179 = por %p177, %p178
    %p180 = scmp.ne.s32.totalorder %s171, %s172
    %p181 = scmp.eq.s32.totalorder %s36, 0
    %p182 = por %p180, %p181
    %p183 = scmp.ne.s32.totalorder %s171, %s172
    %p184 = scmp.eq.s32.totalorder %s37, 1
    %p185 = por %p183, %p184
    %p187 = scmp.ne.s32.totalorder %s172, %s186
    %p188 = scmp.eq.s32.totalorder %s37, 0
    %p189 = por %p187, %p188
    %s191 = sadd.s32 %s190, 1
    %p194 = scmp.eq.s32.totalorder %s31, 1
    %p195 = scmp.ne.s32.totalorder %s190, %s192
    %p196 = scmp.eq.s32.totalorder %s31, 0
    %p197 = por %p195, %p196
    %p198 = scmp.ne.s32.totalorder %s190, %s192
    %p199 = scmp.eq.s32.totalorder %s36, 1
    %p200 = por %p198, %p199
    %p201 = scmp.ne.s32.totalorder %s192, %s193
    %p202 = scmp.eq.s32.totalorder %s36, 0
    %p203 = por %p201, %p202
    %p204 = scmp.ne.s32.totalorder %s192, %s193
    %p205 = scmp.eq.s32.totalorder %s37, 1
    %p206 = por %p204, %p205
    %p208 = scmp.ne.s32.totalorder %s193, %s207
    %p209 = scmp.eq.s32.totalorder %s37, 0
    %p210 = por %p208, %p209
    %s212 = sadd.s32 %s211, 1
    %p215 = scmp.eq.s32.totalorder %s31, 1
    %p216 = scmp.ne.s32.totalorder %s211, %s213
    %p217 = scmp.eq.s32.totalorder %s31, 0
    %p218 = por %p216, %p217
    %p219 = scmp.ne.s32.totalorder %s211, %s213
    %p220 = scmp.eq.s32.totalorder %s36, 1
    %p221 = por %p219, %p220
    %p222 = scmp.ne.s32.totalorder %s213, %s214
    %p223 = scmp.eq.s32.totalorder %s36, 0
    %p224 = por %p222, %p223
    %p225 = scmp.ne.s32.totalorder %s213, %s214
    %p226 = scmp.eq.s32.totalorder %s37, 1
    %p227 = por %p225, %p226
    %p229 = scmp.ne.s32.totalorder %s214, %s228
    %p230 = scmp.eq.s32.totalorder %s37, 0
    %p231 = por %p229, %p230
    %s233 = sadd.s32 %s232, 1
    %p236 = scmp.eq.s32.totalorder %s31, 1
    %p237 = scmp.ne.s32.totalorder %s232, %s234
    %p238 = scmp.eq.s32.totalorder %s31, 0
    %p239 = por %p237, %p238
    %p240 = scmp.ne.s32.totalorder %s232, %s234
    %p241 = scmp.eq.s32.totalorder %s36, 1
    %p242 = por %p240, %p241
    %p243 = scmp.ne.s32.totalorder %s234, %s235
    %p244 = scmp.eq.s32.totalorder %s36, 0
    %p245 = por %p243, %p244
    %p246 = scmp.ne.s32.totalorder %s234, %s235
    %p247 = scmp.eq.s32.totalorder %s37, 1
    %p248 = por %p246, %p247
    %p250 = scmp.ne.s32.totalorder %s235, %s249
    %p251 = scmp.eq.s32.totalorder %s37, 0
    %p252 = por %p250, %p251
    %s254 = sadd.s32 %s253, 1
    %p257 = scmp.eq.s32.totalorder %s31, 1
    %p258 = scmp.ne.s32.totalorder %s253, %s255
    %p259 = scmp.eq.s32.totalorder %s31, 0
    %p260 = por %p258, %p259
    %p261 = scmp.ne.s32.totalorder %s253, %s255
    %p262 = scmp.eq.s32.totalorder %s36, 1
    %p263 = por %p261, %p262
    %p264 = scmp.ne.s32.totalorder %s255, %s256
    %p265 = scmp.eq.s32.totalorder %s36, 0
    %p266 = por %p264, %p265
    %p267 = scmp.ne.s32.totalorder %s255, %s256
    %p268 = scmp.eq.s32.totalorder %s37, 1
    %p269 = por %p267, %p268
    %p271 = scmp.ne.s32.totalorder %s256, %s270
    %p272 = scmp.eq.s32.totalorder %s37, 0
    %p273 = por %p271, %p272
    %s275 = sadd.s32 %s274, 1
    %p278 = scmp.eq.s32.totalorder %s31, 1
    %p279 = scmp.ne.s32.totalorder %s274, %s276
    %p280 = scmp.eq.s32.totalorder %s31, 0
    %p281 = por %p279, %p280
    %p282 = scmp.ne.s32.totalorder %s274, %s276
    %p283 = scmp.eq.s32.totalorder %s36, 1
    %p284 = por %p282, %p283
    %p285 = scmp.ne.s32.totalorder %s276, %s277
    %p286 = scmp.eq.s32.totalorder %s36, 0
    %p287 = por %p285, %p286
    %p288 = scmp.ne.s32.totalorder %s276, %s277
    %p289 = scmp.eq.s32.totalorder %s37, 1
    %p290 = por %p288, %p289
    %p292 = scmp.ne.s32.totalorder %s277, %s291
    %p293 = scmp.eq.s32.totalorder %s37, 0
    %p294 = por %p292, %p293
    %s296 = sadd.s32 %s295, 1
    %p299 = scmp.eq.s32.totalorder %s31, 1
    %p300 = scmp.ne.s32.totalorder %s295, %s297
    %p301 = scmp.eq.s32.totalorder %s31, 0
    %p302 = por %p300, %p301
    %p303 = scmp.ne.s32.totalorder %s295, %s297
    %p304 = scmp.eq.s32.totalorder %s36, 1
    %p305 = por %p303, %p304
    %p306 = scmp.ne.s32.totalorder %s297, %s298
    %p307 = scmp.eq.s32.totalorder %s36, 0
    %p308 = por %p306, %p307
    %p309 = scmp.ne.s32.totalorder %s297, %s298
    %p310 = scmp.eq.s32.totalorder %s37, 1
    %p311 = por %p309, %p310
    %p313 = scmp.ne.s32.totalorder %s298, %s312
    %p314 = scmp.eq.s32.totalorder %s37, 0
    %p315 = por %p313, %p314
    %s317 = sadd.s32 %s316, 1
    %p320 = scmp.eq.s32.totalorder %s31, 1
    %p321 = scmp.ne.s32.totalorder %s316, %s318
    %p322 = scmp.eq.s32.totalorder %s31, 0
    %p323 = por %p321, %p322
    %p324 = scmp.ne.s32.totalorder %s316, %s318
    %p325 = scmp.eq.s32.totalorder %s36, 1
    %p326 = por %p324, %p325
    %p327 = scmp.ne.s32.totalorder %s318, %s319
    %p328 = scmp.eq.s32.totalorder %s36, 0
    %p329 = por %p327, %p328
    %p330 = scmp.ne.s32.totalorder %s318, %s319
    %p331 = scmp.eq.s32.totalorder %s37, 1
    %p332 = por %p330, %p331
    %p334 = scmp.ne.s32.totalorder %s319, %s333
    %p335 = scmp.eq.s32.totalorder %s37, 0
    %p336 = por %p334, %p335
    %s338 = sadd.s32 %s337, 1
    %p341 = scmp.eq.s32.totalorder %s31, 1
    %p342 = scmp.ne.s32.totalorder %s337, %s339
    %p343 = scmp.eq.s32.totalorder %s31, 0
    %p344 = por %p342, %p343
    %p345 = scmp.ne.s32.totalorder %s337, %s339
    %p346 = scmp.eq.s32.totalorder %s36, 1
    %p347 = por %p345, %p346
    %p348 = scmp.ne.s32.totalorder %s339, %s340
    %p349 = scmp.eq.s32.totalorder %s36, 0
    %p350 = por %p348, %p349
    %p351 = scmp.ne.s32.totalorder %s339, %s340
    %p352 = scmp.eq.s32.totalorder %s37, 1
    %p353 = por %p351, %p352
    %p355 = scmp.ne.s32.totalorder %s340, %s354
    %p356 = scmp.eq.s32.totalorder %s37, 0
    %p357 = por %p355, %p356
    %s359 = sadd.s32 %s358, 1
    %p362 = scmp.eq.s32.totalorder %s31, 1
    %p363 = scmp.ne.s32.totalorder %s358, %s360
    %p364 = scmp.eq.s32.totalorder %s31, 0
    %p365 = por %p363, %p364
    %p366 = scmp.ne.s32.totalorder %s358, %s360
    %p367 = scmp.eq.s32.totalorder %s36, 1
    %p368 = por %p366, %p367
    %p369 = scmp.ne.s32.totalorder %s360, %s361
    %p370 = scmp.eq.s32.totalorder %s36, 0
    %p371 = por %p369, %p370
    %p372 = scmp.ne.s32.totalorder %s360, %s361
    %p373 = scmp.eq.s32.totalorder %s37, 1
    %p374 = por %p372, %p373
    %p376 = scmp.ne.s32.totalorder %s361, %s375
    %p377 = scmp.eq.s32.totalorder %s37, 0
    %p378 = por %p376, %p377
    %s380 = sadd.s32 %s379, 1
    %p383 = scmp.eq.s32.totalorder %s31, 1
    %p384 = scmp.ne.s32.totalorder %s379, %s381
    %p385 = scmp.eq.s32.totalorder %s31, 0
    %p386 = por %p384, %p385
    %p387 = scmp.ne.s32.totalorder %s379, %s381
    %p388 = scmp.eq.s32.totalorder %s36, 1
    %p389 = por %p387, %p388
    %p390 = scmp.ne.s32.totalorder %s381, %s382
    %p391 = scmp.eq.s32.totalorder %s36, 0
    %p392 = por %p390, %p391
    %p393 = scmp.ne.s32.totalorder %s381, %s382
    %p394 = scmp.eq.s32.totalorder %s37, 1
    %p395 = por %p393, %p394
    %p397 = scmp.ne.s32.totalorder %s382, %s396
    %p398 = scmp.eq.s32.totalorder %s37, 0
    %p399 = por %p397, %p398
    %s401 = sadd.s32 %s400, 1
    %p404 = scmp.eq.s32.totalorder %s31, 1
    %p405 = scmp.ne.s32.totalorder %s400, %s402
    %p406 = scmp.eq.s32.totalorder %s31, 0
    %p407 = por %p405, %p406
    %p408 = scmp.ne.s32.totalorder %s400, %s402
    %p409 = scmp.eq.s32.totalorder %s36, 1
    %p410 = por %p408, %p409
    %p411 = scmp.ne.s32.totalorder %s402, %s403
    %p412 = scmp.eq.s32.totalorder %s36, 0
    %p413 = por %p411, %p412
    %p414 = scmp.ne.s32.totalorder %s402, %s403
    %p415 = scmp.eq.s32.totalorder %s37, 1
    %p416 = por %p414, %p415
    %p418 = scmp.ne.s32.totalorder %s403, %s417
    %p419 = scmp.eq.s32.totalorder %s37, 0
    %p420 = por %p418, %p419
    %s422 = sadd.s32 %s421, 1
    %p425 = scmp.eq.s32.totalorder %s31, 1
    %p426 = scmp.ne.s32.totalorder %s421, %s423
    %p427 = scmp.eq.s32.totalorder %s31, 0
    %p428 = por %p426, %p427
    %p429 = scmp.ne.s32.totalorder %s421, %s423
    %p430 = scmp.eq.s32.totalorder %s36, 1
    %p431 = por %p429, %p430
    %p432 = scmp.ne.s32.totalorder %s423, %s424
    %p433 = scmp.eq.s32.totalorder %s36, 0
    %p434 = por %p432, %p433
    %p435 = scmp.ne.s32.totalorder %s423, %s424
    %p436 = scmp.eq.s32.totalorder %s37, 1
    %p437 = por %p435, %p436
    %p439 = scmp.ne.s32.totalorder %s424, %s438
    %p440 = scmp.eq.s32.totalorder %s37, 0
    %p441 = por %p439, %p440
    %s443 = sadd.s32 %s442, 1
    %p446 = scmp.eq.s32.totalorder %s31, 1
    %p447 = scmp.ne.s32.totalorder %s442, %s444
    %p448 = scmp.eq.s32.totalorder %s31, 0
    %p449 = por %p447, %p448
    %p450 = scmp.ne.s32.totalorder %s442, %s444
    %p451 = scmp.eq.s32.totalorder %s36, 1
    %p452 = por %p450, %p451
    %p453 = scmp.ne.s32.totalorder %s444, %s445
    %p454 = scmp.eq.s32.totalorder %s36, 0
    %p455 = por %p453, %p454
    %p456 = scmp.ne.s32.totalorder %s444, %s445
    %p457 = scmp.eq.s32.totalorder %s37, 1
    %p458 = por %p456, %p457
    %p460 = scmp.ne.s32.totalorder %s445, %s459
    %p461 = scmp.eq.s32.totalorder %s37, 0
    %p462 = por %p460, %p461
    %s464 = sadd.s32 %s463, 1
    %p467 = scmp.eq.s32.totalorder %s31, 1
    %p468 = scmp.ne.s32.totalorder %s463, %s465
    %p469 = scmp.eq.s32.totalorder %s31, 0
    %p470 = por %p468, %p469
    %p471 = scmp.ne.s32.totalorder %s463, %s465
    %p472 = scmp.eq.s32.totalorder %s36, 1
    %p473 = por %p471, %p472
    %p474 = scmp.ne.s32.totalorder %s465, %s466
    %p475 = scmp.eq.s32.totalorder %s36, 0
    %p476 = por %p474, %p475
    %p477 = scmp.ne.s32.totalorder %s465, %s466
    %p478 = scmp.eq.s32.totalorder %s37, 1
    %p479 = por %p477, %p478
    %p481 = scmp.ne.s32.totalorder %s466, %s480
    %p482 = scmp.eq.s32.totalorder %s37, 0
    %p483 = por %p481, %p482
    %s485 = sadd.s32 %s484, 1
    %p488 = scmp.eq.s32.totalorder %s31, 1
    %p489 = scmp.ne.s32.totalorder %s484, %s486
    %p490 = scmp.eq.s32.totalorder %s31, 0
    %p491 = por %p489, %p490
    %p492 = scmp.ne.s32.totalorder %s484, %s486
    %p493 = scmp.eq.s32.totalorder %s36, 1
    %p494 = por %p492, %p493
    %p495 = scmp.ne.s32.totalorder %s486, %s487
    %p496 = scmp.eq.s32.totalorder %s36, 0
    %p497 = por %p495, %p496
    %p498 = scmp.ne.s32.totalorder %s486, %s487
    %p499 = scmp.eq.s32.totalorder %s37, 1
    %p500 = por %p498, %p499
    %p502 = scmp.ne.s32.totalorder %s487, %s501
    %p503 = scmp.eq.s32.totalorder %s37, 0
    %p504 = por %p502, %p503
    %s506 = sadd.s32 %s505, 1
    %p509 = scmp.eq.s32.totalorder %s31, 1
    %p510 = scmp.ne.s32.totalorder %s505, %s507
    %p511 = scmp.eq.s32.totalorder %s31, 0
    %p512 = por %p510, %p511
    %p513 = scmp.ne.s32.totalorder %s505, %s507
    %p514 = scmp.eq.s32.totalorder %s36, 1
    %p515 = por %p513, %p514
    %p516 = scmp.ne.s32.totalorder %s507, %s508
    %p517 = scmp.eq.s32.totalorder %s36, 0
    %p518 = por %p516, %p517
    %p519 = scmp.ne.s32.totalorder %s507, %s508
    %p520 = scmp.eq.s32.totalorder %s37, 1
    %p521 = por %p519, %p520
    %p523 = scmp.ne.s32.totalorder %s508, %s522
    %p524 = scmp.eq.s32.totalorder %s37, 0
    %p525 = por %p523, %p524
    %s527 = sadd.s32 %s526, 1
    %p530 = scmp.eq.s32.totalorder %s31, 1
    %p531 = scmp.ne.s32.totalorder %s526, %s528
    %p532 = scmp.eq.s32.totalorder %s31, 0
    %p533 = por %p531, %p532
    %p534 = scmp.ne.s32.totalorder %s526, %s528
    %p535 = scmp.eq.s32.totalorder %s36, 1
    %p536 = por %p534, %p535
    %p537 = scmp.ne.s32.totalorder %s528, %s529
    %p538 = scmp.eq.s32.totalorder %s36, 0
    %p539 = por %p537, %p538
    %p540 = scmp.ne.s32.totalorder %s528, %s529
    %p541 = scmp.eq.s32.totalorder %s37, 1
    %p542 = por %p540, %p541
    %p544 = scmp.ne.s32.totalorder %s529, %s543
    %p545 = scmp.eq.s32.totalorder %s37, 0
    %p546 = por %p544, %p545
    %s548 = sadd.s32 %s547, 1
    %p551 = scmp.eq.s32.totalorder %s31, 1
    %p552 = scmp.ne.s32.totalorder %s547, %s549
    %p553 = scmp.eq.s32.totalorder %s31, 0
    %p554 = por %p552, %p553
    %p555 = scmp.ne.s32.totalorder %s547, %s549
    %p556 = scmp.eq.s32.totalorder %s36, 1
    %p557 = por %p555, %p556
    %p558 = scmp.ne.s32.totalorder %s549, %s550
    %p559 = scmp.eq.s32.totalorder %s36, 0
    %p560 = por %p558, %p559
    %p561 = scmp.ne.s32.totalorder %s549, %s550
    %p562 = scmp.eq.s32.totalorder %s37, 1
    %p563 = por %p561, %p562
    %p565 = scmp.ne.s32.totalorder %s550, %s564
    %p566 = scmp.eq.s32.totalorder %s37, 0
    %p567 = por %p565, %p566
    %s569 = sadd.s32 %s568, 1
    %p572 = scmp.eq.s32.totalorder %s31, 1
    %p573 = scmp.ne.s32.totalorder %s568, %s570
    %p574 = scmp.eq.s32.totalorder %s31, 0
    %p575 = por %p573, %p574
    %p576 = scmp.ne.s32.totalorder %s568, %s570
    %p577 = scmp.eq.s32.totalorder %s36, 1
    %p578 = por %p576, %p577
    %p579 = scmp.ne.s32.totalorder %s570, %s571
    %p580 = scmp.eq.s32.totalorder %s36, 0
    %p581 = por %p579, %p580
    %p582 = scmp.ne.s32.totalorder %s570, %s571
    %p583 = scmp.eq.s32.totalorder %s37, 1
    %p584 = por %p582, %p583
    %p586 = scmp.ne.s32.totalorder %s571, %s585
    %p587 = scmp.eq.s32.totalorder %s37, 0
    %p588 = por %p586, %p587
    %s589 = ssub.s32 %s31, %s38
    %p590 = scmp.eq.s32.totalorder %s589, 0
    %s592 = sadd.s32 %s591, 1
    %s593 = scalar_select %p590, %s591, %s592
    %p596 = pneg %p590
    %p597 = scmp.eq.s32.totalorder %s31, 1
    %p598 = por %p596, %p597
    %p599 = scmp.ne.s32.totalorder %s591, %s594
    %p600 = scmp.eq.s32.totalorder %s31, 0
    %p601 = por %p599, %p600
    %p602 = scmp.ne.s32.totalorder %s591, %s594
    %p603 = scmp.eq.s32.totalorder %s36, 1
    %p604 = por %p602, %p603
    %p605 = scmp.ne.s32.totalorder %s594, %s595
    %p606 = scmp.eq.s32.totalorder %s36, 0
    %p607 = por %p605, %p606
    %p608 = scmp.ne.s32.totalorder %s594, %s595
    %p609 = scmp.eq.s32.totalorder %s37, 1
    %p610 = por %p608, %p609
    %p612 = scmp.ne.s32.totalorder %s595, %s611
    %p613 = scmp.eq.s32.totalorder %s37, 0
    %p614 = por %p612, %p613
    %p615 = scmp.le.s32.totalorder 1, %s31
    %p616 = scmp.lt.s32.totalorder %s31, 3
    %p617 = pnand %p615, %p616
    %p618 = pneg %p617
    // Predicated region
    $region9: #{_lambda_.3} parent=5 // pred_check
      _
    $region10: #{_lambda_.3} parent=5 // pred_check_branch
      %620 = sbr.rel (%p617) target = $region12
    $region11: #{_lambda_.3} parent=5 // pred_region
      %s621 = ssub.s32 %s31, 1
      // Predicated region
      $region13: #{_lambda_.3} parent=11 // pred_check
        %p622 = pneg %p182
      $region14: #{_lambda_.3} parent=11 // pred_check_branch
        %624 = sbr.rel (%p622) target = $region16
      $region15: #{_lambda_.3} parent=11 // pred_region
        _
      $region16: #{_lambda_.3} parent=11 // pred_fallthru
        _
      // Predicated region
      $region17: #{_lambda_.3} parent=11 // pred_check
        %p625 = pneg %p203
      $region18: #{_lambda_.3} parent=11 // pred_check_branch
        %627 = sbr.rel (%p625) target = $region20
      $region19: #{_lambda_.3} parent=11 // pred_region
        _
      $region20: #{_lambda_.3} parent=11 // pred_fallthru
        _
      // Predicated region
      $region21: #{_lambda_.3} parent=11 // pred_check
        %p628 = pneg %p224
      $region22: #{_lambda_.3} parent=11 // pred_check_branch
        %630 = sbr.rel (%p628) target = $region24
      $region23: #{_lambda_.3} parent=11 // pred_region
        _
      $region24: #{_lambda_.3} parent=11 // pred_fallthru
        _
      // Predicated region
      $region25: #{_lambda_.3} parent=11 // pred_check
        %p631 = pneg %p245
      $region26: #{_lambda_.3} parent=11 // pred_check_branch
        %633 = sbr.rel (%p631) target = $region28
      $region27: #{_lambda_.3} parent=11 // pred_region
        _
      $region28: #{_lambda_.3} parent=11 // pred_fallthru
        _
      // Predicated region
      $region29: #{_lambda_.3} parent=11 // pred_check
        %p634 = pneg %p266
      $region30: #{_lambda_.3} parent=11 // pred_check_branch
        %636 = sbr.rel (%p634) target = $region32
      $region31: #{_lambda_.3} parent=11 // pred_region
        _
      $region32: #{_lambda_.3} parent=11 // pred_fallthru
        _
      // Predicated region
      $region33: #{_lambda_.3} parent=11 // pred_check
        %p637 = pneg %p287
      $region34: #{_lambda_.3} parent=11 // pred_check_branch
        %639 = sbr.rel (%p637) target = $region36
      $region35: #{_lambda_.3} parent=11 // pred_region
        _
      $region36: #{_lambda_.3} parent=11 // pred_fallthru
        _
      // Predicated region
      $region37: #{_lambda_.3} parent=11 // pred_check
        %p640 = pneg %p308
      $region38: #{_lambda_.3} parent=11 // pred_check_branch
        %642 = sbr.rel (%p640) target = $region40
      $region39: #{_lambda_.3} parent=11 // pred_region
        _
      $region40: #{_lambda_.3} parent=11 // pred_fallthru
        _
      // Predicated region
      $region41: #{_lambda_.3} parent=11 // pred_check
        %p643 = pneg %p329
      $region42: #{_lambda_.3} parent=11 // pred_check_branch
        %645 = sbr.rel (%p643) target = $region44
      $region43: #{_lambda_.3} parent=11 // pred_region
        _
      $region44: #{_lambda_.3} parent=11 // pred_fallthru
        _
      // Predicated region
      $region45: #{_lambda_.3} parent=11 // pred_check
        %p646 = pneg %p350
      $region46: #{_lambda_.3} parent=11 // pred_check_branch
        %648 = sbr.rel (%p646) target = $region48
      $region47: #{_lambda_.3} parent=11 // pred_region
        _
      $region48: #{_lambda_.3} parent=11 // pred_fallthru
        _
      // Predicated region
      $region49: #{_lambda_.3} parent=11 // pred_check
        %p649 = pneg %p371
      $region50: #{_lambda_.3} parent=11 // pred_check_branch
        %651 = sbr.rel (%p649) target = $region52
      $region51: #{_lambda_.3} parent=11 // pred_region
        _
      $region52: #{_lambda_.3} parent=11 // pred_fallthru
        _
      // Predicated region
      $region53: #{_lambda_.3} parent=11 // pred_check
        %p652 = pneg %p392
      $region54: #{_lambda_.3} parent=11 // pred_check_branch
        %654 = sbr.rel (%p652) target = $region56
      $region55: #{_lambda_.3} parent=11 // pred_region
        _
      $region56: #{_lambda_.3} parent=11 // pred_fallthru
        _
      // Predicated region
      $region57: #{_lambda_.3} parent=11 // pred_check
        %p655 = pneg %p413
      $region58: #{_lambda_.3} parent=11 // pred_check_branch
        %657 = sbr.rel (%p655) target = $region60
      $region59: #{_lambda_.3} parent=11 // pred_region
        _
      $region60: #{_lambda_.3} parent=11 // pred_fallthru
        _
      // Predicated region
      $region61: #{_lambda_.3} parent=11 // pred_check
        %p658 = pneg %p434
      $region62: #{_lambda_.3} parent=11 // pred_check_branch
        %660 = sbr.rel (%p658) target = $region64
      $region63: #{_lambda_.3} parent=11 // pred_region
        _
      $region64: #{_lambda_.3} parent=11 // pred_fallthru
        _
      // Predicated region
      $region65: #{_lambda_.3} parent=11 // pred_check
        %p661 = pneg %p455
      $region66: #{_lambda_.3} parent=11 // pred_check_branch
        %663 = sbr.rel (%p661) target = $region68
      $region67: #{_lambda_.3} parent=11 // pred_region
        _
      $region68: #{_lambda_.3} parent=11 // pred_fallthru
        _
      // Predicated region
      $region69: #{_lambda_.3} parent=11 // pred_check
        %p664 = pneg %p476
      $region70: #{_lambda_.3} parent=11 // pred_check_branch
        %666 = sbr.rel (%p664) target = $region72
      $region71: #{_lambda_.3} parent=11 // pred_region
        _
      $region72: #{_lambda_.3} parent=11 // pred_fallthru
        _
      // Predicated region
      $region73: #{_lambda_.3} parent=11 // pred_check
        %p667 = pneg %p497
      $region74: #{_lambda_.3} parent=11 // pred_check_branch
        %669 = sbr.rel (%p667) target = $region76
      $region75: #{_lambda_.3} parent=11 // pred_region
        _
      $region76: #{_lambda_.3} parent=11 // pred_fallthru
        _
      // Predicated region
      $region77: #{_lambda_.3} parent=11 // pred_check
        %p670 = pneg %p518
      $region78: #{_lambda_.3} parent=11 // pred_check_branch
        %672 = sbr.rel (%p670) target = $region80
      $region79: #{_lambda_.3} parent=11 // pred_region
        _
      $region80: #{_lambda_.3} parent=11 // pred_fallthru
        _
      // Predicated region
      $region81: #{_lambda_.3} parent=11 // pred_check
        %p673 = pneg %p539
      $region82: #{_lambda_.3} parent=11 // pred_check_branch
        %675 = sbr.rel (%p673) target = $region84
      $region83: #{_lambda_.3} parent=11 // pred_region
        _
      $region84: #{_lambda_.3} parent=11 // pred_fallthru
        _
      // Predicated region
      $region85: #{_lambda_.3} parent=11 // pred_check
        %p676 = pneg %p560
      $region86: #{_lambda_.3} parent=11 // pred_check_branch
        %678 = sbr.rel (%p676) target = $region88
      $region87: #{_lambda_.3} parent=11 // pred_region
        _
      $region88: #{_lambda_.3} parent=11 // pred_fallthru
        _
      // Predicated region
      $region89: #{_lambda_.3} parent=11 // pred_check
        %p679 = pneg %p581
      $region90: #{_lambda_.3} parent=11 // pred_check_branch
        %681 = sbr.rel (%p679) target = $region92
      $region91: #{_lambda_.3} parent=11 // pred_region
        _
      $region92: #{_lambda_.3} parent=11 // pred_fallthru
        _
    $region12: #{_lambda_.3} parent=5 // pred_fallthru
      _
    %p682 = scmp.lt.s32.totalorder %s31, 2
    // Predicated region
    $region93: #{_lambda_.3} parent=5 // pred_check
      %p683 = pneg %p682
    $region94: #{_lambda_.3} parent=5 // pred_check_branch
      %685 = sbr.rel (%p683) target = $region96
    $region95: #{_lambda_.3} parent=5 // pred_region
      // Predicated region
      $region97: #{_lambda_.3} parent=95 // pred_check
        %p686 = pneg %p51
      $region98: #{_lambda_.3} parent=95 // pred_check_branch
        %688 = sbr.rel (%p686) target = $region100
      $region99: #{_lambda_.3} parent=95 // pred_region
        %p689 = scmp.lt.s32.totalorder %s31, 1
        %s690 = scalar_select %p689, %s31, 1
        %s691 = smul.addr %s690, 8
        %s692 = scalar_lea.vmem %s0, %s691
      $region100: #{_lambda_.3} parent=95 // pred_fallthru
        _
      // Predicated region
      $region101: #{_lambda_.3} parent=95 // pred_check
        %p693 = pneg %p77
      $region102: #{_lambda_.3} parent=95 // pred_check_branch
        %695 = sbr.rel (%p693) target = $region104
      $region103: #{_lambda_.3} parent=95 // pred_region
        %p696 = scmp.lt.s32.totalorder %s31, 1
        %s697 = scalar_select %p696, %s31, 1
        %s698 = smul.addr %s697, 8
        %s699 = scalar_lea.vmem %s1, %s698
      $region104: #{_lambda_.3} parent=95 // pred_fallthru
        _
      // Predicated region
      $region105: #{_lambda_.3} parent=95 // pred_check
        %p700 = pneg %p103
      $region106: #{_lambda_.3} parent=95 // pred_check_branch
        %702 = sbr.rel (%p700) target = $region108
      $region107: #{_lambda_.3} parent=95 // pred_region
        %p703 = scmp.lt.s32.totalorder %s31, 1
        %s704 = scalar_select %p703, %s31, 1
        %s705 = scalar_lea.vmem %s2, %s704
      $region108: #{_lambda_.3} parent=95 // pred_fallthru
        _
      // Predicated region
      $region109: #{_lambda_.3} parent=95 // pred_check
        %p706 = pneg %p129
      $region110: #{_lambda_.3} parent=95 // pred_check_branch
        %708 = sbr.rel (%p706) target = $region112
      $region111: #{_lambda_.3} parent=95 // pred_region
        %p709 = scmp.lt.s32.totalorder %s31, 1
        %s710 = scalar_select %p709, %s31, 1
        %s711 = scalar_lea.vmem %s3, %s710
      $region112: #{_lambda_.3} parent=95 // pred_fallthru
        _
      // Predicated region
      $region113: #{_lambda_.3} parent=95 // pred_check
        %p712 = pneg %p155
      $region114: #{_lambda_.3} parent=95 // pred_check_branch
        %714 = sbr.rel (%p712) target = $region116
      $region115: #{_lambda_.3} parent=95 // pred_region
        %p715 = scmp.lt.s32.totalorder %s31, 1
        %s716 = scalar_select %p715, %s31, 1
        %s717 = smul.addr %s716, 8
        %s718 = scalar_lea.vmem %s4, %s717
      $region116: #{_lambda_.3} parent=95 // pred_fallthru
        _
    $region96: #{_lambda_.3} parent=5 // pred_fallthru
      _
    %p719 = scmp.le.s32.totalorder 1, %s31
    %p720 = scmp.lt.s32.totalorder %s31, 3
    %p721 = pnand %p719, %p720
    %p722 = pneg %p721
    // Predicated region
    $region117: #{_lambda_.3} parent=5 // pred_check
      _
    $region118: #{_lambda_.3} parent=5 // pred_check_branch
      %724 = sbr.rel (%p721) target = $region120
    $region119: #{_lambda_.3} parent=5 // pred_region
      %s725 = ssub.s32 %s31, 1
      %p726 = scmp.lt.s32.totalorder %s36, 1
      %s727 = scalar_select %p726, %s36, 1
      %s728 = smul.addr %s727, 8
      %s729 = scalar_lea.vmem %s0, %s728
      %p730 = pneg %p57
      %p731 = pneg %p54
      %p732 = scmp.lt.s32.totalorder %s36, 1
      %s733 = scalar_select %p732, %s36, 1
      %s734 = smul.addr %s733, 8
      %s735 = scalar_lea.vmem %s1, %s734
      %p736 = pneg %p83
      %p737 = pneg %p80
      %p738 = scmp.lt.s32.totalorder %s36, 1
      %s739 = scalar_select %p738, %s36, 1
      %s740 = scalar_lea.vmem %s2, %s739
      %p741 = pneg %p109
      %p742 = pneg %p106
      %p743 = scmp.lt.s32.totalorder %s36, 1
      %s744 = scalar_select %p743, %s36, 1
      %s745 = scalar_lea.vmem %s3, %s744
      %p746 = pneg %p135
      %p747 = pneg %p132
      %p748 = scmp.lt.s32.totalorder %s36, 1
      %s749 = scalar_select %p748, %s36, 1
      %s750 = smul.addr %s749, 8
      %s751 = scalar_lea.vmem %s4, %s750
      %p752 = pneg %p161
      %p753 = pneg %p158
      %p754 = pneg %p182
      %p755 = pneg %p179
      %p756 = pneg %p203
      %p757 = pneg %p200
      %p758 = pneg %p224
      %p759 = pneg %p221
      %p760 = pneg %p245
      %p761 = pneg %p242
      %p762 = pneg %p266
      %p763 = pneg %p263
      %p764 = pneg %p287
      %p765 = pneg %p284
      %p766 = pneg %p308
      %p767 = pneg %p305
      %p768 = pneg %p329
      %p769 = pneg %p326
      %p770 = pneg %p350
      %p771 = pneg %p347
      %p772 = pneg %p371
      %p773 = pneg %p368
      %p774 = pneg %p392
      %p775 = pneg %p389
      %p776 = pneg %p413
      %p777 = pneg %p410
      %p778 = pneg %p434
      %p779 = pneg %p431
      %p780 = pneg %p455
      %p781 = pneg %p452
      %p782 = pneg %p476
      %p783 = pneg %p473
      %p784 = pneg %p497
      %p785 = pneg %p494
      %p786 = pneg %p518
      %p787 = pneg %p515
      %p788 = pneg %p539
      %p789 = pneg %p536
      %p790 = pneg %p560
      %p791 = pneg %p557
      %p792 = pneg %p581
      %p793 = pneg %p578
      %p794 = pneg %p607
      %p795 = pneg %p604
      %p796 = scmp.lt.s32.totalorder %s36, 1
      %s797 = scalar_select %p796, %s36, 1
      %s798 = smul.addr %s797, 8
      %s799 = scalar_lea.vmem %s25, %s798
      %p800 = scmp.lt.s32.totalorder %s36, 1
      %s801 = scalar_select %p800, %s36, 1
      %s802 = smul.addr %s801, 8
      %s803 = scalar_lea.vmem %s0, %s802
      %p804 = scmp.lt.s32.totalorder %s36, 1
      %s805 = scalar_select %p804, %s36, 1
      %s806 = smul.addr %s805, 8
      %s807 = scalar_lea.vmem %s1, %s806
      %p808 = scmp.lt.s32.totalorder %s36, 1
      %s809 = scalar_select %p808, %s36, 1
      %s810 = scalar_lea.vmem %s2, %s809
      %p811 = scmp.lt.s32.totalorder %s36, 1
      %s812 = scalar_select %p811, %s36, 1
      %s813 = scalar_lea.vmem %s3, %s812
      %p814 = scmp.lt.s32.totalorder %s36, 1
      %s815 = scalar_select %p814, %s36, 1
      %s816 = smul.addr %s815, 8
      %s817 = scalar_lea.vmem %s4, %s816
      %p818 = scmp.lt.s32.totalorder %s36, 1
      %s819 = scalar_select %p818, %s36, 1
      %s820 = smul.addr %s819, 8
      %s821 = scalar_lea.vmem %s25, %s820
      %v823 = vld [vmem:[%s817] sm:$0xff]
      %v824 = vld [vmem:[%s803] sm:$0xff]
      %v825 = vpack.c.bf16 %v824, %v824
      %v826 = vld [vmem:[%s5] sm:$0xf]
      %v827 = vld [vmem:[%s5 + $0x4] sm:$0xf]
      %v828 = vld [vmem:[%s5 + $0x8] sm:$0xf]
      %v829 = vld [vmem:[%s5 + $0xc] sm:$0xf]
      %v830 = vld [vmem:[%s6] sm:$0x1]
      %v832 = vlaneseq
      %v833 = vshrl.u32 %v832, 7
      %v834 = vsub.s32 0, %v833
      %v835 = vrot.slane %v830, %v834
      %v841 = vunpack.c.l.b16 %v826
      %v842 = vunpack.c.l.b16 %v827
      %v843 = vunpack.c.l.b16 %v828
      %v844 = vunpack.c.l.b16 %v829
      %v845 = vpack.c.b16 %v842, %v841
      %v846 = vpack.c.b16 %v844, %v843
      %vm849 = vcmask 261120
      %v851 = vsel %vm849, %v825, 0
      %853 = vmatprep.subr.bf16.mxu0 0
      %854 = vmatpush1.bf16.msra.mxu0 %v845
      %855 = vmatprep.subr.bf16.mxu0 0
      %856 = vmatpush1.bf16.msra.mxu0 %v846
      %857 = vmatprep.subr.bf16.mxu0 0
      %858 = vmatpush1.bf16.msra.mxu0 0
      %859 = vmatprep.subr.bf16.mxu0 0
      %860 = vmatpush1.bf16.msra.mxu0 0
      %861 = vmatprep.subr.bf16.mxu0 0
      %862 = vmatpush1.bf16.msra.mxu0 0
      %863 = vmatprep.subr.bf16.mxu0 0
      %864 = vmatpush1.bf16.msra.mxu0 0
      %865 = vmatprep.subr.bf16.mxu0 0
      %866 = vmatpush1.bf16.msra.mxu0 0
      %867 = vmatprep.subr.bf16.mxu0 0
      %868 = vmatpush1.bf16.msra.mxu0 0
      %869 = vmatprep.subr.bf16.mxu0 0
      %870 = vmatpush1.bf16.msra.mxu0 0
      %871 = vmatprep.subr.bf16.mxu0 0
      %872 = vmatpush1.bf16.msra.mxu0 0
      %873 = vmatprep.subr.bf16.mxu0 0
      %874 = vmatpush1.bf16.msra.mxu0 0
      %875 = vmatprep.subr.bf16.mxu0 0
      %876 = vmatpush1.bf16.msra.mxu0 0
      %877 = vmatprep.subr.bf16.mxu0 0
      %878 = vmatpush1.bf16.msra.mxu0 0
      %879 = vmatprep.subr.bf16.mxu0 0
      %880 = vmatpush1.bf16.msra.mxu0 0
      %881 = vmatprep.subr.bf16.mxu0 0
      %882 = vmatpush1.bf16.msra.mxu0 0
      %883 = vmatprep.subr.bf16.mxu0 0
      %884 = vmatpush1.bf16.msra.mxu0 0
      %885 = vmatprep.mubr.bf16.mxu0 0
      %886 = vmatmul.mubr.bf16.gmra.mrb[0].mxu0 %v851
      %v887 = vpop.f32.mrb[0].mxu0
      %v888 = vadd.f32 %v835, %v887
      %v889 = vpop.f32.mrb[0].mxu0
      %v890 = vpop.f32.mrb[0].mxu0
      %v891 = vpop.f32.mrb[0].mxu0
      %892 = vdwg.mxu0
      %v893 = vld [vmem:[%s810] sm:$0x1]
      %vm894 = vcmp.gt.f32.partialorder %v893, 0.0
      %v895 = vsel %vm894, 1, 0
      %v896 = vlaneseq
      %v897 = vshrl.u32 %v896, 7
      %v898 = vsub.s32 0, %v897
      %v899 = vrot.slane %v895, %v898
      %vm900 = vcmp.eq.s32.totalorder %v899, 1
      %v901 = vlaneseq
      %v902 = vshrl.u32 %v901, 7
      %v903 = vlaneseq
      %v904 = vand.u32 %v903, 127
      %vm905 = vcmp.le.s32.totalorder %v904, %v902
      %vm906 = vmand %vm900, %vm905
      %v907 = vpack.c.bf16 %v888, %v888
      %909 = vrot.lane.b32.xlu0 %v907, 96
      %v910 = vpop.permute.xlu0 %909
      %vm911 = vcmask 64512
      %v913 = vsel %vm911, %v907, 0
      %v916 = vsel %vm911, %v910, 0
      %918 = vmatprep.subr.bf16.mxu0 0
      %919 = vmatpush1.bf16.xpose.msra.mxu0 %v916
      %920 = vmatprep.subr.bf16.mxu0 0
      %921 = vmatpush1.bf16.xpose.msra.mxu0 0
      %922 = vmatprep.subr.bf16.mxu0 0
      %923 = vmatpush1.bf16.xpose.msra.mxu0 0
      %924 = vmatprep.subr.bf16.mxu0 0
      %925 = vmatpush1.bf16.xpose.msra.mxu0 0
      %926 = vmatprep.subr.bf16.mxu0 0
      %927 = vmatpush1.bf16.xpose.msra.mxu0 0
      %928 = vmatprep.subr.bf16.mxu0 0
      %929 = vmatpush1.bf16.xpose.msra.mxu0 0
      %930 = vmatprep.subr.bf16.mxu0 0
      %931 = vmatpush1.bf16.xpose.msra.mxu0 0
      %932 = vmatprep.subr.bf16.mxu0 0
      %933 = vmatpush1.bf16.xpose.msra.mxu0 0
      %934 = vmatprep.subr.bf16.mxu0 0
      %935 = vmatpush1.bf16.xpose.msra.mxu0 0
      %936 = vmatprep.subr.bf16.mxu0 0
      %937 = vmatpush1.bf16.xpose.msra.mxu0 0
      %938 = vmatprep.subr.bf16.mxu0 0
      %939 = vmatpush1.bf16.xpose.msra.mxu0 0
      %940 = vmatprep.subr.bf16.mxu0 0
      %941 = vmatpush1.bf16.xpose.msra.mxu0 0
      %942 = vmatprep.subr.bf16.mxu0 0
      %943 = vmatpush1.bf16.xpose.msra.mxu0 0
      %944 = vmatprep.subr.bf16.mxu0 0
      %945 = vmatpush1.bf16.xpose.msra.mxu0 0
      %946 = vmatprep.subr.bf16.mxu0 0
      %947 = vmatpush1.bf16.xpose.msra.mxu0 0
      %948 = vmatprep.subr.bf16.mxu0 0
      %949 = vmatpush1.bf16.xpose.msra.mxu0 0
      %950 = vmatprep.mubr.bf16.mxu0 0
      %951 = vmatmul.mubr.bf16.gmra.mrb[0].mxu0 %v913
      %v952 = vpop.f32.mrb[0].mxu0
      %v953 = vadd.f32 0.0, %v952
      %v954 = vpop.f32.mrb[0].mxu0
      %v955 = vpop.f32.mrb[0].mxu0
      %v956 = vpop.f32.mrb[0].mxu0
      %957 = vdwg.mxu0
      %v958 = vmul.f32 %v953, 0.35355338
      %v959 = vsel %vm906, %v958, -1e+09
      %v960 = vsel %vm911, %v959, -inf
      %961 = vmax.xlane.f32.xlu0 %v960
      %v962 = vpop.xlane.xlu0 %961
      %v963 = vsub.f32 %v959, %v962
      %v964 = vmul.f32 %v963, 1.442695
      %v965 = vpow.pop %v964
      %v966 = vsel %vm911, %v965, 0.0
      %967 = vadd.xlane.f32.xlu0 %v966
      %v968 = vpop.xlane.xlu0 %967
      %v969 = vrcp.pop %v968
      %v970 = vmul.f32 %v965, %v969
      %v971 = vpack.c.bf16 %v970, %v970
      %972 = vrot.lane.b32.xlu0 %v907, 64
      %v973 = vpop.permute.xlu0 %972
      %v975 = vsel %vm911, %v971, 0
      %vm977 = vcmask 1043456
      %v979 = vsel %vm977, %v973, 0
      %981 = vmatprep.subr.bf16.mxu0 0
      %982 = vmatpush1.bf16.msra.mxu0 %v979
      %983 = vmatprep.subr.bf16.mxu0 0
      %984 = vmatpush1.bf16.msra.mxu0 0
      %985 = vmatprep.subr.bf16.mxu0 0
      %986 = vmatpush1.bf16.msra.mxu0 0
      %987 = vmatprep.subr.bf16.mxu0 0
      %988 = vmatpush1.bf16.msra.mxu0 0
      %989 = vmatprep.subr.bf16.mxu0 0
      %990 = vmatpush1.bf16.msra.mxu0 0
      %991 = vmatprep.subr.bf16.mxu0 0
      %992 = vmatpush1.bf16.msra.mxu0 0
      %993 = vmatprep.subr.bf16.mxu0 0
      %994 = vmatpush1.bf16.msra.mxu0 0
      %995 = vmatprep.subr.bf16.mxu0 0
      %996 = vmatpush1.bf16.msra.mxu0 0
      %997 = vmatprep.subr.bf16.mxu0 0
      %998 = vmatpush1.bf16.msra.mxu0 0
      %999 = vmatprep.subr.bf16.mxu0 0
      %1000 = vmatpush1.bf16.msra.mxu0 0
      %1001 = vmatprep.subr.bf16.mxu0 0
      %1002 = vmatpush1.bf16.msra.mxu0 0
      %1003 = vmatprep.subr.bf16.mxu0 0
      %1004 = vmatpush1.bf16.msra.mxu0 0
      %1005 = vmatprep.subr.bf16.mxu0 0
      %1006 = vmatpush1.bf16.msra.mxu0 0
      %1007 = vmatprep.subr.bf16.mxu0 0
      %1008 = vmatpush1.bf16.msra.mxu0 0
      %1009 = vmatprep.subr.bf16.mxu0 0
      %1010 = vmatpush1.bf16.msra.mxu0 0
      %1011 = vmatprep.subr.bf16.mxu0 0
      %1012 = vmatpush1.bf16.msra.mxu0 0
      %1013 = vmatprep.mubr.bf16.mxu0 0
      %1014 = vmatmul.mubr.bf16.gmra.mrb[0].mxu0 %v975
      %v1015 = vpop.f32.mrb[0].mxu0
      %v1016 = vadd.f32 0.0, %v1015
      %v1017 = vpop.f32.mrb[0].mxu0
      %v1018 = vpop.f32.mrb[0].mxu0
      %v1019 = vpop.f32.mrb[0].mxu0
      %1020 = vdwg.mxu0
      %1021 = vrot.lane.b32.xlu0 %v907, 120
      %v1022 = vpop.permute.xlu0 %1021
      %1023 = vrot.lane.b32.xlu0 %v907, 88
      %v1024 = vpop.permute.xlu0 %1023
      %v1026 = vsel %vm911, %v1022, 0
      %v1029 = vsel %vm911, %v1024, 0
      %1031 = vmatprep.subr.bf16.mxu0 0
      %1032 = vmatpush1.bf16.xpose.msra.mxu0 %v1029
      %1033 = vmatprep.subr.bf16.mxu0 0
      %1034 = vmatpush1.bf16.xpose.msra.mxu0 0
      %1035 = vmatprep.subr.bf16.mxu0 0
      %1036 = vmatpush1.bf16.xpose.msra.mxu0 0
      %1037 = vmatprep.subr.bf16.mxu0 0
      %1038 = vmatpush1.bf16.xpose.msra.mxu0 0
      %1039 = vmatprep.subr.bf16.mxu0 0
      %1040 = vmatpush1.bf16.xpose.msra.mxu0 0
      %1041 = vmatprep.subr.bf16.mxu0 0
      %1042 = vmatpush1.bf16.xpose.msra.mxu0 0
      %1043 = vmatprep.subr.bf16.mxu0 0
      %1044 = vmatpush1.bf16.xpose.msra.mxu0 0
      %1045 = vmatprep.subr.bf16.mxu0 0
      %1046 = vmatpush1.bf16.xpose.msra.mxu0 0
      %1047 = vmatprep.subr.bf16.mxu0 0
      %1048 = vmatpush1.bf16.xpose.msra.mxu0 0
      %1049 = vmatprep.subr.bf16.mxu0 0
      %1050 = vmatpush1.bf16.xpose.msra.mxu0 0
      %1051 = vmatprep.subr.bf16.mxu0 0
      %1052 = vmatpush1.bf16.xpose.msra.mxu0 0
      %1053 = vmatprep.subr.bf16.mxu0 0
      %1054 = vmatpush1.bf16.xpose.msra.mxu0 0
      %1055 = vmatprep.subr.bf16.mxu0 0
      %1056 = vmatpush1.bf16.xpose.msra.mxu0 0
      %1057 = vmatprep.subr.bf16.mxu0 0
      %1058 = vmatpush1.bf16.xpose.msra.mxu0 0
      %1059 = vmatprep.subr.bf16.mxu0 0
      %1060 = vmatpush1.bf16.xpose.msra.mxu0 0
      %1061 = vmatprep.subr.bf16.mxu0 0
      %1062 = vmatpush1.bf16.xpose.msra.mxu0 0
      %1063 = vmatprep.mubr.bf16.mxu0 0
      %1064 = vmatmul.mubr.bf16.gmra.mrb[0].mxu0 %v1026
      %v1065 = vpop.f32.mrb[0].mxu0
      %v1066 = vadd.f32 0.0, %v1065
      %v1067 = vpop.f32.mrb[0].mxu0
      %v1068 = vpop.f32.mrb[0].mxu0
      %v1069 = vpop.f32.mrb[0].mxu0
      %1070 = vdwg.mxu0
      %v1071 = vmul.f32 %v1066, 0.35355338
      %v1072 = vsel %vm906, %v1071, -1e+09
      %v1073 = vsel %vm911, %v1072, -inf
      %1074 = vmax.xlane.f32.xlu0 %v1073
      %v1075 = vpop.xlane.xlu0 %1074
      %v1076 = vsub.f32 %v1072, %v1075
      %v1077 = vmul.f32 %v1076, 1.442695
      %v1078 = vpow.pop %v1077
      %v1079 = vsel %vm911, %v1078, 0.0
      %1080 = vadd.xlane.f32.xlu0 %v1079
      %v1081 = vpop.xlane.xlu0 %1080
      %v1082 = vrcp.pop %v1081
      %v1083 = vmul.f32 %v1078, %v1082
      %v1084 = vpack.c.bf16 %v1083, %v1083
      %1085 = vrot.lane.b32.xlu0 %v907, 56
      %v1086 = vpop.permute.xlu0 %1085
      %v1088 = vsel %vm911, %v1084, 0
      %v1091 = vsel %vm977, %v1086, 0
      %1093 = vmatprep.subr.bf16.mxu0 0
      %1094 = vmatpush1.bf16.msra.mxu0 %v1091
      %1095 = vmatprep.subr.bf16.mxu0 0
      %1096 = vmatpush1.bf16.msra.mxu0 0
      %1097 = vmatprep.subr.bf16.mxu0 0
      %1098 = vmatpush1.bf16.msra.mxu0 0
      %1099 = vmatprep.subr.bf16.mxu0 0
      %1100 = vmatpush1.bf16.msra.mxu0 0
      %1101 = vmatprep.subr.bf16.mxu0 0
      %1102 = vmatpush1.bf16.msra.mxu0 0
      %1103 = vmatprep.subr.bf16.mxu0 0
      %1104 = vmatpush1.bf16.msra.mxu0 0
      %1105 = vmatprep.subr.bf16.mxu0 0
      %1106 = vmatpush1.bf16.msra.mxu0 0
      %1107 = vmatprep.subr.bf16.mxu0 0
      %1108 = vmatpush1.bf16.msra.mxu0 0
      %1109 = vmatprep.subr.bf16.mxu0 0
      %1110 = vmatpush1.bf16.msra.mxu0 0
      %1111 = vmatprep.subr.bf16.mxu0 0
      %1112 = vmatpush1.bf16.msra.mxu0 0
      %1113 = vmatprep.subr.bf16.mxu0 0
      %1114 = vmatpush1.bf16.msra.mxu0 0
      %1115 = vmatprep.subr.bf16.mxu0 0
      %1116 = vmatpush1.bf16.msra.mxu0 0
      %1117 = vmatprep.subr.bf16.mxu0 0
      %1118 = vmatpush1.bf16.msra.mxu0 0
      %1119 = vmatprep.subr.bf16.mxu0 0
      %1120 = vmatpush1.bf16.msra.mxu0 0
      %1121 = vmatprep.subr.bf16.mxu0 0
      %1122 = vmatpush1.bf16.msra.mxu0 0
      %1123 = vmatprep.subr.bf16.mxu0 0
      %1124 = vmatpush1.bf16.msra.mxu0 0
      %1125 = vmatprep.mubr.bf16.mxu0 0
      %1126 = vmatmul.mubr.bf16.gmra.mrb[0].mxu0 %v1088
      %v1127 = vpop.f32.mrb[0].mxu0
      %v1128 = vadd.f32 0.0, %v1127
      %v1129 = vpop.f32.mrb[0].mxu0
      %v1130 = vpop.f32.mrb[0].mxu0
      %v1131 = vpop.f32.mrb[0].mxu0
      %1132 = vdwg.mxu0
      %1133 = vrot.lane.b32.xlu0 %v907, 112
      %v1134 = vpop.permute.xlu0 %1133
      %1135 = vrot.lane.b32.xlu0 %v907, 80
      %v1136 = vpop.permute.xlu0 %1135
      %v1138 = vsel %vm911, %v1134, 0
      %v1141 = vsel %vm911, %v1136, 0
      %1143 = vmatprep.subr.bf16.mxu0 0
      %1144 = vmatpush1.bf16.xpose.msra.mxu0 %v1141
      %1145 = vmatprep.subr.bf16.mxu0 0
      %1146 = vmatpush1.bf16.xpose.msra.mxu0 0
      %1147 = vmatprep.subr.bf16.mxu0 0
      %1148 = vmatpush1.bf16.xpose.msra.mxu0 0
      %1149 = vmatprep.subr.bf16.mxu0 0
      %1150 = vmatpush1.bf16.xpose.msra.mxu0 0
      %1151 = vmatprep.subr.bf16.mxu0 0
      %1152 = vmatpush1.bf16.xpose.msra.mxu0 0
      %1153 = vmatprep.subr.bf16.mxu0 0
      %1154 = vmatpush1.bf16.xpose.msra.mxu0 0
      %1155 = vmatprep.subr.bf16.mxu0 0
      %1156 = vmatpush1.bf16.xpose.msra.mxu0 0
      %1157 = vmatprep.subr.bf16.mxu0 0
      %1158 = vmatpush1.bf16.xpose.msra.mxu0 0
      %1159 = vmatprep.subr.bf16.mxu0 0
      %1160 = vmatpush1.bf16.xpose.msra.mxu0 0
      %1161 = vmatprep.subr.bf16.mxu0 0
      %1162 = vmatpush1.bf16.xpose.msra.mxu0 0
      %1163 = vmatprep.subr.bf16.mxu0 0
      %1164 = vmatpush1.bf16.xpose.msra.mxu0 0
      %1165 = vmatprep.subr.bf16.mxu0 0
      %1166 = vmatpush1.bf16.xpose.msra.mxu0 0
      %1167 = vmatprep.subr.bf16.mxu0 0
      %1168 = vmatpush1.bf16.xpose.msra.mxu0 0
      %1169 = vmatprep.subr.bf16.mxu0 0
      %1170 = vmatpush1.bf16.xpose.msra.mxu0 0
      %1171 = vmatprep.subr.bf16.mxu0 0
      %1172 = vmatpush1.bf16.xpose.msra.mxu0 0
      %1173 = vmatprep.subr.bf16.mxu0 0
      %1174 = vmatpush1.bf16.xpose.msra.mxu0 0
      %1175 = vmatprep.mubr.bf16.mxu0 0
      %1176 = vmatmul.mubr.bf16.gmra.mrb[0].mxu0 %v1138
      %v1177 = vpop.f32.mrb[0].mxu0
      %v1178 = vadd.f32 0.0, %v1177
      %v1179 = vpop.f32.mrb[0].mxu0
      %v1180 = vpop.f32.mrb[0].mxu0
      %v1181 = vpop.f32.mrb[0].mxu0
      %1182 = vdwg.mxu0
      %v1183 = vmul.f32 %v1178, 0.35355338
      %v1184 = vsel %vm906, %v1183, -1e+09
      %v1185 = vsel %vm911, %v1184, -inf
      %1186 = vmax.xlane.f32.xlu0 %v1185
      %v1187 = vpop.xlane.xlu0 %1186
      %v1188 = vsub.f32 %v1184, %v1187
      %v1189 = vmul.f32 %v1188, 1.442695
      %v1190 = vpow.pop %v1189
      %v1191 = vsel %vm911, %v1190, 0.0
      %1192 = vadd.xlane.f32.xlu0 %v1191
      %v1193 = vpop.xlane.xlu0 %1192
      %v1194 = vrcp.pop %v1193
      %v1195 = vmul.f32 %v1190, %v1194
      %v1196 = vpack.c.bf16 %v1195, %v1195
      %1197 = vrot.lane.b32.xlu0 %v907, 48
      %v1198 = vpop.permute.xlu0 %1197
      %v1200 = vsel %vm911, %v1196, 0
      %v1203 = vsel %vm977, %v1198, 0
      %1205 = vmatprep.subr.bf16.mxu0 0
      %1206 = vmatpush1.bf16.msra.mxu0 %v1203
      %1207 = vmatprep.subr.bf16.mxu0 0
      %1208 = vmatpush1.bf16.msra.mxu0 0
      %1209 = vmatprep.subr.bf16.mxu0 0
      %1210 = vmatpush1.bf16.msra.mxu0 0
      %1211 = vmatprep.subr.bf16.mxu0 0
      %1212 = vmatpush1.bf16.msra.mxu0 0
      %1213 = vmatprep.subr.bf16.mxu0 0
      %1214 = vmatpush1.bf16.msra.mxu0 0
      %1215 = vmatprep.subr.bf16.mxu0 0
      %1216 = vmatpush1.bf16.msra.mxu0 0
      %1217 = vmatprep.subr.bf16.mxu0 0
      %1218 = vmatpush1.bf16.msra.mxu0 0
      %1219 = vmatprep.subr.bf16.mxu0 0
      %1220 = vmatpush1.bf16.msra.mxu0 0
      %1221 = vmatprep.subr.bf16.mxu0 0
      %1222 = vmatpush1.bf16.msra.mxu0 0
      %1223 = vmatprep.subr.bf16.mxu0 0
      %1224 = vmatpush1.bf16.msra.mxu0 0
      %1225 = vmatprep.subr.bf16.mxu0 0
      %1226 = vmatpush1.bf16.msra.mxu0 0
      %1227 = vmatprep.subr.bf16.mxu0 0
      %1228 = vmatpush1.bf16.msra.mxu0 0
      %1229 = vmatprep.subr.bf16.mxu0 0
      %1230 = vmatpush1.bf16.msra.mxu0 0
      %1231 = vmatprep.subr.bf16.mxu0 0
      %1232 = vmatpush1.bf16.msra.mxu0 0
      %1233 = vmatprep.subr.bf16.mxu0 0
      %1234 = vmatpush1.bf16.msra.mxu0 0
      %1235 = vmatprep.subr.bf16.mxu0 0
      %1236 = vmatpush1.bf16.msra.mxu0 0
      %1237 = vmatprep.mubr.bf16.mxu0 0
      %1238 = vmatmul.mubr.bf16.gmra.mrb[0].mxu0 %v1200
      %v1239 = vpop.f32.mrb[0].mxu0
      %v1240 = vadd.f32 0.0, %v1239
      %v1241 = vpop.f32.mrb[0].mxu0
      %v1242 = vpop.f32.mrb[0].mxu0
      %v1243 = vpop.f32.mrb[0].mxu0
      %1244 = vdwg.mxu0
      %1245 = vrot.lane.b32.xlu0 %v907, 104
      %v1246 = vpop.permute.xlu0 %1245
      %1247 = vrot.lane.b32.xlu0 %v907, 72
      %v1248 = vpop.permute.xlu0 %1247
      %v1250 = vsel %vm911, %v1246, 0
      %v1253 = vsel %vm911, %v1248, 0
      %1255 = vmatprep.subr.bf16.mxu0 0
      %1256 = vmatpush1.bf16.xpose.msra.mxu0 %v1253
      %1257 = vmatprep.subr.bf16.mxu0 0
      %1258 = vmatpush1.bf16.xpose.msra.mxu0 0
      %1259 = vmatprep.subr.bf16.mxu0 0
      %1260 = vmatpush1.bf16.xpose.msra.mxu0 0
      %1261 = vmatprep.subr.bf16.mxu0 0
      %1262 = vmatpush1.bf16.xpose.msra.mxu0 0
      %1263 = vmatprep.subr.bf16.mxu0 0
      %1264 = vmatpush1.bf16.xpose.msra.mxu0 0
      %1265 = vmatprep.subr.bf16.mxu0 0
      %1266 = vmatpush1.bf16.xpose.msra.mxu0 0
      %1267 = vmatprep.subr.bf16.mxu0 0
      %1268 = vmatpush1.bf16.xpose.msra.mxu0 0
      %1269 = vmatprep.subr.bf16.mxu0 0
      %1270 = vmatpush1.bf16.xpose.msra.mxu0 0
      %1271 = vmatprep.subr.bf16.mxu0 0
      %1272 = vmatpush1.bf16.xpose.msra.mxu0 0
      %1273 = vmatprep.subr.bf16.mxu0 0
      %1274 = vmatpush1.bf16.xpose.msra.mxu0 0
      %1275 = vmatprep.subr.bf16.mxu0 0
      %1276 = vmatpush1.bf16.xpose.msra.mxu0 0
      %1277 = vmatprep.subr.bf16.mxu0 0
      %1278 = vmatpush1.bf16.xpose.msra.mxu0 0
      %1279 = vmatprep.subr.bf16.mxu0 0
      %1280 = vmatpush1.bf16.xpose.msra.mxu0 0
      %1281 = vmatprep.subr.bf16.mxu0 0
      %1282 = vmatpush1.bf16.xpose.msra.mxu0 0
      %1283 = vmatprep.subr.bf16.mxu0 0
      %1284 = vmatpush1.bf16.xpose.msra.mxu0 0
      %1285 = vmatprep.subr.bf16.mxu0 0
      %1286 = vmatpush1.bf16.xpose.msra.mxu0 0
      %1287 = vmatprep.mubr.bf16.mxu0 0
      %1288 = vmatmul.mubr.bf16.gmra.mrb[0].mxu0 %v1250
      %v1289 = vpop.f32.mrb[0].mxu0
      %v1290 = vadd.f32 0.0, %v1289
      %v1291 = vpop.f32.mrb[0].mxu0
      %v1292 = vpop.f32.mrb[0].mxu0
      %v1293 = vpop.f32.mrb[0].mxu0
      %1294 = vdwg.mxu0
      %v1295 = vmul.f32 %v1290, 0.35355338
      %v1296 = vsel %vm906, %v1295, -1e+09
      %v1297 = vsel %vm911, %v1296, -inf
      %1298 = vmax.xlane.f32.xlu0 %v1297
      %v1299 = vpop.xlane.xlu0 %1298
      %v1300 = vsub.f32 %v1296, %v1299
      %v1301 = vmul.f32 %v1300, 1.442695
      %v1302 = vpow.pop %v1301
      %v1303 = vsel %vm911, %v1302, 0.0
      %1304 = vadd.xlane.f32.xlu0 %v1303
      %v1305 = vpop.xlane.xlu0 %1304
      %v1306 = vrcp.pop %v1305
      %v1307 = vmul.f32 %v1302, %v1306
      %v1308 = vpack.c.bf16 %v1307, %v1307
      %1309 = vrot.lane.b32.xlu0 %v907, 40
      %v1310 = vpop.permute.xlu0 %1309
      %v1312 = vsel %vm911, %v1308, 0
      %v1315 = vsel %vm977, %v1310, 0
      %1317 = vmatprep.subr.bf16.mxu0 0
      %1318 = vmatpush1.bf16.msra.mxu0 %v1315
      %1319 = vmatprep.subr.bf16.mxu0 0
      %1320 = vmatpush1.bf16.msra.mxu0 0
      %1321 = vmatprep.subr.bf16.mxu0 0
      %1322 = vmatpush1.bf16.msra.mxu0 0
      %1323 = vmatprep.subr.bf16.mxu0 0
      %1324 = vmatpush1.bf16.msra.mxu0 0
      %1325 = vmatprep.subr.bf16.mxu0 0
      %1326 = vmatpush1.bf16.msra.mxu0 0
      %1327 = vmatprep.subr.bf16.mxu0 0
      %1328 = vmatpush1.bf16.msra.mxu0 0
      %1329 = vmatprep.subr.bf16.mxu0 0
      %1330 = vmatpush1.bf16.msra.mxu0 0
      %1331 = vmatprep.subr.bf16.mxu0 0
      %1332 = vmatpush1.bf16.msra.mxu0 0
      %1333 = vmatprep.subr.bf16.mxu0 0
      %1334 = vmatpush1.bf16.msra.mxu0 0
      %1335 = vmatprep.subr.bf16.mxu0 0
      %1336 = vmatpush1.bf16.msra.mxu0 0
      %1337 = vmatprep.subr.bf16.mxu0 0
      %1338 = vmatpush1.bf16.msra.mxu0 0
      %1339 = vmatprep.subr.bf16.mxu0 0
      %1340 = vmatpush1.bf16.msra.mxu0 0
      %1341 = vmatprep.subr.bf16.mxu0 0
      %1342 = vmatpush1.bf16.msra.mxu0 0
      %1343 = vmatprep.subr.bf16.mxu0 0
      %1344 = vmatpush1.bf16.msra.mxu0 0
      %1345 = vmatprep.subr.bf16.mxu0 0
      %1346 = vmatpush1.bf16.msra.mxu0 0
      %1347 = vmatprep.subr.bf16.mxu0 0
      %1348 = vmatpush1.bf16.msra.mxu0 0
      %1349 = vmatprep.mubr.bf16.mxu0 0
      %1350 = vmatmul.mubr.bf16.gmra.mrb[0].mxu0 %v1312
      %v1351 = vpop.f32.mrb[0].mxu0
      %v1352 = vadd.f32 0.0, %v1351
      %v1353 = vpop.f32.mrb[0].mxu0
      %v1354 = vpop.f32.mrb[0].mxu0
      %v1355 = vpop.f32.mrb[0].mxu0
      %1356 = vdwg.mxu0
      %1358 = vrot.lane.b32.xlu0 %v1128, 8
      %v1359 = vpop.permute.xlu0 %1358
      %1362 = vrot.lane.b32.xlu0 %v1240, 16
      %v1363 = vpop.permute.xlu0 %1362
      %1366 = vrot.lane.b32.xlu0 %v1352, 24
      %v1367 = vpop.permute.xlu0 %1366
      %v1369 = vsel %vm911, %v1016, %v1359
      %vm1370 = vcmask 130048
      %v1371 = vsel %vm1370, %v1369, %v1363
      %vm1372 = vcmask 195584
      %v1373 = vsel %vm1372, %v1371, %v1367
      %v1374 = vpack.c.bf16 %v1373, %v1373
      %v1375 = vld [vmem:[%s7] sm:$0xf]
      %v1376 = vld [vmem:[%s7 + $0x4] sm:$0xf]
      %v1377 = vld [vmem:[%s7 + $0x8] sm:$0xf]
      %v1378 = vld [vmem:[%s7 + $0xc] sm:$0xf]
      %v1383 = vunpack.c.l.b16 %v1375
      %v1384 = vunpack.c.l.b16 %v1376
      %v1385 = vunpack.c.l.b16 %v1377
      %v1386 = vunpack.c.l.b16 %v1378
      %v1387 = vpack.c.b16 %v1384, %v1383
      %v1388 = vpack.c.b16 %v1386, %v1385
      %v1392 = vsel %vm849, %v1374, 0
      %1394 = vmatprep.subr.bf16.mxu0 0
      %1395 = vmatpush1.bf16.msra.mxu0 %v1387
      %1396 = vmatprep.subr.bf16.mxu0 0
      %1397 = vmatpush1.bf16.msra.mxu0 %v1388
      %1398 = vmatprep.subr.bf16.mxu0 0
      %1399 = vmatpush1.bf16.msra.mxu0 0
      %1400 = vmatprep.subr.bf16.mxu0 0
      %1401 = vmatpush1.bf16.msra.mxu0 0
      %1402 = vmatprep.subr.bf16.mxu0 0
      %1403 = vmatpush1.bf16.msra.mxu0 0
      %1404 = vmatprep.subr.bf16.mxu0 0
      %1405 = vmatpush1.bf16.msra.mxu0 0
      %1406 = vmatprep.subr.bf16.mxu0 0
      %1407 = vmatpush1.bf16.msra.mxu0 0
      %1408 = vmatprep.subr.bf16.mxu0 0
      %1409 = vmatpush1.bf16.msra.mxu0 0
      %1410 = vmatprep.subr.bf16.mxu0 0
      %1411 = vmatpush1.bf16.msra.mxu0 0
      %1412 = vmatprep.subr.bf16.mxu0 0
      %1413 = vmatpush1.bf16.msra.mxu0 0
      %1414 = vmatprep.subr.bf16.mxu0 0
      %1415 = vmatpush1.bf16.msra.mxu0 0
      %1416 = vmatprep.subr.bf16.mxu0 0
      %1417 = vmatpush1.bf16.msra.mxu0 0
      %1418 = vmatprep.subr.bf16.mxu0 0
      %1419 = vmatpush1.bf16.msra.mxu0 0
      %1420 = vmatprep.subr.bf16.mxu0 0
      %1421 = vmatpush1.bf16.msra.mxu0 0
      %1422 = vmatprep.subr.bf16.mxu0 0
      %1423 = vmatpush1.bf16.msra.mxu0 0
      %1424 = vmatprep.subr.bf16.mxu0 0
      %1425 = vmatpush1.bf16.msra.mxu0 0
      %1426 = vmatprep.mubr.bf16.mxu0 0
      %1427 = vmatmul.mubr.bf16.gmra.mrb[0].mxu0 %v1392
      %v1428 = vpop.f32.mrb[0].mxu0
      %v1429 = vadd.f32 0.0, %v1428
      %v1430 = vpop.f32.mrb[0].mxu0
      %v1431 = vpop.f32.mrb[0].mxu0
      %v1432 = vpop.f32.mrb[0].mxu0
      %1433 = vdwg.mxu0
      %v1434 = vadd.f32 %v824, %v1429
      %v1435 = vld [vmem:[%s8] sm:$0x1]
      %v1437 = vlaneseq
      %v1438 = vshrl.u32 %v1437, 7
      %v1439 = vsub.s32 0, %v1438
      %v1440 = vrot.slane %v1435, %v1439
      %v1442 = vadd.f32 %v1434, %v1440
      %v1443 = vld [vmem:[%s9] sm:$0x1]
      %v1444 = vld [vmem:[%s10] sm:$0x1]
      %v1445 = vsel %vm849, %v1442, 0.0
      %1446 = vadd.xlane.f32.xlu0 %v1445
      %v1447 = vpop.xlane.xlu0 %1446
      %v1448 = vrcp.pop 32.0
      %v1449 = vmul.f32 %v1447, %v1448
      %v1450 = vsub.f32 %v1442, %v1449
      %v1451 = vmul.f32 %v1450, %v1450
      %v1452 = vsel %vm849, %v1451, 0.0
      %1453 = vadd.xlane.f32.xlu0 %v1452
      %v1454 = vpop.xlane.xlu0 %1453
      %v1455 = vmul.f32 %v1454, %v1448
      %v1456 = vadd.f32 %v1455, 1e-05
      %v1457 = vrsqrt.pop %v1456
      %v1458 = vmul.f32 %v1450, %v1457
      %v1460 = vlaneseq
      %v1461 = vshrl.u32 %v1460, 7
      %v1462 = vsub.s32 0, %v1461
      %v1463 = vrot.slane %v1443, %v1462
      %v1465 = vmul.f32 %v1458, %v1463
      %v1467 = vlaneseq
      %v1468 = vshrl.u32 %v1467, 7
      %v1469 = vsub.s32 0, %v1468
      %v1470 = vrot.slane %v1444, %v1469
      %v1472 = vadd.f32 %v1465, %v1470
      %1474 = vset.pattern.permute.xlu0 0
      %1475 = vperm.xlu0 %1474, %v823
      %v1476 = vpop.permute.xlu0 %1475
      %v1478 = vmul.f32 %v1472, %v1476
      %v1479 = vpack.c.bf16 %v1478, %v1478
      %v1480 = vld [vmem:[%s11] sm:$0xf]
      %v1481 = vld [vmem:[%s11 + $0x4] sm:$0xf]
      %v1482 = vld [vmem:[%s11 + $0x8] sm:$0xf]
      %v1483 = vld [vmem:[%s11 + $0xc] sm:$0xf]
      %v1484 = vld [vmem:[%s12] sm:$0x1]
      %v1486 = vlaneseq
      %v1487 = vshrl.u32 %v1486, 7
      %v1488 = vsub.s32 0, %v1487
      %v1489 = vrot.slane %v1484, %v1488
      %v1495 = vunpack.c.l.b16 %v1480
      %v1496 = vunpack.c.l.b16 %v1481
      %v1497 = vunpack.c.l.b16 %v1482
      %v1498 = vunpack.c.l.b16 %v1483
      %v1499 = vpack.c.b16 %v1496, %v1495
      %v1500 = vpack.c.b16 %v1498, %v1497
      %v1504 = vsel %vm849, %v1479, 0
      %1506 = vmatprep.subr.bf16.mxu0 0
      %1507 = vmatpush1.bf16.msra.mxu0 %v1499
      %1508 = vmatprep.subr.bf16.mxu0 0
      %1509 = vmatpush1.bf16.msra.mxu0 %v1500
      %1510 = vmatprep.subr.bf16.mxu0 0
      %1511 = vmatpush1.bf16.msra.mxu0 0
      %1512 = vmatprep.subr.bf16.mxu0 0
      %1513 = vmatpush1.bf16.msra.mxu0 0
      %1514 = vmatprep.subr.bf16.mxu0 0
      %1515 = vmatpush1.bf16.msra.mxu0 0
      %1516 = vmatprep.subr.bf16.mxu0 0
      %1517 = vmatpush1.bf16.msra.mxu0 0
      %1518 = vmatprep.subr.bf16.mxu0 0
      %1519 = vmatpush1.bf16.msra.mxu0 0
      %1520 = vmatprep.subr.bf16.mxu0 0
      %1521 = vmatpush1.bf16.msra.mxu0 0
      %1522 = vmatprep.subr.bf16.mxu0 0
      %1523 = vmatpush1.bf16.msra.mxu0 0
      %1524 = vmatprep.subr.bf16.mxu0 0
      %1525 = vmatpush1.bf16.msra.mxu0 0
      %1526 = vmatprep.subr.bf16.mxu0 0
      %1527 = vmatpush1.bf16.msra.mxu0 0
      %1528 = vmatprep.subr.bf16.mxu0 0
      %1529 = vmatpush1.bf16.msra.mxu0 0
      %1530 = vmatprep.subr.bf16.mxu0 0
      %1531 = vmatpush1.bf16.msra.mxu0 0
      %1532 = vmatprep.subr.bf16.mxu0 0
      %1533 = vmatpush1.bf16.msra.mxu0 0
      %1534 = vmatprep.subr.bf16.mxu0 0
      %1535 = vmatpush1.bf16.msra.mxu0 0
      %1536 = vmatprep.subr.bf16.mxu0 0
      %1537 = vmatpush1.bf16.msra.mxu0 0
      %1538 = vmatprep.mubr.bf16.mxu0 0
      %1539 = vmatmul.mubr.bf16.gmra.mrb[0].mxu0 %v1504
      %v1540 = vpop.f32.mrb[0].mxu0
      %v1541 = vadd.f32 %v1489, %v1540
      %v1542 = vpop.f32.mrb[0].mxu0
      %v1543 = vpop.f32.mrb[0].mxu0
      %v1544 = vpop.f32.mrb[0].mxu0
      %1545 = vdwg.mxu0
      %v1546 = vld [vmem:[%s807] sm:$0xff]
      %v1547 = vpack.c.bf16 %v1546, %v1546
      %v1548 = vld [vmem:[%s13] sm:$0xf]
      %v1549 = vld [vmem:[%s13 + $0x4] sm:$0xf]
      %v1550 = vld [vmem:[%s13 + $0x8] sm:$0xf]
      %v1551 = vld [vmem:[%s13 + $0xc] sm:$0xf]
      %v1552 = vld [vmem:[%s14] sm:$0x1]
      %v1554 = vlaneseq
      %v1555 = vshrl.u32 %v1554, 7
      %v1556 = vsub.s32 0, %v1555
      %v1557 = vrot.slane %v1552, %v1556
      %v1563 = vunpack.c.l.b16 %v1548
      %v1564 = vunpack.c.l.b16 %v1549
      %v1565 = vunpack.c.l.b16 %v1550
      %v1566 = vunpack.c.l.b16 %v1551
      %v1567 = vpack.c.b16 %v1564, %v1563
      %v1568 = vpack.c.b16 %v1566, %v1565
      %v1572 = vsel %vm849, %v1547, 0
      %1574 = vmatprep.subr.bf16.mxu0 0
      %1575 = vmatpush1.bf16.msra.mxu0 %v1567
      %1576 = vmatprep.subr.bf16.mxu0 0
      %1577 = vmatpush1.bf16.msra.mxu0 %v1568
      %1578 = vmatprep.subr.bf16.mxu0 0
      %1579 = vmatpush1.bf16.msra.mxu0 0
      %1580 = vmatprep.subr.bf16.mxu0 0
      %1581 = vmatpush1.bf16.msra.mxu0 0
      %1582 = vmatprep.subr.bf16.mxu0 0
      %1583 = vmatpush1.bf16.msra.mxu0 0
      %1584 = vmatprep.subr.bf16.mxu0 0
      %1585 = vmatpush1.bf16.msra.mxu0 0
      %1586 = vmatprep.subr.bf16.mxu0 0
      %1587 = vmatpush1.bf16.msra.mxu0 0
      %1588 = vmatprep.subr.bf16.mxu0 0
      %1589 = vmatpush1.bf16.msra.mxu0 0
      %1590 = vmatprep.subr.bf16.mxu0 0
      %1591 = vmatpush1.bf16.msra.mxu0 0
      %1592 = vmatprep.subr.bf16.mxu0 0
      %1593 = vmatpush1.bf16.msra.mxu0 0
      %1594 = vmatprep.subr.bf16.mxu0 0
      %1595 = vmatpush1.bf16.msra.mxu0 0
      %1596 = vmatprep.subr.bf16.mxu0 0
      %1597 = vmatpush1.bf16.msra.mxu0 0
      %1598 = vmatprep.subr.bf16.mxu0 0
      %1599 = vmatpush1.bf16.msra.mxu0 0
      %1600 = vmatprep.subr.bf16.mxu0 0
      %1601 = vmatpush1.bf16.msra.mxu0 0
      %1602 = vmatprep.subr.bf16.mxu0 0
      %1603 = vmatpush1.bf16.msra.mxu0 0
      %1604 = vmatprep.subr.bf16.mxu0 0
      %1605 = vmatpush1.bf16.msra.mxu0 0
      %1606 = vmatprep.mubr.bf16.mxu0 0
      %1607 = vmatmul.mubr.bf16.gmra.mrb[0].mxu0 %v1572
      %v1608 = vpop.f32.mrb[0].mxu0
      %v1609 = vadd.f32 %v1557, %v1608
      %v1610 = vpop.f32.mrb[0].mxu0
      %v1611 = vpop.f32.mrb[0].mxu0
      %v1612 = vpop.f32.mrb[0].mxu0
      %1613 = vdwg.mxu0
      %v1614 = vld [vmem:[%s813] sm:$0x1]
      %vm1615 = vcmp.gt.f32.partialorder %v1614, 0.0
      %v1616 = vsel %vm1615, 1, 0
      %v1617 = vlaneseq
      %v1618 = vshrl.u32 %v1617, 7
      %v1619 = vsub.s32 0, %v1618
      %v1620 = vrot.slane %v1616, %v1619
      %vm1621 = vcmp.eq.s32.totalorder %v1620, 1
      %v1622 = vpack.c.bf16 %v1541, %v1541
      %v1623 = vpack.c.bf16 %v1609, %v1609
      %v1625 = vsel %vm911, %v1622, 0
      %v1628 = vsel %vm911, %v1623, 0
      %1630 = vmatprep.subr.bf16.mxu0 0
      %1631 = vmatpush1.bf16.xpose.msra.mxu0 %v1628
      %1632 = vmatprep.subr.bf16.mxu0 0
      %1633 = vmatpush1.bf16.xpose.msra.mxu0 0
      %1634 = vmatprep.subr.bf16.mxu0 0
      %1635 = vmatpush1.bf16.xpose.msra.mxu0 0
      %1636 = vmatprep.subr.bf16.mxu0 0
      %1637 = vmatpush1.bf16.xpose.msra.mxu0 0
      %1638 = vmatprep.subr.bf16.mxu0 0
      %1639 = vmatpush1.bf16.xpose.msra.mxu0 0
      %1640 = vmatprep.subr.bf16.mxu0 0
      %1641 = vmatpush1.bf16.xpose.msra.mxu0 0
      %1642 = vmatprep.subr.bf16.mxu0 0
      %1643 = vmatpush1.bf16.xpose.msra.mxu0 0
      %1644 = vmatprep.subr.bf16.mxu0 0
      %1645 = vmatpush1.bf16.xpose.msra.mxu0 0
      %1646 = vmatprep.subr.bf16.mxu0 0
      %1647 = vmatpush1.bf16.xpose.msra.mxu0 0
      %1648 = vmatprep.subr.bf16.mxu0 0
      %1649 = vmatpush1.bf16.xpose.msra.mxu0 0
      %1650 = vmatprep.subr.bf16.mxu0 0
      %1651 = vmatpush1.bf16.xpose.msra.mxu0 0
      %1652 = vmatprep.subr.bf16.mxu0 0
      %1653 = vmatpush1.bf16.xpose.msra.mxu0 0
      %1654 = vmatprep.subr.bf16.mxu0 0
      %1655 = vmatpush1.bf16.xpose.msra.mxu0 0
      %1656 = vmatprep.subr.bf16.mxu0 0
      %1657 = vmatpush1.bf16.xpose.msra.mxu0 0
      %1658 = vmatprep.subr.bf16.mxu0 0
      %1659 = vmatpush1.bf16.xpose.msra.mxu0 0
      %1660 = vmatprep.subr.bf16.mxu0 0
      %1661 = vmatpush1.bf16.xpose.msra.mxu0 0
      %1662 = vmatprep.mubr.bf16.mxu0 0
      %1663 = vmatmul.mubr.bf16.gmra.mrb[0].mxu0 %v1625
      %v1664 = vpop.f32.mrb[0].mxu0
      %v1665 = vadd.f32 0.0, %v1664
      %v1666 = vpop.f32.mrb[0].mxu0
      %v1667 = vpop.f32.mrb[0].mxu0
      %v1668 = vpop.f32.mrb[0].mxu0
      %1669 = vdwg.mxu0
      %v1670 = vmul.f32 %v1665, 0.35355338
      %v1671 = vsel %vm1621, %v1670, -1e+09
      %v1672 = vsel %vm911, %v1671, -inf
      %1673 = vmax.xlane.f32.xlu0 %v1672
      %v1674 = vpop.xlane.xlu0 %1673
      %v1675 = vsub.f32 %v1671, %v1674
      %v1676 = vmul.f32 %v1675, 1.442695
      %v1677 = vpow.pop %v1676
      %v1678 = vsel %vm911, %v1677, 0.0
      %1679 = vadd.xlane.f32.xlu0 %v1678
      %v1680 = vpop.xlane.xlu0 %1679
      %v1681 = vrcp.pop %v1680
      %v1682 = vmul.f32 %v1677, %v1681
      %v1683 = vpack.c.bf16 %v1682, %v1682
      %1685 = vrot.lane.b32.xlu0 %v1623, 96
      %v1686 = vpop.permute.xlu0 %1685
      %v1688 = vsel %vm911, %v1683, 0
      %v1691 = vsel %vm977, %v1686, 0
      %1693 = vmatprep.subr.bf16.mxu0 0
      %1694 = vmatpush1.bf16.msra.mxu0 %v1691
      %1695 = vmatprep.subr.bf16.mxu0 0
      %1696 = vmatpush1.bf16.msra.mxu0 0
      %1697 = vmatprep.subr.bf16.mxu0 0
      %1698 = vmatpush1.bf16.msra.mxu0 0
      %1699 = vmatprep.subr.bf16.mxu0 0
      %1700 = vmatpush1.bf16.msra.mxu0 0
      %1701 = vmatprep.subr.bf16.mxu0 0
      %1702 = vmatpush1.bf16.msra.mxu0 0
      %1703 = vmatprep.subr.bf16.mxu0 0
      %1704 = vmatpush1.bf16.msra.mxu0 0
      %1705 = vmatprep.subr.bf16.mxu0 0
      %1706 = vmatpush1.bf16.msra.mxu0 0
      %1707 = vmatprep.subr.bf16.mxu0 0
      %1708 = vmatpush1.bf16.msra.mxu0 0
      %1709 = vmatprep.subr.bf16.mxu0 0
      %1710 = vmatpush1.bf16.msra.mxu0 0
      %1711 = vmatprep.subr.bf16.mxu0 0
      %1712 = vmatpush1.bf16.msra.mxu0 0
      %1713 = vmatprep.subr.bf16.mxu0 0
      %1714 = vmatpush1.bf16.msra.mxu0 0
      %1715 = vmatprep.subr.bf16.mxu0 0
      %1716 = vmatpush1.bf16.msra.mxu0 0
      %1717 = vmatprep.subr.bf16.mxu0 0
      %1718 = vmatpush1.bf16.msra.mxu0 0
      %1719 = vmatprep.subr.bf16.mxu0 0
      %1720 = vmatpush1.bf16.msra.mxu0 0
      %1721 = vmatprep.subr.bf16.mxu0 0
      %1722 = vmatpush1.bf16.msra.mxu0 0
      %1723 = vmatprep.subr.bf16.mxu0 0
      %1724 = vmatpush1.bf16.msra.mxu0 0
      %1725 = vmatprep.mubr.bf16.mxu0 0
      %1726 = vmatmul.mubr.bf16.gmra.mrb[0].mxu0 %v1688
      %v1727 = vpop.f32.mrb[0].mxu0
      %v1728 = vadd.f32 0.0, %v1727
      %v1729 = vpop.f32.mrb[0].mxu0
      %v1730 = vpop.f32.mrb[0].mxu0
      %v1731 = vpop.f32.mrb[0].mxu0
      %1732 = vdwg.mxu0
      %1734 = vrot.lane.b32.xlu0 %v1622, 120
      %v1735 = vpop.permute.xlu0 %1734
      %1736 = vrot.lane.b32.xlu0 %v1623, 120
      %v1737 = vpop.permute.xlu0 %1736
      %v1739 = vsel %vm911, %v1735, 0
      %v1742 = vsel %vm911, %v1737, 0
      %1744 = vmatprep.subr.bf16.mxu0 0
      %1745 = vmatpush1.bf16.xpose.msra.mxu0 %v1742
      %1746 = vmatprep.subr.bf16.mxu0 0
      %1747 = vmatpush1.bf16.xpose.msra.mxu0 0
      %1748 = vmatprep.subr.bf16.mxu0 0
      %1749 = vmatpush1.bf16.xpose.msra.mxu0 0
      %1750 = vmatprep.subr.bf16.mxu0 0
      %1751 = vmatpush1.bf16.xpose.msra.mxu0 0
      %1752 = vmatprep.subr.bf16.mxu0 0
      %1753 = vmatpush1.bf16.xpose.msra.mxu0 0
      %1754 = vmatprep.subr.bf16.mxu0 0
      %1755 = vmatpush1.bf16.xpose.msra.mxu0 0
      %1756 = vmatprep.subr.bf16.mxu0 0
      %1757 = vmatpush1.bf16.xpose.msra.mxu0 0
      %1758 = vmatprep.subr.bf16.mxu0 0
      %1759 = vmatpush1.bf16.xpose.msra.mxu0 0
      %1760 = vmatprep.subr.bf16.mxu0 0
      %1761 = vmatpush1.bf16.xpose.msra.mxu0 0
      %1762 = vmatprep.subr.bf16.mxu0 0
      %1763 = vmatpush1.bf16.xpose.msra.mxu0 0
      %1764 = vmatprep.subr.bf16.mxu0 0
      %1765 = vmatpush1.bf16.xpose.msra.mxu0 0
      %1766 = vmatprep.subr.bf16.mxu0 0
      %1767 = vmatpush1.bf16.xpose.msra.mxu0 0
      %1768 = vmatprep.subr.bf16.mxu0 0
      %1769 = vmatpush1.bf16.xpose.msra.mxu0 0
      %1770 = vmatprep.subr.bf16.mxu0 0
      %1771 = vmatpush1.bf16.xpose.msra.mxu0 0
      %1772 = vmatprep.subr.bf16.mxu0 0
      %1773 = vmatpush1.bf16.xpose.msra.mxu0 0
      %1774 = vmatprep.subr.bf16.mxu0 0
      %1775 = vmatpush1.bf16.xpose.msra.mxu0 0
      %1776 = vmatprep.mubr.bf16.mxu0 0
      %1777 = vmatmul.mubr.bf16.gmra.mrb[0].mxu0 %v1739
      %v1778 = vpop.f32.mrb[0].mxu0
      %v1779 = vadd.f32 0.0, %v1778
      %v1780 = vpop.f32.mrb[0].mxu0
      %v1781 = vpop.f32.mrb[0].mxu0
      %v1782 = vpop.f32.mrb[0].mxu0
      %1783 = vdwg.mxu0
      %v1784 = vmul.f32 %v1779, 0.35355338
      %v1785 = vsel %vm1621, %v1784, -1e+09
      %v1786 = vsel %vm911, %v1785, -inf
      %1787 = vmax.xlane.f32.xlu0 %v1786
      %v1788 = vpop.xlane.xlu0 %1787
      %v1789 = vsub.f32 %v1785, %v1788
      %v1790 = vmul.f32 %v1789, 1.442695
      %v1791 = vpow.pop %v1790
      %v1792 = vsel %vm911, %v1791, 0.0
      %1793 = vadd.xlane.f32.xlu0 %v1792
      %v1794 = vpop.xlane.xlu0 %1793
      %v1795 = vrcp.pop %v1794
      %v1796 = vmul.f32 %v1791, %v1795
      %v1797 = vpack.c.bf16 %v1796, %v1796
      %1798 = vrot.lane.b32.xlu0 %v1623, 88
      %v1799 = vpop.permute.xlu0 %1798
      %v1801 = vsel %vm911, %v1797, 0
      %v1804 = vsel %vm977, %v1799, 0
      %1806 = vmatprep.subr.bf16.mxu0 0
      %1807 = vmatpush1.bf16.msra.mxu0 %v1804
      %1808 = vmatprep.subr.bf16.mxu0 0
      %1809 = vmatpush1.bf16.msra.mxu0 0
      %1810 = vmatprep.subr.bf16.mxu0 0
      %1811 = vmatpush1.bf16.msra.mxu0 0
      %1812 = vmatprep.subr.bf16.mxu0 0
      %1813 = vmatpush1.bf16.msra.mxu0 0
      %1814 = vmatprep.subr.bf16.mxu0 0
      %1815 = vmatpush1.bf16.msra.mxu0 0
      %1816 = vmatprep.subr.bf16.mxu0 0
      %1817 = vmatpush1.bf16.msra.mxu0 0
      %1818 = vmatprep.subr.bf16.mxu0 0
      %1819 = vmatpush1.bf16.msra.mxu0 0
      %1820 = vmatprep.subr.bf16.mxu0 0
      %1821 = vmatpush1.bf16.msra.mxu0 0
      %1822 = vmatprep.subr.bf16.mxu0 0
      %1823 = vmatpush1.bf16.msra.mxu0 0
      %1824 = vmatprep.subr.bf16.mxu0 0
      %1825 = vmatpush1.bf16.msra.mxu0 0
      %1826 = vmatprep.subr.bf16.mxu0 0
      %1827 = vmatpush1.bf16.msra.mxu0 0
      %1828 = vmatprep.subr.bf16.mxu0 0
      %1829 = vmatpush1.bf16.msra.mxu0 0
      %1830 = vmatprep.subr.bf16.mxu0 0
      %1831 = vmatpush1.bf16.msra.mxu0 0
      %1832 = vmatprep.subr.bf16.mxu0 0
      %1833 = vmatpush1.bf16.msra.mxu0 0
      %1834 = vmatprep.subr.bf16.mxu0 0
      %1835 = vmatpush1.bf16.msra.mxu0 0
      %1836 = vmatprep.subr.bf16.mxu0 0
      %1837 = vmatpush1.bf16.msra.mxu0 0
      %1838 = vmatprep.mubr.bf16.mxu0 0
      %1839 = vmatmul.mubr.bf16.gmra.mrb[0].mxu0 %v1801
      %v1840 = vpop.f32.mrb[0].mxu0
      %v1841 = vadd.f32 0.0, %v1840
      %v1842 = vpop.f32.mrb[0].mxu0
      %v1843 = vpop.f32.mrb[0].mxu0
      %v1844 = vpop.f32.mrb[0].mxu0
      %1845 = vdwg.mxu0
      %1846 = vrot.lane.b32.xlu0 %v1622, 112
      %v1847 = vpop.permute.xlu0 %1846
      %1848 = vrot.lane.b32.xlu0 %v1623, 112
      %v1849 = vpop.permute.xlu0 %1848
      %v1851 = vsel %vm911, %v1847, 0
      %v1854 = vsel %vm911, %v1849, 0
      %1856 = vmatprep.subr.bf16.mxu0 0
      %1857 = vmatpush1.bf16.xpose.msra.mxu0 %v1854
      %1858 = vmatprep.subr.bf16.mxu0 0
      %1859 = vmatpush1.bf16.xpose.msra.mxu0 0
      %1860 = vmatprep.subr.bf16.mxu0 0
      %1861 = vmatpush1.bf16.xpose.msra.mxu0 0
      %1862 = vmatprep.subr.bf16.mxu0 0
      %1863 = vmatpush1.bf16.xpose.msra.mxu0 0
      %1864 = vmatprep.subr.bf16.mxu0 0
      %1865 = vmatpush1.bf16.xpose.msra.mxu0 0
      %1866 = vmatprep.subr.bf16.mxu0 0
      %1867 = vmatpush1.bf16.xpose.msra.mxu0 0
      %1868 = vmatprep.subr.bf16.mxu0 0
      %1869 = vmatpush1.bf16.xpose.msra.mxu0 0
      %1870 = vmatprep.subr.bf16.mxu0 0
      %1871 = vmatpush1.bf16.xpose.msra.mxu0 0
      %1872 = vmatprep.subr.bf16.mxu0 0
      %1873 = vmatpush1.bf16.xpose.msra.mxu0 0
      %1874 = vmatprep.subr.bf16.mxu0 0
      %1875 = vmatpush1.bf16.xpose.msra.mxu0 0
      %1876 = vmatprep.subr.bf16.mxu0 0
      %1877 = vmatpush1.bf16.xpose.msra.mxu0 0
      %1878 = vmatprep.subr.bf16.mxu0 0
      %1879 = vmatpush1.bf16.xpose.msra.mxu0 0
      %1880 = vmatprep.subr.bf16.mxu0 0
      %1881 = vmatpush1.bf16.xpose.msra.mxu0 0
      %1882 = vmatprep.subr.bf16.mxu0 0
      %1883 = vmatpush1.bf16.xpose.msra.mxu0 0
      %1884 = vmatprep.subr.bf16.mxu0 0
      %1885 = vmatpush1.bf16.xpose.msra.mxu0 0
      %1886 = vmatprep.subr.bf16.mxu0 0
      %1887 = vmatpush1.bf16.xpose.msra.mxu0 0
      %1888 = vmatprep.mubr.bf16.mxu0 0
      %1889 = vmatmul.mubr.bf16.gmra.mrb[0].mxu0 %v1851
      %v1890 = vpop.f32.mrb[0].mxu0
      %v1891 = vadd.f32 0.0, %v1890
      %v1892 = vpop.f32.mrb[0].mxu0
      %v1893 = vpop.f32.mrb[0].mxu0
      %v1894 = vpop.f32.mrb[0].mxu0
      %1895 = vdwg.mxu0
      %v1896 = vmul.f32 %v1891, 0.35355338
      %v1897 = vsel %vm1621, %v1896, -1e+09
      %v1898 = vsel %vm911, %v1897, -inf
      %1899 = vmax.xlane.f32.xlu0 %v1898
      %v1900 = vpop.xlane.xlu0 %1899
      %v1901 = vsub.f32 %v1897, %v1900
      %v1902 = vmul.f32 %v1901, 1.442695
      %v1903 = vpow.pop %v1902
      %v1904 = vsel %vm911, %v1903, 0.0
      %1905 = vadd.xlane.f32.xlu0 %v1904
      %v1906 = vpop.xlane.xlu0 %1905
      %v1907 = vrcp.pop %v1906
      %v1908 = vmul.f32 %v1903, %v1907
      %v1909 = vpack.c.bf16 %v1908, %v1908
      %1910 = vrot.lane.b32.xlu0 %v1623, 80
      %v1911 = vpop.permute.xlu0 %1910
      %v1913 = vsel %vm911, %v1909, 0
      %v1916 = vsel %vm977, %v1911, 0
      %1918 = vmatprep.subr.bf16.mxu0 0
      %1919 = vmatpush1.bf16.msra.mxu0 %v1916
      %1920 = vmatprep.subr.bf16.mxu0 0
      %1921 = vmatpush1.bf16.msra.mxu0 0
      %1922 = vmatprep.subr.bf16.mxu0 0
      %1923 = vmatpush1.bf16.msra.mxu0 0
      %1924 = vmatprep.subr.bf16.mxu0 0
      %1925 = vmatpush1.bf16.msra.mxu0 0
      %1926 = vmatprep.subr.bf16.mxu0 0
      %1927 = vmatpush1.bf16.msra.mxu0 0
      %1928 = vmatprep.subr.bf16.mxu0 0
      %1929 = vmatpush1.bf16.msra.mxu0 0
      %1930 = vmatprep.subr.bf16.mxu0 0
      %1931 = vmatpush1.bf16.msra.mxu0 0
      %1932 = vmatprep.subr.bf16.mxu0 0
      %1933 = vmatpush1.bf16.msra.mxu0 0
      %1934 = vmatprep.subr.bf16.mxu0 0
      %1935 = vmatpush1.bf16.msra.mxu0 0
      %1936 = vmatprep.subr.bf16.mxu0 0
      %1937 = vmatpush1.bf16.msra.mxu0 0
      %1938 = vmatprep.subr.bf16.mxu0 0
      %1939 = vmatpush1.bf16.msra.mxu0 0
      %1940 = vmatprep.subr.bf16.mxu0 0
      %1941 = vmatpush1.bf16.msra.mxu0 0
      %1942 = vmatprep.subr.bf16.mxu0 0
      %1943 = vmatpush1.bf16.msra.mxu0 0
      %1944 = vmatprep.subr.bf16.mxu0 0
      %1945 = vmatpush1.bf16.msra.mxu0 0
      %1946 = vmatprep.subr.bf16.mxu0 0
      %1947 = vmatpush1.bf16.msra.mxu0 0
      %1948 = vmatprep.subr.bf16.mxu0 0
      %1949 = vmatpush1.bf16.msra.mxu0 0
      %1950 = vmatprep.mubr.bf16.mxu0 0
      %1951 = vmatmul.mubr.bf16.gmra.mrb[0].mxu0 %v1913
      %v1952 = vpop.f32.mrb[0].mxu0
      %v1953 = vadd.f32 0.0, %v1952
      %v1954 = vpop.f32.mrb[0].mxu0
      %v1955 = vpop.f32.mrb[0].mxu0
      %v1956 = vpop.f32.mrb[0].mxu0
      %1957 = vdwg.mxu0
      %1958 = vrot.lane.b32.xlu0 %v1622, 104
      %v1959 = vpop.permute.xlu0 %1958
      %1960 = vrot.lane.b32.xlu0 %v1623, 104
      %v1961 = vpop.permute.xlu0 %1960
      %v1963 = vsel %vm911, %v1959, 0
      %v1966 = vsel %vm911, %v1961, 0
      %1968 = vmatprep.subr.bf16.mxu0 0
      %1969 = vmatpush1.bf16.xpose.msra.mxu0 %v1966
      %1970 = vmatprep.subr.bf16.mxu0 0
      %1971 = vmatpush1.bf16.xpose.msra.mxu0 0
      %1972 = vmatprep.subr.bf16.mxu0 0
      %1973 = vmatpush1.bf16.xpose.msra.mxu0 0
      %1974 = vmatprep.subr.bf16.mxu0 0
      %1975 = vmatpush1.bf16.xpose.msra.mxu0 0
      %1976 = vmatprep.subr.bf16.mxu0 0
      %1977 = vmatpush1.bf16.xpose.msra.mxu0 0
      %1978 = vmatprep.subr.bf16.mxu0 0
      %1979 = vmatpush1.bf16.xpose.msra.mxu0 0
      %1980 = vmatprep.subr.bf16.mxu0 0
      %1981 = vmatpush1.bf16.xpose.msra.mxu0 0
      %1982 = vmatprep.subr.bf16.mxu0 0
      %1983 = vmatpush1.bf16.xpose.msra.mxu0 0
      %1984 = vmatprep.subr.bf16.mxu0 0
      %1985 = vmatpush1.bf16.xpose.msra.mxu0 0
      %1986 = vmatprep.subr.bf16.mxu0 0
      %1987 = vmatpush1.bf16.xpose.msra.mxu0 0
      %1988 = vmatprep.subr.bf16.mxu0 0
      %1989 = vmatpush1.bf16.xpose.msra.mxu0 0
      %1990 = vmatprep.subr.bf16.mxu0 0
      %1991 = vmatpush1.bf16.xpose.msra.mxu0 0
      %1992 = vmatprep.subr.bf16.mxu0 0
      %1993 = vmatpush1.bf16.xpose.msra.mxu0 0
      %1994 = vmatprep.subr.bf16.mxu0 0
      %1995 = vmatpush1.bf16.xpose.msra.mxu0 0
      %1996 = vmatprep.subr.bf16.mxu0 0
      %1997 = vmatpush1.bf16.xpose.msra.mxu0 0
      %1998 = vmatprep.subr.bf16.mxu0 0
      %1999 = vmatpush1.bf16.xpose.msra.mxu0 0
      %2000 = vmatprep.mubr.bf16.mxu0 0
      %2001 = vmatmul.mubr.bf16.gmra.mrb[0].mxu0 %v1963
      %v2002 = vpop.f32.mrb[0].mxu0
      %v2003 = vadd.f32 0.0, %v2002
      %v2004 = vpop.f32.mrb[0].mxu0
      %v2005 = vpop.f32.mrb[0].mxu0
      %v2006 = vpop.f32.mrb[0].mxu0
      %2007 = vdwg.mxu0
      %v2008 = vmul.f32 %v2003, 0.35355338
      %v2009 = vsel %vm1621, %v2008, -1e+09
      %v2010 = vsel %vm911, %v2009, -inf
      %2011 = vmax.xlane.f32.xlu0 %v2010
      %v2012 = vpop.xlane.xlu0 %2011
      %v2013 = vsub.f32 %v2009, %v2012
      %v2014 = vmul.f32 %v2013, 1.442695
      %v2015 = vpow.pop %v2014
      %v2016 = vsel %vm911, %v2015, 0.0
      %2017 = vadd.xlane.f32.xlu0 %v2016
      %v2018 = vpop.xlane.xlu0 %2017
      %v2019 = vrcp.pop %v2018
      %v2020 = vmul.f32 %v2015, %v2019
      %v2021 = vpack.c.bf16 %v2020, %v2020
      %2022 = vrot.lane.b32.xlu0 %v1623, 72
      %v2023 = vpop.permute.xlu0 %2022
      %v2025 = vsel %vm911, %v2021, 0
      %v2028 = vsel %vm977, %v2023, 0
      %2030 = vmatprep.subr.bf16.mxu0 0
      %2031 = vmatpush1.bf16.msra.mxu0 %v2028
      %2032 = vmatprep.subr.bf16.mxu0 0
      %2033 = vmatpush1.bf16.msra.mxu0 0
      %2034 = vmatprep.subr.bf16.mxu0 0
      %2035 = vmatpush1.bf16.msra.mxu0 0
      %2036 = vmatprep.subr.bf16.mxu0 0
      %2037 = vmatpush1.bf16.msra.mxu0 0
      %2038 = vmatprep.subr.bf16.mxu0 0
      %2039 = vmatpush1.bf16.msra.mxu0 0
      %2040 = vmatprep.subr.bf16.mxu0 0
      %2041 = vmatpush1.bf16.msra.mxu0 0
      %2042 = vmatprep.subr.bf16.mxu0 0
      %2043 = vmatpush1.bf16.msra.mxu0 0
      %2044 = vmatprep.subr.bf16.mxu0 0
      %2045 = vmatpush1.bf16.msra.mxu0 0
      %2046 = vmatprep.subr.bf16.mxu0 0
      %2047 = vmatpush1.bf16.msra.mxu0 0
      %2048 = vmatprep.subr.bf16.mxu0 0
      %2049 = vmatpush1.bf16.msra.mxu0 0
      %2050 = vmatprep.subr.bf16.mxu0 0
      %2051 = vmatpush1.bf16.msra.mxu0 0
      %2052 = vmatprep.subr.bf16.mxu0 0
      %2053 = vmatpush1.bf16.msra.mxu0 0
      %2054 = vmatprep.subr.bf16.mxu0 0
      %2055 = vmatpush1.bf16.msra.mxu0 0
      %2056 = vmatprep.subr.bf16.mxu0 0
      %2057 = vmatpush1.bf16.msra.mxu0 0
      %2058 = vmatprep.subr.bf16.mxu0 0
      %2059 = vmatpush1.bf16.msra.mxu0 0
      %2060 = vmatprep.subr.bf16.mxu0 0
      %2061 = vmatpush1.bf16.msra.mxu0 0
      %2062 = vmatprep.mubr.bf16.mxu0 0
      %2063 = vmatmul.mubr.bf16.gmra.mrb[0].mxu0 %v2025
      %v2064 = vpop.f32.mrb[0].mxu0
      %v2065 = vadd.f32 0.0, %v2064
      %v2066 = vpop.f32.mrb[0].mxu0
      %v2067 = vpop.f32.mrb[0].mxu0
      %v2068 = vpop.f32.mrb[0].mxu0
      %2069 = vdwg.mxu0
      %2071 = vrot.lane.b32.xlu0 %v1841, 8
      %v2072 = vpop.permute.xlu0 %2071
      %2075 = vrot.lane.b32.xlu0 %v1953, 16
      %v2076 = vpop.permute.xlu0 %2075
      %2079 = vrot.lane.b32.xlu0 %v2065, 24
      %v2080 = vpop.permute.xlu0 %2079
      %v2082 = vsel %vm911, %v1728, %v2072
      %v2083 = vsel %vm1370, %v2082, %v2076
      %v2084 = vsel %vm1372, %v2083, %v2080
      %v2085 = vpack.c.bf16 %v2084, %v2084
      %v2086 = vld [vmem:[%s15] sm:$0xf]
      %v2087 = vld [vmem:[%s15 + $0x4] sm:$0xf]
      %v2088 = vld [vmem:[%s15 + $0x8] sm:$0xf]
      %v2089 = vld [vmem:[%s15 + $0xc] sm:$0xf]
      %v2094 = vunpack.c.l.b16 %v2086
      %v2095 = vunpack.c.l.b16 %v2087
      %v2096 = vunpack.c.l.b16 %v2088
      %v2097 = vunpack.c.l.b16 %v2089
      %v2098 = vpack.c.b16 %v2095, %v2094
      %v2099 = vpack.c.b16 %v2097, %v2096
      %v2103 = vsel %vm849, %v2085, 0
      %2105 = vmatprep.subr.bf16.mxu0 0
      %2106 = vmatpush1.bf16.msra.mxu0 %v2098
      %2107 = vmatprep.subr.bf16.mxu0 0
      %2108 = vmatpush1.bf16.msra.mxu0 %v2099
      %2109 = vmatprep.subr.bf16.mxu0 0
      %2110 = vmatpush1.bf16.msra.mxu0 0
      %2111 = vmatprep.subr.bf16.mxu0 0
      %2112 = vmatpush1.bf16.msra.mxu0 0
      %2113 = vmatprep.subr.bf16.mxu0 0
      %2114 = vmatpush1.bf16.msra.mxu0 0
      %2115 = vmatprep.subr.bf16.mxu0 0
      %2116 = vmatpush1.bf16.msra.mxu0 0
      %2117 = vmatprep.subr.bf16.mxu0 0
      %2118 = vmatpush1.bf16.msra.mxu0 0
      %2119 = vmatprep.subr.bf16.mxu0 0
      %2120 = vmatpush1.bf16.msra.mxu0 0
      %2121 = vmatprep.subr.bf16.mxu0 0
      %2122 = vmatpush1.bf16.msra.mxu0 0
      %2123 = vmatprep.subr.bf16.mxu0 0
      %2124 = vmatpush1.bf16.msra.mxu0 0
      %2125 = vmatprep.subr.bf16.mxu0 0
      %2126 = vmatpush1.bf16.msra.mxu0 0
      %2127 = vmatprep.subr.bf16.mxu0 0
      %2128 = vmatpush1.bf16.msra.mxu0 0
      %2129 = vmatprep.subr.bf16.mxu0 0
      %2130 = vmatpush1.bf16.msra.mxu0 0
      %2131 = vmatprep.subr.bf16.mxu0 0
      %2132 = vmatpush1.bf16.msra.mxu0 0
      %2133 = vmatprep.subr.bf16.mxu0 0
      %2134 = vmatpush1.bf16.msra.mxu0 0
      %2135 = vmatprep.subr.bf16.mxu0 0
      %2136 = vmatpush1.bf16.msra.mxu0 0
      %2137 = vmatprep.mubr.bf16.mxu0 0
      %2138 = vmatmul.mubr.bf16.gmra.mrb[0].mxu0 %v2103
      %v2139 = vpop.f32.mrb[0].mxu0
      %v2140 = vadd.f32 0.0, %v2139
      %v2141 = vpop.f32.mrb[0].mxu0
      %v2142 = vpop.f32.mrb[0].mxu0
      %v2143 = vpop.f32.mrb[0].mxu0
      %2144 = vdwg.mxu0
      %v2145 = vadd.f32 %v1478, %v2140
      %v2146 = vld [vmem:[%s16] sm:$0x1]
      %v2148 = vlaneseq
      %v2149 = vshrl.u32 %v2148, 7
      %v2150 = vsub.s32 0, %v2149
      %v2151 = vrot.slane %v2146, %v2150
      %v2153 = vadd.f32 %v2145, %v2151
      %v2154 = vld [vmem:[%s17] sm:$0x1]
      %v2155 = vld [vmem:[%s18] sm:$0x1]
      %v2156 = vsel %vm849, %v2153, 0.0
      %2157 = vadd.xlane.f32.xlu0 %v2156
      %v2158 = vpop.xlane.xlu0 %2157
      %v2159 = vmul.f32 %v2158, %v1448
      %v2160 = vsub.f32 %v2153, %v2159
      %v2161 = vmul.f32 %v2160, %v2160
      %v2162 = vsel %vm849, %v2161, 0.0
      %2163 = vadd.xlane.f32.xlu0 %v2162
      %v2164 = vpop.xlane.xlu0 %2163
      %v2165 = vmul.f32 %v2164, %v1448
      %v2166 = vadd.f32 %v2165, 1e-05
      %v2167 = vrsqrt.pop %v2166
      %v2168 = vmul.f32 %v2160, %v2167
      %v2170 = vlaneseq
      %v2171 = vshrl.u32 %v2170, 7
      %v2172 = vsub.s32 0, %v2171
      %v2173 = vrot.slane %v2154, %v2172
      %v2175 = vmul.f32 %v2168, %v2173
      %v2177 = vlaneseq
      %v2178 = vshrl.u32 %v2177, 7
      %v2179 = vsub.s32 0, %v2178
      %v2180 = vrot.slane %v2155, %v2179
      %v2182 = vadd.f32 %v2175, %v2180
      %v2183 = vmul.f32 %v2182, %v1476
      %v2184 = vpack.c.bf16 %v2183, %v2183
      %v2185 = vld [vmem:[%s19] sm:$0xf]
      %v2186 = vld [vmem:[%s19 + $0x4] sm:$0xf]
      %v2187 = vld [vmem:[%s19 + $0x8] sm:$0xf]
      %v2188 = vld [vmem:[%s19 + $0xc] sm:$0xf]
      %v2189 = vld [vmem:[%s20] sm:$0x1]
      %v2191 = vlaneseq
      %v2192 = vshrl.u32 %v2191, 7
      %v2193 = vsub.s32 0, %v2192
      %v2194 = vrot.slane %v2189, %v2193
      %v2200 = vunpack.c.l.b16 %v2185
      %v2201 = vunpack.c.l.b16 %v2186
      %v2202 = vunpack.c.l.b16 %v2187
      %v2203 = vunpack.c.l.b16 %v2188
      %v2204 = vpack.c.b16 %v2201, %v2200
      %v2205 = vpack.c.b16 %v2203, %v2202
      %v2209 = vsel %vm849, %v2184, 0
      %2211 = vmatprep.subr.bf16.mxu0 0
      %2212 = vmatpush1.bf16.msra.mxu0 %v2204
      %2213 = vmatprep.subr.bf16.mxu0 0
      %2214 = vmatpush1.bf16.msra.mxu0 %v2205
      %2215 = vmatprep.subr.bf16.mxu0 0
      %2216 = vmatpush1.bf16.msra.mxu0 0
      %2217 = vmatprep.subr.bf16.mxu0 0
      %2218 = vmatpush1.bf16.msra.mxu0 0
      %2219 = vmatprep.subr.bf16.mxu0 0
      %2220 = vmatpush1.bf16.msra.mxu0 0
      %2221 = vmatprep.subr.bf16.mxu0 0
      %2222 = vmatpush1.bf16.msra.mxu0 0
      %2223 = vmatprep.subr.bf16.mxu0 0
      %2224 = vmatpush1.bf16.msra.mxu0 0
      %2225 = vmatprep.subr.bf16.mxu0 0
      %2226 = vmatpush1.bf16.msra.mxu0 0
      %2227 = vmatprep.subr.bf16.mxu0 0
      %2228 = vmatpush1.bf16.msra.mxu0 0
      %2229 = vmatprep.subr.bf16.mxu0 0
      %2230 = vmatpush1.bf16.msra.mxu0 0
      %2231 = vmatprep.subr.bf16.mxu0 0
      %2232 = vmatpush1.bf16.msra.mxu0 0
      %2233 = vmatprep.subr.bf16.mxu0 0
      %2234 = vmatpush1.bf16.msra.mxu0 0
      %2235 = vmatprep.subr.bf16.mxu0 0
      %2236 = vmatpush1.bf16.msra.mxu0 0
      %2237 = vmatprep.subr.bf16.mxu0 0
      %2238 = vmatpush1.bf16.msra.mxu0 0
      %2239 = vmatprep.subr.bf16.mxu0 0
      %2240 = vmatpush1.bf16.msra.mxu0 0
      %2241 = vmatprep.subr.bf16.mxu0 0
      %2242 = vmatpush1.bf16.msra.mxu0 0
      %2243 = vmatprep.mubr.bf16.mxu0 0
      %2244 = vmatmul.mubr.bf16.gmra.mrb[0].mxu0 %v2209
      %v2245 = vpop.f32.mrb[0].mxu0
      %v2246 = vadd.f32 %v2194, %v2245
      %v2247 = vpop.f32.mrb[0].mxu0
      %v2248 = vpop.f32.mrb[0].mxu0
      %v2249 = vpop.f32.mrb[0].mxu0
      %2250 = vdwg.mxu0
      %v2251 = vmax.f32 %v2246, 0.0
      %v2252 = vpack.c.bf16 %v2251, %v2251
      %v2253 = vld [vmem:[%s21] sm:$0xf]
      %v2254 = vld [vmem:[%s21 + $0x4] sm:$0xf]
      %v2255 = vld [vmem:[%s21 + $0x8] sm:$0xf]
      %v2256 = vld [vmem:[%s21 + $0xc] sm:$0xf]
      %v2257 = vld [vmem:[%s21 + $0x10] sm:$0xf]
      %v2258 = vld [vmem:[%s21 + $0x14] sm:$0xf]
      %v2259 = vld [vmem:[%s21 + $0x18] sm:$0xf]
      %v2260 = vld [vmem:[%s21 + $0x1c] sm:$0xf]
      %v2269 = vunpack.c.l.b16 %v2253
      %v2270 = vunpack.c.l.b16 %v2254
      %v2271 = vunpack.c.l.b16 %v2255
      %v2272 = vunpack.c.l.b16 %v2256
      %v2273 = vunpack.c.l.b16 %v2257
      %v2274 = vunpack.c.l.b16 %v2258
      %v2275 = vunpack.c.l.b16 %v2259
      %v2276 = vunpack.c.l.b16 %v2260
      %v2277 = vpack.c.b16 %v2270, %v2269
      %v2278 = vpack.c.b16 %v2272, %v2271
      %v2279 = vpack.c.b16 %v2274, %v2273
      %v2280 = vpack.c.b16 %v2276, %v2275
      %vm2285 = vcmask 523264
      %v2287 = vsel %vm2285, %v2252, 0
      %2289 = vmatprep.subr.bf16.mxu0 0
      %2290 = vmatpush1.bf16.msra.mxu0 %v2277
      %2291 = vmatprep.subr.bf16.mxu0 0
      %2292 = vmatpush1.bf16.msra.mxu0 %v2278
      %2293 = vmatprep.subr.bf16.mxu0 0
      %2294 = vmatpush1.bf16.msra.mxu0 %v2279
      %2295 = vmatprep.subr.bf16.mxu0 0
      %2296 = vmatpush1.bf16.msra.mxu0 %v2280
      %2297 = vmatprep.subr.bf16.mxu0 0
      %2298 = vmatpush1.bf16.msra.mxu0 0
      %2299 = vmatprep.subr.bf16.mxu0 0
      %2300 = vmatpush1.bf16.msra.mxu0 0
      %2301 = vmatprep.subr.bf16.mxu0 0
      %2302 = vmatpush1.bf16.msra.mxu0 0
      %2303 = vmatprep.subr.bf16.mxu0 0
      %2304 = vmatpush1.bf16.msra.mxu0 0
      %2305 = vmatprep.subr.bf16.mxu0 0
      %2306 = vmatpush1.bf16.msra.mxu0 0
      %2307 = vmatprep.subr.bf16.mxu0 0
      %2308 = vmatpush1.bf16.msra.mxu0 0
      %2309 = vmatprep.subr.bf16.mxu0 0
      %2310 = vmatpush1.bf16.msra.mxu0 0
      %2311 = vmatprep.subr.bf16.mxu0 0
      %2312 = vmatpush1.bf16.msra.mxu0 0
      %2313 = vmatprep.subr.bf16.mxu0 0
      %2314 = vmatpush1.bf16.msra.mxu0 0
      %2315 = vmatprep.subr.bf16.mxu0 0
      %2316 = vmatpush1.bf16.msra.mxu0 0
      %2317 = vmatprep.subr.bf16.mxu0 0
      %2318 = vmatpush1.bf16.msra.mxu0 0
      %2319 = vmatprep.subr.bf16.mxu0 0
      %2320 = vmatpush1.bf16.msra.mxu0 0
      %2321 = vmatprep.mubr.bf16.mxu0 0
      %2322 = vmatmul.mubr.bf16.gmra.mrb[0].mxu0 %v2287
      %v2323 = vpop.f32.mrb[0].mxu0
      %v2324 = vadd.f32 0.0, %v2323
      %v2325 = vpop.f32.mrb[0].mxu0
      %v2326 = vpop.f32.mrb[0].mxu0
      %v2327 = vpop.f32.mrb[0].mxu0
      %2328 = vdwg.mxu0
      %v2329 = vadd.f32 %v2183, %v2324
      %v2330 = vld [vmem:[%s22] sm:$0x1]
      %v2332 = vlaneseq
      %v2333 = vshrl.u32 %v2332, 7
      %v2334 = vsub.s32 0, %v2333
      %v2335 = vrot.slane %v2330, %v2334
      %v2337 = vadd.f32 %v2329, %v2335
      %v2338 = vld [vmem:[%s23] sm:$0x1]
      %v2339 = vld [vmem:[%s24] sm:$0x1]
      %v2340 = vsel %vm849, %v2337, 0.0
      %2341 = vadd.xlane.f32.xlu0 %v2340
      %v2342 = vpop.xlane.xlu0 %2341
      %v2343 = vmul.f32 %v2342, %v1448
      %v2344 = vsub.f32 %v2337, %v2343
      %v2345 = vmul.f32 %v2344, %v2344
      %v2346 = vsel %vm849, %v2345, 0.0
      %2347 = vadd.xlane.f32.xlu0 %v2346
      %v2348 = vpop.xlane.xlu0 %2347
      %v2349 = vmul.f32 %v2348, %v1448
      %v2350 = vadd.f32 %v2349, 1e-05
      %v2351 = vrsqrt.pop %v2350
      %v2352 = vmul.f32 %v2344, %v2351
      %v2354 = vlaneseq
      %v2355 = vshrl.u32 %v2354, 7
      %v2356 = vsub.s32 0, %v2355
      %v2357 = vrot.slane %v2338, %v2356
      %v2359 = vmul.f32 %v2352, %v2357
      %v2361 = vlaneseq
      %v2362 = vshrl.u32 %v2361, 7
      %v2363 = vsub.s32 0, %v2362
      %v2364 = vrot.slane %v2339, %v2363
      %v2366 = vadd.f32 %v2359, %v2364
      %v2367 = vmul.f32 %v2366, %v1476
      %2368 = vst.msk [vmem:[%s821] sm:$0xff] %vm849, %v2367
      %p2369 = scmp.lt.s32.totalorder %s36, 1
      %s2370 = scalar_select %p2369, %s36, 1
      %s2371 = smul.addr %s2370, 8
      %s2372 = scalar_lea.vmem %s25, %s2371
      // Predicated region
      $region121: #{_lambda_.3} parent=119 // pred_check
        %p2373 = pneg %p604
      $region122: #{_lambda_.3} parent=119 // pred_check_branch
        %2375 = sbr.rel (%p2373) target = $region124
      $region123: #{_lambda_.3} parent=119 // pred_region
        _
      $region124: #{_lambda_.3} parent=119 // pred_fallthru
        _
    $region120: #{_lambda_.3} parent=5 // pred_fallthru
      _
    %p2376 = scmp.le.s32.totalorder 2, %s31
    // Predicated region
    $region125: #{_lambda_.3} parent=5 // pred_check
      %p2377 = pneg %p2376
    $region126: #{_lambda_.3} parent=5 // pred_check_branch
      %2379 = sbr.rel (%p2377) target = $region128
    $region127: #{_lambda_.3} parent=5 // pred_region
      %s2380 = ssub.s32 %s31, 2
      // Predicated region
      $region129: #{_lambda_.3} parent=127 // pred_check
        %p2381 = pneg %p610
      $region130: #{_lambda_.3} parent=127 // pred_check_branch
        %2383 = sbr.rel (%p2381) target = $region132
      $region131: #{_lambda_.3} parent=127 // pred_region
        %p2384 = scmp.lt.s32.totalorder %s37, 1
        %s2385 = scalar_select %p2384, %s37, 1
        %s2386 = smul.addr %s2385, 8
        %s2387 = scalar_lea.vmem %s25, %s2386
      $region132: #{_lambda_.3} parent=127 // pred_fallthru
        _
    $region128: #{_lambda_.3} parent=5 // pred_fallthru
      _
  $region6: #{_lambda_.3} parent=0 // loop_footer
    %s35 = sadd.s32 1, %s31
  $region7: #{_lambda_.3} parent=0 // loop_footer_branch
    %30 = sbr.rel target = $region3
  $region8: #{_lambda_.3} parent=0 // loop_exit
    _

</llo_original>
